<compile_context>
chip_gen: v6e
topology: v6e:2x2x1
jax: 0.10.0
libtpu: 0.0.40
codegen_flags: <defaults>
</compile_context>

<pallas_src>
import jax
import jax.numpy as jnp
from jax import lax
from jax.experimental import pallas as pl
from jax.experimental.pallas import tpu as pltpu

H = W = 224
HP = WP = 112
C = 3
NOUT = 4


def _n_core_splits():
    """2 on v7x (2 TensorCores per chip) so both cores get work; 1 elsewhere."""
    try:
        kind = jax.devices()[0].device_kind.lower()
    except Exception:
        return 1
    return 2 if ("v7" in kind or "7x" in kind) else 1


# ----------------------------------------------------------------------------
# Host-side builders for the pool-fused shift matrices (entries 0 / 0.5, exact
# in bf16).  Zero padding of the conv is handled exactly: out-of-range taps
# simply have no matching column/row.
# ----------------------------------------------------------------------------
def _pool_shift_left():
    # PSy[kh, a, r] = 0.5 iff r in {2a + (kh-1), 2a + 1 + (kh-1)}   -> (3, 112, 224)
    kh = jnp.arange(3).reshape(3, 1, 1)
    a = jnp.arange(HP).reshape(1, HP, 1)
    r = jnp.arange(H).reshape(1, 1, H)
    dy = kh - 1
    hit = (r == 2 * a + dy) | (r == 2 * a + 1 + dy)
    return 0.5 * hit.astype(jnp.float32)


def _pool_shift_right():
    # SxPT[kw, r, b] = 0.5 iff r in {2b + (kw-1), 2b + 1 + (kw-1)}  -> (3, 224, 112)
    kw = jnp.arange(3).reshape(3, 1, 1)
    r = jnp.arange(W).reshape(1, W, 1)
    b = jnp.arange(WP).reshape(1, 1, WP)
    dx = kw - 1
    hit = (r == 2 * b + dx) | (r == 2 * b + 1 + dx)
    return 0.5 * hit.astype(jnp.float32)


# ----------------------------------------------------------------------------
# Kernel 1: fused Conv2d(3->3,k=3,pad=1) + AvgPool2d(2,2) + Linear(37632 -> 4).
# Grid = (batch, row_split); each step handles tp = 112 // row_split pooled rows.
# ----------------------------------------------------------------------------
def _make_loc_kernel(tp):
    def loc_kernel(x_ref, psy_ref, rw_ref, fcw_ref, o_ref):
        # x_ref   : (1, 3, 224, 224) bf16  -- one input image
        # psy_ref : (1, 3*tp, 224)   bf16  -- pool-fused row-shift rows, this tile
        # rw_ref  : (3, 3, 224, 336) bf16  -- conv weights folded into col shift/pool
        # fcw_ref : (4, tp, 336)     f32   -- fc_loc weight slab for this row tile
        # o_ref   : (1, 1, 1, 4)     f32   -- partial fc_loc sums (bias added in glue)
        psy = psy_ref[0]                                            # (3*tp, 224) bf16
        acc = jnp.zeros((tp, C * WP), jnp.float32)
        for ci in range(C):
            # Row shift + row pool for all 3 kh taps in one MXU pass (M = 3*tp).
            left = jnp.dot(psy, x_ref[0, ci],
                           preferred_element_type=jnp.float32)      # (3*tp, 224) f32
            for kh in range(3):
                # Column shift + pool with conv weights pre-folded in (N = 336).
                lhs = left[kh * tp:(kh + 1) * tp, :].astype(jnp.bfloat16)
                acc = acc + jnp.dot(lhs, rw_ref[ci, kh],
                                    preferred_element_type=jnp.float32)
        # Fused fc_loc epilogue: 4 independent (tp, 336) reductions (no loop-carried
        # dependence -> the lane reductions can pipeline through the XLU).
        lane = lax.broadcasted_iota(jnp.int32, (1, NOUT), 1)
        parts = []
        for o in range(NOUT):
            prod = acc * fcw_ref[o]                                  # (tp, 336)
            s = jnp.sum(prod, axis=1, keepdims=True)                 # (tp, 1)
            s = jnp.sum(s, axis=0, keepdims=True)                    # (1, 1)
            parts.append(s * (lane == o).astype(jnp.float32))
        o_ref[0, 0] = parts[0] + parts[1] + parts[2] + parts[3]

    return loc_kernel


def localization_fc(x, conv_w, fc_w, fc_b, row_split=None):
    """Conv2d + AvgPool2d + Linear of the localization head.  Returns (N, 4)."""
    if row_split is None:
        row_split = _n_core_splits()
    n = x.shape[0]
    tp = HP // row_split
    x_b = x if x.dtype == jnp.bfloat16 else x.astype(jnp.bfloat16)

    # Structural matrices (batch-independent, built once per forward).
    psy = _pool_shift_left()                                         # (3, 112, 224)
    psy_t = (psy.reshape(3, row_split, tp, H)
             .transpose(1, 0, 2, 3)
             .reshape(row_split, 3 * tp, H)
             .astype(jnp.bfloat16))                                  # (rs, 3*tp, 224)
    sxpt = _pool_shift_right()                                       # (3, 224, 112)
    # Fold conv weights into the column shift/pool factor once (host-side einsum):
    # Rw[ci, kh, r, co*112 + b] = sum_kw w[co, ci, kh, kw] * SxPT[kw, r, b].
    rw = (jnp.einsum("oikw,wrb->ikrob", conv_w.astype(jnp.float32), sxpt)
          .reshape(C, 3, W, C * WP)
          .astype(jnp.bfloat16))                                     # (3, 3, 224, 336)
    # torch Linear weight is (out, in) with in flattened (c, i, j) row-major;
    # reorganize to the (pooled_row, co*112 + col) layout of `acc`.
    fcw_r = (fc_w.reshape(NOUT, C, HP, WP)
             .transpose(0, 2, 1, 3)
             .reshape(NOUT, HP, C * WP)
             .astype(jnp.float32))                                   # (4, 112, 336)

    partial = pl.pallas_call(
        _make_loc_kernel(tp),
        out_shape=jax.ShapeDtypeStruct((n, row_split, 1, NOUT), jnp.float32),
        grid_spec=pltpu.PrefetchScalarGridSpec(
            num_scalar_prefetch=0,
            grid=(n, row_split),
            in_specs=[
                pl.BlockSpec((1, C, H, W), lambda b, rt: (b, 0, 0, 0)),
                pl.BlockSpec((1, 3 * tp, H), lambda b, rt: (rt, 0, 0)),
                # Constant index maps: fetched once, VMEM-resident across the batch.
                pl.BlockSpec((C, 3, W, C * WP), lambda b, rt: (0, 0, 0, 0)),
                pl.BlockSpec((NOUT, tp, C * WP), lambda b, rt: (0, rt, 0)),
            ],
            out_specs=pl.BlockSpec((1, 1, 1, NOUT), lambda b, rt: (b, rt, 0, 0)),
        ),
        compiler_params=pltpu.CompilerParams(
            dimension_semantics=("parallel", "parallel")),
    )(x_b, psy_t, rw, fcw_r)
    return partial[:, :, 0, :].sum(axis=1) + fc_b[None, :]


# ----------------------------------------------------------------------------
# Kernel 2: F.affine_grid + F.grid_sample (bilinear, zeros padding,
# align_corners=False) for axis-aligned theta.  Grid = (batch, row_tiles).
# ----------------------------------------------------------------------------
def _make_gridsample_kernel(ht):
    col_first = (ht == H)

    def gs_kernel(th_ref, x_ref, o_ref):
        # th_ref : (N*6,) f32 in SMEM (scalar prefetch)
        # x_ref  : (1, 672, 224) bf16  -- one image, channels stacked on rows
        # o_ref  : (1, 3, ht, 224) f32
        b = pl.program_id(0)
        rt = pl.program_id(1)
        t00 = th_ref[b * 6 + 0]
        t02 = th_ref[b * 6 + 2]
        t11 = th_ref[b * 6 + 4]
        t12 = th_ref[b * 6 + 5]
        # TODO(synk): general (rotated) affine grids need a 2-D gather; with this
        # module's parameters theta[0,1] == theta[1,0] == 0 whenever the torch
        # reference itself runs without error (its eigvals-ratio check only
        # executes for d == 0), so the separable row/column resampling is exact.

        # Row resampling matrix Ry[a, i] for output rows [rt*ht, rt*ht + ht).
        ii = (lax.broadcasted_iota(jnp.int32, (ht, 1), 0) + rt * ht).astype(jnp.float32)
        yn = (2.0 * ii + 1.0) / H - 1.0            # affine_grid, align_corners=False
        gy = t11 * yn + t12
        iy = ((gy + 1.0) * H - 1.0) * 0.5          # grid_sample unnormalize
        y0 = jnp.floor(iy)
        wy1 = iy - y0
        wy0 = 1.0 - wy1
        y0i = y0.astype(jnp.int32)
        p = lax.broadcasted_iota(jnp.int32, (ht, H), 1)
        ry = (wy0 * (p == y0i).astype(jnp.float32)
              + wy1 * (p == y0i + 1).astype(jnp.float32)).astype(jnp.bfloat16)

        # Column resampling matrix CxT[j, b'] (shared by all rows / channels).
        jj = lax.broadcasted_iota(jnp.int32, (1, W), 1).astype(jnp.float32)
        xn = (2.0 * jj + 1.0) / W - 1.0
        gx = t00 * xn + t02
        ix = ((gx + 1.0) * W - 1.0) * 0.5
        x0 = jnp.floor(ix)
        wx1 = ix - x0
        wx0 = 1.0 - wx1
        x0i = x0.astype(jnp.int32)
        q = lax.broadcasted_iota(jnp.int32, (W, W), 0)
        cxt = (wx0 * (q == x0i).astype(jnp.float32)
               + wx1 * (q == x0i + 1).astype(jnp.float32)).astype(jnp.bfloat16)

        if col_first:
            # Single-tile path: one channel-batched column resample (M = 672),
            # then 3 per-channel row resamples written straight to the output
            # block (no concatenate / VMEM staging copy).
            cols = jnp.dot(x_ref[0], cxt,
                           preferred_element_type=jnp.float32).astype(jnp.bfloat16)
            for c in range(C):
                o_ref[0, c] = jnp.dot(ry, cols[c * H:(c + 1) * H, :],
                                      preferred_element_type=jnp.float32)
        else:
            # Row-tiled path (v7x megacore): row-first per channel so the column
            # resample is not recomputed redundantly across row tiles.
            for c in range(C):
                rows = jnp.dot(ry, x_ref[0, c * H:(c + 1) * H, :],
                               preferred_element_type=jnp.float32).astype(jnp.bfloat16)
                o_ref[0, c] = jnp.dot(rows, cxt, preferred_element_type=jnp.float32)

    return gs_kernel


def grid_sample_affine(x, theta_flat, row_tiles=None):
    """F.affine_grid + F.grid_sample (bilinear, zeros, align_corners=False)."""
    if row_tiles is None:
        row_tiles = _n_core_splits()
    n = x.shape[0]
    ht = H // row_tiles
    x_b = x if x.dtype == jnp.bfloat16 else x.astype(jnp.bfloat16)
    x_rows = x_b.reshape(n, C * H, W)              # free reshape: channels on rows
    return pl.pallas_call(
        _make_gridsample_kernel(ht),
        out_shape=jax.ShapeDtypeStruct((n, C, H, W), jnp.float32),
        grid_spec=pltpu.PrefetchScalarGridSpec(
            num_scalar_prefetch=1,
            grid=(n, row_tiles),
            in_specs=[pl.BlockSpec((1, C * H, W), lambda b, r, th: (b, 0, 0))],
            out_specs=pl.BlockSpec((1, C, ht, W), lambda b, r, th: (b, 0, r, 0)),
        ),
        compiler_params=pltpu.CompilerParams(
            dimension_semantics=("parallel", "parallel")),
    )(theta_flat.astype(jnp.float32), x_rows)


# ----------------------------------------------------------------------------
# Full forward (glue in plain JAX).
# ----------------------------------------------------------------------------
def spatial_transformer_forward(x, conv_w, fc_w, fc_b):
    x_b = x.astype(jnp.bfloat16)                   # cast once; shared by both kernels
    transformer = localization_fc(x_b, conv_w, fc_w, fc_b)          # (N, 4)
    t0 = transformer[:, 0]
    t1 = transformer[:, 1]
    t2 = transformer[:, 2]
    # TODO(synk): like the torch reference, this divides by zero (NaN theta) if the
    # localization head outputs t0 == t1 == 0.
    scale = jnp.sqrt(t0 ** 2 + t1 ** 2)
    c = t0 / scale
    d = t1 / scale
    # theta[i] = [[c, -d, t2], [d, c, t2]]   (row-major flattened to (N, 6))
    theta = jnp.stack([c, -d, t2, d, c, t2], axis=-1)
    # TODO(synk): the torch reference host-loops np.linalg.eigvals([[c,-d],[d,c]])
    # and resets theta to identity if max/min eigenvalue ratio >= 2.  Eigenvalues
    # are c ± i*d, so that comparison only executes without error when d == 0,
    # where the ratio is 1 (< 2): the reset branch is dead code and is omitted.
    return grid_sample_affine(x_b, theta.reshape(-1))


# ----------------------------------------------------------------------------
# Pure-JAX (f32) references used only for the self-test below.
# ----------------------------------------------------------------------------
def _ref_localization_fc(x, conv_w, fc_w, fc_b):
    conv = lax.conv_general_dilated(
        x, conv_w, window_strides=(1, 1), padding=((1, 1), (1, 1)),
        dimension_numbers=("NCHW", "OIHW", "NCHW"),
        precision=lax.Precision.HIGHEST)
    n = x.shape[0]
    pooled = conv.reshape(n, C, HP, 2, WP, 2).mean(axis=(3, 5))
    xs = pooled.reshape(n, C * HP * WP)
    return jnp.dot(xs, fc_w.T, precision=lax.Precision.HIGHEST) + fc_b[None, :]


def _ref_grid_sample(x, theta):
    n, c, h, w = x.shape
    xn = jnp.broadcast_to((2.0 * jnp.arange(w, dtype=jnp.float32) + 1.0) / w - 1.0,
                          (h, w))
    yn = jnp.broadcast_to(((2.0 * jnp.arange(h, dtype=jnp.float32) + 1.0) / h - 1.0)[:, None],
                          (h, w))

    def one(img, th):
        gx = th[0, 0] * xn + th[0, 1] * yn + th[0, 2]
        gy = th[1, 0] * xn + th[1, 1] * yn + th[1, 2]
        ix = ((gx + 1.0) * w - 1.0) * 0.5
        iy = ((gy + 1.0) * h - 1.0) * 0.5
        x0 = jnp.floor(ix)
        y0 = jnp.floor(iy)
        wx1 = ix - x0
        wy1 = iy - y0

        def tap(yy, xx, wgt):
            valid = (yy >= 0) & (yy < h) & (xx >= 0) & (xx < w)
            yyc = jnp.clip(yy, 0, h - 1).astype(jnp.int32)
            xxc = jnp.clip(xx, 0, w - 1).astype(jnp.int32)
            vals = img[:, yyc, xxc]
            return jnp.where(valid[None], vals, 0.0) * wgt[None]

        return (tap(y0, x0, (1.0 - wy1) * (1.0 - wx1))
                + tap(y0, x0 + 1.0, (1.0 - wy1) * wx1)
                + tap(y0 + 1.0, x0, wy1 * (1.0 - wx1))
                + tap(y0 + 1.0, x0 + 1.0, wy1 * wx1))

    return jax.vmap(one)(x, theta)


if __name__ == "__main__":
    key = jax.random.PRNGKey(0)
    k1, k2, k3 = jax.random.split(key, 3)
    x = jax.random.normal(k1, (2, C, H, W), jnp.float32)

    # ---- Check 1: module's deterministic __init__ parameters -> identity warp.
    conv_w0 = jnp.zeros((C, C, 3, 3), jnp.float32)        # zeroed conv weight
    fc_w0 = jnp.zeros((NOUT, C * HP * WP), jnp.float32)   # zeroed fc weight
    fc_b0 = jnp.array([1.0, 0.0, 0.0, 0.0], jnp.float32)  # fc bias
    fwd = jax.jit(spatial_transformer_forward)
    out = jax.block_until_ready(fwd(x, conv_w0, fc_w0, fc_b0))
    assert out.shape == x.shape and out.dtype == jnp.float32
    err1 = jnp.abs(out - x)
    # bf16 matmul operands bound the error at ~0.4% relative of |x|.
    assert float(err1.max()) < 5e-2 and float(err1.mean()) < 1e-2, (
        float(err1.max()), float(err1.mean()))

    # ---- Check 2: fused conv+pool+fc kernel vs pure-f32 JAX reference.
    conv_w = 0.05 * jax.random.normal(k2, (C, C, 3, 3), jnp.float32)
    fc_w = 1e-4 * jax.random.normal(k3, (NOUT, C * HP * WP), jnp.float32)
    fc_w = fc_w.at[1].set(0.0)                            # keep theta axis-aligned (see TODO)
    fc_b = jnp.array([1.0, 0.0, 0.05, 0.0], jnp.float32)
    tr_kernel = jax.block_until_ready(localization_fc(x, conv_w, fc_w, fc_b))
    tr_ref = _ref_localization_fc(x, conv_w, fc_w, fc_b)
    err_fc = float(jnp.max(jnp.abs(tr_kernel - tr_ref)))
    assert err_fc < 1e-2, err_fc

    # ---- Check 3: grid-sample kernel vs gather-based bilinear f32 reference.
    t0, t1, t2 = tr_ref[:, 0], tr_ref[:, 1], tr_ref[:, 2]
    scale = jnp.sqrt(t0 ** 2 + t1 ** 2)
    cth, dth = t0 / scale, t1 / scale
    theta = jnp.stack([cth, -dth, t2, dth, cth, t2], axis=-1)
    out_kernel = jax.block_until_ready(grid_sample_affine(x, theta.reshape(-1)))
    out_ref = _ref_grid_sample(x, theta.reshape(-1, 2, 3))
    err_gs = jnp.abs(out_kernel - out_ref)
    assert float(err_gs.max()) < 1e-1 and float(err_gs.mean()) < 1e-2, (
        float(err_gs.max()), float(err_gs.mean()))

    # ---- Full forward end-to-end with the non-trivial weights.
    out_full = jax.block_until_ready(fwd(x, conv_w, fc_w, fc_b))
    assert out_full.shape == x.shape

    print("KERNEL_OK")
</pallas_src>

<mosaic_0001>
module attributes {stable_mosaic.version = 11 : i64} {
  func.func @loc_kernel(%arg0: i32, %arg1: i32, %arg2: memref<1x3x224x224xbf16, #tpu.memory_space<vmem>>, %arg3: memref<1x336x224xbf16, #tpu.memory_space<vmem>>, %arg4: memref<3x3x224x336xbf16, #tpu.memory_space<vmem>>, %arg5: memref<4x112x336xf32, #tpu.memory_space<vmem>>, %arg6: memref<1x1x1x4xf32, #tpu.memory_space<vmem>>) attributes {dimension_semantics = [#tpu.dimension_semantics<parallel>, #tpu.dimension_semantics<parallel>], iteration_bounds = array<i64: 2, 1>, scalar_prefetch = 0 : i64, scratch_operands = 0 : i64, tpu.core_type = #tpu.core_type<tc>, window_params = [{transform_indices = @transform_0, window_bounds = array<i64: 1, 3, 224, 224>}, {transform_indices = @transform_1, window_bounds = array<i64: 1, 336, 224>}, {pipeline_mode = #tpu.pipeline_mode<synchronous>, transform_indices = @transform_2, window_bounds = array<i64: 3, 3, 224, 336>}, {transform_indices = @transform_3, window_bounds = array<i64: 4, 112, 336>}, {transform_indices = @transform_4, window_bounds = array<i64: 1, 1, 1, 4>}]} {
    %c0 = arith.constant 0 : index
    %c0_0 = arith.constant 0 : index
    %c0_1 = arith.constant 0 : index
    %0 = vector.load %arg3[%c0, %c0_0, %c0_1] : memref<1x336x224xbf16, #tpu.memory_space<vmem>>, vector<1x336x224xbf16>
    %1 = vector.shape_cast %0 : vector<1x336x224xbf16> to vector<336x224xbf16>
    %cst = arith.constant 0.000000e+00 : f32
    %2 = vector.broadcast %cst : f32 to vector<112x336xf32>
    %c0_2 = arith.constant 0 : index
    %c0_3 = arith.constant 0 : index
    %c0_4 = arith.constant 0 : index
    %c0_5 = arith.constant 0 : index
    %3 = vector.load %arg2[%c0_2, %c0_3, %c0_4, %c0_5] : memref<1x3x224x224xbf16, #tpu.memory_space<vmem>>, vector<1x1x224x224xbf16>
    %4 = vector.shape_cast %3 : vector<1x1x224x224xbf16> to vector<224x224xbf16>
    %cst_6 = arith.constant dense<0.000000e+00> : vector<336x224xf32>
    %5 = tpu.matmul %1, %4, %cst_6 {dimension_numbers = #tpu.dot_dimension_numbers<[1], [0], [0], [1], [0, 0, 1, 1], [], []>} : vector<336x224xbf16>, vector<224x224xbf16>, vector<336x224xf32> -> vector<336x224xf32>
    %6 = vector.extract_strided_slice %5 {offsets = [0, 0], sizes = [112, 224], strides = [1, 1]} : vector<336x224xf32> to vector<112x224xf32>
    %7 = arith.truncf %6 : vector<112x224xf32> to vector<112x224xbf16>
    %c0_7 = arith.constant 0 : index
    %c0_8 = arith.constant 0 : index
    %c0_9 = arith.constant 0 : index
    %c0_10 = arith.constant 0 : index
    %8 = vector.load %arg4[%c0_7, %c0_8, %c0_9, %c0_10] : memref<3x3x224x336xbf16, #tpu.memory_space<vmem>>, vector<1x1x224x336xbf16>
    %9 = vector.shape_cast %8 : vector<1x1x224x336xbf16> to vector<224x336xbf16>
    %cst_11 = arith.constant dense<0.000000e+00> : vector<112x336xf32>
    %10 = tpu.matmul %7, %9, %cst_11 {dimension_numbers = #tpu.dot_dimension_numbers<[1], [0], [0], [1], [0, 0, 1, 1], [], []>} : vector<112x224xbf16>, vector<224x336xbf16>, vector<112x336xf32> -> vector<112x336xf32>
    %11 = arith.addf %2, %10 : vector<112x336xf32>
    %12 = vector.extract_strided_slice %5 {offsets = [112, 0], sizes = [112, 224], strides = [1, 1]} : vector<336x224xf32> to vector<112x224xf32>
    %13 = arith.truncf %12 : vector<112x224xf32> to vector<112x224xbf16>
    %c0_12 = arith.constant 0 : index
    %c1 = arith.constant 1 : index
    %c0_13 = arith.constant 0 : index
    %c0_14 = arith.constant 0 : index
    %14 = vector.load %arg4[%c0_12, %c1, %c0_13, %c0_14] : memref<3x3x224x336xbf16, #tpu.memory_space<vmem>>, vector<1x1x224x336xbf16>
    %15 = vector.shape_cast %14 : vector<1x1x224x336xbf16> to vector<224x336xbf16>
    %cst_15 = arith.constant dense<0.000000e+00> : vector<112x336xf32>
    %16 = tpu.matmul %13, %15, %cst_15 {dimension_numbers = #tpu.dot_dimension_numbers<[1], [0], [0], [1], [0, 0, 1, 1], [], []>} : vector<112x224xbf16>, vector<224x336xbf16>, vector<112x336xf32> -> vector<112x336xf32>
    %17 = arith.addf %11, %16 : vector<112x336xf32>
    %18 = vector.extract_strided_slice %5 {offsets = [224, 0], sizes = [112, 224], strides = [1, 1]} : vector<336x224xf32> to vector<112x224xf32>
    %19 = arith.truncf %18 : vector<112x224xf32> to vector<112x224xbf16>
    %c0_16 = arith.constant 0 : index
    %c2 = arith.constant 2 : index
    %c0_17 = arith.constant 0 : index
    %c0_18 = arith.constant 0 : index
    %20 = vector.load %arg4[%c0_16, %c2, %c0_17, %c0_18] : memref<3x3x224x336xbf16, #tpu.memory_space<vmem>>, vector<1x1x224x336xbf16>
    %21 = vector.shape_cast %20 : vector<1x1x224x336xbf16> to vector<224x336xbf16>
    %cst_19 = arith.constant dense<0.000000e+00> : vector<112x336xf32>
    %22 = tpu.matmul %19, %21, %cst_19 {dimension_numbers = #tpu.dot_dimension_numbers<[1], [0], [0], [1], [0, 0, 1, 1], [], []>} : vector<112x224xbf16>, vector<224x336xbf16>, vector<112x336xf32> -> vector<112x336xf32>
    %23 = arith.addf %17, %22 : vector<112x336xf32>
    %c0_20 = arith.constant 0 : index
    %c1_21 = arith.constant 1 : index
    %c0_22 = arith.constant 0 : index
    %c0_23 = arith.constant 0 : index
    %24 = vector.load %arg2[%c0_20, %c1_21, %c0_22, %c0_23] : memref<1x3x224x224xbf16, #tpu.memory_space<vmem>>, vector<1x1x224x224xbf16>
    %25 = vector.shape_cast %24 : vector<1x1x224x224xbf16> to vector<224x224xbf16>
    %cst_24 = arith.constant dense<0.000000e+00> : vector<336x224xf32>
    %26 = tpu.matmul %1, %25, %cst_24 {dimension_numbers = #tpu.dot_dimension_numbers<[1], [0], [0], [1], [0, 0, 1, 1], [], []>} : vector<336x224xbf16>, vector<224x224xbf16>, vector<336x224xf32> -> vector<336x224xf32>
    %27 = vector.extract_strided_slice %26 {offsets = [0, 0], sizes = [112, 224], strides = [1, 1]} : vector<336x224xf32> to vector<112x224xf32>
    %28 = arith.truncf %27 : vector<112x224xf32> to vector<112x224xbf16>
    %c1_25 = arith.constant 1 : index
    %c0_26 = arith.constant 0 : index
    %c0_27 = arith.constant 0 : index
    %c0_28 = arith.constant 0 : index
    %29 = vector.load %arg4[%c1_25, %c0_26, %c0_27, %c0_28] : memref<3x3x224x336xbf16, #tpu.memory_space<vmem>>, vector<1x1x224x336xbf16>
    %30 = vector.shape_cast %29 : vector<1x1x224x336xbf16> to vector<224x336xbf16>
    %cst_29 = arith.constant dense<0.000000e+00> : vector<112x336xf32>
    %31 = tpu.matmul %28, %30, %cst_29 {dimension_numbers = #tpu.dot_dimension_numbers<[1], [0], [0], [1], [0, 0, 1, 1], [], []>} : vector<112x224xbf16>, vector<224x336xbf16>, vector<112x336xf32> -> vector<112x336xf32>
    %32 = arith.addf %23, %31 : vector<112x336xf32>
    %33 = vector.extract_strided_slice %26 {offsets = [112, 0], sizes = [112, 224], strides = [1, 1]} : vector<336x224xf32> to vector<112x224xf32>
    %34 = arith.truncf %33 : vector<112x224xf32> to vector<112x224xbf16>
    %c1_30 = arith.constant 1 : index
    %c1_31 = arith.constant 1 : index
    %c0_32 = arith.constant 0 : index
    %c0_33 = arith.constant 0 : index
    %35 = vector.load %arg4[%c1_30, %c1_31, %c0_32, %c0_33] : memref<3x3x224x336xbf16, #tpu.memory_space<vmem>>, vector<1x1x224x336xbf16>
    %36 = vector.shape_cast %35 : vector<1x1x224x336xbf16> to vector<224x336xbf16>
    %cst_34 = arith.constant dense<0.000000e+00> : vector<112x336xf32>
    %37 = tpu.matmul %34, %36, %cst_34 {dimension_numbers = #tpu.dot_dimension_numbers<[1], [0], [0], [1], [0, 0, 1, 1], [], []>} : vector<112x224xbf16>, vector<224x336xbf16>, vector<112x336xf32> -> vector<112x336xf32>
    %38 = arith.addf %32, %37 : vector<112x336xf32>
    %39 = vector.extract_strided_slice %26 {offsets = [224, 0], sizes = [112, 224], strides = [1, 1]} : vector<336x224xf32> to vector<112x224xf32>
    %40 = arith.truncf %39 : vector<112x224xf32> to vector<112x224xbf16>
    %c1_35 = arith.constant 1 : index
    %c2_36 = arith.constant 2 : index
    %c0_37 = arith.constant 0 : index
    %c0_38 = arith.constant 0 : index
    %41 = vector.load %arg4[%c1_35, %c2_36, %c0_37, %c0_38] : memref<3x3x224x336xbf16, #tpu.memory_space<vmem>>, vector<1x1x224x336xbf16>
    %42 = vector.shape_cast %41 : vector<1x1x224x336xbf16> to vector<224x336xbf16>
    %cst_39 = arith.constant dense<0.000000e+00> : vector<112x336xf32>
    %43 = tpu.matmul %40, %42, %cst_39 {dimension_numbers = #tpu.dot_dimension_numbers<[1], [0], [0], [1], [0, 0, 1, 1], [], []>} : vector<112x224xbf16>, vector<224x336xbf16>, vector<112x336xf32> -> vector<112x336xf32>
    %44 = arith.addf %38, %43 : vector<112x336xf32>
    %c0_40 = arith.constant 0 : index
    %c2_41 = arith.constant 2 : index
    %c0_42 = arith.constant 0 : index
    %c0_43 = arith.constant 0 : index
    %45 = vector.load %arg2[%c0_40, %c2_41, %c0_42, %c0_43] : memref<1x3x224x224xbf16, #tpu.memory_space<vmem>>, vector<1x1x224x224xbf16>
    %46 = vector.shape_cast %45 : vector<1x1x224x224xbf16> to vector<224x224xbf16>
    %cst_44 = arith.constant dense<0.000000e+00> : vector<336x224xf32>
    %47 = tpu.matmul %1, %46, %cst_44 {dimension_numbers = #tpu.dot_dimension_numbers<[1], [0], [0], [1], [0, 0, 1, 1], [], []>} : vector<336x224xbf16>, vector<224x224xbf16>, vector<336x224xf32> -> vector<336x224xf32>
    %48 = vector.extract_strided_slice %47 {offsets = [0, 0], sizes = [112, 224], strides = [1, 1]} : vector<336x224xf32> to vector<112x224xf32>
    %49 = arith.truncf %48 : vector<112x224xf32> to vector<112x224xbf16>
    %c2_45 = arith.constant 2 : index
    %c0_46 = arith.constant 0 : index
    %c0_47 = arith.constant 0 : index
    %c0_48 = arith.constant 0 : index
    %50 = vector.load %arg4[%c2_45, %c0_46, %c0_47, %c0_48] : memref<3x3x224x336xbf16, #tpu.memory_space<vmem>>, vector<1x1x224x336xbf16>
    %51 = vector.shape_cast %50 : vector<1x1x224x336xbf16> to vector<224x336xbf16>
    %cst_49 = arith.constant dense<0.000000e+00> : vector<112x336xf32>
    %52 = tpu.matmul %49, %51, %cst_49 {dimension_numbers = #tpu.dot_dimension_numbers<[1], [0], [0], [1], [0, 0, 1, 1], [], []>} : vector<112x224xbf16>, vector<224x336xbf16>, vector<112x336xf32> -> vector<112x336xf32>
    %53 = arith.addf %44, %52 : vector<112x336xf32>
    %54 = vector.extract_strided_slice %47 {offsets = [112, 0], sizes = [112, 224], strides = [1, 1]} : vector<336x224xf32> to vector<112x224xf32>
    %55 = arith.truncf %54 : vector<112x224xf32> to vector<112x224xbf16>
    %c2_50 = arith.constant 2 : index
    %c1_51 = arith.constant 1 : index
    %c0_52 = arith.constant 0 : index
    %c0_53 = arith.constant 0 : index
    %56 = vector.load %arg4[%c2_50, %c1_51, %c0_52, %c0_53] : memref<3x3x224x336xbf16, #tpu.memory_space<vmem>>, vector<1x1x224x336xbf16>
    %57 = vector.shape_cast %56 : vector<1x1x224x336xbf16> to vector<224x336xbf16>
    %cst_54 = arith.constant dense<0.000000e+00> : vector<112x336xf32>
    %58 = tpu.matmul %55, %57, %cst_54 {dimension_numbers = #tpu.dot_dimension_numbers<[1], [0], [0], [1], [0, 0, 1, 1], [], []>} : vector<112x224xbf16>, vector<224x336xbf16>, vector<112x336xf32> -> vector<112x336xf32>
    %59 = arith.addf %53, %58 : vector<112x336xf32>
    %60 = vector.extract_strided_slice %47 {offsets = [224, 0], sizes = [112, 224], strides = [1, 1]} : vector<336x224xf32> to vector<112x224xf32>
    %61 = arith.truncf %60 : vector<112x224xf32> to vector<112x224xbf16>
    %c2_55 = arith.constant 2 : index
    %c2_56 = arith.constant 2 : index
    %c0_57 = arith.constant 0 : index
    %c0_58 = arith.constant 0 : index
    %62 = vector.load %arg4[%c2_55, %c2_56, %c0_57, %c0_58] : memref<3x3x224x336xbf16, #tpu.memory_space<vmem>>, vector<1x1x224x336xbf16>
    %63 = vector.shape_cast %62 : vector<1x1x224x336xbf16> to vector<224x336xbf16>
    %cst_59 = arith.constant dense<0.000000e+00> : vector<112x336xf32>
    %64 = tpu.matmul %61, %63, %cst_59 {dimension_numbers = #tpu.dot_dimension_numbers<[1], [0], [0], [1], [0, 0, 1, 1], [], []>} : vector<112x224xbf16>, vector<224x336xbf16>, vector<112x336xf32> -> vector<112x336xf32>
    %65 = arith.addf %59, %64 : vector<112x336xf32>
    %66 = tpu.iota {dimensions = array<i32: 1>} : vector<1x4xi32>
    %c0_60 = arith.constant 0 : index
    %c0_61 = arith.constant 0 : index
    %c0_62 = arith.constant 0 : index
    %67 = vector.load %arg5[%c0_60, %c0_61, %c0_62] : memref<4x112x336xf32, #tpu.memory_space<vmem>>, vector<1x112x336xf32>
    %68 = vector.shape_cast %67 : vector<1x112x336xf32> to vector<112x336xf32>
    %69 = arith.mulf %65, %68 : vector<112x336xf32>
    %cst_63 = arith.constant dense<0.000000e+00> : vector<112xf32>
    %70 = vector.multi_reduction <add>, %69, %cst_63 [1] : vector<112x336xf32> to vector<112xf32>
    %71 = vector.shape_cast %70 : vector<112xf32> to vector<112x1xf32>
    %cst_64 = arith.constant dense<0.000000e+00> : vector<1xf32>
    %72 = vector.multi_reduction <add>, %71, %cst_64 [0] : vector<112x1xf32> to vector<1xf32>
    %73 = vector.shape_cast %72 : vector<1xf32> to vector<1x1xf32>
    %c0_i32 = arith.constant 0 : i32
    %74 = vector.broadcast %c0_i32 : i32 to vector<1x4xi32>
    %75 = arith.cmpi eq, %66, %74 : vector<1x4xi32>
    %76 = arith.extui %75 : vector<1x4xi1> to vector<1x4xi32>
    %77 = arith.sitofp %76 : vector<1x4xi32> to vector<1x4xf32>
    %78 = vector.broadcast %73 : vector<1x1xf32> to vector<1x4xf32>
    %79 = arith.mulf %78, %77 : vector<1x4xf32>
    %c1_65 = arith.constant 1 : index
    %c0_66 = arith.constant 0 : index
    %c0_67 = arith.constant 0 : index
    %80 = vector.load %arg5[%c1_65, %c0_66, %c0_67] : memref<4x112x336xf32, #tpu.memory_space<vmem>>, vector<1x112x336xf32>
    %81 = vector.shape_cast %80 : vector<1x112x336xf32> to vector<112x336xf32>
    %82 = arith.mulf %65, %81 : vector<112x336xf32>
    %cst_68 = arith.constant dense<0.000000e+00> : vector<112xf32>
    %83 = vector.multi_reduction <add>, %82, %cst_68 [1] : vector<112x336xf32> to vector<112xf32>
    %84 = vector.shape_cast %83 : vector<112xf32> to vector<112x1xf32>
    %cst_69 = arith.constant dense<0.000000e+00> : vector<1xf32>
    %85 = vector.multi_reduction <add>, %84, %cst_69 [0] : vector<112x1xf32> to vector<1xf32>
    %86 = vector.shape_cast %85 : vector<1xf32> to vector<1x1xf32>
    %c1_i32 = arith.constant 1 : i32
    %87 = vector.broadcast %c1_i32 : i32 to vector<1x4xi32>
    %88 = arith.cmpi eq, %66, %87 : vector<1x4xi32>
    %89 = arith.extui %88 : vector<1x4xi1> to vector<1x4xi32>
    %90 = arith.sitofp %89 : vector<1x4xi32> to vector<1x4xf32>
    %91 = vector.broadcast %86 : vector<1x1xf32> to vector<1x4xf32>
    %92 = arith.mulf %91, %90 : vector<1x4xf32>
    %c2_70 = arith.constant 2 : index
    %c0_71 = arith.constant 0 : index
    %c0_72 = arith.constant 0 : index
    %93 = vector.load %arg5[%c2_70, %c0_71, %c0_72] : memref<4x112x336xf32, #tpu.memory_space<vmem>>, vector<1x112x336xf32>
    %94 = vector.shape_cast %93 : vector<1x112x336xf32> to vector<112x336xf32>
    %95 = arith.mulf %65, %94 : vector<112x336xf32>
    %cst_73 = arith.constant dense<0.000000e+00> : vector<112xf32>
    %96 = vector.multi_reduction <add>, %95, %cst_73 [1] : vector<112x336xf32> to vector<112xf32>
    %97 = vector.shape_cast %96 : vector<112xf32> to vector<112x1xf32>
    %cst_74 = arith.constant dense<0.000000e+00> : vector<1xf32>
    %98 = vector.multi_reduction <add>, %97, %cst_74 [0] : vector<112x1xf32> to vector<1xf32>
    %99 = vector.shape_cast %98 : vector<1xf32> to vector<1x1xf32>
    %c2_i32 = arith.constant 2 : i32
    %100 = vector.broadcast %c2_i32 : i32 to vector<1x4xi32>
    %101 = arith.cmpi eq, %66, %100 : vector<1x4xi32>
    %102 = arith.extui %101 : vector<1x4xi1> to vector<1x4xi32>
    %103 = arith.sitofp %102 : vector<1x4xi32> to vector<1x4xf32>
    %104 = vector.broadcast %99 : vector<1x1xf32> to vector<1x4xf32>
    %105 = arith.mulf %104, %103 : vector<1x4xf32>
    %c3 = arith.constant 3 : index
    %c0_75 = arith.constant 0 : index
    %c0_76 = arith.constant 0 : index
    %106 = vector.load %arg5[%c3, %c0_75, %c0_76] : memref<4x112x336xf32, #tpu.memory_space<vmem>>, vector<1x112x336xf32>
    %107 = vector.shape_cast %106 : vector<1x112x336xf32> to vector<112x336xf32>
    %108 = arith.mulf %65, %107 : vector<112x336xf32>
    %cst_77 = arith.constant dense<0.000000e+00> : vector<112xf32>
    %109 = vector.multi_reduction <add>, %108, %cst_77 [1] : vector<112x336xf32> to vector<112xf32>
    %110 = vector.shape_cast %109 : vector<112xf32> to vector<112x1xf32>
    %cst_78 = arith.constant dense<0.000000e+00> : vector<1xf32>
    %111 = vector.multi_reduction <add>, %110, %cst_78 [0] : vector<112x1xf32> to vector<1xf32>
    %112 = vector.shape_cast %111 : vector<1xf32> to vector<1x1xf32>
    %c3_i32 = arith.constant 3 : i32
    %113 = vector.broadcast %c3_i32 : i32 to vector<1x4xi32>
    %114 = arith.cmpi eq, %66, %113 : vector<1x4xi32>
    %115 = arith.extui %114 : vector<1x4xi1> to vector<1x4xi32>
    %116 = arith.sitofp %115 : vector<1x4xi32> to vector<1x4xf32>
    %117 = vector.broadcast %112 : vector<1x1xf32> to vector<1x4xf32>
    %118 = arith.mulf %117, %116 : vector<1x4xf32>
    %119 = arith.addf %79, %92 : vector<1x4xf32>
    %120 = arith.addf %119, %105 : vector<1x4xf32>
    %121 = arith.addf %120, %118 : vector<1x4xf32>
    %c0_79 = arith.constant 0 : index
    %c0_80 = arith.constant 0 : index
    %c0_81 = arith.constant 0 : index
    %c0_82 = arith.constant 0 : index
    %122 = vector.load %arg6[%c0_79, %c0_80, %c0_81, %c0_82] : memref<1x1x1x4xf32, #tpu.memory_space<vmem>>, vector<1x1x1x4xf32>
    %123 = vector.shape_cast %122 : vector<1x1x1x4xf32> to vector<1x4xf32>
    %124 = vector.shape_cast %121 : vector<1x4xf32> to vector<1x1x1x4xf32>
    tpu.vector_store %arg6[%c0_79, %c0_80, %c0_81, %c0_82], %124 {strides = array<i32>} : memref<1x1x1x4xf32, #tpu.memory_space<vmem>>, vector<1x1x1x4xf32>,
    return
  }
  func.func @transform_0(%arg0: i32, %arg1: i32) -> (i32, i32, i32, i32) {
    %c0_i32 = arith.constant 0 : i32
    %c0_i32_0 = arith.constant 0 : i32
    %c0_i32_1 = arith.constant 0 : i32
    %c0_i32_2 = arith.constant 0 : i32
    return %arg0, %c0_i32, %c0_i32_0, %c0_i32_1 : i32, i32, i32, i32
  }
  func.func @transform_1(%arg0: i32, %arg1: i32) -> (i32, i32, i32) {
    %c0_i32 = arith.constant 0 : i32
    %c0_i32_0 = arith.constant 0 : i32
    %c0_i32_1 = arith.constant 0 : i32
    return %arg1, %c0_i32, %c0_i32_0 : i32, i32, i32
  }
  func.func @transform_2(%arg0: i32, %arg1: i32) -> (i32, i32, i32, i32) {
    %c0_i32 = arith.constant 0 : i32
    %c0_i32_0 = arith.constant 0 : i32
    %c0_i32_1 = arith.constant 0 : i32
    %c0_i32_2 = arith.constant 0 : i32
    %c0_i32_3 = arith.constant 0 : i32
    return %c0_i32, %c0_i32_0, %c0_i32_1, %c0_i32_2 : i32, i32, i32, i32
  }
  func.func @transform_3(%arg0: i32, %arg1: i32) -> (i32, i32, i32) {
    %c0_i32 = arith.constant 0 : i32
    %c0_i32_0 = arith.constant 0 : i32
    %c0_i32_1 = arith.constant 0 : i32
    return %c0_i32, %arg1, %c0_i32_0 : i32, i32, i32
  }
  func.func @transform_4(%arg0: i32, %arg1: i32) -> (i32, i32, i32, i32) {
    %c0_i32 = arith.constant 0 : i32
    %c0_i32_0 = arith.constant 0 : i32
    %c0_i32_1 = arith.constant 0 : i32
    return %arg0, %arg1, %c0_i32, %c0_i32_0 : i32, i32, i32, i32
  }
}

module attributes {stable_mosaic.version = 11 : i64} {
  func.func @gs_kernel(%arg0: i32, %arg1: i32, %arg2: memref<12xf32, #tpu.memory_space<smem>>, %arg3: memref<1x672x224xbf16, #tpu.memory_space<vmem>>, %arg4: memref<1x3x224x224xf32, #tpu.memory_space<vmem>>) attributes {dimension_semantics = [#tpu.dimension_semantics<parallel>, #tpu.dimension_semantics<parallel>], iteration_bounds = array<i64: 2, 1>, scalar_prefetch = 1 : i64, scratch_operands = 0 : i64, tpu.core_type = #tpu.core_type<tc>, window_params = [{transform_indices = @transform_0, window_bounds = array<i64: 1, 672, 224>}, {transform_indices = @transform_1, window_bounds = array<i64: 1, 3, 224, 224>}]} {
    %c6_i32 = arith.constant 6 : i32
    %0 = arith.muli %arg0, %c6_i32 : i32
    %c0_i32 = arith.constant 0 : i32
    %1 = arith.addi %0, %c0_i32 : i32
    %2 = arith.index_cast %1 : i32 to index
    %3 = memref.load %arg2[%2] : memref<12xf32, #tpu.memory_space<smem>>
    %c6_i32_0 = arith.constant 6 : i32
    %4 = arith.muli %arg0, %c6_i32_0 : i32
    %c2_i32 = arith.constant 2 : i32
    %5 = arith.addi %4, %c2_i32 : i32
    %6 = arith.index_cast %5 : i32 to index
    %7 = memref.load %arg2[%6] : memref<12xf32, #tpu.memory_space<smem>>
    %c6_i32_1 = arith.constant 6 : i32
    %8 = arith.muli %arg0, %c6_i32_1 : i32
    %c4_i32 = arith.constant 4 : i32
    %9 = arith.addi %8, %c4_i32 : i32
    %10 = arith.index_cast %9 : i32 to index
    %11 = memref.load %arg2[%10] : memref<12xf32, #tpu.memory_space<smem>>
    %c6_i32_2 = arith.constant 6 : i32
    %12 = arith.muli %arg0, %c6_i32_2 : i32
    %c5_i32 = arith.constant 5 : i32
    %13 = arith.addi %12, %c5_i32 : i32
    %14 = arith.index_cast %13 : i32 to index
    %15 = memref.load %arg2[%14] : memref<12xf32, #tpu.memory_space<smem>>
    %16 = tpu.iota {dimensions = array<i32: 0>} : vector<224x1xi32>
    %c224_i32 = arith.constant 224 : i32
    %17 = arith.muli %arg1, %c224_i32 : i32
    %18 = vector.broadcast %17 : i32 to vector<224x1xi32>
    %19 = arith.addi %16, %18 : vector<224x1xi32>
    %20 = arith.sitofp %19 : vector<224x1xi32> to vector<224x1xf32>
    %cst = arith.constant 2.000000e+00 : f32
    %21 = vector.broadcast %cst : f32 to vector<224x1xf32>
    %22 = arith.mulf %21, %20 : vector<224x1xf32>
    %cst_3 = arith.constant 1.000000e+00 : f32
    %23 = vector.broadcast %cst_3 : f32 to vector<224x1xf32>
    %24 = arith.addf %22, %23 : vector<224x1xf32>
    %cst_4 = arith.constant 2.240000e+02 : f32
    %25 = vector.broadcast %cst_4 : f32 to vector<224x1xf32>
    %26 = arith.divf %24, %25 : vector<224x1xf32>
    %cst_5 = arith.constant 1.000000e+00 : f32
    %27 = vector.broadcast %cst_5 : f32 to vector<224x1xf32>
    %28 = arith.subf %26, %27 : vector<224x1xf32>
    %29 = vector.broadcast %11 : f32 to vector<224x1xf32>
    %30 = arith.mulf %29, %28 : vector<224x1xf32>
    %31 = vector.broadcast %15 : f32 to vector<224x1xf32>
    %32 = arith.addf %30, %31 : vector<224x1xf32>
    %cst_6 = arith.constant 1.000000e+00 : f32
    %33 = vector.broadcast %cst_6 : f32 to vector<224x1xf32>
    %34 = arith.addf %32, %33 : vector<224x1xf32>
    %cst_7 = arith.constant 2.240000e+02 : f32
    %35 = vector.broadcast %cst_7 : f32 to vector<224x1xf32>
    %36 = arith.mulf %34, %35 : vector<224x1xf32>
    %cst_8 = arith.constant 1.000000e+00 : f32
    %37 = vector.broadcast %cst_8 : f32 to vector<224x1xf32>
    %38 = arith.subf %36, %37 : vector<224x1xf32>
    %cst_9 = arith.constant 5.000000e-01 : f32
    %39 = vector.broadcast %cst_9 : f32 to vector<224x1xf32>
    %40 = arith.mulf %38, %39 : vector<224x1xf32>
    %41 = math.floor %40 : vector<224x1xf32>
    %42 = arith.subf %40, %41 : vector<224x1xf32>
    %cst_10 = arith.constant 1.000000e+00 : f32
    %43 = vector.broadcast %cst_10 : f32 to vector<224x1xf32>
    %44 = arith.subf %43, %42 : vector<224x1xf32>
    %45 = arith.fptosi %41 : vector<224x1xf32> to vector<224x1xi32>
    %46 = tpu.iota {dimensions = array<i32: 1>} : vector<224x224xi32>
    %47 = vector.broadcast %45 : vector<224x1xi32> to vector<224x224xi32>
    %48 = arith.cmpi eq, %46, %47 : vector<224x224xi32>
    %49 = arith.extui %48 : vector<224x224xi1> to vector<224x224xi32>
    %50 = arith.sitofp %49 : vector<224x224xi32> to vector<224x224xf32>
    %51 = vector.broadcast %44 : vector<224x1xf32> to vector<224x224xf32>
    %52 = arith.mulf %51, %50 : vector<224x224xf32>
    %c1_i32 = arith.constant 1 : i32
    %53 = vector.broadcast %c1_i32 : i32 to vector<224x1xi32>
    %54 = arith.addi %45, %53 : vector<224x1xi32>
    %55 = vector.broadcast %54 : vector<224x1xi32> to vector<224x224xi32>
    %56 = arith.cmpi eq, %46, %55 : vector<224x224xi32>
    %57 = arith.extui %56 : vector<224x224xi1> to vector<224x224xi32>
    %58 = arith.sitofp %57 : vector<224x224xi32> to vector<224x224xf32>
    %59 = vector.broadcast %42 : vector<224x1xf32> to vector<224x224xf32>
    %60 = arith.mulf %59, %58 : vector<224x224xf32>
    %61 = arith.addf %52, %60 : vector<224x224xf32>
    %62 = arith.truncf %61 : vector<224x224xf32> to vector<224x224xbf16>
    %63 = tpu.iota {dimensions = array<i32: 1>} : vector<1x224xi32>
    %64 = arith.sitofp %63 : vector<1x224xi32> to vector<1x224xf32>
    %cst_11 = arith.constant 2.000000e+00 : f32
    %65 = vector.broadcast %cst_11 : f32 to vector<1x224xf32>
    %66 = arith.mulf %65, %64 : vector<1x224xf32>
    %cst_12 = arith.constant 1.000000e+00 : f32
    %67 = vector.broadcast %cst_12 : f32 to vector<1x224xf32>
    %68 = arith.addf %66, %67 : vector<1x224xf32>
    %cst_13 = arith.constant 2.240000e+02 : f32
    %69 = vector.broadcast %cst_13 : f32 to vector<1x224xf32>
    %70 = arith.divf %68, %69 : vector<1x224xf32>
    %cst_14 = arith.constant 1.000000e+00 : f32
    %71 = vector.broadcast %cst_14 : f32 to vector<1x224xf32>
    %72 = arith.subf %70, %71 : vector<1x224xf32>
    %73 = vector.broadcast %3 : f32 to vector<1x224xf32>
    %74 = arith.mulf %73, %72 : vector<1x224xf32>
    %75 = vector.broadcast %7 : f32 to vector<1x224xf32>
    %76 = arith.addf %74, %75 : vector<1x224xf32>
    %cst_15 = arith.constant 1.000000e+00 : f32
    %77 = vector.broadcast %cst_15 : f32 to vector<1x224xf32>
    %78 = arith.addf %76, %77 : vector<1x224xf32>
    %cst_16 = arith.constant 2.240000e+02 : f32
    %79 = vector.broadcast %cst_16 : f32 to vector<1x224xf32>
    %80 = arith.mulf %78, %79 : vector<1x224xf32>
    %cst_17 = arith.constant 1.000000e+00 : f32
    %81 = vector.broadcast %cst_17 : f32 to vector<1x224xf32>
    %82 = arith.subf %80, %81 : vector<1x224xf32>
    %cst_18 = arith.constant 5.000000e-01 : f32
    %83 = vector.broadcast %cst_18 : f32 to vector<1x224xf32>
    %84 = arith.mulf %82, %83 : vector<1x224xf32>
    %85 = math.floor %84 : vector<1x224xf32>
    %86 = arith.subf %84, %85 : vector<1x224xf32>
    %cst_19 = arith.constant 1.000000e+00 : f32
    %87 = vector.broadcast %cst_19 : f32 to vector<1x224xf32>
    %88 = arith.subf %87, %86 : vector<1x224xf32>
    %89 = arith.fptosi %85 : vector<1x224xf32> to vector<1x224xi32>
    %90 = tpu.iota {dimensions = array<i32: 0>} : vector<224x224xi32>
    %91 = vector.broadcast %89 : vector<1x224xi32> to vector<224x224xi32>
    %92 = arith.cmpi eq, %90, %91 : vector<224x224xi32>
    %93 = arith.extui %92 : vector<224x224xi1> to vector<224x224xi32>
    %94 = arith.sitofp %93 : vector<224x224xi32> to vector<224x224xf32>
    %95 = vector.broadcast %88 : vector<1x224xf32> to vector<224x224xf32>
    %96 = arith.mulf %95, %94 : vector<224x224xf32>
    %c1_i32_20 = arith.constant 1 : i32
    %97 = vector.broadcast %c1_i32_20 : i32 to vector<1x224xi32>
    %98 = arith.addi %89, %97 : vector<1x224xi32>
    %99 = vector.broadcast %98 : vector<1x224xi32> to vector<224x224xi32>
    %100 = arith.cmpi eq, %90, %99 : vector<224x224xi32>
    %101 = arith.extui %100 : vector<224x224xi1> to vector<224x224xi32>
    %102 = arith.sitofp %101 : vector<224x224xi32> to vector<224x224xf32>
    %103 = vector.broadcast %86 : vector<1x224xf32> to vector<224x224xf32>
    %104 = arith.mulf %103, %102 : vector<224x224xf32>
    %105 = arith.addf %96, %104 : vector<224x224xf32>
    %106 = arith.truncf %105 : vector<224x224xf32> to vector<224x224xbf16>
    %c0 = arith.constant 0 : index
    %c0_21 = arith.constant 0 : index
    %c0_22 = arith.constant 0 : index
    %107 = vector.load %arg3[%c0, %c0_21, %c0_22] : memref<1x672x224xbf16, #tpu.memory_space<vmem>>, vector<1x672x224xbf16>
    %108 = vector.shape_cast %107 : vector<1x672x224xbf16> to vector<672x224xbf16>
    %cst_23 = arith.constant dense<0.000000e+00> : vector<672x224xf32>
    %109 = tpu.matmul %108, %106, %cst_23 {dimension_numbers = #tpu.dot_dimension_numbers<[1], [0], [0], [1], [0, 0, 1, 1], [], []>} : vector<672x224xbf16>, vector<224x224xbf16>, vector<672x224xf32> -> vector<672x224xf32>
    %110 = arith.truncf %109 : vector<672x224xf32> to vector<672x224xbf16>
    %111 = vector.extract_strided_slice %110 {offsets = [0, 0], sizes = [224, 224], strides = [1, 1]} : vector<672x224xbf16> to vector<224x224xbf16>
    %cst_24 = arith.constant dense<0.000000e+00> : vector<224x224xf32>
    %112 = tpu.matmul %62, %111, %cst_24 {dimension_numbers = #tpu.dot_dimension_numbers<[1], [0], [0], [1], [0, 0, 1, 1], [], []>} : vector<224x224xbf16>, vector<224x224xbf16>, vector<224x224xf32> -> vector<224x224xf32>
    %c0_25 = arith.constant 0 : index
    %c0_26 = arith.constant 0 : index
    %c0_27 = arith.constant 0 : index
    %c0_28 = arith.constant 0 : index
    %113 = vector.load %arg4[%c0_25, %c0_26, %c0_27, %c0_28] : memref<1x3x224x224xf32, #tpu.memory_space<vmem>>, vector<1x1x224x224xf32>
    %114 = vector.shape_cast %113 : vector<1x1x224x224xf32> to vector<224x224xf32>
    %115 = vector.shape_cast %112 : vector<224x224xf32> to vector<1x1x224x224xf32>
    tpu.vector_store %arg4[%c0_25, %c0_26, %c0_27, %c0_28], %115 {strides = array<i32>} : memref<1x3x224x224xf32, #tpu.memory_space<vmem>>, vector<1x1x224x224xf32>,
    %116 = vector.extract_strided_slice %110 {offsets = [224, 0], sizes = [224, 224], strides = [1, 1]} : vector<672x224xbf16> to vector<224x224xbf16>
    %cst_29 = arith.constant dense<0.000000e+00> : vector<224x224xf32>
    %117 = tpu.matmul %62, %116, %cst_29 {dimension_numbers = #tpu.dot_dimension_numbers<[1], [0], [0], [1], [0, 0, 1, 1], [], []>} : vector<224x224xbf16>, vector<224x224xbf16>, vector<224x224xf32> -> vector<224x224xf32>
    %c0_30 = arith.constant 0 : index
    %c1 = arith.constant 1 : index
    %c0_31 = arith.constant 0 : index
    %c0_32 = arith.constant 0 : index
    %118 = vector.load %arg4[%c0_30, %c1, %c0_31, %c0_32] : memref<1x3x224x224xf32, #tpu.memory_space<vmem>>, vector<1x1x224x224xf32>
    %119 = vector.shape_cast %118 : vector<1x1x224x224xf32> to vector<224x224xf32>
    %120 = vector.shape_cast %117 : vector<224x224xf32> to vector<1x1x224x224xf32>
    tpu.vector_store %arg4[%c0_30, %c1, %c0_31, %c0_32], %120 {strides = array<i32>} : memref<1x3x224x224xf32, #tpu.memory_space<vmem>>, vector<1x1x224x224xf32>,
    %121 = vector.extract_strided_slice %110 {offsets = [448, 0], sizes = [224, 224], strides = [1, 1]} : vector<672x224xbf16> to vector<224x224xbf16>
    %cst_33 = arith.constant dense<0.000000e+00> : vector<224x224xf32>
    %122 = tpu.matmul %62, %121, %cst_33 {dimension_numbers = #tpu.dot_dimension_numbers<[1], [0], [0], [1], [0, 0, 1, 1], [], []>} : vector<224x224xbf16>, vector<224x224xbf16>, vector<224x224xf32> -> vector<224x224xf32>
    %c0_34 = arith.constant 0 : index
    %c2 = arith.constant 2 : index
    %c0_35 = arith.constant 0 : index
    %c0_36 = arith.constant 0 : index
    %123 = vector.load %arg4[%c0_34, %c2, %c0_35, %c0_36] : memref<1x3x224x224xf32, #tpu.memory_space<vmem>>, vector<1x1x224x224xf32>
    %124 = vector.shape_cast %123 : vector<1x1x224x224xf32> to vector<224x224xf32>
    %125 = vector.shape_cast %122 : vector<224x224xf32> to vector<1x1x224x224xf32>
    tpu.vector_store %arg4[%c0_34, %c2, %c0_35, %c0_36], %125 {strides = array<i32>} : memref<1x3x224x224xf32, #tpu.memory_space<vmem>>, vector<1x1x224x224xf32>,
    return
  }
  func.func @transform_0(%arg0: i32, %arg1: i32, %arg2: memref<12xf32, #tpu.memory_space<smem>>) -> (i32, i32, i32) {
    %c0_i32 = arith.constant 0 : i32
    %c0_i32_0 = arith.constant 0 : i32
    %c0_i32_1 = arith.constant 0 : i32
    return %arg0, %c0_i32, %c0_i32_0 : i32, i32, i32
  }
  func.func @transform_1(%arg0: i32, %arg1: i32, %arg2: memref<12xf32, #tpu.memory_space<smem>>) -> (i32, i32, i32, i32) {
    %c0_i32 = arith.constant 0 : i32
    %c0_i32_0 = arith.constant 0 : i32
    %c0_i32_1 = arith.constant 0 : i32
    return %arg0, %c0_i32, %arg1, %c0_i32_0 : i32, i32, i32, i32
  }
}

</mosaic_0001>

<llo_original>
// kernel: spatial_transformer_forward.3
$region0: #{spatial_transformer_forward.3}
  #allocation0 [shape = 'u32[]', space=smem, size = 0x4, offset = 0x4, fixed_abs, tag = 'smem constant byte address 0x4 - core index']
  #allocation1 [shape = 'u32[144,128]{1,0:T(1,128)}', space=vmem, size = 0x12000, scoped, tag = 'internal scratch']
  #allocation2 [shape = 's32[1]{0}', space=sflag, size = 0x4, scoped, tag = 'scoped memory for spatial_transformer_forward.3']
  #allocation3 [shape = 'u8[512]{0}', space=smem, size = 0x200, scoped, tag = 'prefetched SMEM operand 0']
  %s0 = inlined_call_operand.vmem [shape: f32[12], index: 0, kind: input, shape index: {}]
  %s1 = inlined_call_operand.vmem [shape: bf16[2,672,224], index: 1, kind: input, shape index: {}]
  %s2 = inlined_call_operand.hbm [shape: f32[2,3,224,224], index: 2, kind: output, shape index: {}]
  %s3 = sld [smem:[#allocation0]]
  $region37: #{spatial_transformer_forward.3} parent=0
    _
  %s5 = ssub.s32 1, %s3
  %s6 = scalar_select 0, %s5, %s3
  %s7 = sshll.u32 %s0, 4
  %s8 = int_to_ptr.vmem [resolvable:$true] %s7
  %10 = dma.vmem_to_smem %s8, 16, [#allocation3], [#allocation2]
  %11 = dma.done [#allocation2], 16
  %12 = sfence
  $region1: #{spatial_transformer_forward.3} parent=0
    #allocation4 [shape = 'u8[1376256]{0}', space=vmem, size = 0x150000, scoped, tag = 'output window, operand 0']
    #allocation5 [shape = 's32[2]{0}', space=sflag, size = 0x8, scoped, tag = 'scoped memory for spatial_transformer_forward.3']
    %13 = vsyncpa [#allocation5], 0
    %s14 = scalar_lea.sflag [#allocation5], 1
    %15 = vsyncpa %s14, 0
    loop: start=0, step=1, limit=4
    $region2: #{spatial_transformer_forward.3} parent=1 // loop_pre_header
      _
    $region3: #{spatial_transformer_forward.3} parent=1 // loop_header
      %s17 = sphi 0, %s21
      %p18 = scmp.ge.s32.totalorder %s17, 4
      %s24 = sphi 0, %s36
      %s25 = sphi 0, %s32
      %s26 = sphi 0, %s24
      %s27 = sphi 0, %s25
      %s28 = sphi 0, %s26
      %s29 = sphi 0, %s27
      %s39 = sphi 0, %s41
      %s42 = sphi 0, %s39
      %s43 = sphi 0, %s42
      %s59 = sphi 0, %s43
      %s67 = sphi 0, %s69
      %s70 = sphi 0, %s67
      %s71 = sphi 0, %s70
      %s87 = sphi 0, %s71
    $region4: #{spatial_transformer_forward.3} parent=1 // loop_header_branch
      %20 = sbr.rel (%p18) target = $region8
    $region5: #{spatial_transformer_forward.3} parent=1 // loop_body
      %s22 = ssub.s32 %s17, 1
      %s23 = ssub.s32 %s17, 2
      %s30 = sadd.s32 1, %s25
      %p31 = scmp.ge.s32.totalorder %s30, 1
      %s32 = scalar_select %p31, 0, %s30
      %s33 = sadd.s32 1, %s24
      %s34 = scalar_select %p31, %s33, %s24
      %p35 = scmp.ge.s32.totalorder %s34, 2
      %s36 = scalar_select %p35, 0, %s34
      %s37 = ssub.s32 %s24, %s36
      %p38 = scmp.eq.s32.totalorder %s37, 0
      %s40 = sadd.s32 %s39, 1
      %s41 = scalar_select %p38, %s39, %s40
      %p44 = pneg %p38
      %p45 = scmp.eq.s32.totalorder %s17, 1
      %p46 = por %p44, %p45
      %p47 = scmp.ne.s32.totalorder %s39, %s42
      %p48 = scmp.eq.s32.totalorder %s17, 0
      %p49 = por %p47, %p48
      %p50 = scmp.ne.s32.totalorder %s39, %s42
      %p51 = scmp.eq.s32.totalorder %s22, 1
      %p52 = por %p50, %p51
      %p53 = scmp.ne.s32.totalorder %s42, %s43
      %p54 = scmp.eq.s32.totalorder %s22, 0
      %p55 = por %p53, %p54
      %p56 = scmp.ne.s32.totalorder %s42, %s43
      %p57 = scmp.eq.s32.totalorder %s23, 1
      %p58 = por %p56, %p57
      %p60 = scmp.ne.s32.totalorder %s43, %s59
      %p61 = scmp.eq.s32.totalorder %s23, 0
      %p62 = por %p60, %p61
      %s63 = ssub.s32 %s24, %s36
      %s64 = ssub.s32 %s25, %s32
      %s65 = sor.u32 %s63, %s64
      %p66 = scmp.eq.s32.totalorder %s65, 0
      %s68 = sadd.s32 %s67, 1
      %s69 = scalar_select %p66, %s67, %s68
      %p72 = pneg %p66
      %p73 = scmp.eq.s32.totalorder %s17, 1
      %p74 = por %p72, %p73
      %p75 = scmp.ne.s32.totalorder %s67, %s70
      %p76 = scmp.eq.s32.totalorder %s17, 0
      %p77 = por %p75, %p76
      %p78 = scmp.ne.s32.totalorder %s67, %s70
      %p79 = scmp.eq.s32.totalorder %s22, 1
      %p80 = por %p78, %p79
      %p81 = scmp.ne.s32.totalorder %s70, %s71
      %p82 = scmp.eq.s32.totalorder %s22, 0
      %p83 = por %p81, %p82
      %p84 = scmp.ne.s32.totalorder %s70, %s71
      %p85 = scmp.eq.s32.totalorder %s23, 1
      %p86 = por %p84, %p85
      %p88 = scmp.ne.s32.totalorder %s71, %s87
      %p89 = scmp.eq.s32.totalorder %s23, 0
      %p90 = por %p88, %p89
      %p91 = scmp.le.s32.totalorder 1, %s17
      %p92 = scmp.lt.s32.totalorder %s17, 3
      %p93 = pnand %p91, %p92
      %p94 = pneg %p93
      // Predicated region
      $region9: #{spatial_transformer_forward.3} parent=5 // pred_check
        _
      $region10: #{spatial_transformer_forward.3} parent=5 // pred_check_branch
        %96 = sbr.rel (%p93) target = $region12
      $region11: #{spatial_transformer_forward.3} parent=5 // pred_region
        %s97 = ssub.s32 %s17, 1
      $region12: #{spatial_transformer_forward.3} parent=5 // pred_fallthru
        _
      %p98 = scmp.lt.s32.totalorder %s17, 2
      // Predicated region
      $region13: #{spatial_transformer_forward.3} parent=5 // pred_check
        %p99 = pneg %p98
      $region14: #{spatial_transformer_forward.3} parent=5 // pred_check_branch
        %101 = sbr.rel (%p99) target = $region16
      $region15: #{spatial_transformer_forward.3} parent=5 // pred_region
        // Predicated region
        $region17: #{spatial_transformer_forward.3} parent=15 // pred_check
          %p102 = pneg %p49
        $region18: #{spatial_transformer_forward.3} parent=15 // pred_check_branch
          %104 = sbr.rel (%p102) target = $region20
        $region19: #{spatial_transformer_forward.3} parent=15 // pred_region
          %p105 = scmp.lt.s32.totalorder %s24, 1
          %s106 = scalar_select %p105, %s24, 1
          %s107 = smul.addr %s106, 168
          %s108 = smul.addr %s107, 4
          %s109 = scalar_lea.vmem %s1, %s108
        $region20: #{spatial_transformer_forward.3} parent=15 // pred_fallthru
          _
      $region16: #{spatial_transformer_forward.3} parent=5 // pred_fallthru
        _
      %p110 = scmp.le.s32.totalorder 1, %s17
      %p111 = scmp.lt.s32.totalorder %s17, 3
      %p112 = pnand %p110, %p111
      %p113 = pneg %p112
      // Predicated region
      $region21: #{spatial_transformer_forward.3} parent=5 // pred_check
        _
      $region22: #{spatial_transformer_forward.3} parent=5 // pred_check_branch
        %115 = sbr.rel (%p112) target = $region24
      $region23: #{spatial_transformer_forward.3} parent=5 // pred_region
        %s116 = ssub.s32 %s17, 1
        %p117 = scmp.lt.s32.totalorder %s26, 1
        %s118 = scalar_select %p117, %s26, 1
        %s119 = smul.addr %s118, 168
        %s120 = smul.addr %s119, 4
        %s121 = scalar_lea.vmem %s1, %s120
        %p122 = pneg %p55
        %p123 = pneg %p52
        %p124 = pneg %p83
        %p125 = pneg %p80
        %s126 = sand.u32 %s70, 1
        %s127 = scalar_lea.sflag [#allocation5], %s126
        %s128 = sand.u32 %s70, 1
        %s129 = smul.addr %s128, 1344
        %s130 = scalar_lea.vmem [#allocation4], %s129
        %p131 = scmp.lt.s32.totalorder %s26, 1
        %s132 = scalar_select %p131, %s26, 1
        %s133 = smul.addr %s132, 168
        %s134 = smul.addr %s133, 4
        %s135 = scalar_lea.vmem %s1, %s134
        %s136 = smul.u32 28, %s27
        %s138 = smul.u32 %s26, 6
        %s139 = sld [smem:[#allocation3 + %s138]]
        %s140 = sadd.s32 %s138, 2
        %s141 = sld [smem:[#allocation3 + %s140]]
        %s142 = sadd.s32 %s138, 4
        %s143 = sld [smem:[#allocation3 + %s142]]
        %s144 = sadd.s32 %s138, 5
        %s145 = sld [smem:[#allocation3 + %s144]]
        %v146 = vlaneseq
        %v147 = vshrl.u32 %v146, 7
        %v148 = vadd.s32 %v147, 8
        %v149 = vadd.s32 %v147, 16
        %v150 = vadd.s32 %v147, 24
        %v151 = vadd.s32 %v147, 32
        %v152 = vadd.s32 %v147, 40
        %v153 = vadd.s32 %v147, 48
        %v154 = vadd.s32 %v147, 56
        %v155 = vadd.s32 %v147, 64
        %v156 = vadd.s32 %v147, 72
        %v157 = vadd.s32 %v147, 80
        %v158 = vadd.s32 %v147, 88
        %v159 = vadd.s32 %v147, 96
        %v160 = vadd.s32 %v147, 104
        %v161 = vadd.s32 %v147, 112
        %v162 = vadd.s32 %v147, 120
        %v163 = vadd.s32 %v147, 128
        %v164 = vadd.s32 %v147, 136
        %v165 = vadd.s32 %v147, 144
        %v166 = vadd.s32 %v147, 152
        %v167 = vadd.s32 %v147, 160
        %v168 = vadd.s32 %v147, 168
        %v169 = vadd.s32 %v147, 176
        %v170 = vadd.s32 %v147, 184
        %v171 = vadd.s32 %v147, 192
        %v172 = vadd.s32 %v147, 200
        %v173 = vadd.s32 %v147, 208
        %v174 = vadd.s32 %v147, 216
        %s175 = smul.u32 %s27, 224
        %v176 = vstv %s175
        %v177 = vadd.s32 %v147, %v176
        %v178 = vadd.s32 %v148, %v176
        %v179 = vadd.s32 %v149, %v176
        %v180 = vadd.s32 %v150, %v176
        %v181 = vadd.s32 %v151, %v176
        %v182 = vadd.s32 %v152, %v176
        %v183 = vadd.s32 %v153, %v176
        %v184 = vadd.s32 %v154, %v176
        %v185 = vadd.s32 %v155, %v176
        %v186 = vadd.s32 %v156, %v176
        %v187 = vadd.s32 %v157, %v176
        %v188 = vadd.s32 %v158, %v176
        %v189 = vadd.s32 %v159, %v176
        %v190 = vadd.s32 %v160, %v176
        %v191 = vadd.s32 %v161, %v176
        %v192 = vadd.s32 %v162, %v176
        %v193 = vadd.s32 %v163, %v176
        %v194 = vadd.s32 %v164, %v176
        %v195 = vadd.s32 %v165, %v176
        %v196 = vadd.s32 %v166, %v176
        %v197 = vadd.s32 %v167, %v176
        %v198 = vadd.s32 %v168, %v176
        %v199 = vadd.s32 %v169, %v176
        %v200 = vadd.s32 %v170, %v176
        %v201 = vadd.s32 %v171, %v176
        %v202 = vadd.s32 %v172, %v176
        %v203 = vadd.s32 %v173, %v176
        %v204 = vadd.s32 %v174, %v176
        %v205 = vcvt.s32.f32 %v177
        %v206 = vcvt.s32.f32 %v178
        %v207 = vcvt.s32.f32 %v179
        %v208 = vcvt.s32.f32 %v180
        %v209 = vcvt.s32.f32 %v181
        %v210 = vcvt.s32.f32 %v182
        %v211 = vcvt.s32.f32 %v183
        %v212 = vcvt.s32.f32 %v184
        %v213 = vcvt.s32.f32 %v185
        %v214 = vcvt.s32.f32 %v186
        %v215 = vcvt.s32.f32 %v187
        %v216 = vcvt.s32.f32 %v188
        %v217 = vcvt.s32.f32 %v189
        %v218 = vcvt.s32.f32 %v190
        %v219 = vcvt.s32.f32 %v191
        %v220 = vcvt.s32.f32 %v192
        %v221 = vcvt.s32.f32 %v193
        %v222 = vcvt.s32.f32 %v194
        %v223 = vcvt.s32.f32 %v195
        %v224 = vcvt.s32.f32 %v196
        %v225 = vcvt.s32.f32 %v197
        %v226 = vcvt.s32.f32 %v198
        %v227 = vcvt.s32.f32 %v199
        %v228 = vcvt.s32.f32 %v200
        %v229 = vcvt.s32.f32 %v201
        %v230 = vcvt.s32.f32 %v202
        %v231 = vcvt.s32.f32 %v203
        %v232 = vcvt.s32.f32 %v204
        %v233 = vmul.f32 %v205, 2.0
        %v234 = vmul.f32 %v206, 2.0
        %v235 = vmul.f32 %v207, 2.0
        %v236 = vmul.f32 %v208, 2.0
        %v237 = vmul.f32 %v209, 2.0
        %v238 = vmul.f32 %v210, 2.0
        %v239 = vmul.f32 %v211, 2.0
        %v240 = vmul.f32 %v212, 2.0
        %v241 = vmul.f32 %v213, 2.0
        %v242 = vmul.f32 %v214, 2.0
        %v243 = vmul.f32 %v215, 2.0
        %v244 = vmul.f32 %v216, 2.0
        %v245 = vmul.f32 %v217, 2.0
        %v246 = vmul.f32 %v218, 2.0
        %v247 = vmul.f32 %v219, 2.0
        %v248 = vmul.f32 %v220, 2.0
        %v249 = vmul.f32 %v221, 2.0
        %v250 = vmul.f32 %v222, 2.0
        %v251 = vmul.f32 %v223, 2.0
        %v252 = vmul.f32 %v224, 2.0
        %v253 = vmul.f32 %v225, 2.0
        %v254 = vmul.f32 %v226, 2.0
        %v255 = vmul.f32 %v227, 2.0
        %v256 = vmul.f32 %v228, 2.0
        %v257 = vmul.f32 %v229, 2.0
        %v258 = vmul.f32 %v230, 2.0
        %v259 = vmul.f32 %v231, 2.0
        %v260 = vmul.f32 %v232, 2.0
        %v261 = vadd.f32 %v233, 1.0
        %v262 = vadd.f32 %v234, 1.0
        %v263 = vadd.f32 %v235, 1.0
        %v264 = vadd.f32 %v236, 1.0
        %v265 = vadd.f32 %v237, 1.0
        %v266 = vadd.f32 %v238, 1.0
        %v267 = vadd.f32 %v239, 1.0
        %v268 = vadd.f32 %v240, 1.0
        %v269 = vadd.f32 %v241, 1.0
        %v270 = vadd.f32 %v242, 1.0
        %v271 = vadd.f32 %v243, 1.0
        %v272 = vadd.f32 %v244, 1.0
        %v273 = vadd.f32 %v245, 1.0
        %v274 = vadd.f32 %v246, 1.0
        %v275 = vadd.f32 %v247, 1.0
        %v276 = vadd.f32 %v248, 1.0
        %v277 = vadd.f32 %v249, 1.0
        %v278 = vadd.f32 %v250, 1.0
        %v279 = vadd.f32 %v251, 1.0
        %v280 = vadd.f32 %v252, 1.0
        %v281 = vadd.f32 %v253, 1.0
        %v282 = vadd.f32 %v254, 1.0
        %v283 = vadd.f32 %v255, 1.0
        %v284 = vadd.f32 %v256, 1.0
        %v285 = vadd.f32 %v257, 1.0
        %v286 = vadd.f32 %v258, 1.0
        %v287 = vadd.f32 %v259, 1.0
        %v288 = vadd.f32 %v260, 1.0
        %v289 = vrcp.pop 224.0
        %v290 = vmul.f32 %v261, %v289
        %v291 = vmul.f32 %v262, %v289
        %v292 = vmul.f32 %v263, %v289
        %v293 = vmul.f32 %v264, %v289
        %v294 = vmul.f32 %v265, %v289
        %v295 = vmul.f32 %v266, %v289
        %v296 = vmul.f32 %v267, %v289
        %v297 = vmul.f32 %v268, %v289
        %v298 = vmul.f32 %v269, %v289
        %v299 = vmul.f32 %v270, %v289
        %v300 = vmul.f32 %v271, %v289
        %v301 = vmul.f32 %v272, %v289
        %v302 = vmul.f32 %v273, %v289
        %v303 = vmul.f32 %v274, %v289
        %v304 = vmul.f32 %v275, %v289
        %v305 = vmul.f32 %v276, %v289
        %v306 = vmul.f32 %v277, %v289
        %v307 = vmul.f32 %v278, %v289
        %v308 = vmul.f32 %v279, %v289
        %v309 = vmul.f32 %v280, %v289
        %v310 = vmul.f32 %v281, %v289
        %v311 = vmul.f32 %v282, %v289
        %v312 = vmul.f32 %v283, %v289
        %v313 = vmul.f32 %v284, %v289
        %v314 = vmul.f32 %v285, %v289
        %v315 = vmul.f32 %v286, %v289
        %v316 = vmul.f32 %v287, %v289
        %v317 = vmul.f32 %v288, %v289
        %v318 = vsub.f32 %v290, 1.0
        %v319 = vsub.f32 %v291, 1.0
        %v320 = vsub.f32 %v292, 1.0
        %v321 = vsub.f32 %v293, 1.0
        %v322 = vsub.f32 %v294, 1.0
        %v323 = vsub.f32 %v295, 1.0
        %v324 = vsub.f32 %v296, 1.0
        %v325 = vsub.f32 %v297, 1.0
        %v326 = vsub.f32 %v298, 1.0
        %v327 = vsub.f32 %v299, 1.0
        %v328 = vsub.f32 %v300, 1.0
        %v329 = vsub.f32 %v301, 1.0
        %v330 = vsub.f32 %v302, 1.0
        %v331 = vsub.f32 %v303, 1.0
        %v332 = vsub.f32 %v304, 1.0
        %v333 = vsub.f32 %v305, 1.0
        %v334 = vsub.f32 %v306, 1.0
        %v335 = vsub.f32 %v307, 1.0
        %v336 = vsub.f32 %v308, 1.0
        %v337 = vsub.f32 %v309, 1.0
        %v338 = vsub.f32 %v310, 1.0
        %v339 = vsub.f32 %v311, 1.0
        %v340 = vsub.f32 %v312, 1.0
        %v341 = vsub.f32 %v313, 1.0
        %v342 = vsub.f32 %v314, 1.0
        %v343 = vsub.f32 %v315, 1.0
        %v344 = vsub.f32 %v316, 1.0
        %v345 = vsub.f32 %v317, 1.0
        %v346 = vstv %s143
        %v347 = vmul.f32 %v346, %v318
        %v348 = vmul.f32 %v346, %v319
        %v349 = vmul.f32 %v346, %v320
        %v350 = vmul.f32 %v346, %v321
        %v351 = vmul.f32 %v346, %v322
        %v352 = vmul.f32 %v346, %v323
        %v353 = vmul.f32 %v346, %v324
        %v354 = vmul.f32 %v346, %v325
        %v355 = vmul.f32 %v346, %v326
        %v356 = vmul.f32 %v346, %v327
        %v357 = vmul.f32 %v346, %v328
        %v358 = vmul.f32 %v346, %v329
        %v359 = vmul.f32 %v346, %v330
        %v360 = vmul.f32 %v346, %v331
        %v361 = vmul.f32 %v346, %v332
        %v362 = vmul.f32 %v346, %v333
        %v363 = vmul.f32 %v346, %v334
        %v364 = vmul.f32 %v346, %v335
        %v365 = vmul.f32 %v346, %v336
        %v366 = vmul.f32 %v346, %v337
        %v367 = vmul.f32 %v346, %v338
        %v368 = vmul.f32 %v346, %v339
        %v369 = vmul.f32 %v346, %v340
        %v370 = vmul.f32 %v346, %v341
        %v371 = vmul.f32 %v346, %v342
        %v372 = vmul.f32 %v346, %v343
        %v373 = vmul.f32 %v346, %v344
        %v374 = vmul.f32 %v346, %v345
        %v375 = vstv %s145
        %v376 = vadd.f32 %v347, %v375
        %v377 = vadd.f32 %v348, %v375
        %v378 = vadd.f32 %v349, %v375
        %v379 = vadd.f32 %v350, %v375
        %v380 = vadd.f32 %v351, %v375
        %v381 = vadd.f32 %v352, %v375
        %v382 = vadd.f32 %v353, %v375
        %v383 = vadd.f32 %v354, %v375
        %v384 = vadd.f32 %v355, %v375
        %v385 = vadd.f32 %v356, %v375
        %v386 = vadd.f32 %v357, %v375
        %v387 = vadd.f32 %v358, %v375
        %v388 = vadd.f32 %v359, %v375
        %v389 = vadd.f32 %v360, %v375
        %v390 = vadd.f32 %v361, %v375
        %v391 = vadd.f32 %v362, %v375
        %v392 = vadd.f32 %v363, %v375
        %v393 = vadd.f32 %v364, %v375
        %v394 = vadd.f32 %v365, %v375
        %v395 = vadd.f32 %v366, %v375
        %v396 = vadd.f32 %v367, %v375
        %v397 = vadd.f32 %v368, %v375
        %v398 = vadd.f32 %v369, %v375
        %v399 = vadd.f32 %v370, %v375
        %v400 = vadd.f32 %v371, %v375
        %v401 = vadd.f32 %v372, %v375
        %v402 = vadd.f32 %v373, %v375
        %v403 = vadd.f32 %v374, %v375
        %v404 = vadd.f32 %v376, 1.0
        %v405 = vadd.f32 %v377, 1.0
        %v406 = vadd.f32 %v378, 1.0
        %v407 = vadd.f32 %v379, 1.0
        %v408 = vadd.f32 %v380, 1.0
        %v409 = vadd.f32 %v381, 1.0
        %v410 = vadd.f32 %v382, 1.0
        %v411 = vadd.f32 %v383, 1.0
        %v412 = vadd.f32 %v384, 1.0
        %v413 = vadd.f32 %v385, 1.0
        %v414 = vadd.f32 %v386, 1.0
        %v415 = vadd.f32 %v387, 1.0
        %v416 = vadd.f32 %v388, 1.0
        %v417 = vadd.f32 %v389, 1.0
        %v418 = vadd.f32 %v390, 1.0
        %v419 = vadd.f32 %v391, 1.0
        %v420 = vadd.f32 %v392, 1.0
        %v421 = vadd.f32 %v393, 1.0
        %v422 = vadd.f32 %v394, 1.0
        %v423 = vadd.f32 %v395, 1.0
        %v424 = vadd.f32 %v396, 1.0
        %v425 = vadd.f32 %v397, 1.0
        %v426 = vadd.f32 %v398, 1.0
        %v427 = vadd.f32 %v399, 1.0
        %v428 = vadd.f32 %v400, 1.0
        %v429 = vadd.f32 %v401, 1.0
        %v430 = vadd.f32 %v402, 1.0
        %v431 = vadd.f32 %v403, 1.0
        %v432 = vmul.f32 %v404, 224.0
        %v433 = vmul.f32 %v405, 224.0
        %v434 = vmul.f32 %v406, 224.0
        %v435 = vmul.f32 %v407, 224.0
        %v436 = vmul.f32 %v408, 224.0
        %v437 = vmul.f32 %v409, 224.0
        %v438 = vmul.f32 %v410, 224.0
        %v439 = vmul.f32 %v411, 224.0
        %v440 = vmul.f32 %v412, 224.0
        %v441 = vmul.f32 %v413, 224.0
        %v442 = vmul.f32 %v414, 224.0
        %v443 = vmul.f32 %v415, 224.0
        %v444 = vmul.f32 %v416, 224.0
        %v445 = vmul.f32 %v417, 224.0
        %v446 = vmul.f32 %v418, 224.0
        %v447 = vmul.f32 %v419, 224.0
        %v448 = vmul.f32 %v420, 224.0
        %v449 = vmul.f32 %v421, 224.0
        %v450 = vmul.f32 %v422, 224.0
        %v451 = vmul.f32 %v423, 224.0
        %v452 = vmul.f32 %v424, 224.0
        %v453 = vmul.f32 %v425, 224.0
        %v454 = vmul.f32 %v426, 224.0
        %v455 = vmul.f32 %v427, 224.0
        %v456 = vmul.f32 %v428, 224.0
        %v457 = vmul.f32 %v429, 224.0
        %v458 = vmul.f32 %v430, 224.0
        %v459 = vmul.f32 %v431, 224.0
        %v460 = vsub.f32 %v432, 1.0
        %v461 = vsub.f32 %v433, 1.0
        %v462 = vsub.f32 %v434, 1.0
        %v463 = vsub.f32 %v435, 1.0
        %v464 = vsub.f32 %v436, 1.0
        %v465 = vsub.f32 %v437, 1.0
        %v466 = vsub.f32 %v438, 1.0
        %v467 = vsub.f32 %v439, 1.0
        %v468 = vsub.f32 %v440, 1.0
        %v469 = vsub.f32 %v441, 1.0
        %v470 = vsub.f32 %v442, 1.0
        %v471 = vsub.f32 %v443, 1.0
        %v472 = vsub.f32 %v444, 1.0
        %v473 = vsub.f32 %v445, 1.0
        %v474 = vsub.f32 %v446, 1.0
        %v475 = vsub.f32 %v447, 1.0
        %v476 = vsub.f32 %v448, 1.0
        %v477 = vsub.f32 %v449, 1.0
        %v478 = vsub.f32 %v450, 1.0
        %v479 = vsub.f32 %v451, 1.0
        %v480 = vsub.f32 %v452, 1.0
        %v481 = vsub.f32 %v453, 1.0
        %v482 = vsub.f32 %v454, 1.0
        %v483 = vsub.f32 %v455, 1.0
        %v484 = vsub.f32 %v456, 1.0
        %v485 = vsub.f32 %v457, 1.0
        %v486 = vsub.f32 %v458, 1.0
        %v487 = vsub.f32 %v459, 1.0
        %v488 = vmul.f32 %v460, 0.5
        %v489 = vmul.f32 %v461, 0.5
        %v490 = vmul.f32 %v462, 0.5
        %v491 = vmul.f32 %v463, 0.5
        %v492 = vmul.f32 %v464, 0.5
        %v493 = vmul.f32 %v465, 0.5
        %v494 = vmul.f32 %v466, 0.5
        %v495 = vmul.f32 %v467, 0.5
        %v496 = vmul.f32 %v468, 0.5
        %v497 = vmul.f32 %v469, 0.5
        %v498 = vmul.f32 %v470, 0.5
        %v499 = vmul.f32 %v471, 0.5
        %v500 = vmul.f32 %v472, 0.5
        %v501 = vmul.f32 %v473, 0.5
        %v502 = vmul.f32 %v474, 0.5
        %v503 = vmul.f32 %v475, 0.5
        %v504 = vmul.f32 %v476, 0.5
        %v505 = vmul.f32 %v477, 0.5
        %v506 = vmul.f32 %v478, 0.5
        %v507 = vmul.f32 %v479, 0.5
        %v508 = vmul.f32 %v480, 0.5
        %v509 = vmul.f32 %v481, 0.5
        %v510 = vmul.f32 %v482, 0.5
        %v511 = vmul.f32 %v483, 0.5
        %v512 = vmul.f32 %v484, 0.5
        %v513 = vmul.f32 %v485, 0.5
        %v514 = vmul.f32 %v486, 0.5
        %v515 = vmul.f32 %v487, 0.5
        %v516 = vfloor.f32 %v488
        %v517 = vfloor.f32 %v489
        %v518 = vfloor.f32 %v490
        %v519 = vfloor.f32 %v491
        %v520 = vfloor.f32 %v492
        %v521 = vfloor.f32 %v493
        %v522 = vfloor.f32 %v494
        %v523 = vfloor.f32 %v495
        %v524 = vfloor.f32 %v496
        %v525 = vfloor.f32 %v497
        %v526 = vfloor.f32 %v498
        %v527 = vfloor.f32 %v499
        %v528 = vfloor.f32 %v500
        %v529 = vfloor.f32 %v501
        %v530 = vfloor.f32 %v502
        %v531 = vfloor.f32 %v503
        %v532 = vfloor.f32 %v504
        %v533 = vfloor.f32 %v505
        %v534 = vfloor.f32 %v506
        %v535 = vfloor.f32 %v507
        %v536 = vfloor.f32 %v508
        %v537 = vfloor.f32 %v509
        %v538 = vfloor.f32 %v510
        %v539 = vfloor.f32 %v511
        %v540 = vfloor.f32 %v512
        %v541 = vfloor.f32 %v513
        %v542 = vfloor.f32 %v514
        %v543 = vfloor.f32 %v515
        %v544 = vsub.f32 %v488, %v516
        %v545 = vsub.f32 %v489, %v517
        %v546 = vsub.f32 %v490, %v518
        %v547 = vsub.f32 %v491, %v519
        %v548 = vsub.f32 %v492, %v520
        %v549 = vsub.f32 %v493, %v521
        %v550 = vsub.f32 %v494, %v522
        %v551 = vsub.f32 %v495, %v523
        %v552 = vsub.f32 %v496, %v524
        %v553 = vsub.f32 %v497, %v525
        %v554 = vsub.f32 %v498, %v526
        %v555 = vsub.f32 %v499, %v527
        %v556 = vsub.f32 %v500, %v528
        %v557 = vsub.f32 %v501, %v529
        %v558 = vsub.f32 %v502, %v530
        %v559 = vsub.f32 %v503, %v531
        %v560 = vsub.f32 %v504, %v532
        %v561 = vsub.f32 %v505, %v533
        %v562 = vsub.f32 %v506, %v534
        %v563 = vsub.f32 %v507, %v535
        %v564 = vsub.f32 %v508, %v536
        %v565 = vsub.f32 %v509, %v537
        %v566 = vsub.f32 %v510, %v538
        %v567 = vsub.f32 %v511, %v539
        %v568 = vsub.f32 %v512, %v540
        %v569 = vsub.f32 %v513, %v541
        %v570 = vsub.f32 %v514, %v542
        %v571 = vsub.f32 %v515, %v543
        %v572 = vsub.f32 1.0, %v544
        %v573 = vsub.f32 1.0, %v545
        %v574 = vsub.f32 1.0, %v546
        %v575 = vsub.f32 1.0, %v547
        %v576 = vsub.f32 1.0, %v548
        %v577 = vsub.f32 1.0, %v549
        %v578 = vsub.f32 1.0, %v550
        %v579 = vsub.f32 1.0, %v551
        %v580 = vsub.f32 1.0, %v552
        %v581 = vsub.f32 1.0, %v553
        %v582 = vsub.f32 1.0, %v554
        %v583 = vsub.f32 1.0, %v555
        %v584 = vsub.f32 1.0, %v556
        %v585 = vsub.f32 1.0, %v557
        %v586 = vsub.f32 1.0, %v558
        %v587 = vsub.f32 1.0, %v559
        %v588 = vsub.f32 1.0, %v560
        %v589 = vsub.f32 1.0, %v561
        %v590 = vsub.f32 1.0, %v562
        %v591 = vsub.f32 1.0, %v563
        %v592 = vsub.f32 1.0, %v564
        %v593 = vsub.f32 1.0, %v565
        %v594 = vsub.f32 1.0, %v566
        %v595 = vsub.f32 1.0, %v567
        %v596 = vsub.f32 1.0, %v568
        %v597 = vsub.f32 1.0, %v569
        %v598 = vsub.f32 1.0, %v570
        %v599 = vsub.f32 1.0, %v571
        %v600 = vcvt.f32.s32.to.zero.pseudo %v516
        %v601 = vcvt.f32.s32.to.zero.pseudo %v517
        %v602 = vcvt.f32.s32.to.zero.pseudo %v518
        %v603 = vcvt.f32.s32.to.zero.pseudo %v519
        %v604 = vcvt.f32.s32.to.zero.pseudo %v520
        %v605 = vcvt.f32.s32.to.zero.pseudo %v521
        %v606 = vcvt.f32.s32.to.zero.pseudo %v522
        %v607 = vcvt.f32.s32.to.zero.pseudo %v523
        %v608 = vcvt.f32.s32.to.zero.pseudo %v524
        %v609 = vcvt.f32.s32.to.zero.pseudo %v525
        %v610 = vcvt.f32.s32.to.zero.pseudo %v526
        %v611 = vcvt.f32.s32.to.zero.pseudo %v527
        %v612 = vcvt.f32.s32.to.zero.pseudo %v528
        %v613 = vcvt.f32.s32.to.zero.pseudo %v529
        %v614 = vcvt.f32.s32.to.zero.pseudo %v530
        %v615 = vcvt.f32.s32.to.zero.pseudo %v531
        %v616 = vcvt.f32.s32.to.zero.pseudo %v532
        %v617 = vcvt.f32.s32.to.zero.pseudo %v533
        %v618 = vcvt.f32.s32.to.zero.pseudo %v534
        %v619 = vcvt.f32.s32.to.zero.pseudo %v535
        %v620 = vcvt.f32.s32.to.zero.pseudo %v536
        %v621 = vcvt.f32.s32.to.zero.pseudo %v537
        %v622 = vcvt.f32.s32.to.zero.pseudo %v538
        %v623 = vcvt.f32.s32.to.zero.pseudo %v539
        %v624 = vcvt.f32.s32.to.zero.pseudo %v540
        %v625 = vcvt.f32.s32.to.zero.pseudo %v541
        %v626 = vcvt.f32.s32.to.zero.pseudo %v542
        %v627 = vcvt.f32.s32.to.zero.pseudo %v543
        %v628 = vlaneseq
        %v629 = vand.u32 %v628, 127
        %v630 = vadd.s32 %v629, 128
        %vm631 = vcmp.eq.s32.totalorder %v629, %v600
        %vm632 = vcmp.eq.s32.totalorder %v630, %v600
        %vm633 = vcmp.eq.s32.totalorder %v629, %v601
        %vm634 = vcmp.eq.s32.totalorder %v630, %v601
        %vm635 = vcmp.eq.s32.totalorder %v629, %v602
        %vm636 = vcmp.eq.s32.totalorder %v630, %v602
        %vm637 = vcmp.eq.s32.totalorder %v629, %v603
        %vm638 = vcmp.eq.s32.totalorder %v630, %v603
        %vm639 = vcmp.eq.s32.totalorder %v629, %v604
        %vm640 = vcmp.eq.s32.totalorder %v630, %v604
        %vm641 = vcmp.eq.s32.totalorder %v629, %v605
        %vm642 = vcmp.eq.s32.totalorder %v630, %v605
        %vm643 = vcmp.eq.s32.totalorder %v629, %v606
        %vm644 = vcmp.eq.s32.totalorder %v630, %v606
        %vm645 = vcmp.eq.s32.totalorder %v629, %v607
        %vm646 = vcmp.eq.s32.totalorder %v630, %v607
        %vm647 = vcmp.eq.s32.totalorder %v629, %v608
        %vm648 = vcmp.eq.s32.totalorder %v630, %v608
        %vm649 = vcmp.eq.s32.totalorder %v629, %v609
        %vm650 = vcmp.eq.s32.totalorder %v630, %v609
        %vm651 = vcmp.eq.s32.totalorder %v629, %v610
        %vm652 = vcmp.eq.s32.totalorder %v630, %v610
        %vm653 = vcmp.eq.s32.totalorder %v629, %v611
        %vm654 = vcmp.eq.s32.totalorder %v630, %v611
        %vm655 = vcmp.eq.s32.totalorder %v629, %v612
        %vm656 = vcmp.eq.s32.totalorder %v630, %v612
        %vm657 = vcmp.eq.s32.totalorder %v629, %v613
        %vm658 = vcmp.eq.s32.totalorder %v630, %v613
        %vm659 = vcmp.eq.s32.totalorder %v629, %v614
        %vm660 = vcmp.eq.s32.totalorder %v630, %v614
        %vm661 = vcmp.eq.s32.totalorder %v629, %v615
        %vm662 = vcmp.eq.s32.totalorder %v630, %v615
        %vm663 = vcmp.eq.s32.totalorder %v629, %v616
        %vm664 = vcmp.eq.s32.totalorder %v630, %v616
        %vm665 = vcmp.eq.s32.totalorder %v629, %v617
        %vm666 = vcmp.eq.s32.totalorder %v630, %v617
        %vm667 = vcmp.eq.s32.totalorder %v629, %v618
        %vm668 = vcmp.eq.s32.totalorder %v630, %v618
        %vm669 = vcmp.eq.s32.totalorder %v629, %v619
        %vm670 = vcmp.eq.s32.totalorder %v630, %v619
        %vm671 = vcmp.eq.s32.totalorder %v629, %v620
        %vm672 = vcmp.eq.s32.totalorder %v630, %v620
        %vm673 = vcmp.eq.s32.totalorder %v629, %v621
        %vm674 = vcmp.eq.s32.totalorder %v630, %v621
        %vm675 = vcmp.eq.s32.totalorder %v629, %v622
        %vm676 = vcmp.eq.s32.totalorder %v630, %v622
        %vm677 = vcmp.eq.s32.totalorder %v629, %v623
        %vm678 = vcmp.eq.s32.totalorder %v630, %v623
        %vm679 = vcmp.eq.s32.totalorder %v629, %v624
        %vm680 = vcmp.eq.s32.totalorder %v630, %v624
        %vm681 = vcmp.eq.s32.totalorder %v629, %v625
        %vm682 = vcmp.eq.s32.totalorder %v630, %v625
        %vm683 = vcmp.eq.s32.totalorder %v629, %v626
        %vm684 = vcmp.eq.s32.totalorder %v630, %v626
        %vm685 = vcmp.eq.s32.totalorder %v629, %v627
        %vm686 = vcmp.eq.s32.totalorder %v630, %v627
        %v687 = vsel %vm631, 1, 0
        %v688 = vsel %vm632, 1, 0
        %v689 = vsel %vm633, 1, 0
        %v690 = vsel %vm634, 1, 0
        %v691 = vsel %vm635, 1, 0
        %v692 = vsel %vm636, 1, 0
        %v693 = vsel %vm637, 1, 0
        %v694 = vsel %vm638, 1, 0
        %v695 = vsel %vm639, 1, 0
        %v696 = vsel %vm640, 1, 0
        %v697 = vsel %vm641, 1, 0
        %v698 = vsel %vm642, 1, 0
        %v699 = vsel %vm643, 1, 0
        %v700 = vsel %vm644, 1, 0
        %v701 = vsel %vm645, 1, 0
        %v702 = vsel %vm646, 1, 0
        %v703 = vsel %vm647, 1, 0
        %v704 = vsel %vm648, 1, 0
        %v705 = vsel %vm649, 1, 0
        %v706 = vsel %vm650, 1, 0
        %v707 = vsel %vm651, 1, 0
        %v708 = vsel %vm652, 1, 0
        %v709 = vsel %vm653, 1, 0
        %v710 = vsel %vm654, 1, 0
        %v711 = vsel %vm655, 1, 0
        %v712 = vsel %vm656, 1, 0
        %v713 = vsel %vm657, 1, 0
        %v714 = vsel %vm658, 1, 0
        %v715 = vsel %vm659, 1, 0
        %v716 = vsel %vm660, 1, 0
        %v717 = vsel %vm661, 1, 0
        %v718 = vsel %vm662, 1, 0
        %v719 = vsel %vm663, 1, 0
        %v720 = vsel %vm664, 1, 0
        %v721 = vsel %vm665, 1, 0
        %v722 = vsel %vm666, 1, 0
        %v723 = vsel %vm667, 1, 0
        %v724 = vsel %vm668, 1, 0
        %v725 = vsel %vm669, 1, 0
        %v726 = vsel %vm670, 1, 0
        %v727 = vsel %vm671, 1, 0
        %v728 = vsel %vm672, 1, 0
        %v729 = vsel %vm673, 1, 0
        %v730 = vsel %vm674, 1, 0
        %v731 = vsel %vm675, 1, 0
        %v732 = vsel %vm676, 1, 0
        %v733 = vsel %vm677, 1, 0
        %v734 = vsel %vm678, 1, 0
        %v735 = vsel %vm679, 1, 0
        %v736 = vsel %vm680, 1, 0
        %v737 = vsel %vm681, 1, 0
        %v738 = vsel %vm682, 1, 0
        %v739 = vsel %vm683, 1, 0
        %v740 = vsel %vm684, 1, 0
        %v741 = vsel %vm685, 1, 0
        %v742 = vsel %vm686, 1, 0
        %v743 = vcvt.s32.f32 %v687
        %v744 = vcvt.s32.f32 %v688
        %v745 = vcvt.s32.f32 %v689
        %v746 = vcvt.s32.f32 %v690
        %v747 = vcvt.s32.f32 %v691
        %v748 = vcvt.s32.f32 %v692
        %v749 = vcvt.s32.f32 %v693
        %v750 = vcvt.s32.f32 %v694
        %v751 = vcvt.s32.f32 %v695
        %v752 = vcvt.s32.f32 %v696
        %v753 = vcvt.s32.f32 %v697
        %v754 = vcvt.s32.f32 %v698
        %v755 = vcvt.s32.f32 %v699
        %v756 = vcvt.s32.f32 %v700
        %v757 = vcvt.s32.f32 %v701
        %v758 = vcvt.s32.f32 %v702
        %v759 = vcvt.s32.f32 %v703
        %v760 = vcvt.s32.f32 %v704
        %v761 = vcvt.s32.f32 %v705
        %v762 = vcvt.s32.f32 %v706
        %v763 = vcvt.s32.f32 %v707
        %v764 = vcvt.s32.f32 %v708
        %v765 = vcvt.s32.f32 %v709
        %v766 = vcvt.s32.f32 %v710
        %v767 = vcvt.s32.f32 %v711
        %v768 = vcvt.s32.f32 %v712
        %v769 = vcvt.s32.f32 %v713
        %v770 = vcvt.s32.f32 %v714
        %v771 = vcvt.s32.f32 %v715
        %v772 = vcvt.s32.f32 %v716
        %v773 = vcvt.s32.f32 %v717
        %v774 = vcvt.s32.f32 %v718
        %v775 = vcvt.s32.f32 %v719
        %v776 = vcvt.s32.f32 %v720
        %v777 = vcvt.s32.f32 %v721
        %v778 = vcvt.s32.f32 %v722
        %v779 = vcvt.s32.f32 %v723
        %v780 = vcvt.s32.f32 %v724
        %v781 = vcvt.s32.f32 %v725
        %v782 = vcvt.s32.f32 %v726
        %v783 = vcvt.s32.f32 %v727
        %v784 = vcvt.s32.f32 %v728
        %v785 = vcvt.s32.f32 %v729
        %v786 = vcvt.s32.f32 %v730
        %v787 = vcvt.s32.f32 %v731
        %v788 = vcvt.s32.f32 %v732
        %v789 = vcvt.s32.f32 %v733
        %v790 = vcvt.s32.f32 %v734
        %v791 = vcvt.s32.f32 %v735
        %v792 = vcvt.s32.f32 %v736
        %v793 = vcvt.s32.f32 %v737
        %v794 = vcvt.s32.f32 %v738
        %v795 = vcvt.s32.f32 %v739
        %v796 = vcvt.s32.f32 %v740
        %v797 = vcvt.s32.f32 %v741
        %v798 = vcvt.s32.f32 %v742
        %v799 = vmul.f32 %v572, %v743
        %v800 = vmul.f32 %v572, %v744
        %v801 = vmul.f32 %v573, %v745
        %v802 = vmul.f32 %v573, %v746
        %v803 = vmul.f32 %v574, %v747
        %v804 = vmul.f32 %v574, %v748
        %v805 = vmul.f32 %v575, %v749
        %v806 = vmul.f32 %v575, %v750
        %v807 = vmul.f32 %v576, %v751
        %v808 = vmul.f32 %v576, %v752
        %v809 = vmul.f32 %v577, %v753
        %v810 = vmul.f32 %v577, %v754
        %v811 = vmul.f32 %v578, %v755
        %v812 = vmul.f32 %v578, %v756
        %v813 = vmul.f32 %v579, %v757
        %v814 = vmul.f32 %v579, %v758
        %v815 = vmul.f32 %v580, %v759
        %v816 = vmul.f32 %v580, %v760
        %v817 = vmul.f32 %v581, %v761
        %v818 = vmul.f32 %v581, %v762
        %v819 = vmul.f32 %v582, %v763
        %v820 = vmul.f32 %v582, %v764
        %v821 = vmul.f32 %v583, %v765
        %v822 = vmul.f32 %v583, %v766
        %v823 = vmul.f32 %v584, %v767
        %v824 = vmul.f32 %v584, %v768
        %v825 = vmul.f32 %v585, %v769
        %v826 = vmul.f32 %v585, %v770
        %v827 = vmul.f32 %v586, %v771
        %v828 = vmul.f32 %v586, %v772
        %v829 = vmul.f32 %v587, %v773
        %v830 = vmul.f32 %v587, %v774
        %v831 = vmul.f32 %v588, %v775
        %v832 = vmul.f32 %v588, %v776
        %v833 = vmul.f32 %v589, %v777
        %v834 = vmul.f32 %v589, %v778
        %v835 = vmul.f32 %v590, %v779
        %v836 = vmul.f32 %v590, %v780
        %v837 = vmul.f32 %v591, %v781
        %v838 = vmul.f32 %v591, %v782
        %v839 = vmul.f32 %v592, %v783
        %v840 = vmul.f32 %v592, %v784
        %v841 = vmul.f32 %v593, %v785
        %v842 = vmul.f32 %v593, %v786
        %v843 = vmul.f32 %v594, %v787
        %v844 = vmul.f32 %v594, %v788
        %v845 = vmul.f32 %v595, %v789
        %v846 = vmul.f32 %v595, %v790
        %v847 = vmul.f32 %v596, %v791
        %v848 = vmul.f32 %v596, %v792
        %v849 = vmul.f32 %v597, %v793
        %v850 = vmul.f32 %v597, %v794
        %v851 = vmul.f32 %v598, %v795
        %v852 = vmul.f32 %v598, %v796
        %v853 = vmul.f32 %v599, %v797
        %v854 = vmul.f32 %v599, %v798
        %v855 = vadd.s32 %v600, 1
        %v856 = vadd.s32 %v601, 1
        %v857 = vadd.s32 %v602, 1
        %v858 = vadd.s32 %v603, 1
        %v859 = vadd.s32 %v604, 1
        %v860 = vadd.s32 %v605, 1
        %v861 = vadd.s32 %v606, 1
        %v862 = vadd.s32 %v607, 1
        %v863 = vadd.s32 %v608, 1
        %v864 = vadd.s32 %v609, 1
        %v865 = vadd.s32 %v610, 1
        %v866 = vadd.s32 %v611, 1
        %v867 = vadd.s32 %v612, 1
        %v868 = vadd.s32 %v613, 1
        %v869 = vadd.s32 %v614, 1
        %v870 = vadd.s32 %v615, 1
        %v871 = vadd.s32 %v616, 1
        %v872 = vadd.s32 %v617, 1
        %v873 = vadd.s32 %v618, 1
        %v874 = vadd.s32 %v619, 1
        %v875 = vadd.s32 %v620, 1
        %v876 = vadd.s32 %v621, 1
        %v877 = vadd.s32 %v622, 1
        %v878 = vadd.s32 %v623, 1
        %v879 = vadd.s32 %v624, 1
        %v880 = vadd.s32 %v625, 1
        %v881 = vadd.s32 %v626, 1
        %v882 = vadd.s32 %v627, 1
        %vm883 = vcmp.eq.s32.totalorder %v629, %v855
        %vm884 = vcmp.eq.s32.totalorder %v630, %v855
        %vm885 = vcmp.eq.s32.totalorder %v629, %v856
        %vm886 = vcmp.eq.s32.totalorder %v630, %v856
        %vm887 = vcmp.eq.s32.totalorder %v629, %v857
        %vm888 = vcmp.eq.s32.totalorder %v630, %v857
        %vm889 = vcmp.eq.s32.totalorder %v629, %v858
        %vm890 = vcmp.eq.s32.totalorder %v630, %v858
        %vm891 = vcmp.eq.s32.totalorder %v629, %v859
        %vm892 = vcmp.eq.s32.totalorder %v630, %v859
        %vm893 = vcmp.eq.s32.totalorder %v629, %v860
        %vm894 = vcmp.eq.s32.totalorder %v630, %v860
        %vm895 = vcmp.eq.s32.totalorder %v629, %v861
        %vm896 = vcmp.eq.s32.totalorder %v630, %v861
        %vm897 = vcmp.eq.s32.totalorder %v629, %v862
        %vm898 = vcmp.eq.s32.totalorder %v630, %v862
        %vm899 = vcmp.eq.s32.totalorder %v629, %v863
        %vm900 = vcmp.eq.s32.totalorder %v630, %v863
        %vm901 = vcmp.eq.s32.totalorder %v629, %v864
        %vm902 = vcmp.eq.s32.totalorder %v630, %v864
        %vm903 = vcmp.eq.s32.totalorder %v629, %v865
        %vm904 = vcmp.eq.s32.totalorder %v630, %v865
        %vm905 = vcmp.eq.s32.totalorder %v629, %v866
        %vm906 = vcmp.eq.s32.totalorder %v630, %v866
        %vm907 = vcmp.eq.s32.totalorder %v629, %v867
        %vm908 = vcmp.eq.s32.totalorder %v630, %v867
        %vm909 = vcmp.eq.s32.totalorder %v629, %v868
        %vm910 = vcmp.eq.s32.totalorder %v630, %v868
        %vm911 = vcmp.eq.s32.totalorder %v629, %v869
        %vm912 = vcmp.eq.s32.totalorder %v630, %v869
        %vm913 = vcmp.eq.s32.totalorder %v629, %v870
        %vm914 = vcmp.eq.s32.totalorder %v630, %v870
        %vm915 = vcmp.eq.s32.totalorder %v629, %v871
        %vm916 = vcmp.eq.s32.totalorder %v630, %v871
        %vm917 = vcmp.eq.s32.totalorder %v629, %v872
        %vm918 = vcmp.eq.s32.totalorder %v630, %v872
        %vm919 = vcmp.eq.s32.totalorder %v629, %v873
        %vm920 = vcmp.eq.s32.totalorder %v630, %v873
        %vm921 = vcmp.eq.s32.totalorder %v629, %v874
        %vm922 = vcmp.eq.s32.totalorder %v630, %v874
        %vm923 = vcmp.eq.s32.totalorder %v629, %v875
        %vm924 = vcmp.eq.s32.totalorder %v630, %v875
        %vm925 = vcmp.eq.s32.totalorder %v629, %v876
        %vm926 = vcmp.eq.s32.totalorder %v630, %v876
        %vm927 = vcmp.eq.s32.totalorder %v629, %v877
        %vm928 = vcmp.eq.s32.totalorder %v630, %v877
        %vm929 = vcmp.eq.s32.totalorder %v629, %v878
        %vm930 = vcmp.eq.s32.totalorder %v630, %v878
        %vm931 = vcmp.eq.s32.totalorder %v629, %v879
        %vm932 = vcmp.eq.s32.totalorder %v630, %v879
        %vm933 = vcmp.eq.s32.totalorder %v629, %v880
        %vm934 = vcmp.eq.s32.totalorder %v630, %v880
        %vm935 = vcmp.eq.s32.totalorder %v629, %v881
        %vm936 = vcmp.eq.s32.totalorder %v630, %v881
        %vm937 = vcmp.eq.s32.totalorder %v629, %v882
        %vm938 = vcmp.eq.s32.totalorder %v630, %v882
        %v939 = vsel %vm883, 1, 0
        %v940 = vsel %vm884, 1, 0
        %v941 = vsel %vm885, 1, 0
        %v942 = vsel %vm886, 1, 0
        %v943 = vsel %vm887, 1, 0
        %v944 = vsel %vm888, 1, 0
        %v945 = vsel %vm889, 1, 0
        %v946 = vsel %vm890, 1, 0
        %v947 = vsel %vm891, 1, 0
        %v948 = vsel %vm892, 1, 0
        %v949 = vsel %vm893, 1, 0
        %v950 = vsel %vm894, 1, 0
        %v951 = vsel %vm895, 1, 0
        %v952 = vsel %vm896, 1, 0
        %v953 = vsel %vm897, 1, 0
        %v954 = vsel %vm898, 1, 0
        %v955 = vsel %vm899, 1, 0
        %v956 = vsel %vm900, 1, 0
        %v957 = vsel %vm901, 1, 0
        %v958 = vsel %vm902, 1, 0
        %v959 = vsel %vm903, 1, 0
        %v960 = vsel %vm904, 1, 0
        %v961 = vsel %vm905, 1, 0
        %v962 = vsel %vm906, 1, 0
        %v963 = vsel %vm907, 1, 0
        %v964 = vsel %vm908, 1, 0
        %v965 = vsel %vm909, 1, 0
        %v966 = vsel %vm910, 1, 0
        %v967 = vsel %vm911, 1, 0
        %v968 = vsel %vm912, 1, 0
        %v969 = vsel %vm913, 1, 0
        %v970 = vsel %vm914, 1, 0
        %v971 = vsel %vm915, 1, 0
        %v972 = vsel %vm916, 1, 0
        %v973 = vsel %vm917, 1, 0
        %v974 = vsel %vm918, 1, 0
        %v975 = vsel %vm919, 1, 0
        %v976 = vsel %vm920, 1, 0
        %v977 = vsel %vm921, 1, 0
        %v978 = vsel %vm922, 1, 0
        %v979 = vsel %vm923, 1, 0
        %v980 = vsel %vm924, 1, 0
        %v981 = vsel %vm925, 1, 0
        %v982 = vsel %vm926, 1, 0
        %v983 = vsel %vm927, 1, 0
        %v984 = vsel %vm928, 1, 0
        %v985 = vsel %vm929, 1, 0
        %v986 = vsel %vm930, 1, 0
        %v987 = vsel %vm931, 1, 0
        %v988 = vsel %vm932, 1, 0
        %v989 = vsel %vm933, 1, 0
        %v990 = vsel %vm934, 1, 0
        %v991 = vsel %vm935, 1, 0
        %v992 = vsel %vm936, 1, 0
        %v993 = vsel %vm937, 1, 0
        %v994 = vsel %vm938, 1, 0
        %v995 = vcvt.s32.f32 %v939
        %v996 = vcvt.s32.f32 %v940
        %v997 = vcvt.s32.f32 %v941
        %v998 = vcvt.s32.f32 %v942
        %v999 = vcvt.s32.f32 %v943
        %v1000 = vcvt.s32.f32 %v944
        %v1001 = vcvt.s32.f32 %v945
        %v1002 = vcvt.s32.f32 %v946
        %v1003 = vcvt.s32.f32 %v947
        %v1004 = vcvt.s32.f32 %v948
        %v1005 = vcvt.s32.f32 %v949
        %v1006 = vcvt.s32.f32 %v950
        %v1007 = vcvt.s32.f32 %v951
        %v1008 = vcvt.s32.f32 %v952
        %v1009 = vcvt.s32.f32 %v953
        %v1010 = vcvt.s32.f32 %v954
        %v1011 = vcvt.s32.f32 %v955
        %v1012 = vcvt.s32.f32 %v956
        %v1013 = vcvt.s32.f32 %v957
        %v1014 = vcvt.s32.f32 %v958
        %v1015 = vcvt.s32.f32 %v959
        %v1016 = vcvt.s32.f32 %v960
        %v1017 = vcvt.s32.f32 %v961
        %v1018 = vcvt.s32.f32 %v962
        %v1019 = vcvt.s32.f32 %v963
        %v1020 = vcvt.s32.f32 %v964
        %v1021 = vcvt.s32.f32 %v965
        %v1022 = vcvt.s32.f32 %v966
        %v1023 = vcvt.s32.f32 %v967
        %v1024 = vcvt.s32.f32 %v968
        %v1025 = vcvt.s32.f32 %v969
        %v1026 = vcvt.s32.f32 %v970
        %v1027 = vcvt.s32.f32 %v971
        %v1028 = vcvt.s32.f32 %v972
        %v1029 = vcvt.s32.f32 %v973
        %v1030 = vcvt.s32.f32 %v974
        %v1031 = vcvt.s32.f32 %v975
        %v1032 = vcvt.s32.f32 %v976
        %v1033 = vcvt.s32.f32 %v977
        %v1034 = vcvt.s32.f32 %v978
        %v1035 = vcvt.s32.f32 %v979
        %v1036 = vcvt.s32.f32 %v980
        %v1037 = vcvt.s32.f32 %v981
        %v1038 = vcvt.s32.f32 %v982
        %v1039 = vcvt.s32.f32 %v983
        %v1040 = vcvt.s32.f32 %v984
        %v1041 = vcvt.s32.f32 %v985
        %v1042 = vcvt.s32.f32 %v986
        %v1043 = vcvt.s32.f32 %v987
        %v1044 = vcvt.s32.f32 %v988
        %v1045 = vcvt.s32.f32 %v989
        %v1046 = vcvt.s32.f32 %v990
        %v1047 = vcvt.s32.f32 %v991
        %v1048 = vcvt.s32.f32 %v992
        %v1049 = vcvt.s32.f32 %v993
        %v1050 = vcvt.s32.f32 %v994
        %v1051 = vmul.f32 %v544, %v995
        %v1052 = vmul.f32 %v544, %v996
        %v1053 = vmul.f32 %v545, %v997
        %v1054 = vmul.f32 %v545, %v998
        %v1055 = vmul.f32 %v546, %v999
        %v1056 = vmul.f32 %v546, %v1000
        %v1057 = vmul.f32 %v547, %v1001
        %v1058 = vmul.f32 %v547, %v1002
        %v1059 = vmul.f32 %v548, %v1003
        %v1060 = vmul.f32 %v548, %v1004
        %v1061 = vmul.f32 %v549, %v1005
        %v1062 = vmul.f32 %v549, %v1006
        %v1063 = vmul.f32 %v550, %v1007
        %v1064 = vmul.f32 %v550, %v1008
        %v1065 = vmul.f32 %v551, %v1009
        %v1066 = vmul.f32 %v551, %v1010
        %v1067 = vmul.f32 %v552, %v1011
        %v1068 = vmul.f32 %v552, %v1012
        %v1069 = vmul.f32 %v553, %v1013
        %v1070 = vmul.f32 %v553, %v1014
        %v1071 = vmul.f32 %v554, %v1015
        %v1072 = vmul.f32 %v554, %v1016
        %v1073 = vmul.f32 %v555, %v1017
        %v1074 = vmul.f32 %v555, %v1018
        %v1075 = vmul.f32 %v556, %v1019
        %v1076 = vmul.f32 %v556, %v1020
        %v1077 = vmul.f32 %v557, %v1021
        %v1078 = vmul.f32 %v557, %v1022
        %v1079 = vmul.f32 %v558, %v1023
        %v1080 = vmul.f32 %v558, %v1024
        %v1081 = vmul.f32 %v559, %v1025
        %v1082 = vmul.f32 %v559, %v1026
        %v1083 = vmul.f32 %v560, %v1027
        %v1084 = vmul.f32 %v560, %v1028
        %v1085 = vmul.f32 %v561, %v1029
        %v1086 = vmul.f32 %v561, %v1030
        %v1087 = vmul.f32 %v562, %v1031
        %v1088 = vmul.f32 %v562, %v1032
        %v1089 = vmul.f32 %v563, %v1033
        %v1090 = vmul.f32 %v563, %v1034
        %v1091 = vmul.f32 %v564, %v1035
        %v1092 = vmul.f32 %v564, %v1036
        %v1093 = vmul.f32 %v565, %v1037
        %v1094 = vmul.f32 %v565, %v1038
        %v1095 = vmul.f32 %v566, %v1039
        %v1096 = vmul.f32 %v566, %v1040
        %v1097 = vmul.f32 %v567, %v1041
        %v1098 = vmul.f32 %v567, %v1042
        %v1099 = vmul.f32 %v568, %v1043
        %v1100 = vmul.f32 %v568, %v1044
        %v1101 = vmul.f32 %v569, %v1045
        %v1102 = vmul.f32 %v569, %v1046
        %v1103 = vmul.f32 %v570, %v1047
        %v1104 = vmul.f32 %v570, %v1048
        %v1105 = vmul.f32 %v571, %v1049
        %v1106 = vmul.f32 %v571, %v1050
        %v1107 = vadd.f32 %v799, %v1051
        %v1108 = vadd.f32 %v800, %v1052
        %v1109 = vadd.f32 %v801, %v1053
        %v1110 = vadd.f32 %v802, %v1054
        %v1111 = vadd.f32 %v803, %v1055
        %v1112 = vadd.f32 %v804, %v1056
        %v1113 = vadd.f32 %v805, %v1057
        %v1114 = vadd.f32 %v806, %v1058
        %v1115 = vadd.f32 %v807, %v1059
        %v1116 = vadd.f32 %v808, %v1060
        %v1117 = vadd.f32 %v809, %v1061
        %v1118 = vadd.f32 %v810, %v1062
        %v1119 = vadd.f32 %v811, %v1063
        %v1120 = vadd.f32 %v812, %v1064
        %v1121 = vadd.f32 %v813, %v1065
        %v1122 = vadd.f32 %v814, %v1066
        %v1123 = vadd.f32 %v815, %v1067
        %v1124 = vadd.f32 %v816, %v1068
        %v1125 = vadd.f32 %v817, %v1069
        %v1126 = vadd.f32 %v818, %v1070
        %v1127 = vadd.f32 %v819, %v1071
        %v1128 = vadd.f32 %v820, %v1072
        %v1129 = vadd.f32 %v821, %v1073
        %v1130 = vadd.f32 %v822, %v1074
        %v1131 = vadd.f32 %v823, %v1075
        %v1132 = vadd.f32 %v824, %v1076
        %v1133 = vadd.f32 %v825, %v1077
        %v1134 = vadd.f32 %v826, %v1078
        %v1135 = vadd.f32 %v827, %v1079
        %v1136 = vadd.f32 %v828, %v1080
        %v1137 = vadd.f32 %v829, %v1081
        %v1138 = vadd.f32 %v830, %v1082
        %v1139 = vadd.f32 %v831, %v1083
        %v1140 = vadd.f32 %v832, %v1084
        %v1141 = vadd.f32 %v833, %v1085
        %v1142 = vadd.f32 %v834, %v1086
        %v1143 = vadd.f32 %v835, %v1087
        %v1144 = vadd.f32 %v836, %v1088
        %v1145 = vadd.f32 %v837, %v1089
        %v1146 = vadd.f32 %v838, %v1090
        %v1147 = vadd.f32 %v839, %v1091
        %v1148 = vadd.f32 %v840, %v1092
        %v1149 = vadd.f32 %v841, %v1093
        %v1150 = vadd.f32 %v842, %v1094
        %v1151 = vadd.f32 %v843, %v1095
        %v1152 = vadd.f32 %v844, %v1096
        %v1153 = vadd.f32 %v845, %v1097
        %v1154 = vadd.f32 %v846, %v1098
        %v1155 = vadd.f32 %v847, %v1099
        %v1156 = vadd.f32 %v848, %v1100
        %v1157 = vadd.f32 %v849, %v1101
        %v1158 = vadd.f32 %v850, %v1102
        %v1159 = vadd.f32 %v851, %v1103
        %v1160 = vadd.f32 %v852, %v1104
        %v1161 = vadd.f32 %v853, %v1105
        %v1162 = vadd.f32 %v854, %v1106
        %v1163 = vpack.c.bf16 %v1109, %v1107
        %v1164 = vpack.c.bf16 %v1110, %v1108
        %v1165 = vpack.c.bf16 %v1113, %v1111
        %v1166 = vpack.c.bf16 %v1114, %v1112
        %v1167 = vpack.c.bf16 %v1117, %v1115
        %v1168 = vpack.c.bf16 %v1118, %v1116
        %v1169 = vpack.c.bf16 %v1121, %v1119
        %v1170 = vpack.c.bf16 %v1122, %v1120
        %v1171 = vpack.c.bf16 %v1125, %v1123
        %v1172 = vpack.c.bf16 %v1126, %v1124
        %v1173 = vpack.c.bf16 %v1129, %v1127
        %v1174 = vpack.c.bf16 %v1130, %v1128
        %v1175 = vpack.c.bf16 %v1133, %v1131
        %v1176 = vpack.c.bf16 %v1134, %v1132
        %v1177 = vpack.c.bf16 %v1137, %v1135
        %v1178 = vpack.c.bf16 %v1138, %v1136
        %v1179 = vpack.c.bf16 %v1141, %v1139
        %v1180 = vpack.c.bf16 %v1142, %v1140
        %v1181 = vpack.c.bf16 %v1145, %v1143
        %v1182 = vpack.c.bf16 %v1146, %v1144
        %v1183 = vpack.c.bf16 %v1149, %v1147
        %v1184 = vpack.c.bf16 %v1150, %v1148
        %v1185 = vpack.c.bf16 %v1153, %v1151
        %v1186 = vpack.c.bf16 %v1154, %v1152
        %v1187 = vpack.c.bf16 %v1157, %v1155
        %v1188 = vpack.c.bf16 %v1158, %v1156
        %v1189 = vpack.c.bf16 %v1161, %v1159
        %v1190 = vpack.c.bf16 %v1162, %v1160
        %v1191 = vcvt.s32.f32 %v629
        %v1192 = vcvt.s32.f32 %v630
        %v1193 = vmul.f32 %v1191, 2.0
        %v1194 = vmul.f32 %v1192, 2.0
        %v1195 = vadd.f32 %v1193, 1.0
        %v1196 = vadd.f32 %v1194, 1.0
        %v1197 = vmul.f32 %v1195, %v289
        %v1198 = vmul.f32 %v1196, %v289
        %v1199 = vsub.f32 %v1197, 1.0
        %v1200 = vsub.f32 %v1198, 1.0
        %v1201 = vstv %s139
        %v1202 = vmul.f32 %v1201, %v1199
        %v1203 = vmul.f32 %v1201, %v1200
        %v1204 = vstv %s141
        %v1205 = vadd.f32 %v1202, %v1204
        %v1206 = vadd.f32 %v1203, %v1204
        %v1207 = vadd.f32 %v1205, 1.0
        %v1208 = vadd.f32 %v1206, 1.0
        %v1209 = vmul.f32 %v1207, 224.0
        %v1210 = vmul.f32 %v1208, 224.0
        %v1211 = vsub.f32 %v1209, 1.0
        %v1212 = vsub.f32 %v1210, 1.0
        %v1213 = vmul.f32 %v1211, 0.5
        %v1214 = vmul.f32 %v1212, 0.5
        %v1215 = vfloor.f32 %v1213
        %v1216 = vfloor.f32 %v1214
        %v1217 = vsub.f32 %v1213, %v1215
        %v1218 = vsub.f32 %v1214, %v1216
        %v1219 = vsub.f32 1.0, %v1217
        %v1220 = vsub.f32 1.0, %v1218
        %v1221 = vcvt.f32.s32.to.zero.pseudo %v1215
        %v1222 = vcvt.f32.s32.to.zero.pseudo %v1216
        %vm1223 = vcmp.eq.s32.totalorder %v147, %v1221
        %vm1224 = vcmp.eq.s32.totalorder %v147, %v1222
        %vm1225 = vcmp.eq.s32.totalorder %v148, %v1221
        %vm1226 = vcmp.eq.s32.totalorder %v148, %v1222
        %vm1227 = vcmp.eq.s32.totalorder %v149, %v1221
        %vm1228 = vcmp.eq.s32.totalorder %v149, %v1222
        %vm1229 = vcmp.eq.s32.totalorder %v150, %v1221
        %vm1230 = vcmp.eq.s32.totalorder %v150, %v1222
        %vm1231 = vcmp.eq.s32.totalorder %v151, %v1221
        %vm1232 = vcmp.eq.s32.totalorder %v151, %v1222
        %vm1233 = vcmp.eq.s32.totalorder %v152, %v1221
        %vm1234 = vcmp.eq.s32.totalorder %v152, %v1222
        %vm1235 = vcmp.eq.s32.totalorder %v153, %v1221
        %vm1236 = vcmp.eq.s32.totalorder %v153, %v1222
        %vm1237 = vcmp.eq.s32.totalorder %v154, %v1221
        %vm1238 = vcmp.eq.s32.totalorder %v154, %v1222
        %vm1239 = vcmp.eq.s32.totalorder %v155, %v1221
        %vm1240 = vcmp.eq.s32.totalorder %v155, %v1222
        %vm1241 = vcmp.eq.s32.totalorder %v156, %v1221
        %vm1242 = vcmp.eq.s32.totalorder %v156, %v1222
        %vm1243 = vcmp.eq.s32.totalorder %v157, %v1221
        %vm1244 = vcmp.eq.s32.totalorder %v157, %v1222
        %vm1245 = vcmp.eq.s32.totalorder %v158, %v1221
        %vm1246 = vcmp.eq.s32.totalorder %v158, %v1222
        %vm1247 = vcmp.eq.s32.totalorder %v159, %v1221
        %vm1248 = vcmp.eq.s32.totalorder %v159, %v1222
        %vm1249 = vcmp.eq.s32.totalorder %v160, %v1221
        %vm1250 = vcmp.eq.s32.totalorder %v160, %v1222
        %vm1251 = vcmp.eq.s32.totalorder %v161, %v1221
        %vm1252 = vcmp.eq.s32.totalorder %v161, %v1222
        %vm1253 = vcmp.eq.s32.totalorder %v162, %v1221
        %vm1254 = vcmp.eq.s32.totalorder %v162, %v1222
        %vm1255 = vcmp.eq.s32.totalorder %v163, %v1221
        %vm1256 = vcmp.eq.s32.totalorder %v163, %v1222
        %vm1257 = vcmp.eq.s32.totalorder %v164, %v1221
        %vm1258 = vcmp.eq.s32.totalorder %v164, %v1222
        %vm1259 = vcmp.eq.s32.totalorder %v165, %v1221
        %vm1260 = vcmp.eq.s32.totalorder %v165, %v1222
        %vm1261 = vcmp.eq.s32.totalorder %v166, %v1221
        %vm1262 = vcmp.eq.s32.totalorder %v166, %v1222
        %vm1263 = vcmp.eq.s32.totalorder %v167, %v1221
        %vm1264 = vcmp.eq.s32.totalorder %v167, %v1222
        %vm1265 = vcmp.eq.s32.totalorder %v168, %v1221
        %vm1266 = vcmp.eq.s32.totalorder %v168, %v1222
        %vm1267 = vcmp.eq.s32.totalorder %v169, %v1221
        %vm1268 = vcmp.eq.s32.totalorder %v169, %v1222
        %vm1269 = vcmp.eq.s32.totalorder %v170, %v1221
        %vm1270 = vcmp.eq.s32.totalorder %v170, %v1222
        %vm1271 = vcmp.eq.s32.totalorder %v171, %v1221
        %vm1272 = vcmp.eq.s32.totalorder %v171, %v1222
        %vm1273 = vcmp.eq.s32.totalorder %v172, %v1221
        %vm1274 = vcmp.eq.s32.totalorder %v172, %v1222
        %vm1275 = vcmp.eq.s32.totalorder %v173, %v1221
        %vm1276 = vcmp.eq.s32.totalorder %v173, %v1222
        %vm1277 = vcmp.eq.s32.totalorder %v174, %v1221
        %vm1278 = vcmp.eq.s32.totalorder %v174, %v1222
        %v1279 = vsel %vm1223, 1, 0
        %v1280 = vsel %vm1224, 1, 0
        %v1281 = vsel %vm1225, 1, 0
        %v1282 = vsel %vm1226, 1, 0
        %v1283 = vsel %vm1227, 1, 0
        %v1284 = vsel %vm1228, 1, 0
        %v1285 = vsel %vm1229, 1, 0
        %v1286 = vsel %vm1230, 1, 0
        %v1287 = vsel %vm1231, 1, 0
        %v1288 = vsel %vm1232, 1, 0
        %v1289 = vsel %vm1233, 1, 0
        %v1290 = vsel %vm1234, 1, 0
        %v1291 = vsel %vm1235, 1, 0
        %v1292 = vsel %vm1236, 1, 0
        %v1293 = vsel %vm1237, 1, 0
        %v1294 = vsel %vm1238, 1, 0
        %v1295 = vsel %vm1239, 1, 0
        %v1296 = vsel %vm1240, 1, 0
        %v1297 = vsel %vm1241, 1, 0
        %v1298 = vsel %vm1242, 1, 0
        %v1299 = vsel %vm1243, 1, 0
        %v1300 = vsel %vm1244, 1, 0
        %v1301 = vsel %vm1245, 1, 0
        %v1302 = vsel %vm1246, 1, 0
        %v1303 = vsel %vm1247, 1, 0
        %v1304 = vsel %vm1248, 1, 0
        %v1305 = vsel %vm1249, 1, 0
        %v1306 = vsel %vm1250, 1, 0
        %v1307 = vsel %vm1251, 1, 0
        %v1308 = vsel %vm1252, 1, 0
        %v1309 = vsel %vm1253, 1, 0
        %v1310 = vsel %vm1254, 1, 0
        %v1311 = vsel %vm1255, 1, 0
        %v1312 = vsel %vm1256, 1, 0
        %v1313 = vsel %vm1257, 1, 0
        %v1314 = vsel %vm1258, 1, 0
        %v1315 = vsel %vm1259, 1, 0
        %v1316 = vsel %vm1260, 1, 0
        %v1317 = vsel %vm1261, 1, 0
        %v1318 = vsel %vm1262, 1, 0
        %v1319 = vsel %vm1263, 1, 0
        %v1320 = vsel %vm1264, 1, 0
        %v1321 = vsel %vm1265, 1, 0
        %v1322 = vsel %vm1266, 1, 0
        %v1323 = vsel %vm1267, 1, 0
        %v1324 = vsel %vm1268, 1, 0
        %v1325 = vsel %vm1269, 1, 0
        %v1326 = vsel %vm1270, 1, 0
        %v1327 = vsel %vm1271, 1, 0
        %v1328 = vsel %vm1272, 1, 0
        %v1329 = vsel %vm1273, 1, 0
        %v1330 = vsel %vm1274, 1, 0
        %v1331 = vsel %vm1275, 1, 0
        %v1332 = vsel %vm1276, 1, 0
        %v1333 = vsel %vm1277, 1, 0
        %v1334 = vsel %vm1278, 1, 0
        %v1335 = vcvt.s32.f32 %v1279
        %v1336 = vcvt.s32.f32 %v1280
        %v1337 = vcvt.s32.f32 %v1281
        %v1338 = vcvt.s32.f32 %v1282
        %v1339 = vcvt.s32.f32 %v1283
        %v1340 = vcvt.s32.f32 %v1284
        %v1341 = vcvt.s32.f32 %v1285
        %v1342 = vcvt.s32.f32 %v1286
        %v1343 = vcvt.s32.f32 %v1287
        %v1344 = vcvt.s32.f32 %v1288
        %v1345 = vcvt.s32.f32 %v1289
        %v1346 = vcvt.s32.f32 %v1290
        %v1347 = vcvt.s32.f32 %v1291
        %v1348 = vcvt.s32.f32 %v1292
        %v1349 = vcvt.s32.f32 %v1293
        %v1350 = vcvt.s32.f32 %v1294
        %v1351 = vcvt.s32.f32 %v1295
        %v1352 = vcvt.s32.f32 %v1296
        %v1353 = vcvt.s32.f32 %v1297
        %v1354 = vcvt.s32.f32 %v1298
        %v1355 = vcvt.s32.f32 %v1299
        %v1356 = vcvt.s32.f32 %v1300
        %v1357 = vcvt.s32.f32 %v1301
        %v1358 = vcvt.s32.f32 %v1302
        %v1359 = vcvt.s32.f32 %v1303
        %v1360 = vcvt.s32.f32 %v1304
        %v1361 = vcvt.s32.f32 %v1305
        %v1362 = vcvt.s32.f32 %v1306
        %v1363 = vcvt.s32.f32 %v1307
        %v1364 = vcvt.s32.f32 %v1308
        %v1365 = vcvt.s32.f32 %v1309
        %v1366 = vcvt.s32.f32 %v1310
        %v1367 = vcvt.s32.f32 %v1311
        %v1368 = vcvt.s32.f32 %v1312
        %v1369 = vcvt.s32.f32 %v1313
        %v1370 = vcvt.s32.f32 %v1314
        %v1371 = vcvt.s32.f32 %v1315
        %v1372 = vcvt.s32.f32 %v1316
        %v1373 = vcvt.s32.f32 %v1317
        %v1374 = vcvt.s32.f32 %v1318
        %v1375 = vcvt.s32.f32 %v1319
        %v1376 = vcvt.s32.f32 %v1320
        %v1377 = vcvt.s32.f32 %v1321
        %v1378 = vcvt.s32.f32 %v1322
        %v1379 = vcvt.s32.f32 %v1323
        %v1380 = vcvt.s32.f32 %v1324
        %v1381 = vcvt.s32.f32 %v1325
        %v1382 = vcvt.s32.f32 %v1326
        %v1383 = vcvt.s32.f32 %v1327
        %v1384 = vcvt.s32.f32 %v1328
        %v1385 = vcvt.s32.f32 %v1329
        %v1386 = vcvt.s32.f32 %v1330
        %v1387 = vcvt.s32.f32 %v1331
        %v1388 = vcvt.s32.f32 %v1332
        %v1389 = vcvt.s32.f32 %v1333
        %v1390 = vcvt.s32.f32 %v1334
        %v1391 = vmul.f32 %v1219, %v1335
        %v1392 = vmul.f32 %v1220, %v1336
        %v1393 = vmul.f32 %v1219, %v1337
        %v1394 = vmul.f32 %v1220, %v1338
        %v1395 = vmul.f32 %v1219, %v1339
        %v1396 = vmul.f32 %v1220, %v1340
        %v1397 = vmul.f32 %v1219, %v1341
        %v1398 = vmul.f32 %v1220, %v1342
        %v1399 = vmul.f32 %v1219, %v1343
        %v1400 = vmul.f32 %v1220, %v1344
        %v1401 = vmul.f32 %v1219, %v1345
        %v1402 = vmul.f32 %v1220, %v1346
        %v1403 = vmul.f32 %v1219, %v1347
        %v1404 = vmul.f32 %v1220, %v1348
        %v1405 = vmul.f32 %v1219, %v1349
        %v1406 = vmul.f32 %v1220, %v1350
        %v1407 = vmul.f32 %v1219, %v1351
        %v1408 = vmul.f32 %v1220, %v1352
        %v1409 = vmul.f32 %v1219, %v1353
        %v1410 = vmul.f32 %v1220, %v1354
        %v1411 = vmul.f32 %v1219, %v1355
        %v1412 = vmul.f32 %v1220, %v1356
        %v1413 = vmul.f32 %v1219, %v1357
        %v1414 = vmul.f32 %v1220, %v1358
        %v1415 = vmul.f32 %v1219, %v1359
        %v1416 = vmul.f32 %v1220, %v1360
        %v1417 = vmul.f32 %v1219, %v1361
        %v1418 = vmul.f32 %v1220, %v1362
        %v1419 = vmul.f32 %v1219, %v1363
        %v1420 = vmul.f32 %v1220, %v1364
        %v1421 = vmul.f32 %v1219, %v1365
        %v1422 = vmul.f32 %v1220, %v1366
        %v1423 = vmul.f32 %v1219, %v1367
        %v1424 = vmul.f32 %v1220, %v1368
        %v1425 = vmul.f32 %v1219, %v1369
        %v1426 = vmul.f32 %v1220, %v1370
        %v1427 = vmul.f32 %v1219, %v1371
        %v1428 = vmul.f32 %v1220, %v1372
        %v1429 = vmul.f32 %v1219, %v1373
        %v1430 = vmul.f32 %v1220, %v1374
        %v1431 = vmul.f32 %v1219, %v1375
        %v1432 = vmul.f32 %v1220, %v1376
        %v1433 = vmul.f32 %v1219, %v1377
        %v1434 = vmul.f32 %v1220, %v1378
        %v1435 = vmul.f32 %v1219, %v1379
        %v1436 = vmul.f32 %v1220, %v1380
        %v1437 = vmul.f32 %v1219, %v1381
        %v1438 = vmul.f32 %v1220, %v1382
        %v1439 = vmul.f32 %v1219, %v1383
        %v1440 = vmul.f32 %v1220, %v1384
        %v1441 = vmul.f32 %v1219, %v1385
        %v1442 = vmul.f32 %v1220, %v1386
        %v1443 = vmul.f32 %v1219, %v1387
        %v1444 = vmul.f32 %v1220, %v1388
        %v1445 = vmul.f32 %v1219, %v1389
        %v1446 = vmul.f32 %v1220, %v1390
        %v1447 = vadd.s32 %v1221, 1
        %v1448 = vadd.s32 %v1222, 1
        %vm1449 = vcmp.eq.s32.totalorder %v147, %v1447
        %vm1450 = vcmp.eq.s32.totalorder %v147, %v1448
        %vm1451 = vcmp.eq.s32.totalorder %v148, %v1447
        %vm1452 = vcmp.eq.s32.totalorder %v148, %v1448
        %vm1453 = vcmp.eq.s32.totalorder %v149, %v1447
        %vm1454 = vcmp.eq.s32.totalorder %v149, %v1448
        %vm1455 = vcmp.eq.s32.totalorder %v150, %v1447
        %vm1456 = vcmp.eq.s32.totalorder %v150, %v1448
        %vm1457 = vcmp.eq.s32.totalorder %v151, %v1447
        %vm1458 = vcmp.eq.s32.totalorder %v151, %v1448
        %vm1459 = vcmp.eq.s32.totalorder %v152, %v1447
        %vm1460 = vcmp.eq.s32.totalorder %v152, %v1448
        %vm1461 = vcmp.eq.s32.totalorder %v153, %v1447
        %vm1462 = vcmp.eq.s32.totalorder %v153, %v1448
        %vm1463 = vcmp.eq.s32.totalorder %v154, %v1447
        %vm1464 = vcmp.eq.s32.totalorder %v154, %v1448
        %vm1465 = vcmp.eq.s32.totalorder %v155, %v1447
        %vm1466 = vcmp.eq.s32.totalorder %v155, %v1448
        %vm1467 = vcmp.eq.s32.totalorder %v156, %v1447
        %vm1468 = vcmp.eq.s32.totalorder %v156, %v1448
        %vm1469 = vcmp.eq.s32.totalorder %v157, %v1447
        %vm1470 = vcmp.eq.s32.totalorder %v157, %v1448
        %vm1471 = vcmp.eq.s32.totalorder %v158, %v1447
        %vm1472 = vcmp.eq.s32.totalorder %v158, %v1448
        %vm1473 = vcmp.eq.s32.totalorder %v159, %v1447
        %vm1474 = vcmp.eq.s32.totalorder %v159, %v1448
        %vm1475 = vcmp.eq.s32.totalorder %v160, %v1447
        %vm1476 = vcmp.eq.s32.totalorder %v160, %v1448
        %vm1477 = vcmp.eq.s32.totalorder %v161, %v1447
        %vm1478 = vcmp.eq.s32.totalorder %v161, %v1448
        %vm1479 = vcmp.eq.s32.totalorder %v162, %v1447
        %vm1480 = vcmp.eq.s32.totalorder %v162, %v1448
        %vm1481 = vcmp.eq.s32.totalorder %v163, %v1447
        %vm1482 = vcmp.eq.s32.totalorder %v163, %v1448
        %vm1483 = vcmp.eq.s32.totalorder %v164, %v1447
        %vm1484 = vcmp.eq.s32.totalorder %v164, %v1448
        %vm1485 = vcmp.eq.s32.totalorder %v165, %v1447
        %vm1486 = vcmp.eq.s32.totalorder %v165, %v1448
        %vm1487 = vcmp.eq.s32.totalorder %v166, %v1447
        %vm1488 = vcmp.eq.s32.totalorder %v166, %v1448
        %vm1489 = vcmp.eq.s32.totalorder %v167, %v1447
        %vm1490 = vcmp.eq.s32.totalorder %v167, %v1448
        %vm1491 = vcmp.eq.s32.totalorder %v168, %v1447
        %vm1492 = vcmp.eq.s32.totalorder %v168, %v1448
        %vm1493 = vcmp.eq.s32.totalorder %v169, %v1447
        %vm1494 = vcmp.eq.s32.totalorder %v169, %v1448
        %vm1495 = vcmp.eq.s32.totalorder %v170, %v1447
        %vm1496 = vcmp.eq.s32.totalorder %v170, %v1448
        %vm1497 = vcmp.eq.s32.totalorder %v171, %v1447
        %vm1498 = vcmp.eq.s32.totalorder %v171, %v1448
        %vm1499 = vcmp.eq.s32.totalorder %v172, %v1447
        %vm1500 = vcmp.eq.s32.totalorder %v172, %v1448
        %vm1501 = vcmp.eq.s32.totalorder %v173, %v1447
        %vm1502 = vcmp.eq.s32.totalorder %v173, %v1448
        %vm1503 = vcmp.eq.s32.totalorder %v174, %v1447
        %vm1504 = vcmp.eq.s32.totalorder %v174, %v1448
        %v1505 = vsel %vm1449, 1, 0
        %v1506 = vsel %vm1450, 1, 0
        %v1507 = vsel %vm1451, 1, 0
        %v1508 = vsel %vm1452, 1, 0
        %v1509 = vsel %vm1453, 1, 0
        %v1510 = vsel %vm1454, 1, 0
        %v1511 = vsel %vm1455, 1, 0
        %v1512 = vsel %vm1456, 1, 0
        %v1513 = vsel %vm1457, 1, 0
        %v1514 = vsel %vm1458, 1, 0
        %v1515 = vsel %vm1459, 1, 0
        %v1516 = vsel %vm1460, 1, 0
        %v1517 = vsel %vm1461, 1, 0
        %v1518 = vsel %vm1462, 1, 0
        %v1519 = vsel %vm1463, 1, 0
        %v1520 = vsel %vm1464, 1, 0
        %v1521 = vsel %vm1465, 1, 0
        %v1522 = vsel %vm1466, 1, 0
        %v1523 = vsel %vm1467, 1, 0
        %v1524 = vsel %vm1468, 1, 0
        %v1525 = vsel %vm1469, 1, 0
        %v1526 = vsel %vm1470, 1, 0
        %v1527 = vsel %vm1471, 1, 0
        %v1528 = vsel %vm1472, 1, 0
        %v1529 = vsel %vm1473, 1, 0
        %v1530 = vsel %vm1474, 1, 0
        %v1531 = vsel %vm1475, 1, 0
        %v1532 = vsel %vm1476, 1, 0
        %v1533 = vsel %vm1477, 1, 0
        %v1534 = vsel %vm1478, 1, 0
        %v1535 = vsel %vm1479, 1, 0
        %v1536 = vsel %vm1480, 1, 0
        %v1537 = vsel %vm1481, 1, 0
        %v1538 = vsel %vm1482, 1, 0
        %v1539 = vsel %vm1483, 1, 0
        %v1540 = vsel %vm1484, 1, 0
        %v1541 = vsel %vm1485, 1, 0
        %v1542 = vsel %vm1486, 1, 0
        %v1543 = vsel %vm1487, 1, 0
        %v1544 = vsel %vm1488, 1, 0
        %v1545 = vsel %vm1489, 1, 0
        %v1546 = vsel %vm1490, 1, 0
        %v1547 = vsel %vm1491, 1, 0
        %v1548 = vsel %vm1492, 1, 0
        %v1549 = vsel %vm1493, 1, 0
        %v1550 = vsel %vm1494, 1, 0
        %v1551 = vsel %vm1495, 1, 0
        %v1552 = vsel %vm1496, 1, 0
        %v1553 = vsel %vm1497, 1, 0
        %v1554 = vsel %vm1498, 1, 0
        %v1555 = vsel %vm1499, 1, 0
        %v1556 = vsel %vm1500, 1, 0
        %v1557 = vsel %vm1501, 1, 0
        %v1558 = vsel %vm1502, 1, 0
        %v1559 = vsel %vm1503, 1, 0
        %v1560 = vsel %vm1504, 1, 0
        %v1561 = vcvt.s32.f32 %v1505
        %v1562 = vcvt.s32.f32 %v1506
        %v1563 = vcvt.s32.f32 %v1507
        %v1564 = vcvt.s32.f32 %v1508
        %v1565 = vcvt.s32.f32 %v1509
        %v1566 = vcvt.s32.f32 %v1510
        %v1567 = vcvt.s32.f32 %v1511
        %v1568 = vcvt.s32.f32 %v1512
        %v1569 = vcvt.s32.f32 %v1513
        %v1570 = vcvt.s32.f32 %v1514
        %v1571 = vcvt.s32.f32 %v1515
        %v1572 = vcvt.s32.f32 %v1516
        %v1573 = vcvt.s32.f32 %v1517
        %v1574 = vcvt.s32.f32 %v1518
        %v1575 = vcvt.s32.f32 %v1519
        %v1576 = vcvt.s32.f32 %v1520
        %v1577 = vcvt.s32.f32 %v1521
        %v1578 = vcvt.s32.f32 %v1522
        %v1579 = vcvt.s32.f32 %v1523
        %v1580 = vcvt.s32.f32 %v1524
        %v1581 = vcvt.s32.f32 %v1525
        %v1582 = vcvt.s32.f32 %v1526
        %v1583 = vcvt.s32.f32 %v1527
        %v1584 = vcvt.s32.f32 %v1528
        %v1585 = vcvt.s32.f32 %v1529
        %v1586 = vcvt.s32.f32 %v1530
        %v1587 = vcvt.s32.f32 %v1531
        %v1588 = vcvt.s32.f32 %v1532
        %v1589 = vcvt.s32.f32 %v1533
        %v1590 = vcvt.s32.f32 %v1534
        %v1591 = vcvt.s32.f32 %v1535
        %v1592 = vcvt.s32.f32 %v1536
        %v1593 = vcvt.s32.f32 %v1537
        %v1594 = vcvt.s32.f32 %v1538
        %v1595 = vcvt.s32.f32 %v1539
        %v1596 = vcvt.s32.f32 %v1540
        %v1597 = vcvt.s32.f32 %v1541
        %v1598 = vcvt.s32.f32 %v1542
        %v1599 = vcvt.s32.f32 %v1543
        %v1600 = vcvt.s32.f32 %v1544
        %v1601 = vcvt.s32.f32 %v1545
        %v1602 = vcvt.s32.f32 %v1546
        %v1603 = vcvt.s32.f32 %v1547
        %v1604 = vcvt.s32.f32 %v1548
        %v1605 = vcvt.s32.f32 %v1549
        %v1606 = vcvt.s32.f32 %v1550
        %v1607 = vcvt.s32.f32 %v1551
        %v1608 = vcvt.s32.f32 %v1552
        %v1609 = vcvt.s32.f32 %v1553
        %v1610 = vcvt.s32.f32 %v1554
        %v1611 = vcvt.s32.f32 %v1555
        %v1612 = vcvt.s32.f32 %v1556
        %v1613 = vcvt.s32.f32 %v1557
        %v1614 = vcvt.s32.f32 %v1558
        %v1615 = vcvt.s32.f32 %v1559
        %v1616 = vcvt.s32.f32 %v1560
        %v1617 = vmul.f32 %v1217, %v1561
        %v1618 = vmul.f32 %v1218, %v1562
        %v1619 = vmul.f32 %v1217, %v1563
        %v1620 = vmul.f32 %v1218, %v1564
        %v1621 = vmul.f32 %v1217, %v1565
        %v1622 = vmul.f32 %v1218, %v1566
        %v1623 = vmul.f32 %v1217, %v1567
        %v1624 = vmul.f32 %v1218, %v1568
        %v1625 = vmul.f32 %v1217, %v1569
        %v1626 = vmul.f32 %v1218, %v1570
        %v1627 = vmul.f32 %v1217, %v1571
        %v1628 = vmul.f32 %v1218, %v1572
        %v1629 = vmul.f32 %v1217, %v1573
        %v1630 = vmul.f32 %v1218, %v1574
        %v1631 = vmul.f32 %v1217, %v1575
        %v1632 = vmul.f32 %v1218, %v1576
        %v1633 = vmul.f32 %v1217, %v1577
        %v1634 = vmul.f32 %v1218, %v1578
        %v1635 = vmul.f32 %v1217, %v1579
        %v1636 = vmul.f32 %v1218, %v1580
        %v1637 = vmul.f32 %v1217, %v1581
        %v1638 = vmul.f32 %v1218, %v1582
        %v1639 = vmul.f32 %v1217, %v1583
        %v1640 = vmul.f32 %v1218, %v1584
        %v1641 = vmul.f32 %v1217, %v1585
        %v1642 = vmul.f32 %v1218, %v1586
        %v1643 = vmul.f32 %v1217, %v1587
        %v1644 = vmul.f32 %v1218, %v1588
        %v1645 = vmul.f32 %v1217, %v1589
        %v1646 = vmul.f32 %v1218, %v1590
        %v1647 = vmul.f32 %v1217, %v1591
        %v1648 = vmul.f32 %v1218, %v1592
        %v1649 = vmul.f32 %v1217, %v1593
        %v1650 = vmul.f32 %v1218, %v1594
        %v1651 = vmul.f32 %v1217, %v1595
        %v1652 = vmul.f32 %v1218, %v1596
        %v1653 = vmul.f32 %v1217, %v1597
        %v1654 = vmul.f32 %v1218, %v1598
        %v1655 = vmul.f32 %v1217, %v1599
        %v1656 = vmul.f32 %v1218, %v1600
        %v1657 = vmul.f32 %v1217, %v1601
        %v1658 = vmul.f32 %v1218, %v1602
        %v1659 = vmul.f32 %v1217, %v1603
        %v1660 = vmul.f32 %v1218, %v1604
        %v1661 = vmul.f32 %v1217, %v1605
        %v1662 = vmul.f32 %v1218, %v1606
        %v1663 = vmul.f32 %v1217, %v1607
        %v1664 = vmul.f32 %v1218, %v1608
        %v1665 = vmul.f32 %v1217, %v1609
        %v1666 = vmul.f32 %v1218, %v1610
        %v1667 = vmul.f32 %v1217, %v1611
        %v1668 = vmul.f32 %v1218, %v1612
        %v1669 = vmul.f32 %v1217, %v1613
        %v1670 = vmul.f32 %v1218, %v1614
        %v1671 = vmul.f32 %v1217, %v1615
        %v1672 = vmul.f32 %v1218, %v1616
        %v1673 = vadd.f32 %v1391, %v1617
        %v1674 = vadd.f32 %v1392, %v1618
        %v1675 = vadd.f32 %v1393, %v1619
        %v1676 = vadd.f32 %v1394, %v1620
        %v1677 = vadd.f32 %v1395, %v1621
        %v1678 = vadd.f32 %v1396, %v1622
        %v1679 = vadd.f32 %v1397, %v1623
        %v1680 = vadd.f32 %v1398, %v1624
        %v1681 = vadd.f32 %v1399, %v1625
        %v1682 = vadd.f32 %v1400, %v1626
        %v1683 = vadd.f32 %v1401, %v1627
        %v1684 = vadd.f32 %v1402, %v1628
        %v1685 = vadd.f32 %v1403, %v1629
        %v1686 = vadd.f32 %v1404, %v1630
        %v1687 = vadd.f32 %v1405, %v1631
        %v1688 = vadd.f32 %v1406, %v1632
        %v1689 = vadd.f32 %v1407, %v1633
        %v1690 = vadd.f32 %v1408, %v1634
        %v1691 = vadd.f32 %v1409, %v1635
        %v1692 = vadd.f32 %v1410, %v1636
        %v1693 = vadd.f32 %v1411, %v1637
        %v1694 = vadd.f32 %v1412, %v1638
        %v1695 = vadd.f32 %v1413, %v1639
        %v1696 = vadd.f32 %v1414, %v1640
        %v1697 = vadd.f32 %v1415, %v1641
        %v1698 = vadd.f32 %v1416, %v1642
        %v1699 = vadd.f32 %v1417, %v1643
        %v1700 = vadd.f32 %v1418, %v1644
        %v1701 = vadd.f32 %v1419, %v1645
        %v1702 = vadd.f32 %v1420, %v1646
        %v1703 = vadd.f32 %v1421, %v1647
        %v1704 = vadd.f32 %v1422, %v1648
        %v1705 = vadd.f32 %v1423, %v1649
        %v1706 = vadd.f32 %v1424, %v1650
        %v1707 = vadd.f32 %v1425, %v1651
        %v1708 = vadd.f32 %v1426, %v1652
        %v1709 = vadd.f32 %v1427, %v1653
        %v1710 = vadd.f32 %v1428, %v1654
        %v1711 = vadd.f32 %v1429, %v1655
        %v1712 = vadd.f32 %v1430, %v1656
        %v1713 = vadd.f32 %v1431, %v1657
        %v1714 = vadd.f32 %v1432, %v1658
        %v1715 = vadd.f32 %v1433, %v1659
        %v1716 = vadd.f32 %v1434, %v1660
        %v1717 = vadd.f32 %v1435, %v1661
        %v1718 = vadd.f32 %v1436, %v1662
        %v1719 = vadd.f32 %v1437, %v1663
        %v1720 = vadd.f32 %v1438, %v1664
        %v1721 = vadd.f32 %v1439, %v1665
        %v1722 = vadd.f32 %v1440, %v1666
        %v1723 = vadd.f32 %v1441, %v1667
        %v1724 = vadd.f32 %v1442, %v1668
        %v1725 = vadd.f32 %v1443, %v1669
        %v1726 = vadd.f32 %v1444, %v1670
        %v1727 = vadd.f32 %v1445, %v1671
        %v1728 = vadd.f32 %v1446, %v1672
        %v1729 = vpack.c.bf16 %v1675, %v1673
        %v1730 = vpack.c.bf16 %v1676, %v1674
        %v1731 = vpack.c.bf16 %v1679, %v1677
        %v1732 = vpack.c.bf16 %v1680, %v1678
        %v1733 = vpack.c.bf16 %v1683, %v1681
        %v1734 = vpack.c.bf16 %v1684, %v1682
        %v1735 = vpack.c.bf16 %v1687, %v1685
        %v1736 = vpack.c.bf16 %v1688, %v1686
        %v1737 = vpack.c.bf16 %v1691, %v1689
        %v1738 = vpack.c.bf16 %v1692, %v1690
        %v1739 = vpack.c.bf16 %v1695, %v1693
        %v1740 = vpack.c.bf16 %v1696, %v1694
        %v1741 = vpack.c.bf16 %v1699, %v1697
        %v1742 = vpack.c.bf16 %v1700, %v1698
        %v1743 = vpack.c.bf16 %v1703, %v1701
        %v1744 = vpack.c.bf16 %v1704, %v1702
        %v1745 = vpack.c.bf16 %v1707, %v1705
        %v1746 = vpack.c.bf16 %v1708, %v1706
        %v1747 = vpack.c.bf16 %v1711, %v1709
        %v1748 = vpack.c.bf16 %v1712, %v1710
        %v1749 = vpack.c.bf16 %v1715, %v1713
        %v1750 = vpack.c.bf16 %v1716, %v1714
        %v1751 = vpack.c.bf16 %v1719, %v1717
        %v1752 = vpack.c.bf16 %v1720, %v1718
        %v1753 = vpack.c.bf16 %v1723, %v1721
        %v1754 = vpack.c.bf16 %v1724, %v1722
        %v1755 = vpack.c.bf16 %v1727, %v1725
        %v1756 = vpack.c.bf16 %v1728, %v1726
        %v1757 = vld [vmem:[%s135] sm:$0xff]
        %v1758 = vld [vmem:[%s135 + $0x8] sm:$0xff]
        %v1759 = vld [vmem:[%s135 + $0x10] sm:$0xff]
        %v1760 = vld [vmem:[%s135 + $0x18] sm:$0xff]
        %v1761 = vld [vmem:[%s135 + $0x20] sm:$0xff]
        %v1762 = vld [vmem:[%s135 + $0x28] sm:$0xff]
        %v1763 = vld [vmem:[%s135 + $0x30] sm:$0xff]
        %v1764 = vld [vmem:[%s135 + $0x38] sm:$0xff]
        %v1765 = vld [vmem:[%s135 + $0x40] sm:$0xff]
        %v1766 = vld [vmem:[%s135 + $0x48] sm:$0xff]
        %v1767 = vld [vmem:[%s135 + $0x50] sm:$0xff]
        %v1768 = vld [vmem:[%s135 + $0x58] sm:$0xff]
        %v1769 = vld [vmem:[%s135 + $0x60] sm:$0xff]
        %v1770 = vld [vmem:[%s135 + $0x68] sm:$0xff]
        %v1771 = vld [vmem:[%s135 + $0x70] sm:$0xff]
        %v1772 = vld [vmem:[%s135 + $0x78] sm:$0xff]
        %v1773 = vld [vmem:[%s135 + $0x80] sm:$0xff]
        %v1774 = vld [vmem:[%s135 + $0x88] sm:$0xff]
        %v1775 = vld [vmem:[%s135 + $0x90] sm:$0xff]
        %v1776 = vld [vmem:[%s135 + $0x98] sm:$0xff]
        %v1777 = vld [vmem:[%s135 + $0xa0] sm:$0xff]
        %v1778 = vld [vmem:[%s135 + $0xa8] sm:$0xff]
        %v1779 = vld [vmem:[%s135 + $0xb0] sm:$0xff]
        %v1780 = vld [vmem:[%s135 + $0xb8] sm:$0xff]
        %v1781 = vld [vmem:[%s135 + $0xc0] sm:$0xff]
        %v1782 = vld [vmem:[%s135 + $0xc8] sm:$0xff]
        %v1783 = vld [vmem:[%s135 + $0xd0] sm:$0xff]
        %v1784 = vld [vmem:[%s135 + $0xd8] sm:$0xff]
        %v1785 = vld [vmem:[%s135 + $0xe0] sm:$0xff]
        %v1786 = vld [vmem:[%s135 + $0xe8] sm:$0xff]
        %v1787 = vld [vmem:[%s135 + $0xf0] sm:$0xff]
        %v1788 = vld [vmem:[%s135 + $0xf8] sm:$0xff]
        %v1789 = vld [vmem:[%s135 + $0x100] sm:$0xff]
        %v1790 = vld [vmem:[%s135 + $0x108] sm:$0xff]
        %v1791 = vld [vmem:[%s135 + $0x110] sm:$0xff]
        %v1792 = vld [vmem:[%s135 + $0x118] sm:$0xff]
        %v1793 = vld [vmem:[%s135 + $0x120] sm:$0xff]
        %v1794 = vld [vmem:[%s135 + $0x128] sm:$0xff]
        %v1795 = vld [vmem:[%s135 + $0x130] sm:$0xff]
        %v1796 = vld [vmem:[%s135 + $0x138] sm:$0xff]
        %v1797 = vld [vmem:[%s135 + $0x140] sm:$0xff]
        %v1798 = vld [vmem:[%s135 + $0x148] sm:$0xff]
        %v1799 = vld [vmem:[%s135 + $0x150] sm:$0xff]
        %v1800 = vld [vmem:[%s135 + $0x158] sm:$0xff]
        %v1801 = vld [vmem:[%s135 + $0x160] sm:$0xff]
        %v1802 = vld [vmem:[%s135 + $0x168] sm:$0xff]
        %v1803 = vld [vmem:[%s135 + $0x170] sm:$0xff]
        %v1804 = vld [vmem:[%s135 + $0x178] sm:$0xff]
        %v1805 = vld [vmem:[%s135 + $0x180] sm:$0xff]
        %v1806 = vld [vmem:[%s135 + $0x188] sm:$0xff]
        %v1807 = vld [vmem:[%s135 + $0x190] sm:$0xff]
        %v1808 = vld [vmem:[%s135 + $0x198] sm:$0xff]
        %v1809 = vld [vmem:[%s135 + $0x1a0] sm:$0xff]
        %v1810 = vld [vmem:[%s135 + $0x1a8] sm:$0xff]
        %v1811 = vld [vmem:[%s135 + $0x1b0] sm:$0xff]
        %v1812 = vld [vmem:[%s135 + $0x1b8] sm:$0xff]
        %v1813 = vld [vmem:[%s135 + $0x1c0] sm:$0xff]
        %v1814 = vld [vmem:[%s135 + $0x1c8] sm:$0xff]
        %v1815 = vld [vmem:[%s135 + $0x1d0] sm:$0xff]
        %v1816 = vld [vmem:[%s135 + $0x1d8] sm:$0xff]
        %v1817 = vld [vmem:[%s135 + $0x1e0] sm:$0xff]
        %v1818 = vld [vmem:[%s135 + $0x1e8] sm:$0xff]
        %v1819 = vld [vmem:[%s135 + $0x1f0] sm:$0xff]
        %v1820 = vld [vmem:[%s135 + $0x1f8] sm:$0xff]
        %v1821 = vld [vmem:[%s135 + $0x200] sm:$0xff]
        %v1822 = vld [vmem:[%s135 + $0x208] sm:$0xff]
        %v1823 = vld [vmem:[%s135 + $0x210] sm:$0xff]
        %v1824 = vld [vmem:[%s135 + $0x218] sm:$0xff]
        %v1825 = vld [vmem:[%s135 + $0x220] sm:$0xff]
        %v1826 = vld [vmem:[%s135 + $0x228] sm:$0xff]
        %v1827 = vld [vmem:[%s135 + $0x230] sm:$0xff]
        %v1828 = vld [vmem:[%s135 + $0x238] sm:$0xff]
        %v1829 = vld [vmem:[%s135 + $0x240] sm:$0xff]
        %v1830 = vld [vmem:[%s135 + $0x248] sm:$0xff]
        %v1831 = vld [vmem:[%s135 + $0x250] sm:$0xff]
        %v1832 = vld [vmem:[%s135 + $0x258] sm:$0xff]
        %v1833 = vld [vmem:[%s135 + $0x260] sm:$0xff]
        %v1834 = vld [vmem:[%s135 + $0x268] sm:$0xff]
        %v1835 = vld [vmem:[%s135 + $0x270] sm:$0xff]
        %v1836 = vld [vmem:[%s135 + $0x278] sm:$0xff]
        %v1837 = vld [vmem:[%s135 + $0x280] sm:$0xff]
        %v1838 = vld [vmem:[%s135 + $0x288] sm:$0xff]
        %v1839 = vld [vmem:[%s135 + $0x290] sm:$0xff]
        %v1840 = vld [vmem:[%s135 + $0x298] sm:$0xff]
        %v1925 = vunpack.c.l.b16 %v1757
        %v1926 = vunpack.c.h.b16 %v1757
        %v1927 = vunpack.c.l.b16 %v1758
        %v1928 = vunpack.c.h.b16 %v1758
        %v1929 = vunpack.c.l.b16 %v1759
        %v1930 = vunpack.c.h.b16 %v1759
        %v1931 = vunpack.c.l.b16 %v1760
        %v1932 = vunpack.c.h.b16 %v1760
        %v1933 = vunpack.c.l.b16 %v1761
        %v1934 = vunpack.c.h.b16 %v1761
        %v1935 = vunpack.c.l.b16 %v1762
        %v1936 = vunpack.c.h.b16 %v1762
        %v1937 = vunpack.c.l.b16 %v1763
        %v1938 = vunpack.c.h.b16 %v1763
        %v1939 = vunpack.c.l.b16 %v1764
        %v1940 = vunpack.c.h.b16 %v1764
        %v1941 = vunpack.c.l.b16 %v1765
        %v1942 = vunpack.c.h.b16 %v1765
        %v1943 = vunpack.c.l.b16 %v1766
        %v1944 = vunpack.c.h.b16 %v1766
        %v1945 = vunpack.c.l.b16 %v1767
        %v1946 = vunpack.c.h.b16 %v1767
        %v1947 = vunpack.c.l.b16 %v1768
        %v1948 = vunpack.c.h.b16 %v1768
        %v1949 = vunpack.c.l.b16 %v1769
        %v1950 = vunpack.c.h.b16 %v1769
        %v1951 = vunpack.c.l.b16 %v1770
        %v1952 = vunpack.c.h.b16 %v1770
        %v1953 = vunpack.c.l.b16 %v1771
        %v1954 = vunpack.c.h.b16 %v1771
        %v1955 = vunpack.c.l.b16 %v1772
        %v1956 = vunpack.c.h.b16 %v1772
        %v1957 = vunpack.c.l.b16 %v1773
        %v1958 = vunpack.c.h.b16 %v1773
        %v1959 = vunpack.c.l.b16 %v1774
        %v1960 = vunpack.c.h.b16 %v1774
        %v1961 = vunpack.c.l.b16 %v1775
        %v1962 = vunpack.c.h.b16 %v1775
        %v1963 = vunpack.c.l.b16 %v1776
        %v1964 = vunpack.c.h.b16 %v1776
        %v1965 = vunpack.c.l.b16 %v1777
        %v1966 = vunpack.c.h.b16 %v1777
        %v1967 = vunpack.c.l.b16 %v1778
        %v1968 = vunpack.c.h.b16 %v1778
        %v1969 = vunpack.c.l.b16 %v1779
        %v1970 = vunpack.c.h.b16 %v1779
        %v1971 = vunpack.c.l.b16 %v1780
        %v1972 = vunpack.c.h.b16 %v1780
        %v1973 = vunpack.c.l.b16 %v1781
        %v1974 = vunpack.c.h.b16 %v1781
        %v1975 = vunpack.c.l.b16 %v1782
        %v1976 = vunpack.c.h.b16 %v1782
        %v1977 = vunpack.c.l.b16 %v1783
        %v1978 = vunpack.c.h.b16 %v1783
        %v1979 = vunpack.c.l.b16 %v1784
        %v1980 = vunpack.c.h.b16 %v1784
        %v1981 = vunpack.c.l.b16 %v1785
        %v1982 = vunpack.c.h.b16 %v1785
        %v1983 = vunpack.c.l.b16 %v1786
        %v1984 = vunpack.c.h.b16 %v1786
        %v1985 = vunpack.c.l.b16 %v1787
        %v1986 = vunpack.c.h.b16 %v1787
        %v1987 = vunpack.c.l.b16 %v1788
        %v1988 = vunpack.c.h.b16 %v1788
        %v1989 = vunpack.c.l.b16 %v1789
        %v1990 = vunpack.c.h.b16 %v1789
        %v1991 = vunpack.c.l.b16 %v1790
        %v1992 = vunpack.c.h.b16 %v1790
        %v1993 = vunpack.c.l.b16 %v1791
        %v1994 = vunpack.c.h.b16 %v1791
        %v1995 = vunpack.c.l.b16 %v1792
        %v1996 = vunpack.c.h.b16 %v1792
        %v1997 = vunpack.c.l.b16 %v1793
        %v1998 = vunpack.c.h.b16 %v1793
        %v1999 = vunpack.c.l.b16 %v1794
        %v2000 = vunpack.c.h.b16 %v1794
        %v2001 = vunpack.c.l.b16 %v1795
        %v2002 = vunpack.c.h.b16 %v1795
        %v2003 = vunpack.c.l.b16 %v1796
        %v2004 = vunpack.c.h.b16 %v1796
        %v2005 = vunpack.c.l.b16 %v1797
        %v2006 = vunpack.c.h.b16 %v1797
        %v2007 = vunpack.c.l.b16 %v1798
        %v2008 = vunpack.c.h.b16 %v1798
        %v2009 = vunpack.c.l.b16 %v1799
        %v2010 = vunpack.c.h.b16 %v1799
        %v2011 = vunpack.c.l.b16 %v1800
        %v2012 = vunpack.c.h.b16 %v1800
        %v2013 = vunpack.c.l.b16 %v1801
        %v2014 = vunpack.c.h.b16 %v1801
        %v2015 = vunpack.c.l.b16 %v1802
        %v2016 = vunpack.c.h.b16 %v1802
        %v2017 = vunpack.c.l.b16 %v1803
        %v2018 = vunpack.c.h.b16 %v1803
        %v2019 = vunpack.c.l.b16 %v1804
        %v2020 = vunpack.c.h.b16 %v1804
        %v2021 = vunpack.c.l.b16 %v1805
        %v2022 = vunpack.c.h.b16 %v1805
        %v2023 = vunpack.c.l.b16 %v1806
        %v2024 = vunpack.c.h.b16 %v1806
        %v2025 = vunpack.c.l.b16 %v1807
        %v2026 = vunpack.c.h.b16 %v1807
        %v2027 = vunpack.c.l.b16 %v1808
        %v2028 = vunpack.c.h.b16 %v1808
        %v2029 = vunpack.c.l.b16 %v1809
        %v2030 = vunpack.c.h.b16 %v1809
        %v2031 = vunpack.c.l.b16 %v1810
        %v2032 = vunpack.c.h.b16 %v1810
        %v2033 = vunpack.c.l.b16 %v1811
        %v2034 = vunpack.c.h.b16 %v1811
        %v2035 = vunpack.c.l.b16 %v1812
        %v2036 = vunpack.c.h.b16 %v1812
        %v2037 = vunpack.c.l.b16 %v1813
        %v2038 = vunpack.c.h.b16 %v1813
        %v2039 = vunpack.c.l.b16 %v1814
        %v2040 = vunpack.c.h.b16 %v1814
        %v2041 = vunpack.c.l.b16 %v1815
        %v2042 = vunpack.c.h.b16 %v1815
        %v2043 = vunpack.c.l.b16 %v1816
        %v2044 = vunpack.c.h.b16 %v1816
        %v2045 = vunpack.c.l.b16 %v1817
        %v2046 = vunpack.c.h.b16 %v1817
        %v2047 = vunpack.c.l.b16 %v1818
        %v2048 = vunpack.c.h.b16 %v1818
        %v2049 = vunpack.c.l.b16 %v1819
        %v2050 = vunpack.c.h.b16 %v1819
        %v2051 = vunpack.c.l.b16 %v1820
        %v2052 = vunpack.c.h.b16 %v1820
        %v2053 = vunpack.c.l.b16 %v1821
        %v2054 = vunpack.c.h.b16 %v1821
        %v2055 = vunpack.c.l.b16 %v1822
        %v2056 = vunpack.c.h.b16 %v1822
        %v2057 = vunpack.c.l.b16 %v1823
        %v2058 = vunpack.c.h.b16 %v1823
        %v2059 = vunpack.c.l.b16 %v1824
        %v2060 = vunpack.c.h.b16 %v1824
        %v2061 = vunpack.c.l.b16 %v1825
        %v2062 = vunpack.c.h.b16 %v1825
        %v2063 = vunpack.c.l.b16 %v1826
        %v2064 = vunpack.c.h.b16 %v1826
        %v2065 = vunpack.c.l.b16 %v1827
        %v2066 = vunpack.c.h.b16 %v1827
        %v2067 = vunpack.c.l.b16 %v1828
        %v2068 = vunpack.c.h.b16 %v1828
        %v2069 = vunpack.c.l.b16 %v1829
        %v2070 = vunpack.c.h.b16 %v1829
        %v2071 = vunpack.c.l.b16 %v1830
        %v2072 = vunpack.c.h.b16 %v1830
        %v2073 = vunpack.c.l.b16 %v1831
        %v2074 = vunpack.c.h.b16 %v1831
        %v2075 = vunpack.c.l.b16 %v1832
        %v2076 = vunpack.c.h.b16 %v1832
        %v2077 = vunpack.c.l.b16 %v1833
        %v2078 = vunpack.c.h.b16 %v1833
        %v2079 = vunpack.c.l.b16 %v1834
        %v2080 = vunpack.c.h.b16 %v1834
        %v2081 = vunpack.c.l.b16 %v1835
        %v2082 = vunpack.c.h.b16 %v1835
        %v2083 = vunpack.c.l.b16 %v1836
        %v2084 = vunpack.c.h.b16 %v1836
        %v2085 = vunpack.c.l.b16 %v1837
        %v2086 = vunpack.c.h.b16 %v1837
        %v2087 = vunpack.c.l.b16 %v1838
        %v2088 = vunpack.c.h.b16 %v1838
        %v2089 = vunpack.c.l.b16 %v1839
        %v2090 = vunpack.c.h.b16 %v1839
        %v2091 = vunpack.c.l.b16 %v1840
        %v2092 = vunpack.c.h.b16 %v1840
        %v2093 = vpack.c.b16 %v1927, %v1925
        %v2094 = vpack.c.b16 %v1928, %v1926
        %v2095 = vpack.c.b16 %v1931, %v1929
        %v2096 = vpack.c.b16 %v1932, %v1930
        %v2097 = vpack.c.b16 %v1935, %v1933
        %v2098 = vpack.c.b16 %v1936, %v1934
        %v2099 = vpack.c.b16 %v1939, %v1937
        %v2100 = vpack.c.b16 %v1940, %v1938
        %v2101 = vpack.c.b16 %v1943, %v1941
        %v2102 = vpack.c.b16 %v1944, %v1942
        %v2103 = vpack.c.b16 %v1947, %v1945
        %v2104 = vpack.c.b16 %v1948, %v1946
        %v2105 = vpack.c.b16 %v1951, %v1949
        %v2106 = vpack.c.b16 %v1952, %v1950
        %v2107 = vpack.c.b16 %v1955, %v1953
        %v2108 = vpack.c.b16 %v1956, %v1954
        %v2109 = vpack.c.b16 %v1959, %v1957
        %v2110 = vpack.c.b16 %v1960, %v1958
        %v2111 = vpack.c.b16 %v1963, %v1961
        %v2112 = vpack.c.b16 %v1964, %v1962
        %v2113 = vpack.c.b16 %v1967, %v1965
        %v2114 = vpack.c.b16 %v1968, %v1966
        %v2115 = vpack.c.b16 %v1971, %v1969
        %v2116 = vpack.c.b16 %v1972, %v1970
        %v2117 = vpack.c.b16 %v1975, %v1973
        %v2118 = vpack.c.b16 %v1976, %v1974
        %v2119 = vpack.c.b16 %v1979, %v1977
        %v2120 = vpack.c.b16 %v1980, %v1978
        %v2121 = vpack.c.b16 %v1983, %v1981
        %v2122 = vpack.c.b16 %v1984, %v1982
        %v2123 = vpack.c.b16 %v1987, %v1985
        %v2124 = vpack.c.b16 %v1988, %v1986
        %v2125 = vpack.c.b16 %v1991, %v1989
        %v2126 = vpack.c.b16 %v1992, %v1990
        %v2127 = vpack.c.b16 %v1995, %v1993
        %v2128 = vpack.c.b16 %v1996, %v1994
        %v2129 = vpack.c.b16 %v1999, %v1997
        %v2130 = vpack.c.b16 %v2000, %v1998
        %v2131 = vpack.c.b16 %v2003, %v2001
        %v2132 = vpack.c.b16 %v2004, %v2002
        %v2133 = vpack.c.b16 %v2007, %v2005
        %v2134 = vpack.c.b16 %v2008, %v2006
        %v2135 = vpack.c.b16 %v2011, %v2009
        %v2136 = vpack.c.b16 %v2012, %v2010
        %v2137 = vpack.c.b16 %v2015, %v2013
        %v2138 = vpack.c.b16 %v2016, %v2014
        %v2139 = vpack.c.b16 %v2019, %v2017
        %v2140 = vpack.c.b16 %v2020, %v2018
        %v2141 = vpack.c.b16 %v2023, %v2021
        %v2142 = vpack.c.b16 %v2024, %v2022
        %v2143 = vpack.c.b16 %v2027, %v2025
        %v2144 = vpack.c.b16 %v2028, %v2026
        %v2145 = vpack.c.b16 %v2031, %v2029
        %v2146 = vpack.c.b16 %v2032, %v2030
        %v2147 = vpack.c.b16 %v2035, %v2033
        %v2148 = vpack.c.b16 %v2036, %v2034
        %v2149 = vpack.c.b16 %v2039, %v2037
        %v2150 = vpack.c.b16 %v2040, %v2038
        %v2151 = vpack.c.b16 %v2043, %v2041
        %v2152 = vpack.c.b16 %v2044, %v2042
        %v2153 = vpack.c.b16 %v2047, %v2045
        %v2154 = vpack.c.b16 %v2048, %v2046
        %v2155 = vpack.c.b16 %v2051, %v2049
        %v2156 = vpack.c.b16 %v2052, %v2050
        %v2157 = vpack.c.b16 %v2055, %v2053
        %v2158 = vpack.c.b16 %v2056, %v2054
        %v2159 = vpack.c.b16 %v2059, %v2057
        %v2160 = vpack.c.b16 %v2060, %v2058
        %v2161 = vpack.c.b16 %v2063, %v2061
        %v2162 = vpack.c.b16 %v2064, %v2062
        %v2163 = vpack.c.b16 %v2067, %v2065
        %v2164 = vpack.c.b16 %v2068, %v2066
        %v2165 = vpack.c.b16 %v2071, %v2069
        %v2166 = vpack.c.b16 %v2072, %v2070
        %v2167 = vpack.c.b16 %v2075, %v2073
        %v2168 = vpack.c.b16 %v2076, %v2074
        %v2169 = vpack.c.b16 %v2079, %v2077
        %v2170 = vpack.c.b16 %v2080, %v2078
        %v2171 = vpack.c.b16 %v2083, %v2081
        %v2172 = vpack.c.b16 %v2084, %v2082
        %v2173 = vpack.c.b16 %v2087, %v2085
        %v2174 = vpack.c.b16 %v2088, %v2086
        %v2175 = vpack.c.b16 %v2091, %v2089
        %v2176 = vpack.c.b16 %v2092, %v2090
        %vm2219 = vcmask 785408
        %v2221 = vsel %vm2219, %v2094, 0
        %v2224 = vsel %vm2219, %v2096, 0
        %v2227 = vsel %vm2219, %v2098, 0
        %v2230 = vsel %vm2219, %v2100, 0
        %v2233 = vsel %vm2219, %v2102, 0
        %v2236 = vsel %vm2219, %v2104, 0
        %v2239 = vsel %vm2219, %v2106, 0
        %v2242 = vsel %vm2219, %v2108, 0
        %v2245 = vsel %vm2219, %v2110, 0
        %v2248 = vsel %vm2219, %v2112, 0
        %v2251 = vsel %vm2219, %v2114, 0
        %v2254 = vsel %vm2219, %v2116, 0
        %v2257 = vsel %vm2219, %v2118, 0
        %v2260 = vsel %vm2219, %v2120, 0
        %v2263 = vsel %vm2219, %v2122, 0
        %v2266 = vsel %vm2219, %v2124, 0
        %v2269 = vsel %vm2219, %v2126, 0
        %v2272 = vsel %vm2219, %v2128, 0
        %v2275 = vsel %vm2219, %v2130, 0
        %v2278 = vsel %vm2219, %v2132, 0
        %v2281 = vsel %vm2219, %v2134, 0
        %v2284 = vsel %vm2219, %v2136, 0
        %v2287 = vsel %vm2219, %v2138, 0
        %v2290 = vsel %vm2219, %v2140, 0
        %v2293 = vsel %vm2219, %v2142, 0
        %v2296 = vsel %vm2219, %v2144, 0
        %v2299 = vsel %vm2219, %v2146, 0
        %v2302 = vsel %vm2219, %v2148, 0
        %v2305 = vsel %vm2219, %v2150, 0
        %v2308 = vsel %vm2219, %v2152, 0
        %v2311 = vsel %vm2219, %v2154, 0
        %v2314 = vsel %vm2219, %v2156, 0
        %v2317 = vsel %vm2219, %v2158, 0
        %v2320 = vsel %vm2219, %v2160, 0
        %v2323 = vsel %vm2219, %v2162, 0
        %v2326 = vsel %vm2219, %v2164, 0
        %v2329 = vsel %vm2219, %v2166, 0
        %v2332 = vsel %vm2219, %v2168, 0
        %v2335 = vsel %vm2219, %v2170, 0
        %v2338 = vsel %vm2219, %v2172, 0
        %v2341 = vsel %vm2219, %v2174, 0
        %v2344 = vsel %vm2219, %v2176, 0
        %2346 = vmatprep.subr.bf16.mxu0 %v1744
        %2347 = vmatpush1.bf16.msra.mxu0 %v1743
        %2348 = vmatprep.subr.bf16.mxu0 %v1742
        %2349 = vmatpush1.bf16.msra.mxu0 %v1741
        %2350 = vmatprep.subr.bf16.mxu0 %v1740
        %2351 = vmatpush1.bf16.msra.mxu0 %v1739
        %2352 = vmatprep.subr.bf16.mxu0 %v1738
        %2353 = vmatpush1.bf16.msra.mxu0 %v1737
        %2354 = vmatprep.subr.bf16.mxu0 %v1736
        %2355 = vmatpush1.bf16.msra.mxu0 %v1735
        %2356 = vmatprep.subr.bf16.mxu0 %v1734
        %2357 = vmatpush1.bf16.msra.mxu0 %v1733
        %2358 = vmatprep.subr.bf16.mxu0 %v1732
        %2359 = vmatpush1.bf16.msra.mxu0 %v1731
        %2360 = vmatprep.subr.bf16.mxu0 %v1730
        %2361 = vmatpush1.bf16.msra.mxu0 %v1729
        %2362 = vmatprep.subr.bf16.mxu0 0
        %2363 = vmatpush2.bf16.msra.mxu0 0
        %2364 = vmatprep.subr.bf16.mxu0 0
        %2365 = vmatpush2.bf16.msra.mxu0 0
        %2366 = vmatprep.subr.bf16.mxu0 %v1756
        %2367 = vmatpush2.bf16.msra.mxu0 %v1755
        %2368 = vmatprep.subr.bf16.mxu0 %v1754
        %2369 = vmatpush2.bf16.msra.mxu0 %v1753
        %2370 = vmatprep.subr.bf16.mxu0 %v1752
        %2371 = vmatpush2.bf16.msra.mxu0 %v1751
        %2372 = vmatprep.subr.bf16.mxu0 %v1750
        %2373 = vmatpush2.bf16.msra.mxu0 %v1749
        %2374 = vmatprep.subr.bf16.mxu0 %v1748
        %2375 = vmatpush2.bf16.msra.mxu0 %v1747
        %2376 = vmatprep.subr.bf16.mxu0 %v1746
        %2377 = vmatpush2.bf16.msra.mxu0 %v1745
        %2378 = vmatprep.mubr.bf16.mxu0 %v2221
        %2379 = vmatmul.mubr.bf16.gmra.mxu0 %v2093
        %v2380 = vpop.f32.mrf.mxu0
        %v2381 = vadd.f32 0.0, %v2380
        %v2382 = vpop.f32.mrf.mxu0
        %v2383 = vadd.f32 0.0, %v2382
        %v2384 = vpop.f32.mrf.mxu0
        %v2385 = vadd.f32 0.0, %v2384
        %v2386 = vpop.f32.mrf.mxu0
        %v2387 = vadd.f32 0.0, %v2386
        %2388 = vmatprep.mubr.bf16.mxu0 %v2224
        %2389 = vmatmul.mubr.bf16.gmra.mxu0 %v2095
        %v2390 = vpop.f32.mrf.mxu0
        %v2391 = vadd.f32 0.0, %v2390
        %v2392 = vpop.f32.mrf.mxu0
        %v2393 = vadd.f32 0.0, %v2392
        %v2394 = vpop.f32.mrf.mxu0
        %v2395 = vadd.f32 0.0, %v2394
        %v2396 = vpop.f32.mrf.mxu0
        %v2397 = vadd.f32 0.0, %v2396
        %2398 = vmatprep.mubr.bf16.mxu0 %v2227
        %2399 = vmatmul.mubr.bf16.gmra.mxu0 %v2097
        %v2400 = vpop.f32.mrf.mxu0
        %v2401 = vadd.f32 0.0, %v2400
        %v2402 = vpop.f32.mrf.mxu0
        %v2403 = vadd.f32 0.0, %v2402
        %v2404 = vpop.f32.mrf.mxu0
        %v2405 = vadd.f32 0.0, %v2404
        %v2406 = vpop.f32.mrf.mxu0
        %v2407 = vadd.f32 0.0, %v2406
        %2408 = vmatprep.mubr.bf16.mxu0 %v2230
        %2409 = vmatmul.mubr.bf16.gmra.mxu0 %v2099
        %v2410 = vpop.f32.mrf.mxu0
        %v2411 = vadd.f32 0.0, %v2410
        %v2412 = vpop.f32.mrf.mxu0
        %v2413 = vadd.f32 0.0, %v2412
        %v2414 = vpop.f32.mrf.mxu0
        %v2415 = vadd.f32 0.0, %v2414
        %v2416 = vpop.f32.mrf.mxu0
        %v2417 = vadd.f32 0.0, %v2416
        %2418 = vmatprep.mubr.bf16.mxu0 %v2233
        %2419 = vmatmul.mubr.bf16.gmra.mxu0 %v2101
        %v2420 = vpop.f32.mrf.mxu0
        %v2421 = vadd.f32 0.0, %v2420
        %v2422 = vpop.f32.mrf.mxu0
        %v2423 = vadd.f32 0.0, %v2422
        %v2424 = vpop.f32.mrf.mxu0
        %v2425 = vadd.f32 0.0, %v2424
        %v2426 = vpop.f32.mrf.mxu0
        %v2427 = vadd.f32 0.0, %v2426
        %2428 = vmatprep.mubr.bf16.mxu0 %v2236
        %2429 = vmatmul.mubr.bf16.gmra.mxu0 %v2103
        %v2430 = vpop.f32.mrf.mxu0
        %v2431 = vadd.f32 0.0, %v2430
        %v2432 = vpop.f32.mrf.mxu0
        %v2433 = vadd.f32 0.0, %v2432
        %v2434 = vpop.f32.mrf.mxu0
        %v2435 = vadd.f32 0.0, %v2434
        %v2436 = vpop.f32.mrf.mxu0
        %v2437 = vadd.f32 0.0, %v2436
        %2438 = vmatprep.mubr.bf16.mxu0 %v2239
        %2439 = vmatmul.mubr.bf16.gmra.mxu0 %v2105
        %v2440 = vpop.f32.mrf.mxu0
        %v2441 = vadd.f32 0.0, %v2440
        %v2442 = vpop.f32.mrf.mxu0
        %v2443 = vadd.f32 0.0, %v2442
        %v2444 = vpop.f32.mrf.mxu0
        %v2445 = vadd.f32 0.0, %v2444
        %v2446 = vpop.f32.mrf.mxu0
        %v2447 = vadd.f32 0.0, %v2446
        %2448 = vmatprep.mubr.bf16.mxu0 %v2242
        %2449 = vmatmul.mubr.bf16.gmra.mxu0 %v2107
        %v2450 = vpop.f32.mrf.mxu0
        %v2451 = vadd.f32 0.0, %v2450
        %v2452 = vpop.f32.mrf.mxu0
        %v2453 = vadd.f32 0.0, %v2452
        %v2454 = vpop.f32.mrf.mxu0
        %v2455 = vadd.f32 0.0, %v2454
        %v2456 = vpop.f32.mrf.mxu0
        %v2457 = vadd.f32 0.0, %v2456
        %2458 = vmatprep.mubr.bf16.mxu0 %v2245
        %2459 = vmatmul.mubr.bf16.gmra.mxu0 %v2109
        %v2460 = vpop.f32.mrf.mxu0
        %v2461 = vadd.f32 0.0, %v2460
        %v2462 = vpop.f32.mrf.mxu0
        %v2463 = vadd.f32 0.0, %v2462
        %v2464 = vpop.f32.mrf.mxu0
        %v2465 = vadd.f32 0.0, %v2464
        %v2466 = vpop.f32.mrf.mxu0
        %v2467 = vadd.f32 0.0, %v2466
        %2468 = vmatprep.mubr.bf16.mxu0 %v2248
        %2469 = vmatmul.mubr.bf16.gmra.mxu0 %v2111
        %v2470 = vpop.f32.mrf.mxu0
        %v2471 = vadd.f32 0.0, %v2470
        %v2472 = vpop.f32.mrf.mxu0
        %v2473 = vadd.f32 0.0, %v2472
        %v2474 = vpop.f32.mrf.mxu0
        %v2475 = vadd.f32 0.0, %v2474
        %v2476 = vpop.f32.mrf.mxu0
        %v2477 = vadd.f32 0.0, %v2476
        %2478 = vmatprep.mubr.bf16.mxu0 %v2251
        %2479 = vmatmul.mubr.bf16.gmra.mxu0 %v2113
        %v2480 = vpop.f32.mrf.mxu0
        %v2481 = vadd.f32 0.0, %v2480
        %v2482 = vpop.f32.mrf.mxu0
        %v2483 = vadd.f32 0.0, %v2482
        %v2484 = vpop.f32.mrf.mxu0
        %v2485 = vadd.f32 0.0, %v2484
        %v2486 = vpop.f32.mrf.mxu0
        %v2487 = vadd.f32 0.0, %v2486
        %2488 = vmatprep.mubr.bf16.mxu0 %v2254
        %2489 = vmatmul.mubr.bf16.gmra.mxu0 %v2115
        %v2490 = vpop.f32.mrf.mxu0
        %v2491 = vadd.f32 0.0, %v2490
        %v2492 = vpop.f32.mrf.mxu0
        %v2493 = vadd.f32 0.0, %v2492
        %v2494 = vpop.f32.mrf.mxu0
        %v2495 = vadd.f32 0.0, %v2494
        %v2496 = vpop.f32.mrf.mxu0
        %v2497 = vadd.f32 0.0, %v2496
        %2498 = vmatprep.mubr.bf16.mxu0 %v2257
        %2499 = vmatmul.mubr.bf16.gmra.mxu0 %v2117
        %v2500 = vpop.f32.mrf.mxu0
        %v2501 = vadd.f32 0.0, %v2500
        %v2502 = vpop.f32.mrf.mxu0
        %v2503 = vadd.f32 0.0, %v2502
        %v2504 = vpop.f32.mrf.mxu0
        %v2505 = vadd.f32 0.0, %v2504
        %v2506 = vpop.f32.mrf.mxu0
        %v2507 = vadd.f32 0.0, %v2506
        %2508 = vmatprep.mubr.bf16.mxu0 %v2260
        %2509 = vmatmul.mubr.bf16.gmra.mxu0 %v2119
        %v2510 = vpop.f32.mrf.mxu0
        %v2511 = vadd.f32 0.0, %v2510
        %v2512 = vpop.f32.mrf.mxu0
        %v2513 = vadd.f32 0.0, %v2512
        %v2514 = vpop.f32.mrf.mxu0
        %v2515 = vadd.f32 0.0, %v2514
        %v2516 = vpop.f32.mrf.mxu0
        %v2517 = vadd.f32 0.0, %v2516
        %2518 = vmatprep.mubr.bf16.mxu0 %v2263
        %2519 = vmatmul.mubr.bf16.gmra.mxu0 %v2121
        %v2520 = vpop.f32.mrf.mxu0
        %v2521 = vadd.f32 0.0, %v2520
        %v2522 = vpop.f32.mrf.mxu0
        %v2523 = vadd.f32 0.0, %v2522
        %v2524 = vpop.f32.mrf.mxu0
        %v2525 = vadd.f32 0.0, %v2524
        %v2526 = vpop.f32.mrf.mxu0
        %v2527 = vadd.f32 0.0, %v2526
        %2528 = vmatprep.mubr.bf16.mxu0 %v2266
        %2529 = vmatmul.mubr.bf16.gmra.mxu0 %v2123
        %v2530 = vpop.f32.mrf.mxu0
        %v2531 = vadd.f32 0.0, %v2530
        %v2532 = vpop.f32.mrf.mxu0
        %v2533 = vadd.f32 0.0, %v2532
        %v2534 = vpop.f32.mrf.mxu0
        %v2535 = vadd.f32 0.0, %v2534
        %v2536 = vpop.f32.mrf.mxu0
        %v2537 = vadd.f32 0.0, %v2536
        %2538 = vmatprep.mubr.bf16.mxu0 %v2269
        %2539 = vmatmul.mubr.bf16.gmra.mxu0 %v2125
        %v2540 = vpop.f32.mrf.mxu0
        %v2541 = vadd.f32 0.0, %v2540
        %v2542 = vpop.f32.mrf.mxu0
        %v2543 = vadd.f32 0.0, %v2542
        %v2544 = vpop.f32.mrf.mxu0
        %v2545 = vadd.f32 0.0, %v2544
        %v2546 = vpop.f32.mrf.mxu0
        %v2547 = vadd.f32 0.0, %v2546
        %2548 = vmatprep.mubr.bf16.mxu0 %v2272
        %2549 = vmatmul.mubr.bf16.gmra.mxu0 %v2127
        %v2550 = vpop.f32.mrf.mxu0
        %v2551 = vadd.f32 0.0, %v2550
        %v2552 = vpop.f32.mrf.mxu0
        %v2553 = vadd.f32 0.0, %v2552
        %v2554 = vpop.f32.mrf.mxu0
        %v2555 = vadd.f32 0.0, %v2554
        %v2556 = vpop.f32.mrf.mxu0
        %v2557 = vadd.f32 0.0, %v2556
        %2558 = vmatprep.mubr.bf16.mxu0 %v2275
        %2559 = vmatmul.mubr.bf16.gmra.mxu0 %v2129
        %v2560 = vpop.f32.mrf.mxu0
        %v2561 = vadd.f32 0.0, %v2560
        %v2562 = vpop.f32.mrf.mxu0
        %v2563 = vadd.f32 0.0, %v2562
        %v2564 = vpop.f32.mrf.mxu0
        %v2565 = vadd.f32 0.0, %v2564
        %v2566 = vpop.f32.mrf.mxu0
        %v2567 = vadd.f32 0.0, %v2566
        %2568 = vmatprep.mubr.bf16.mxu0 %v2278
        %2569 = vmatmul.mubr.bf16.gmra.mxu0 %v2131
        %v2570 = vpop.f32.mrf.mxu0
        %v2571 = vadd.f32 0.0, %v2570
        %v2572 = vpop.f32.mrf.mxu0
        %v2573 = vadd.f32 0.0, %v2572
        %v2574 = vpop.f32.mrf.mxu0
        %v2575 = vadd.f32 0.0, %v2574
        %v2576 = vpop.f32.mrf.mxu0
        %v2577 = vadd.f32 0.0, %v2576
        %2578 = vmatprep.mubr.bf16.mxu0 %v2281
        %2579 = vmatmul.mubr.bf16.gmra.mxu0 %v2133
        %v2580 = vpop.f32.mrf.mxu0
        %v2581 = vadd.f32 0.0, %v2580
        %v2582 = vpop.f32.mrf.mxu0
        %v2583 = vadd.f32 0.0, %v2582
        %v2584 = vpop.f32.mrf.mxu0
        %v2585 = vadd.f32 0.0, %v2584
        %v2586 = vpop.f32.mrf.mxu0
        %v2587 = vadd.f32 0.0, %v2586
        %2588 = vmatprep.mubr.bf16.mxu0 %v2284
        %2589 = vmatmul.mubr.bf16.gmra.mxu0 %v2135
        %v2590 = vpop.f32.mrf.mxu0
        %v2591 = vadd.f32 0.0, %v2590
        %v2592 = vpop.f32.mrf.mxu0
        %v2593 = vadd.f32 0.0, %v2592
        %v2594 = vpop.f32.mrf.mxu0
        %v2595 = vadd.f32 0.0, %v2594
        %v2596 = vpop.f32.mrf.mxu0
        %v2597 = vadd.f32 0.0, %v2596
        %2598 = vmatprep.mubr.bf16.mxu0 %v2287
        %2599 = vmatmul.mubr.bf16.gmra.mxu0 %v2137
        %v2600 = vpop.f32.mrf.mxu0
        %v2601 = vadd.f32 0.0, %v2600
        %v2602 = vpop.f32.mrf.mxu0
        %v2603 = vadd.f32 0.0, %v2602
        %v2604 = vpop.f32.mrf.mxu0
        %v2605 = vadd.f32 0.0, %v2604
        %v2606 = vpop.f32.mrf.mxu0
        %v2607 = vadd.f32 0.0, %v2606
        %2608 = vmatprep.mubr.bf16.mxu0 %v2290
        %2609 = vmatmul.mubr.bf16.gmra.mxu0 %v2139
        %v2610 = vpop.f32.mrf.mxu0
        %v2611 = vadd.f32 0.0, %v2610
        %v2612 = vpop.f32.mrf.mxu0
        %v2613 = vadd.f32 0.0, %v2612
        %v2614 = vpop.f32.mrf.mxu0
        %v2615 = vadd.f32 0.0, %v2614
        %v2616 = vpop.f32.mrf.mxu0
        %v2617 = vadd.f32 0.0, %v2616
        %2618 = vmatprep.mubr.bf16.mxu0 %v2293
        %2619 = vmatmul.mubr.bf16.gmra.mxu0 %v2141
        %v2620 = vpop.f32.mrf.mxu0
        %v2621 = vadd.f32 0.0, %v2620
        %v2622 = vpop.f32.mrf.mxu0
        %v2623 = vadd.f32 0.0, %v2622
        %v2624 = vpop.f32.mrf.mxu0
        %v2625 = vadd.f32 0.0, %v2624
        %v2626 = vpop.f32.mrf.mxu0
        %v2627 = vadd.f32 0.0, %v2626
        %2628 = vmatprep.mubr.bf16.mxu0 %v2296
        %2629 = vmatmul.mubr.bf16.gmra.mxu0 %v2143
        %v2630 = vpop.f32.mrf.mxu0
        %v2631 = vadd.f32 0.0, %v2630
        %v2632 = vpop.f32.mrf.mxu0
        %v2633 = vadd.f32 0.0, %v2632
        %v2634 = vpop.f32.mrf.mxu0
        %v2635 = vadd.f32 0.0, %v2634
        %v2636 = vpop.f32.mrf.mxu0
        %v2637 = vadd.f32 0.0, %v2636
        %2638 = vmatprep.mubr.bf16.mxu0 %v2299
        %2639 = vmatmul.mubr.bf16.gmra.mxu0 %v2145
        %v2640 = vpop.f32.mrf.mxu0
        %v2641 = vadd.f32 0.0, %v2640
        %v2642 = vpop.f32.mrf.mxu0
        %v2643 = vadd.f32 0.0, %v2642
        %v2644 = vpop.f32.mrf.mxu0
        %v2645 = vadd.f32 0.0, %v2644
        %v2646 = vpop.f32.mrf.mxu0
        %v2647 = vadd.f32 0.0, %v2646
        %2648 = vmatprep.mubr.bf16.mxu0 %v2302
        %2649 = vmatmul.mubr.bf16.gmra.mxu0 %v2147
        %v2650 = vpop.f32.mrf.mxu0
        %v2651 = vadd.f32 0.0, %v2650
        %v2652 = vpop.f32.mrf.mxu0
        %v2653 = vadd.f32 0.0, %v2652
        %v2654 = vpop.f32.mrf.mxu0
        %v2655 = vadd.f32 0.0, %v2654
        %v2656 = vpop.f32.mrf.mxu0
        %v2657 = vadd.f32 0.0, %v2656
        %2658 = vmatprep.mubr.bf16.mxu0 %v2305
        %2659 = vmatmul.mubr.bf16.gmra.mxu0 %v2149
        %v2660 = vpop.f32.mrf.mxu0
        %v2661 = vadd.f32 0.0, %v2660
        %v2662 = vpop.f32.mrf.mxu0
        %v2663 = vadd.f32 0.0, %v2662
        %v2664 = vpop.f32.mrf.mxu0
        %v2665 = vadd.f32 0.0, %v2664
        %v2666 = vpop.f32.mrf.mxu0
        %v2667 = vadd.f32 0.0, %v2666
        %2668 = vmatprep.mubr.bf16.mxu0 %v2308
        %2669 = vmatmul.mubr.bf16.gmra.mxu0 %v2151
        %v2670 = vpop.f32.mrf.mxu0
        %v2671 = vadd.f32 0.0, %v2670
        %v2672 = vpop.f32.mrf.mxu0
        %v2673 = vadd.f32 0.0, %v2672
        %v2674 = vpop.f32.mrf.mxu0
        %v2675 = vadd.f32 0.0, %v2674
        %v2676 = vpop.f32.mrf.mxu0
        %v2677 = vadd.f32 0.0, %v2676
        %2678 = vmatprep.mubr.bf16.mxu0 %v2311
        %2679 = vmatmul.mubr.bf16.gmra.mxu0 %v2153
        %v2680 = vpop.f32.mrf.mxu0
        %v2681 = vadd.f32 0.0, %v2680
        %v2682 = vpop.f32.mrf.mxu0
        %v2683 = vadd.f32 0.0, %v2682
        %v2684 = vpop.f32.mrf.mxu0
        %v2685 = vadd.f32 0.0, %v2684
        %v2686 = vpop.f32.mrf.mxu0
        %v2687 = vadd.f32 0.0, %v2686
        %2688 = vmatprep.mubr.bf16.mxu0 %v2314
        %2689 = vmatmul.mubr.bf16.gmra.mxu0 %v2155
        %v2690 = vpop.f32.mrf.mxu0
        %v2691 = vadd.f32 0.0, %v2690
        %v2692 = vpop.f32.mrf.mxu0
        %v2693 = vadd.f32 0.0, %v2692
        %v2694 = vpop.f32.mrf.mxu0
        %v2695 = vadd.f32 0.0, %v2694
        %v2696 = vpop.f32.mrf.mxu0
        %v2697 = vadd.f32 0.0, %v2696
        %2698 = vmatprep.mubr.bf16.mxu0 %v2317
        %2699 = vmatmul.mubr.bf16.gmra.mxu0 %v2157
        %v2700 = vpop.f32.mrf.mxu0
        %v2701 = vadd.f32 0.0, %v2700
        %v2702 = vpop.f32.mrf.mxu0
        %v2703 = vadd.f32 0.0, %v2702
        %v2704 = vpop.f32.mrf.mxu0
        %v2705 = vadd.f32 0.0, %v2704
        %v2706 = vpop.f32.mrf.mxu0
        %v2707 = vadd.f32 0.0, %v2706
        %2708 = vmatprep.mubr.bf16.mxu0 %v2320
        %2709 = vmatmul.mubr.bf16.gmra.mxu0 %v2159
        %v2710 = vpop.f32.mrf.mxu0
        %v2711 = vadd.f32 0.0, %v2710
        %v2712 = vpop.f32.mrf.mxu0
        %v2713 = vadd.f32 0.0, %v2712
        %v2714 = vpop.f32.mrf.mxu0
        %v2715 = vadd.f32 0.0, %v2714
        %v2716 = vpop.f32.mrf.mxu0
        %v2717 = vadd.f32 0.0, %v2716
        %2718 = vmatprep.mubr.bf16.mxu0 %v2323
        %2719 = vmatmul.mubr.bf16.gmra.mxu0 %v2161
        %v2720 = vpop.f32.mrf.mxu0
        %v2721 = vadd.f32 0.0, %v2720
        %v2722 = vpop.f32.mrf.mxu0
        %v2723 = vadd.f32 0.0, %v2722
        %v2724 = vpop.f32.mrf.mxu0
        %v2725 = vadd.f32 0.0, %v2724
        %v2726 = vpop.f32.mrf.mxu0
        %v2727 = vadd.f32 0.0, %v2726
        %2728 = vmatprep.mubr.bf16.mxu0 %v2326
        %2729 = vmatmul.mubr.bf16.gmra.mxu0 %v2163
        %v2730 = vpop.f32.mrf.mxu0
        %v2731 = vadd.f32 0.0, %v2730
        %v2732 = vpop.f32.mrf.mxu0
        %v2733 = vadd.f32 0.0, %v2732
        %v2734 = vpop.f32.mrf.mxu0
        %v2735 = vadd.f32 0.0, %v2734
        %v2736 = vpop.f32.mrf.mxu0
        %v2737 = vadd.f32 0.0, %v2736
        %2738 = vmatprep.mubr.bf16.mxu0 %v2329
        %2739 = vmatmul.mubr.bf16.gmra.mxu0 %v2165
        %v2740 = vpop.f32.mrf.mxu0
        %v2741 = vadd.f32 0.0, %v2740
        %v2742 = vpop.f32.mrf.mxu0
        %v2743 = vadd.f32 0.0, %v2742
        %v2744 = vpop.f32.mrf.mxu0
        %v2745 = vadd.f32 0.0, %v2744
        %v2746 = vpop.f32.mrf.mxu0
        %v2747 = vadd.f32 0.0, %v2746
        %2748 = vmatprep.mubr.bf16.mxu0 %v2332
        %2749 = vmatmul.mubr.bf16.gmra.mxu0 %v2167
        %v2750 = vpop.f32.mrf.mxu0
        %v2751 = vadd.f32 0.0, %v2750
        %v2752 = vpop.f32.mrf.mxu0
        %v2753 = vadd.f32 0.0, %v2752
        %v2754 = vpop.f32.mrf.mxu0
        %v2755 = vadd.f32 0.0, %v2754
        %v2756 = vpop.f32.mrf.mxu0
        %v2757 = vadd.f32 0.0, %v2756
        %2758 = vmatprep.mubr.bf16.mxu0 %v2335
        %2759 = vmatmul.mubr.bf16.gmra.mxu0 %v2169
        %v2760 = vpop.f32.mrf.mxu0
        %v2761 = vadd.f32 0.0, %v2760
        %v2762 = vpop.f32.mrf.mxu0
        %v2763 = vadd.f32 0.0, %v2762
        %v2764 = vpop.f32.mrf.mxu0
        %v2765 = vadd.f32 0.0, %v2764
        %v2766 = vpop.f32.mrf.mxu0
        %v2767 = vadd.f32 0.0, %v2766
        %2768 = vmatprep.mubr.bf16.mxu0 %v2338
        %2769 = vmatmul.mubr.bf16.gmra.mxu0 %v2171
        %v2770 = vpop.f32.mrf.mxu0
        %v2771 = vadd.f32 0.0, %v2770
        %v2772 = vpop.f32.mrf.mxu0
        %v2773 = vadd.f32 0.0, %v2772
        %v2774 = vpop.f32.mrf.mxu0
        %v2775 = vadd.f32 0.0, %v2774
        %v2776 = vpop.f32.mrf.mxu0
        %v2777 = vadd.f32 0.0, %v2776
        %2778 = vmatprep.mubr.bf16.mxu0 %v2341
        %2779 = vmatmul.mubr.bf16.gmra.mxu0 %v2173
        %v2780 = vpop.f32.mrf.mxu0
        %v2781 = vadd.f32 0.0, %v2780
        %v2782 = vpop.f32.mrf.mxu0
        %v2783 = vadd.f32 0.0, %v2782
        %v2784 = vpop.f32.mrf.mxu0
        %v2785 = vadd.f32 0.0, %v2784
        %v2786 = vpop.f32.mrf.mxu0
        %v2787 = vadd.f32 0.0, %v2786
        %2788 = vmatprep.mubr.bf16.mxu0 %v2344
        %2789 = vmatmul.mubr.bf16.gmra.mxu0 %v2175
        %v2790 = vpop.f32.mrf.mxu0
        %v2791 = vadd.f32 0.0, %v2790
        %v2792 = vpop.f32.mrf.mxu0
        %v2793 = vadd.f32 0.0, %v2792
        %v2794 = vpop.f32.mrf.mxu0
        %v2795 = vadd.f32 0.0, %v2794
        %v2796 = vpop.f32.mrf.mxu0
        %v2797 = vadd.f32 0.0, %v2796
        %2798 = vdwg.mxu0
        %v2799 = vpack.c.bf16 %v2385, %v2381
        %v2800 = vpack.c.bf16 %v2387, %v2383
        %v2801 = vpack.c.bf16 %v2395, %v2391
        %v2802 = vpack.c.bf16 %v2397, %v2393
        %v2803 = vpack.c.bf16 %v2405, %v2401
        %v2804 = vpack.c.bf16 %v2407, %v2403
        %v2805 = vpack.c.bf16 %v2415, %v2411
        %v2806 = vpack.c.bf16 %v2417, %v2413
        %v2807 = vpack.c.bf16 %v2425, %v2421
        %v2808 = vpack.c.bf16 %v2427, %v2423
        %v2809 = vpack.c.bf16 %v2435, %v2431
        %v2810 = vpack.c.bf16 %v2437, %v2433
        %v2811 = vpack.c.bf16 %v2445, %v2441
        %v2812 = vpack.c.bf16 %v2447, %v2443
        %v2813 = vpack.c.bf16 %v2455, %v2451
        %v2814 = vpack.c.bf16 %v2457, %v2453
        %v2815 = vpack.c.bf16 %v2465, %v2461
        %v2816 = vpack.c.bf16 %v2467, %v2463
        %v2817 = vpack.c.bf16 %v2475, %v2471
        %v2818 = vpack.c.bf16 %v2477, %v2473
        %v2819 = vpack.c.bf16 %v2485, %v2481
        %v2820 = vpack.c.bf16 %v2487, %v2483
        %v2821 = vpack.c.bf16 %v2495, %v2491
        %v2822 = vpack.c.bf16 %v2497, %v2493
        %v2823 = vpack.c.bf16 %v2505, %v2501
        %v2824 = vpack.c.bf16 %v2507, %v2503
        %v2825 = vpack.c.bf16 %v2515, %v2511
        %v2826 = vpack.c.bf16 %v2517, %v2513
        %v2827 = vpack.c.bf16 %v2525, %v2521
        %v2828 = vpack.c.bf16 %v2527, %v2523
        %v2829 = vpack.c.bf16 %v2535, %v2531
        %v2830 = vpack.c.bf16 %v2537, %v2533
        %v2831 = vpack.c.bf16 %v2545, %v2541
        %v2832 = vpack.c.bf16 %v2547, %v2543
        %v2833 = vpack.c.bf16 %v2555, %v2551
        %v2834 = vpack.c.bf16 %v2557, %v2553
        %v2835 = vpack.c.bf16 %v2565, %v2561
        %v2836 = vpack.c.bf16 %v2567, %v2563
        %v2837 = vpack.c.bf16 %v2575, %v2571
        %v2838 = vpack.c.bf16 %v2577, %v2573
        %v2839 = vpack.c.bf16 %v2585, %v2581
        %v2840 = vpack.c.bf16 %v2587, %v2583
        %v2841 = vpack.c.bf16 %v2595, %v2591
        %v2842 = vpack.c.bf16 %v2597, %v2593
        %v2843 = vpack.c.bf16 %v2605, %v2601
        %v2844 = vpack.c.bf16 %v2607, %v2603
        %v2845 = vpack.c.bf16 %v2615, %v2611
        %v2846 = vpack.c.bf16 %v2617, %v2613
        %v2847 = vpack.c.bf16 %v2625, %v2621
        %v2848 = vpack.c.bf16 %v2627, %v2623
        %v2849 = vpack.c.bf16 %v2635, %v2631
        %v2850 = vpack.c.bf16 %v2637, %v2633
        %v2851 = vpack.c.bf16 %v2645, %v2641
        %v2852 = vpack.c.bf16 %v2647, %v2643
        %v2853 = vpack.c.bf16 %v2655, %v2651
        %v2854 = vpack.c.bf16 %v2657, %v2653
        %v2855 = vpack.c.bf16 %v2665, %v2661
        %v2856 = vpack.c.bf16 %v2667, %v2663
        %v2857 = vpack.c.bf16 %v2675, %v2671
        %v2858 = vpack.c.bf16 %v2677, %v2673
        %v2859 = vpack.c.bf16 %v2685, %v2681
        %v2860 = vpack.c.bf16 %v2687, %v2683
        %v2861 = vpack.c.bf16 %v2695, %v2691
        %v2862 = vpack.c.bf16 %v2697, %v2693
        %v2863 = vpack.c.bf16 %v2705, %v2701
        %v2864 = vpack.c.bf16 %v2707, %v2703
        %v2865 = vpack.c.bf16 %v2715, %v2711
        %v2866 = vpack.c.bf16 %v2717, %v2713
        %v2867 = vpack.c.bf16 %v2725, %v2721
        %v2868 = vpack.c.bf16 %v2727, %v2723
        %v2869 = vpack.c.bf16 %v2735, %v2731
        %v2870 = vpack.c.bf16 %v2737, %v2733
        %v2871 = vpack.c.bf16 %v2745, %v2741
        %v2872 = vpack.c.bf16 %v2747, %v2743
        %v2873 = vpack.c.bf16 %v2755, %v2751
        %v2874 = vpack.c.bf16 %v2757, %v2753
        %v2875 = vpack.c.bf16 %v2765, %v2761
        %v2876 = vpack.c.bf16 %v2767, %v2763
        %v2877 = vpack.c.bf16 %v2775, %v2771
        %v2878 = vpack.c.bf16 %v2777, %v2773
        %v2879 = vpack.c.bf16 %v2785, %v2781
        %v2880 = vpack.c.bf16 %v2787, %v2783
        %v2881 = vpack.c.bf16 %v2795, %v2791
        %v2882 = vpack.c.bf16 %v2797, %v2793
        %v2884 = vsel %vm2219, %v1164, 0
        %v2887 = vsel %vm2219, %v1166, 0
        %v2890 = vsel %vm2219, %v1168, 0
        %v2893 = vsel %vm2219, %v1170, 0
        %v2896 = vsel %vm2219, %v1172, 0
        %v2899 = vsel %vm2219, %v1174, 0
        %v2902 = vsel %vm2219, %v1176, 0
        %v2905 = vsel %vm2219, %v1178, 0
        %v2908 = vsel %vm2219, %v1180, 0
        %v2911 = vsel %vm2219, %v1182, 0
        %v2914 = vsel %vm2219, %v1184, 0
        %v2917 = vsel %vm2219, %v1186, 0
        %v2920 = vsel %vm2219, %v1188, 0
        %v2923 = vsel %vm2219, %v1190, 0
        %2925 = vmatprep.subr.bf16.mxu0 %v2814
        %2926 = vmatpush1.bf16.msra.mxu0 %v2813
        %2927 = vmatprep.subr.bf16.mxu0 %v2812
        %2928 = vmatpush1.bf16.msra.mxu0 %v2811
        %2929 = vmatprep.subr.bf16.mxu0 %v2810
        %2930 = vmatpush1.bf16.msra.mxu0 %v2809
        %2931 = vmatprep.subr.bf16.mxu0 %v2808
        %2932 = vmatpush1.bf16.msra.mxu0 %v2807
        %2933 = vmatprep.subr.bf16.mxu0 %v2806
        %2934 = vmatpush1.bf16.msra.mxu0 %v2805
        %2935 = vmatprep.subr.bf16.mxu0 %v2804
        %2936 = vmatpush1.bf16.msra.mxu0 %v2803
        %2937 = vmatprep.subr.bf16.mxu0 %v2802
        %2938 = vmatpush1.bf16.msra.mxu0 %v2801
        %2939 = vmatprep.subr.bf16.mxu0 %v2800
        %2940 = vmatpush1.bf16.msra.mxu0 %v2799
        %2941 = vmatprep.subr.bf16.mxu0 0
        %2942 = vmatpush2.bf16.msra.mxu0 0
        %2943 = vmatprep.subr.bf16.mxu0 0
        %2944 = vmatpush2.bf16.msra.mxu0 0
        %2945 = vmatprep.subr.bf16.mxu0 %v2826
        %2946 = vmatpush2.bf16.msra.mxu0 %v2825
        %2947 = vmatprep.subr.bf16.mxu0 %v2824
        %2948 = vmatpush2.bf16.msra.mxu0 %v2823
        %2949 = vmatprep.subr.bf16.mxu0 %v2822
        %2950 = vmatpush2.bf16.msra.mxu0 %v2821
        %2951 = vmatprep.subr.bf16.mxu0 %v2820
        %2952 = vmatpush2.bf16.msra.mxu0 %v2819
        %2953 = vmatprep.subr.bf16.mxu0 %v2818
        %2954 = vmatpush2.bf16.msra.mxu0 %v2817
        %2955 = vmatprep.subr.bf16.mxu0 %v2816
        %2956 = vmatpush2.bf16.msra.mxu0 %v2815
        %2957 = vmatprep.mubr.bf16.mxu0 %v2884
        %2958 = vmatmul.mubr.bf16.gmra.mxu0 %v1163
        %v2959 = vpop.f32.mrf.mxu0
        %v2960 = vadd.f32 0.0, %v2959
        %v2961 = vpop.f32.mrf.mxu0
        %v2962 = vadd.f32 0.0, %v2961
        %v2963 = vpop.f32.mrf.mxu0
        %v2964 = vadd.f32 0.0, %v2963
        %v2965 = vpop.f32.mrf.mxu0
        %v2966 = vadd.f32 0.0, %v2965
        %2967 = vmatprep.mubr.bf16.mxu0 %v2887
        %2968 = vmatmul.mubr.bf16.gmra.mxu0 %v1165
        %v2969 = vpop.f32.mrf.mxu0
        %v2970 = vadd.f32 0.0, %v2969
        %v2971 = vpop.f32.mrf.mxu0
        %v2972 = vadd.f32 0.0, %v2971
        %v2973 = vpop.f32.mrf.mxu0
        %v2974 = vadd.f32 0.0, %v2973
        %v2975 = vpop.f32.mrf.mxu0
        %v2976 = vadd.f32 0.0, %v2975
        %2977 = vmatprep.mubr.bf16.mxu0 %v2890
        %2978 = vmatmul.mubr.bf16.gmra.mxu0 %v1167
        %v2979 = vpop.f32.mrf.mxu0
        %v2980 = vadd.f32 0.0, %v2979
        %v2981 = vpop.f32.mrf.mxu0
        %v2982 = vadd.f32 0.0, %v2981
        %v2983 = vpop.f32.mrf.mxu0
        %v2984 = vadd.f32 0.0, %v2983
        %v2985 = vpop.f32.mrf.mxu0
        %v2986 = vadd.f32 0.0, %v2985
        %2987 = vmatprep.mubr.bf16.mxu0 %v2893
        %2988 = vmatmul.mubr.bf16.gmra.mxu0 %v1169
        %v2989 = vpop.f32.mrf.mxu0
        %v2990 = vadd.f32 0.0, %v2989
        %v2991 = vpop.f32.mrf.mxu0
        %v2992 = vadd.f32 0.0, %v2991
        %v2993 = vpop.f32.mrf.mxu0
        %v2994 = vadd.f32 0.0, %v2993
        %v2995 = vpop.f32.mrf.mxu0
        %v2996 = vadd.f32 0.0, %v2995
        %2997 = vmatprep.mubr.bf16.mxu0 %v2896
        %2998 = vmatmul.mubr.bf16.gmra.mxu0 %v1171
        %v2999 = vpop.f32.mrf.mxu0
        %v3000 = vadd.f32 0.0, %v2999
        %v3001 = vpop.f32.mrf.mxu0
        %v3002 = vadd.f32 0.0, %v3001
        %v3003 = vpop.f32.mrf.mxu0
        %v3004 = vadd.f32 0.0, %v3003
        %v3005 = vpop.f32.mrf.mxu0
        %v3006 = vadd.f32 0.0, %v3005
        %3007 = vmatprep.mubr.bf16.mxu0 %v2899
        %3008 = vmatmul.mubr.bf16.gmra.mxu0 %v1173
        %v3009 = vpop.f32.mrf.mxu0
        %v3010 = vadd.f32 0.0, %v3009
        %v3011 = vpop.f32.mrf.mxu0
        %v3012 = vadd.f32 0.0, %v3011
        %v3013 = vpop.f32.mrf.mxu0
        %v3014 = vadd.f32 0.0, %v3013
        %v3015 = vpop.f32.mrf.mxu0
        %v3016 = vadd.f32 0.0, %v3015
        %3017 = vmatprep.mubr.bf16.mxu0 %v2902
        %3018 = vmatmul.mubr.bf16.gmra.mxu0 %v1175
        %v3019 = vpop.f32.mrf.mxu0
        %v3020 = vadd.f32 0.0, %v3019
        %v3021 = vpop.f32.mrf.mxu0
        %v3022 = vadd.f32 0.0, %v3021
        %v3023 = vpop.f32.mrf.mxu0
        %v3024 = vadd.f32 0.0, %v3023
        %v3025 = vpop.f32.mrf.mxu0
        %v3026 = vadd.f32 0.0, %v3025
        %3027 = vmatprep.mubr.bf16.mxu0 %v2905
        %3028 = vmatmul.mubr.bf16.gmra.mxu0 %v1177
        %v3029 = vpop.f32.mrf.mxu0
        %v3030 = vadd.f32 0.0, %v3029
        %v3031 = vpop.f32.mrf.mxu0
        %v3032 = vadd.f32 0.0, %v3031
        %v3033 = vpop.f32.mrf.mxu0
        %v3034 = vadd.f32 0.0, %v3033
        %v3035 = vpop.f32.mrf.mxu0
        %v3036 = vadd.f32 0.0, %v3035
        %3037 = vmatprep.mubr.bf16.mxu0 %v2908
        %3038 = vmatmul.mubr.bf16.gmra.mxu0 %v1179
        %v3039 = vpop.f32.mrf.mxu0
        %v3040 = vadd.f32 0.0, %v3039
        %v3041 = vpop.f32.mrf.mxu0
        %v3042 = vadd.f32 0.0, %v3041
        %v3043 = vpop.f32.mrf.mxu0
        %v3044 = vadd.f32 0.0, %v3043
        %v3045 = vpop.f32.mrf.mxu0
        %v3046 = vadd.f32 0.0, %v3045
        %3047 = vmatprep.mubr.bf16.mxu0 %v2911
        %3048 = vmatmul.mubr.bf16.gmra.mxu0 %v1181
        %v3049 = vpop.f32.mrf.mxu0
        %v3050 = vadd.f32 0.0, %v3049
        %v3051 = vpop.f32.mrf.mxu0
        %v3052 = vadd.f32 0.0, %v3051
        %v3053 = vpop.f32.mrf.mxu0
        %v3054 = vadd.f32 0.0, %v3053
        %v3055 = vpop.f32.mrf.mxu0
        %v3056 = vadd.f32 0.0, %v3055
        %3057 = vmatprep.mubr.bf16.mxu0 %v2914
        %3058 = vmatmul.mubr.bf16.gmra.mxu0 %v1183
        %v3059 = vpop.f32.mrf.mxu0
        %v3060 = vadd.f32 0.0, %v3059
        %v3061 = vpop.f32.mrf.mxu0
        %v3062 = vadd.f32 0.0, %v3061
        %v3063 = vpop.f32.mrf.mxu0
        %v3064 = vadd.f32 0.0, %v3063
        %v3065 = vpop.f32.mrf.mxu0
        %v3066 = vadd.f32 0.0, %v3065
        %3067 = vmatprep.mubr.bf16.mxu0 %v2917
        %3068 = vmatmul.mubr.bf16.gmra.mxu0 %v1185
        %v3069 = vpop.f32.mrf.mxu0
        %v3070 = vadd.f32 0.0, %v3069
        %v3071 = vpop.f32.mrf.mxu0
        %v3072 = vadd.f32 0.0, %v3071
        %v3073 = vpop.f32.mrf.mxu0
        %v3074 = vadd.f32 0.0, %v3073
        %v3075 = vpop.f32.mrf.mxu0
        %v3076 = vadd.f32 0.0, %v3075
        %3077 = vmatprep.mubr.bf16.mxu0 %v2920
        %3078 = vmatmul.mubr.bf16.gmra.mxu0 %v1187
        %v3079 = vpop.f32.mrf.mxu0
        %v3080 = vadd.f32 0.0, %v3079
        %v3081 = vpop.f32.mrf.mxu0
        %v3082 = vadd.f32 0.0, %v3081
        %v3083 = vpop.f32.mrf.mxu0
        %v3084 = vadd.f32 0.0, %v3083
        %v3085 = vpop.f32.mrf.mxu0
        %v3086 = vadd.f32 0.0, %v3085
        %3087 = vmatprep.mubr.bf16.mxu0 %v2923
        %3088 = vmatmul.mubr.bf16.gmra.mxu0 %v1189
        %v3089 = vpop.f32.mrf.mxu0
        %v3090 = vadd.f32 0.0, %v3089
        %v3091 = vpop.f32.mrf.mxu0
        %v3092 = vadd.f32 0.0, %v3091
        %v3093 = vpop.f32.mrf.mxu0
        %v3094 = vadd.f32 0.0, %v3093
        %v3095 = vpop.f32.mrf.mxu0
        %v3096 = vadd.f32 0.0, %v3095
        %3097 = vdwg.mxu0
        %3098 = vst [vmem:[%s130] sm:$0xff] %v2960
        %3099 = vst.msk [vmem:[%s130 + $0x8] sm:$0xff] %vm2219, %v2962
        %3100 = vst [vmem:[%s130 + $0x10] sm:$0xff] %v2964
        %3101 = vst.msk [vmem:[%s130 + $0x18] sm:$0xff] %vm2219, %v2966
        %3102 = vst [vmem:[%s130 + $0x20] sm:$0xff] %v2970
        %3103 = vst.msk [vmem:[%s130 + $0x28] sm:$0xff] %vm2219, %v2972
        %3104 = vst [vmem:[%s130 + $0x30] sm:$0xff] %v2974
        %3105 = vst.msk [vmem:[%s130 + $0x38] sm:$0xff] %vm2219, %v2976
        %3106 = vst [vmem:[%s130 + $0x40] sm:$0xff] %v2980
        %3107 = vst.msk [vmem:[%s130 + $0x48] sm:$0xff] %vm2219, %v2982
        %3108 = vst [vmem:[%s130 + $0x50] sm:$0xff] %v2984
        %3109 = vst.msk [vmem:[%s130 + $0x58] sm:$0xff] %vm2219, %v2986
        %3110 = vst [vmem:[%s130 + $0x60] sm:$0xff] %v2990
        %3111 = vst.msk [vmem:[%s130 + $0x68] sm:$0xff] %vm2219, %v2992
        %3112 = vst [vmem:[%s130 + $0x70] sm:$0xff] %v2994
        %3113 = vst.msk [vmem:[%s130 + $0x78] sm:$0xff] %vm2219, %v2996
        %3114 = vst [vmem:[%s130 + $0x80] sm:$0xff] %v3000
        %3115 = vst.msk [vmem:[%s130 + $0x88] sm:$0xff] %vm2219, %v3002
        %3116 = vst [vmem:[%s130 + $0x90] sm:$0xff] %v3004
        %3117 = vst.msk [vmem:[%s130 + $0x98] sm:$0xff] %vm2219, %v3006
        %3118 = vst [vmem:[%s130 + $0xa0] sm:$0xff] %v3010
        %3119 = vst.msk [vmem:[%s130 + $0xa8] sm:$0xff] %vm2219, %v3012
        %3120 = vst [vmem:[%s130 + $0xb0] sm:$0xff] %v3014
        %3121 = vst.msk [vmem:[%s130 + $0xb8] sm:$0xff] %vm2219, %v3016
        %3122 = vst [vmem:[%s130 + $0xc0] sm:$0xff] %v3020
        %3123 = vst.msk [vmem:[%s130 + $0xc8] sm:$0xff] %vm2219, %v3022
        %3124 = vst [vmem:[%s130 + $0xd0] sm:$0xff] %v3024
        %3125 = vst.msk [vmem:[%s130 + $0xd8] sm:$0xff] %vm2219, %v3026
        %3126 = vst [vmem:[%s130 + $0xe0] sm:$0xff] %v3030
        %3127 = vst.msk [vmem:[%s130 + $0xe8] sm:$0xff] %vm2219, %v3032
        %3128 = vst [vmem:[%s130 + $0xf0] sm:$0xff] %v3034
        %3129 = vst.msk [vmem:[%s130 + $0xf8] sm:$0xff] %vm2219, %v3036
        %3130 = vst [vmem:[%s130 + $0x100] sm:$0xff] %v3040
        %3131 = vst.msk [vmem:[%s130 + $0x108] sm:$0xff] %vm2219, %v3042
        %3132 = vst [vmem:[%s130 + $0x110] sm:$0xff] %v3044
        %3133 = vst.msk [vmem:[%s130 + $0x118] sm:$0xff] %vm2219, %v3046
        %3134 = vst [vmem:[%s130 + $0x120] sm:$0xff] %v3050
        %3135 = vst.msk [vmem:[%s130 + $0x128] sm:$0xff] %vm2219, %v3052
        %3136 = vst [vmem:[%s130 + $0x130] sm:$0xff] %v3054
        %3137 = vst.msk [vmem:[%s130 + $0x138] sm:$0xff] %vm2219, %v3056
        %3138 = vst [vmem:[%s130 + $0x140] sm:$0xff] %v3060
        %3139 = vst.msk [vmem:[%s130 + $0x148] sm:$0xff] %vm2219, %v3062
        %3140 = vst [vmem:[%s130 + $0x150] sm:$0xff] %v3064
        %3141 = vst.msk [vmem:[%s130 + $0x158] sm:$0xff] %vm2219, %v3066
        %3142 = vst [vmem:[%s130 + $0x160] sm:$0xff] %v3070
        %3143 = vst.msk [vmem:[%s130 + $0x168] sm:$0xff] %vm2219, %v3072
        %3144 = vst [vmem:[%s130 + $0x170] sm:$0xff] %v3074
        %3145 = vst.msk [vmem:[%s130 + $0x178] sm:$0xff] %vm2219, %v3076
        %3146 = vst [vmem:[%s130 + $0x180] sm:$0xff] %v3080
        %3147 = vst.msk [vmem:[%s130 + $0x188] sm:$0xff] %vm2219, %v3082
        %3148 = vst [vmem:[%s130 + $0x190] sm:$0xff] %v3084
        %3149 = vst.msk [vmem:[%s130 + $0x198] sm:$0xff] %vm2219, %v3086
        %3150 = vst [vmem:[%s130 + $0x1a0] sm:$0xff] %v3090
        %3151 = vst.msk [vmem:[%s130 + $0x1a8] sm:$0xff] %vm2219, %v3092
        %3152 = vst [vmem:[%s130 + $0x1b0] sm:$0xff] %v3094
        %3153 = vst.msk [vmem:[%s130 + $0x1b8] sm:$0xff] %vm2219, %v3096
        %3154 = vmatprep.subr.bf16.mxu0 %v2842
        %3155 = vmatpush1.bf16.msra.mxu0 %v2841
        %3156 = vmatprep.subr.bf16.mxu0 %v2840
        %3157 = vmatpush1.bf16.msra.mxu0 %v2839
        %3158 = vmatprep.subr.bf16.mxu0 %v2838
        %3159 = vmatpush1.bf16.msra.mxu0 %v2837
        %3160 = vmatprep.subr.bf16.mxu0 %v2836
        %3161 = vmatpush1.bf16.msra.mxu0 %v2835
        %3162 = vmatprep.subr.bf16.mxu0 %v2834
        %3163 = vmatpush1.bf16.msra.mxu0 %v2833
        %3164 = vmatprep.subr.bf16.mxu0 %v2832
        %3165 = vmatpush1.bf16.msra.mxu0 %v2831
        %3166 = vmatprep.subr.bf16.mxu0 %v2830
        %3167 = vmatpush1.bf16.msra.mxu0 %v2829
        %3168 = vmatprep.subr.bf16.mxu0 %v2828
        %3169 = vmatpush1.bf16.msra.mxu0 %v2827
        %3170 = vmatprep.subr.bf16.mxu0 0
        %3171 = vmatpush2.bf16.msra.mxu0 0
        %3172 = vmatprep.subr.bf16.mxu0 0
        %3173 = vmatpush2.bf16.msra.mxu0 0
        %3174 = vmatprep.subr.bf16.mxu0 %v2854
        %3175 = vmatpush2.bf16.msra.mxu0 %v2853
        %3176 = vmatprep.subr.bf16.mxu0 %v2852
        %3177 = vmatpush2.bf16.msra.mxu0 %v2851
        %3178 = vmatprep.subr.bf16.mxu0 %v2850
        %3179 = vmatpush2.bf16.msra.mxu0 %v2849
        %3180 = vmatprep.subr.bf16.mxu0 %v2848
        %3181 = vmatpush2.bf16.msra.mxu0 %v2847
        %3182 = vmatprep.subr.bf16.mxu0 %v2846
        %3183 = vmatpush2.bf16.msra.mxu0 %v2845
        %3184 = vmatprep.subr.bf16.mxu0 %v2844
        %3185 = vmatpush2.bf16.msra.mxu0 %v2843
        %3186 = vmatprep.mubr.bf16.mxu0 %v2884
        %3187 = vmatmul.mubr.bf16.gmra.mxu0 %v1163
        %v3188 = vpop.f32.mrf.mxu0
        %v3189 = vadd.f32 0.0, %v3188
        %v3190 = vpop.f32.mrf.mxu0
        %v3191 = vadd.f32 0.0, %v3190
        %v3192 = vpop.f32.mrf.mxu0
        %v3193 = vadd.f32 0.0, %v3192
        %v3194 = vpop.f32.mrf.mxu0
        %v3195 = vadd.f32 0.0, %v3194
        %3196 = vmatprep.mubr.bf16.mxu0 %v2887
        %3197 = vmatmul.mubr.bf16.gmra.mxu0 %v1165
        %v3198 = vpop.f32.mrf.mxu0
        %v3199 = vadd.f32 0.0, %v3198
        %v3200 = vpop.f32.mrf.mxu0
        %v3201 = vadd.f32 0.0, %v3200
        %v3202 = vpop.f32.mrf.mxu0
        %v3203 = vadd.f32 0.0, %v3202
        %v3204 = vpop.f32.mrf.mxu0
        %v3205 = vadd.f32 0.0, %v3204
        %3206 = vmatprep.mubr.bf16.mxu0 %v2890
        %3207 = vmatmul.mubr.bf16.gmra.mxu0 %v1167
        %v3208 = vpop.f32.mrf.mxu0
        %v3209 = vadd.f32 0.0, %v3208
        %v3210 = vpop.f32.mrf.mxu0
        %v3211 = vadd.f32 0.0, %v3210
        %v3212 = vpop.f32.mrf.mxu0
        %v3213 = vadd.f32 0.0, %v3212
        %v3214 = vpop.f32.mrf.mxu0
        %v3215 = vadd.f32 0.0, %v3214
        %3216 = vmatprep.mubr.bf16.mxu0 %v2893
        %3217 = vmatmul.mubr.bf16.gmra.mxu0 %v1169
        %v3218 = vpop.f32.mrf.mxu0
        %v3219 = vadd.f32 0.0, %v3218
        %v3220 = vpop.f32.mrf.mxu0
        %v3221 = vadd.f32 0.0, %v3220
        %v3222 = vpop.f32.mrf.mxu0
        %v3223 = vadd.f32 0.0, %v3222
        %v3224 = vpop.f32.mrf.mxu0
        %v3225 = vadd.f32 0.0, %v3224
        %3226 = vmatprep.mubr.bf16.mxu0 %v2896
        %3227 = vmatmul.mubr.bf16.gmra.mxu0 %v1171
        %v3228 = vpop.f32.mrf.mxu0
        %v3229 = vadd.f32 0.0, %v3228
        %v3230 = vpop.f32.mrf.mxu0
        %v3231 = vadd.f32 0.0, %v3230
        %v3232 = vpop.f32.mrf.mxu0
        %v3233 = vadd.f32 0.0, %v3232
        %v3234 = vpop.f32.mrf.mxu0
        %v3235 = vadd.f32 0.0, %v3234
        %3236 = vmatprep.mubr.bf16.mxu0 %v2899
        %3237 = vmatmul.mubr.bf16.gmra.mxu0 %v1173
        %v3238 = vpop.f32.mrf.mxu0
        %v3239 = vadd.f32 0.0, %v3238
        %v3240 = vpop.f32.mrf.mxu0
        %v3241 = vadd.f32 0.0, %v3240
        %v3242 = vpop.f32.mrf.mxu0
        %v3243 = vadd.f32 0.0, %v3242
        %v3244 = vpop.f32.mrf.mxu0
        %v3245 = vadd.f32 0.0, %v3244
        %3246 = vmatprep.mubr.bf16.mxu0 %v2902
        %3247 = vmatmul.mubr.bf16.gmra.mxu0 %v1175
        %v3248 = vpop.f32.mrf.mxu0
        %v3249 = vadd.f32 0.0, %v3248
        %v3250 = vpop.f32.mrf.mxu0
        %v3251 = vadd.f32 0.0, %v3250
        %v3252 = vpop.f32.mrf.mxu0
        %v3253 = vadd.f32 0.0, %v3252
        %v3254 = vpop.f32.mrf.mxu0
        %v3255 = vadd.f32 0.0, %v3254
        %3256 = vmatprep.mubr.bf16.mxu0 %v2905
        %3257 = vmatmul.mubr.bf16.gmra.mxu0 %v1177
        %v3258 = vpop.f32.mrf.mxu0
        %v3259 = vadd.f32 0.0, %v3258
        %v3260 = vpop.f32.mrf.mxu0
        %v3261 = vadd.f32 0.0, %v3260
        %v3262 = vpop.f32.mrf.mxu0
        %v3263 = vadd.f32 0.0, %v3262
        %v3264 = vpop.f32.mrf.mxu0
        %v3265 = vadd.f32 0.0, %v3264
        %3266 = vmatprep.mubr.bf16.mxu0 %v2908
        %3267 = vmatmul.mubr.bf16.gmra.mxu0 %v1179
        %v3268 = vpop.f32.mrf.mxu0
        %v3269 = vadd.f32 0.0, %v3268
        %v3270 = vpop.f32.mrf.mxu0
        %v3271 = vadd.f32 0.0, %v3270
        %v3272 = vpop.f32.mrf.mxu0
        %v3273 = vadd.f32 0.0, %v3272
        %v3274 = vpop.f32.mrf.mxu0
        %v3275 = vadd.f32 0.0, %v3274
        %3276 = vmatprep.mubr.bf16.mxu0 %v2911
        %3277 = vmatmul.mubr.bf16.gmra.mxu0 %v1181
        %v3278 = vpop.f32.mrf.mxu0
        %v3279 = vadd.f32 0.0, %v3278
        %v3280 = vpop.f32.mrf.mxu0
        %v3281 = vadd.f32 0.0, %v3280
        %v3282 = vpop.f32.mrf.mxu0
        %v3283 = vadd.f32 0.0, %v3282
        %v3284 = vpop.f32.mrf.mxu0
        %v3285 = vadd.f32 0.0, %v3284
        %3286 = vmatprep.mubr.bf16.mxu0 %v2914
        %3287 = vmatmul.mubr.bf16.gmra.mxu0 %v1183
        %v3288 = vpop.f32.mrf.mxu0
        %v3289 = vadd.f32 0.0, %v3288
        %v3290 = vpop.f32.mrf.mxu0
        %v3291 = vadd.f32 0.0, %v3290
        %v3292 = vpop.f32.mrf.mxu0
        %v3293 = vadd.f32 0.0, %v3292
        %v3294 = vpop.f32.mrf.mxu0
        %v3295 = vadd.f32 0.0, %v3294
        %3296 = vmatprep.mubr.bf16.mxu0 %v2917
        %3297 = vmatmul.mubr.bf16.gmra.mxu0 %v1185
        %v3298 = vpop.f32.mrf.mxu0
        %v3299 = vadd.f32 0.0, %v3298
        %v3300 = vpop.f32.mrf.mxu0
        %v3301 = vadd.f32 0.0, %v3300
        %v3302 = vpop.f32.mrf.mxu0
        %v3303 = vadd.f32 0.0, %v3302
        %v3304 = vpop.f32.mrf.mxu0
        %v3305 = vadd.f32 0.0, %v3304
        %3306 = vmatprep.mubr.bf16.mxu0 %v2920
        %3307 = vmatmul.mubr.bf16.gmra.mxu0 %v1187
        %v3308 = vpop.f32.mrf.mxu0
        %v3309 = vadd.f32 0.0, %v3308
        %v3310 = vpop.f32.mrf.mxu0
        %v3311 = vadd.f32 0.0, %v3310
        %v3312 = vpop.f32.mrf.mxu0
        %v3313 = vadd.f32 0.0, %v3312
        %v3314 = vpop.f32.mrf.mxu0
        %v3315 = vadd.f32 0.0, %v3314
        %3316 = vmatprep.mubr.bf16.mxu0 %v2923
        %3317 = vmatmul.mubr.bf16.gmra.mxu0 %v1189
        %v3318 = vpop.f32.mrf.mxu0
        %v3319 = vadd.f32 0.0, %v3318
        %v3320 = vpop.f32.mrf.mxu0
        %v3321 = vadd.f32 0.0, %v3320
        %v3322 = vpop.f32.mrf.mxu0
        %v3323 = vadd.f32 0.0, %v3322
        %v3324 = vpop.f32.mrf.mxu0
        %v3325 = vadd.f32 0.0, %v3324
        %3326 = vdwg.mxu0
        %s3327 = scalar_lea.vmem %s130, 448 [#allocation4]
        %3328 = vst [vmem:[%s3327] sm:$0xff] %v3189
        %3329 = vst.msk [vmem:[%s3327 + $0x8] sm:$0xff] %vm2219, %v3191
        %3330 = vst [vmem:[%s3327 + $0x10] sm:$0xff] %v3193
        %3331 = vst.msk [vmem:[%s3327 + $0x18] sm:$0xff] %vm2219, %v3195
        %3332 = vst [vmem:[%s3327 + $0x20] sm:$0xff] %v3199
        %3333 = vst.msk [vmem:[%s3327 + $0x28] sm:$0xff] %vm2219, %v3201
        %3334 = vst [vmem:[%s3327 + $0x30] sm:$0xff] %v3203
        %3335 = vst.msk [vmem:[%s3327 + $0x38] sm:$0xff] %vm2219, %v3205
        %3336 = vst [vmem:[%s3327 + $0x40] sm:$0xff] %v3209
        %3337 = vst.msk [vmem:[%s3327 + $0x48] sm:$0xff] %vm2219, %v3211
        %3338 = vst [vmem:[%s3327 + $0x50] sm:$0xff] %v3213
        %3339 = vst.msk [vmem:[%s3327 + $0x58] sm:$0xff] %vm2219, %v3215
        %3340 = vst [vmem:[%s3327 + $0x60] sm:$0xff] %v3219
        %3341 = vst.msk [vmem:[%s3327 + $0x68] sm:$0xff] %vm2219, %v3221
        %3342 = vst [vmem:[%s3327 + $0x70] sm:$0xff] %v3223
        %3343 = vst.msk [vmem:[%s3327 + $0x78] sm:$0xff] %vm2219, %v3225
        %3344 = vst [vmem:[%s3327 + $0x80] sm:$0xff] %v3229
        %3345 = vst.msk [vmem:[%s3327 + $0x88] sm:$0xff] %vm2219, %v3231
        %3346 = vst [vmem:[%s3327 + $0x90] sm:$0xff] %v3233
        %3347 = vst.msk [vmem:[%s3327 + $0x98] sm:$0xff] %vm2219, %v3235
        %3348 = vst [vmem:[%s3327 + $0xa0] sm:$0xff] %v3239
        %3349 = vst.msk [vmem:[%s3327 + $0xa8] sm:$0xff] %vm2219, %v3241
        %3350 = vst [vmem:[%s3327 + $0xb0] sm:$0xff] %v3243
        %3351 = vst.msk [vmem:[%s3327 + $0xb8] sm:$0xff] %vm2219, %v3245
        %3352 = vst [vmem:[%s3327 + $0xc0] sm:$0xff] %v3249
        %3353 = vst.msk [vmem:[%s3327 + $0xc8] sm:$0xff] %vm2219, %v3251
        %3354 = vst [vmem:[%s3327 + $0xd0] sm:$0xff] %v3253
        %3355 = vst.msk [vmem:[%s3327 + $0xd8] sm:$0xff] %vm2219, %v3255
        %3356 = vst [vmem:[%s3327 + $0xe0] sm:$0xff] %v3259
        %3357 = vst.msk [vmem:[%s3327 + $0xe8] sm:$0xff] %vm2219, %v3261
        %3358 = vst [vmem:[%s3327 + $0xf0] sm:$0xff] %v3263
        %3359 = vst.msk [vmem:[%s3327 + $0xf8] sm:$0xff] %vm2219, %v3265
        %3360 = vst [vmem:[%s3327 + $0x100] sm:$0xff] %v3269
        %3361 = vst.msk [vmem:[%s3327 + $0x108] sm:$0xff] %vm2219, %v3271
        %3362 = vst [vmem:[%s3327 + $0x110] sm:$0xff] %v3273
        %3363 = vst.msk [vmem:[%s3327 + $0x118] sm:$0xff] %vm2219, %v3275
        %3364 = vst [vmem:[%s3327 + $0x120] sm:$0xff] %v3279
        %3365 = vst.msk [vmem:[%s3327 + $0x128] sm:$0xff] %vm2219, %v3281
        %3366 = vst [vmem:[%s3327 + $0x130] sm:$0xff] %v3283
        %3367 = vst.msk [vmem:[%s3327 + $0x138] sm:$0xff] %vm2219, %v3285
        %3368 = vst [vmem:[%s3327 + $0x140] sm:$0xff] %v3289
        %3369 = vst.msk [vmem:[%s3327 + $0x148] sm:$0xff] %vm2219, %v3291
        %3370 = vst [vmem:[%s3327 + $0x150] sm:$0xff] %v3293
        %3371 = vst.msk [vmem:[%s3327 + $0x158] sm:$0xff] %vm2219, %v3295
        %3372 = vst [vmem:[%s3327 + $0x160] sm:$0xff] %v3299
        %3373 = vst.msk [vmem:[%s3327 + $0x168] sm:$0xff] %vm2219, %v3301
        %3374 = vst [vmem:[%s3327 + $0x170] sm:$0xff] %v3303
        %3375 = vst.msk [vmem:[%s3327 + $0x178] sm:$0xff] %vm2219, %v3305
        %3376 = vst [vmem:[%s3327 + $0x180] sm:$0xff] %v3309
        %3377 = vst.msk [vmem:[%s3327 + $0x188] sm:$0xff] %vm2219, %v3311
        %3378 = vst [vmem:[%s3327 + $0x190] sm:$0xff] %v3313
        %3379 = vst.msk [vmem:[%s3327 + $0x198] sm:$0xff] %vm2219, %v3315
        %3380 = vst [vmem:[%s3327 + $0x1a0] sm:$0xff] %v3319
        %3381 = vst.msk [vmem:[%s3327 + $0x1a8] sm:$0xff] %vm2219, %v3321
        %3382 = vst [vmem:[%s3327 + $0x1b0] sm:$0xff] %v3323
        %3383 = vst.msk [vmem:[%s3327 + $0x1b8] sm:$0xff] %vm2219, %v3325
        %3384 = vmatprep.subr.bf16.mxu0 %v2870
        %3385 = vmatpush1.bf16.msra.mxu0 %v2869
        %3386 = vmatprep.subr.bf16.mxu0 %v2868
        %3387 = vmatpush1.bf16.msra.mxu0 %v2867
        %3388 = vmatprep.subr.bf16.mxu0 %v2866
        %3389 = vmatpush1.bf16.msra.mxu0 %v2865
        %3390 = vmatprep.subr.bf16.mxu0 %v2864
        %3391 = vmatpush1.bf16.msra.mxu0 %v2863
        %3392 = vmatprep.subr.bf16.mxu0 %v2862
        %3393 = vmatpush1.bf16.msra.mxu0 %v2861
        %3394 = vmatprep.subr.bf16.mxu0 %v2860
        %3395 = vmatpush1.bf16.msra.mxu0 %v2859
        %3396 = vmatprep.subr.bf16.mxu0 %v2858
        %3397 = vmatpush1.bf16.msra.mxu0 %v2857
        %3398 = vmatprep.subr.bf16.mxu0 %v2856
        %3399 = vmatpush1.bf16.msra.mxu0 %v2855
        %3400 = vmatprep.subr.bf16.mxu0 0
        %3401 = vmatpush2.bf16.msra.mxu0 0
        %3402 = vmatprep.subr.bf16.mxu0 0
        %3403 = vmatpush2.bf16.msra.mxu0 0
        %3404 = vmatprep.subr.bf16.mxu0 %v2882
        %3405 = vmatpush2.bf16.msra.mxu0 %v2881
        %3406 = vmatprep.subr.bf16.mxu0 %v2880
        %3407 = vmatpush2.bf16.msra.mxu0 %v2879
        %3408 = vmatprep.subr.bf16.mxu0 %v2878
        %3409 = vmatpush2.bf16.msra.mxu0 %v2877
        %3410 = vmatprep.subr.bf16.mxu0 %v2876
        %3411 = vmatpush2.bf16.msra.mxu0 %v2875
        %3412 = vmatprep.subr.bf16.mxu0 %v2874
        %3413 = vmatpush2.bf16.msra.mxu0 %v2873
        %3414 = vmatprep.subr.bf16.mxu0 %v2872
        %3415 = vmatpush2.bf16.msra.mxu0 %v2871
        %3416 = vmatprep.mubr.bf16.mxu0 %v2884
        %3417 = vmatmul.mubr.bf16.gmra.mxu0 %v1163
        %v3418 = vpop.f32.mrf.mxu0
        %v3419 = vadd.f32 0.0, %v3418
        %v3420 = vpop.f32.mrf.mxu0
        %v3421 = vadd.f32 0.0, %v3420
        %v3422 = vpop.f32.mrf.mxu0
        %v3423 = vadd.f32 0.0, %v3422
        %v3424 = vpop.f32.mrf.mxu0
        %v3425 = vadd.f32 0.0, %v3424
        %3426 = vmatprep.mubr.bf16.mxu0 %v2887
        %3427 = vmatmul.mubr.bf16.gmra.mxu0 %v1165
        %v3428 = vpop.f32.mrf.mxu0
        %v3429 = vadd.f32 0.0, %v3428
        %v3430 = vpop.f32.mrf.mxu0
        %v3431 = vadd.f32 0.0, %v3430
        %v3432 = vpop.f32.mrf.mxu0
        %v3433 = vadd.f32 0.0, %v3432
        %v3434 = vpop.f32.mrf.mxu0
        %v3435 = vadd.f32 0.0, %v3434
        %3436 = vmatprep.mubr.bf16.mxu0 %v2890
        %3437 = vmatmul.mubr.bf16.gmra.mxu0 %v1167
        %v3438 = vpop.f32.mrf.mxu0
        %v3439 = vadd.f32 0.0, %v3438
        %v3440 = vpop.f32.mrf.mxu0
        %v3441 = vadd.f32 0.0, %v3440
        %v3442 = vpop.f32.mrf.mxu0
        %v3443 = vadd.f32 0.0, %v3442
        %v3444 = vpop.f32.mrf.mxu0
        %v3445 = vadd.f32 0.0, %v3444
        %3446 = vmatprep.mubr.bf16.mxu0 %v2893
        %3447 = vmatmul.mubr.bf16.gmra.mxu0 %v1169
        %v3448 = vpop.f32.mrf.mxu0
        %v3449 = vadd.f32 0.0, %v3448
        %v3450 = vpop.f32.mrf.mxu0
        %v3451 = vadd.f32 0.0, %v3450
        %v3452 = vpop.f32.mrf.mxu0
        %v3453 = vadd.f32 0.0, %v3452
        %v3454 = vpop.f32.mrf.mxu0
        %v3455 = vadd.f32 0.0, %v3454
        %3456 = vmatprep.mubr.bf16.mxu0 %v2896
        %3457 = vmatmul.mubr.bf16.gmra.mxu0 %v1171
        %v3458 = vpop.f32.mrf.mxu0
        %v3459 = vadd.f32 0.0, %v3458
        %v3460 = vpop.f32.mrf.mxu0
        %v3461 = vadd.f32 0.0, %v3460
        %v3462 = vpop.f32.mrf.mxu0
        %v3463 = vadd.f32 0.0, %v3462
        %v3464 = vpop.f32.mrf.mxu0
        %v3465 = vadd.f32 0.0, %v3464
        %3466 = vmatprep.mubr.bf16.mxu0 %v2899
        %3467 = vmatmul.mubr.bf16.gmra.mxu0 %v1173
        %v3468 = vpop.f32.mrf.mxu0
        %v3469 = vadd.f32 0.0, %v3468
        %v3470 = vpop.f32.mrf.mxu0
        %v3471 = vadd.f32 0.0, %v3470
        %v3472 = vpop.f32.mrf.mxu0
        %v3473 = vadd.f32 0.0, %v3472
        %v3474 = vpop.f32.mrf.mxu0
        %v3475 = vadd.f32 0.0, %v3474
        %3476 = vmatprep.mubr.bf16.mxu0 %v2902
        %3477 = vmatmul.mubr.bf16.gmra.mxu0 %v1175
        %v3478 = vpop.f32.mrf.mxu0
        %v3479 = vadd.f32 0.0, %v3478
        %v3480 = vpop.f32.mrf.mxu0
        %v3481 = vadd.f32 0.0, %v3480
        %v3482 = vpop.f32.mrf.mxu0
        %v3483 = vadd.f32 0.0, %v3482
        %v3484 = vpop.f32.mrf.mxu0
        %v3485 = vadd.f32 0.0, %v3484
        %3486 = vmatprep.mubr.bf16.mxu0 %v2905
        %3487 = vmatmul.mubr.bf16.gmra.mxu0 %v1177
        %v3488 = vpop.f32.mrf.mxu0
        %v3489 = vadd.f32 0.0, %v3488
        %v3490 = vpop.f32.mrf.mxu0
        %v3491 = vadd.f32 0.0, %v3490
        %v3492 = vpop.f32.mrf.mxu0
        %v3493 = vadd.f32 0.0, %v3492
        %v3494 = vpop.f32.mrf.mxu0
        %v3495 = vadd.f32 0.0, %v3494
        %3496 = vmatprep.mubr.bf16.mxu0 %v2908
        %3497 = vmatmul.mubr.bf16.gmra.mxu0 %v1179
        %v3498 = vpop.f32.mrf.mxu0
        %v3499 = vadd.f32 0.0, %v3498
        %v3500 = vpop.f32.mrf.mxu0
        %v3501 = vadd.f32 0.0, %v3500
        %v3502 = vpop.f32.mrf.mxu0
        %v3503 = vadd.f32 0.0, %v3502
        %v3504 = vpop.f32.mrf.mxu0
        %v3505 = vadd.f32 0.0, %v3504
        %3506 = vmatprep.mubr.bf16.mxu0 %v2911
        %3507 = vmatmul.mubr.bf16.gmra.mxu0 %v1181
        %v3508 = vpop.f32.mrf.mxu0
        %v3509 = vadd.f32 0.0, %v3508
        %v3510 = vpop.f32.mrf.mxu0
        %v3511 = vadd.f32 0.0, %v3510
        %v3512 = vpop.f32.mrf.mxu0
        %v3513 = vadd.f32 0.0, %v3512
        %v3514 = vpop.f32.mrf.mxu0
        %v3515 = vadd.f32 0.0, %v3514
        %3516 = vmatprep.mubr.bf16.mxu0 %v2914
        %3517 = vmatmul.mubr.bf16.gmra.mxu0 %v1183
        %v3518 = vpop.f32.mrf.mxu0
        %v3519 = vadd.f32 0.0, %v3518
        %v3520 = vpop.f32.mrf.mxu0
        %v3521 = vadd.f32 0.0, %v3520
        %v3522 = vpop.f32.mrf.mxu0
        %v3523 = vadd.f32 0.0, %v3522
        %v3524 = vpop.f32.mrf.mxu0
        %v3525 = vadd.f32 0.0, %v3524
        %3526 = vmatprep.mubr.bf16.mxu0 %v2917
        %3527 = vmatmul.mubr.bf16.gmra.mxu0 %v1185
        %v3528 = vpop.f32.mrf.mxu0
        %v3529 = vadd.f32 0.0, %v3528
        %v3530 = vpop.f32.mrf.mxu0
        %v3531 = vadd.f32 0.0, %v3530
        %v3532 = vpop.f32.mrf.mxu0
        %v3533 = vadd.f32 0.0, %v3532
        %v3534 = vpop.f32.mrf.mxu0
        %v3535 = vadd.f32 0.0, %v3534
        %3536 = vmatprep.mubr.bf16.mxu0 %v2920
        %3537 = vmatmul.mubr.bf16.gmra.mxu0 %v1187
        %v3538 = vpop.f32.mrf.mxu0
        %v3539 = vadd.f32 0.0, %v3538
        %v3540 = vpop.f32.mrf.mxu0
        %v3541 = vadd.f32 0.0, %v3540
        %v3542 = vpop.f32.mrf.mxu0
        %v3543 = vadd.f32 0.0, %v3542
        %v3544 = vpop.f32.mrf.mxu0
        %v3545 = vadd.f32 0.0, %v3544
        %3546 = vmatprep.mubr.bf16.mxu0 %v2923
        %3547 = vmatmul.mubr.bf16.gmra.mxu0 %v1189
        %v3548 = vpop.f32.mrf.mxu0
        %v3549 = vadd.f32 0.0, %v3548
        %v3550 = vpop.f32.mrf.mxu0
        %v3551 = vadd.f32 0.0, %v3550
        %v3552 = vpop.f32.mrf.mxu0
        %v3553 = vadd.f32 0.0, %v3552
        %v3554 = vpop.f32.mrf.mxu0
        %v3555 = vadd.f32 0.0, %v3554
        %3556 = vdwg.mxu0
        %s3557 = scalar_lea.vmem %s130, 896 [#allocation4]
        %3558 = vst [vmem:[%s3557] sm:$0xff] %v3419
        %3559 = vst.msk [vmem:[%s3557 + $0x8] sm:$0xff] %vm2219, %v3421
        %3560 = vst [vmem:[%s3557 + $0x10] sm:$0xff] %v3423
        %3561 = vst.msk [vmem:[%s3557 + $0x18] sm:$0xff] %vm2219, %v3425
        %3562 = vst [vmem:[%s3557 + $0x20] sm:$0xff] %v3429
        %3563 = vst.msk [vmem:[%s3557 + $0x28] sm:$0xff] %vm2219, %v3431
        %3564 = vst [vmem:[%s3557 + $0x30] sm:$0xff] %v3433
        %3565 = vst.msk [vmem:[%s3557 + $0x38] sm:$0xff] %vm2219, %v3435
        %3566 = vst [vmem:[%s3557 + $0x40] sm:$0xff] %v3439
        %3567 = vst.msk [vmem:[%s3557 + $0x48] sm:$0xff] %vm2219, %v3441
        %3568 = vst [vmem:[%s3557 + $0x50] sm:$0xff] %v3443
        %3569 = vst.msk [vmem:[%s3557 + $0x58] sm:$0xff] %vm2219, %v3445
        %3570 = vst [vmem:[%s3557 + $0x60] sm:$0xff] %v3449
        %3571 = vst.msk [vmem:[%s3557 + $0x68] sm:$0xff] %vm2219, %v3451
        %3572 = vst [vmem:[%s3557 + $0x70] sm:$0xff] %v3453
        %3573 = vst.msk [vmem:[%s3557 + $0x78] sm:$0xff] %vm2219, %v3455
        %3574 = vst [vmem:[%s3557 + $0x80] sm:$0xff] %v3459
        %3575 = vst.msk [vmem:[%s3557 + $0x88] sm:$0xff] %vm2219, %v3461
        %3576 = vst [vmem:[%s3557 + $0x90] sm:$0xff] %v3463
        %3577 = vst.msk [vmem:[%s3557 + $0x98] sm:$0xff] %vm2219, %v3465
        %3578 = vst [vmem:[%s3557 + $0xa0] sm:$0xff] %v3469
        %3579 = vst.msk [vmem:[%s3557 + $0xa8] sm:$0xff] %vm2219, %v3471
        %3580 = vst [vmem:[%s3557 + $0xb0] sm:$0xff] %v3473
        %3581 = vst.msk [vmem:[%s3557 + $0xb8] sm:$0xff] %vm2219, %v3475
        %3582 = vst [vmem:[%s3557 + $0xc0] sm:$0xff] %v3479
        %3583 = vst.msk [vmem:[%s3557 + $0xc8] sm:$0xff] %vm2219, %v3481
        %3584 = vst [vmem:[%s3557 + $0xd0] sm:$0xff] %v3483
        %3585 = vst.msk [vmem:[%s3557 + $0xd8] sm:$0xff] %vm2219, %v3485
        %3586 = vst [vmem:[%s3557 + $0xe0] sm:$0xff] %v3489
        %3587 = vst.msk [vmem:[%s3557 + $0xe8] sm:$0xff] %vm2219, %v3491
        %3588 = vst [vmem:[%s3557 + $0xf0] sm:$0xff] %v3493
        %3589 = vst.msk [vmem:[%s3557 + $0xf8] sm:$0xff] %vm2219, %v3495
        %3590 = vst [vmem:[%s3557 + $0x100] sm:$0xff] %v3499
        %3591 = vst.msk [vmem:[%s3557 + $0x108] sm:$0xff] %vm2219, %v3501
        %3592 = vst [vmem:[%s3557 + $0x110] sm:$0xff] %v3503
        %3593 = vst.msk [vmem:[%s3557 + $0x118] sm:$0xff] %vm2219, %v3505
        %3594 = vst [vmem:[%s3557 + $0x120] sm:$0xff] %v3509
        %3595 = vst.msk [vmem:[%s3557 + $0x128] sm:$0xff] %vm2219, %v3511
        %3596 = vst [vmem:[%s3557 + $0x130] sm:$0xff] %v3513
        %3597 = vst.msk [vmem:[%s3557 + $0x138] sm:$0xff] %vm2219, %v3515
        %3598 = vst [vmem:[%s3557 + $0x140] sm:$0xff] %v3519
        %3599 = vst.msk [vmem:[%s3557 + $0x148] sm:$0xff] %vm2219, %v3521
        %3600 = vst [vmem:[%s3557 + $0x150] sm:$0xff] %v3523
        %3601 = vst.msk [vmem:[%s3557 + $0x158] sm:$0xff] %vm2219, %v3525
        %3602 = vst [vmem:[%s3557 + $0x160] sm:$0xff] %v3529
        %3603 = vst.msk [vmem:[%s3557 + $0x168] sm:$0xff] %vm2219, %v3531
        %3604 = vst [vmem:[%s3557 + $0x170] sm:$0xff] %v3533
        %3605 = vst.msk [vmem:[%s3557 + $0x178] sm:$0xff] %vm2219, %v3535
        %3606 = vst [vmem:[%s3557 + $0x180] sm:$0xff] %v3539
        %3607 = vst.msk [vmem:[%s3557 + $0x188] sm:$0xff] %vm2219, %v3541
        %3608 = vst [vmem:[%s3557 + $0x190] sm:$0xff] %v3543
        %3609 = vst.msk [vmem:[%s3557 + $0x198] sm:$0xff] %vm2219, %v3545
        %3610 = vst [vmem:[%s3557 + $0x1a0] sm:$0xff] %v3549
        %3611 = vst.msk [vmem:[%s3557 + $0x1a8] sm:$0xff] %vm2219, %v3551
        %3612 = vst [vmem:[%s3557 + $0x1b0] sm:$0xff] %v3553
        %3613 = vst.msk [vmem:[%s3557 + $0x1b8] sm:$0xff] %vm2219, %v3555
        %s3614 = sand.u32 %s70, 1
        %s3615 = scalar_lea.sflag [#allocation5], %s3614
        %s3616 = sand.u32 %s70, 1
        %s3617 = smul.addr %s3616, 1344
        %s3618 = scalar_lea.vmem [#allocation4], %s3617
        // Predicated region
        $region25: #{spatial_transformer_forward.3} parent=23 // pred_check
          %p3619 = pneg %p80
        $region26: #{spatial_transformer_forward.3} parent=23 // pred_check_branch
          %3621 = sbr.rel (%p3619) target = $region28
        $region27: #{spatial_transformer_forward.3} parent=23 // pred_region
          %s3622 = smul.u32 28, %s27
          %s3624 = ssub.s32 21504, 21504
          %3625 = vsyncadd %s3615, %s3624
          %s3626 = smul.addr %s3622, 2
          %s3627 = smul.addr %s26, 168
          %s3628 = sadd.s32 %s3626, %s3627
          %s3629 = smul.addr %s3628, 128
          %s3630 = scalar_lea.hbm %s2, %s3629
          %s3631 = sshll.u32 %s3618, 4
          %s3632 = int_to_ptr.vmem [resolvable:$true] %s3631
          %3637 = dma.vmem_to_hbm [thread:$0]  %s3632, 21504, %s3630, %s3615, 256, 256, 16
        $region28: #{spatial_transformer_forward.3} parent=23 // pred_fallthru
          _
      $region24: #{spatial_transformer_forward.3} parent=5 // pred_fallthru
        _
      %p3638 = scmp.le.s32.totalorder 2, %s17
      // Predicated region
      $region29: #{spatial_transformer_forward.3} parent=5 // pred_check
        %p3639 = pneg %p3638
      $region30: #{spatial_transformer_forward.3} parent=5 // pred_check_branch
        %3641 = sbr.rel (%p3639) target = $region32
      $region31: #{spatial_transformer_forward.3} parent=5 // pred_region
        %s3642 = ssub.s32 %s17, 2
        // Predicated region
        $region33: #{spatial_transformer_forward.3} parent=31 // pred_check
          %p3643 = pneg %p86
        $region34: #{spatial_transformer_forward.3} parent=31 // pred_check_branch
          %3645 = sbr.rel (%p3643) target = $region36
        $region35: #{spatial_transformer_forward.3} parent=31 // pred_region
          %s3646 = sand.u32 %s71, 1
          %s3647 = scalar_lea.sflag [#allocation5], %s3646
          %s3648 = sand.u32 %s71, 1
          %s3649 = smul.addr %s3648, 1344
          %s3650 = scalar_lea.vmem [#allocation4], %s3649
          %3651 = dma.done %s3647, 21504
        $region36: #{spatial_transformer_forward.3} parent=31 // pred_fallthru
          _
      $region32: #{spatial_transformer_forward.3} parent=5 // pred_fallthru
        _
    $region6: #{spatial_transformer_forward.3} parent=1 // loop_footer
      %s21 = sadd.s32 1, %s17
    $region7: #{spatial_transformer_forward.3} parent=1 // loop_footer_branch
      %16 = sbr.rel target = $region3
    $region8: #{spatial_transformer_forward.3} parent=1 // loop_exit
      _
    %3652 = vsyncpa [#allocation5], 1
    %s3653 = scalar_lea.sflag [#allocation5], 1
    %3654 = vsyncpa %s3653, 1

// kernel: spatial_transformer_forward.2
$region0: #{spatial_transformer_forward.2}
  #allocation0 [shape = 'u32[]', space=smem, size = 0x4, offset = 0x4, fixed_abs, tag = 'smem constant byte address 0x4 - core index']
  #allocation1 [shape = 'u32[144,128]{1,0:T(1,128)}', space=vmem, size = 0x12000, scoped, tag = 'internal scratch']
  %s0 = inlined_call_operand.vmem [shape: bf16[2,3,224,224], index: 0, kind: input, shape index: {}]
  %s1 = inlined_call_operand.vmem [shape: bf16[1,336,224], index: 1, kind: input, shape index: {}]
  %s2 = inlined_call_operand.vmem [shape: bf16[3,3,224,336], index: 2, kind: input, shape index: {}]
  %s3 = inlined_call_operand.vmem [shape: f32[4,112,336], index: 3, kind: input, shape index: {}]
  %s4 = inlined_call_operand.vmem [shape: f32[2,1,1,4], index: 4, kind: output, shape index: {}]
  %s5 = sld [smem:[#allocation0]]
  $region49: #{spatial_transformer_forward.2} parent=0
    _
  %s7 = ssub.s32 1, %s5
  %s8 = scalar_select 0, %s7, %s5
  loop: start=0, step=1, limit=4
  $region2: #{spatial_transformer_forward.2} parent=0 // loop_pre_header
    _
  $region3: #{spatial_transformer_forward.2} parent=0 // loop_header
    %s10 = sphi 0, %s14
    %p11 = scmp.ge.s32.totalorder %s10, 4
    %s17 = sphi 0, %s29
    %s18 = sphi 0, %s25
    %s19 = sphi 0, %s17
    %s20 = sphi 0, %s18
    %s21 = sphi 0, %s19
    %s22 = sphi 0, %s20
    %s32 = sphi 0, %s34
    %s35 = sphi 0, %s32
    %s36 = sphi 0, %s35
    %s52 = sphi 0, %s36
    %s58 = sphi 0, %s60
    %s61 = sphi 0, %s58
    %s62 = sphi 0, %s61
    %s78 = sphi 0, %s62
    %s82 = sphi 0, %s82
    %s84 = sphi 0, %s82
    %s85 = sphi 0, %s84
    %s99 = sphi 0, %s85
    %s105 = sphi 0, %s107
    %s108 = sphi 0, %s105
    %s109 = sphi 0, %s108
    %s125 = sphi 0, %s109
    %s133 = sphi 0, %s135
    %s136 = sphi 0, %s133
    %s137 = sphi 0, %s136
    %s153 = sphi 0, %s137
  $region4: #{spatial_transformer_forward.2} parent=0 // loop_header_branch
    %13 = sbr.rel (%p11) target = $region8
  $region5: #{spatial_transformer_forward.2} parent=0 // loop_body
    %s15 = ssub.s32 %s10, 1
    %s16 = ssub.s32 %s10, 2
    %s23 = sadd.s32 1, %s18
    %p24 = scmp.ge.s32.totalorder %s23, 1
    %s25 = scalar_select %p24, 0, %s23
    %s26 = sadd.s32 1, %s17
    %s27 = scalar_select %p24, %s26, %s17
    %p28 = scmp.ge.s32.totalorder %s27, 2
    %s29 = scalar_select %p28, 0, %s27
    %s30 = ssub.s32 %s17, %s29
    %p31 = scmp.eq.s32.totalorder %s30, 0
    %s33 = sadd.s32 %s32, 1
    %s34 = scalar_select %p31, %s32, %s33
    %p37 = pneg %p31
    %p38 = scmp.eq.s32.totalorder %s10, 1
    %p39 = por %p37, %p38
    %p40 = scmp.ne.s32.totalorder %s32, %s35
    %p41 = scmp.eq.s32.totalorder %s10, 0
    %p42 = por %p40, %p41
    %p43 = scmp.ne.s32.totalorder %s32, %s35
    %p44 = scmp.eq.s32.totalorder %s15, 1
    %p45 = por %p43, %p44
    %p46 = scmp.ne.s32.totalorder %s35, %s36
    %p47 = scmp.eq.s32.totalorder %s15, 0
    %p48 = por %p46, %p47
    %p49 = scmp.ne.s32.totalorder %s35, %s36
    %p50 = scmp.eq.s32.totalorder %s16, 1
    %p51 = por %p49, %p50
    %p53 = scmp.ne.s32.totalorder %s36, %s52
    %p54 = scmp.eq.s32.totalorder %s16, 0
    %p55 = por %p53, %p54
    %s56 = ssub.s32 %s18, %s25
    %p57 = scmp.eq.s32.totalorder %s56, 0
    %s59 = sadd.s32 %s58, 1
    %s60 = scalar_select %p57, %s58, %s59
    %p63 = pneg %p57
    %p64 = scmp.eq.s32.totalorder %s10, 1
    %p65 = por %p63, %p64
    %p66 = scmp.ne.s32.totalorder %s58, %s61
    %p67 = scmp.eq.s32.totalorder %s10, 0
    %p68 = por %p66, %p67
    %p69 = scmp.ne.s32.totalorder %s58, %s61
    %p70 = scmp.eq.s32.totalorder %s15, 1
    %p71 = por %p69, %p70
    %p72 = scmp.ne.s32.totalorder %s61, %s62
    %p73 = scmp.eq.s32.totalorder %s15, 0
    %p74 = por %p72, %p73
    %p75 = scmp.ne.s32.totalorder %s61, %s62
    %p76 = scmp.eq.s32.totalorder %s16, 1
    %p77 = por %p75, %p76
    %p79 = scmp.ne.s32.totalorder %s62, %s78
    %p80 = scmp.eq.s32.totalorder %s16, 0
    %p81 = por %p79, %p80
    %s83 = sadd.s32 %s82, 1
    %p86 = scmp.eq.s32.totalorder %s10, 1
    %p87 = scmp.ne.s32.totalorder %s82, %s84
    %p88 = scmp.eq.s32.totalorder %s10, 0
    %p89 = por %p87, %p88
    %p90 = scmp.ne.s32.totalorder %s82, %s84
    %p91 = scmp.eq.s32.totalorder %s15, 1
    %p92 = por %p90, %p91
    %p93 = scmp.ne.s32.totalorder %s84, %s85
    %p94 = scmp.eq.s32.totalorder %s15, 0
    %p95 = por %p93, %p94
    %p96 = scmp.ne.s32.totalorder %s84, %s85
    %p97 = scmp.eq.s32.totalorder %s16, 1
    %p98 = por %p96, %p97
    %p100 = scmp.ne.s32.totalorder %s85, %s99
    %p101 = scmp.eq.s32.totalorder %s16, 0
    %p102 = por %p100, %p101
    %s103 = ssub.s32 %s18, %s25
    %p104 = scmp.eq.s32.totalorder %s103, 0
    %s106 = sadd.s32 %s105, 1
    %s107 = scalar_select %p104, %s105, %s106
    %p110 = pneg %p104
    %p111 = scmp.eq.s32.totalorder %s10, 1
    %p112 = por %p110, %p111
    %p113 = scmp.ne.s32.totalorder %s105, %s108
    %p114 = scmp.eq.s32.totalorder %s10, 0
    %p115 = por %p113, %p114
    %p116 = scmp.ne.s32.totalorder %s105, %s108
    %p117 = scmp.eq.s32.totalorder %s15, 1
    %p118 = por %p116, %p117
    %p119 = scmp.ne.s32.totalorder %s108, %s109
    %p120 = scmp.eq.s32.totalorder %s15, 0
    %p121 = por %p119, %p120
    %p122 = scmp.ne.s32.totalorder %s108, %s109
    %p123 = scmp.eq.s32.totalorder %s16, 1
    %p124 = por %p122, %p123
    %p126 = scmp.ne.s32.totalorder %s109, %s125
    %p127 = scmp.eq.s32.totalorder %s16, 0
    %p128 = por %p126, %p127
    %s129 = ssub.s32 %s17, %s29
    %s130 = ssub.s32 %s18, %s25
    %s131 = sor.u32 %s129, %s130
    %p132 = scmp.eq.s32.totalorder %s131, 0
    %s134 = sadd.s32 %s133, 1
    %s135 = scalar_select %p132, %s133, %s134
    %p138 = pneg %p132
    %p139 = scmp.eq.s32.totalorder %s10, 1
    %p140 = por %p138, %p139
    %p141 = scmp.ne.s32.totalorder %s133, %s136
    %p142 = scmp.eq.s32.totalorder %s10, 0
    %p143 = por %p141, %p142
    %p144 = scmp.ne.s32.totalorder %s133, %s136
    %p145 = scmp.eq.s32.totalorder %s15, 1
    %p146 = por %p144, %p145
    %p147 = scmp.ne.s32.totalorder %s136, %s137
    %p148 = scmp.eq.s32.totalorder %s15, 0
    %p149 = por %p147, %p148
    %p150 = scmp.ne.s32.totalorder %s136, %s137
    %p151 = scmp.eq.s32.totalorder %s16, 1
    %p152 = por %p150, %p151
    %p154 = scmp.ne.s32.totalorder %s137, %s153
    %p155 = scmp.eq.s32.totalorder %s16, 0
    %p156 = por %p154, %p155
    %p157 = scmp.le.s32.totalorder 1, %s10
    %p158 = scmp.lt.s32.totalorder %s10, 3
    %p159 = pnand %p157, %p158
    %p160 = pneg %p159
    // Predicated region
    $region9: #{spatial_transformer_forward.2} parent=5 // pred_check
      _
    $region10: #{spatial_transformer_forward.2} parent=5 // pred_check_branch
      %162 = sbr.rel (%p159) target = $region12
    $region11: #{spatial_transformer_forward.2} parent=5 // pred_region
      %s163 = ssub.s32 %s10, 1
      // Predicated region
      $region13: #{spatial_transformer_forward.2} parent=11 // pred_check
        %p164 = pneg %p74
      $region14: #{spatial_transformer_forward.2} parent=11 // pred_check_branch
        %166 = sbr.rel (%p164) target = $region16
      $region15: #{spatial_transformer_forward.2} parent=11 // pred_region
        %p167 = scmp.lt.s32.totalorder %s20, 0
        %s168 = scalar_select %p167, %s20, 0
        %s169 = smul.addr %s168, 84
        %s170 = smul.addr %s169, 4
        %s171 = scalar_lea.vmem %s1, %s170
      $region16: #{spatial_transformer_forward.2} parent=11 // pred_fallthru
        _
      // Predicated region
      $region17: #{spatial_transformer_forward.2} parent=11 // pred_check
        %p172 = pneg %p95
      $region18: #{spatial_transformer_forward.2} parent=11 // pred_check_branch
        %174 = sbr.rel (%p172) target = $region20
      $region19: #{spatial_transformer_forward.2} parent=11 // pred_region
        _
      $region20: #{spatial_transformer_forward.2} parent=11 // pred_fallthru
        _
      // Predicated region
      $region21: #{spatial_transformer_forward.2} parent=11 // pred_check
        %p175 = pneg %p121
      $region22: #{spatial_transformer_forward.2} parent=11 // pred_check_branch
        %177 = sbr.rel (%p175) target = $region24
      $region23: #{spatial_transformer_forward.2} parent=11 // pred_region
        %s178 = smul.u32 14, %s20
        %p179 = scmp.lt.s32.totalorder %s178, 13
        %s180 = scalar_select %p179, %s178, 13
        %s181 = smul.addr %s180, 3
        %s182 = smul.addr %s181, 8
        %s183 = scalar_lea.vmem %s3, %s182
        %s184 = smul.u32 14, %s20
      $region24: #{spatial_transformer_forward.2} parent=11 // pred_fallthru
        _
    $region12: #{spatial_transformer_forward.2} parent=5 // pred_fallthru
      _
    %p185 = scmp.lt.s32.totalorder %s10, 2
    // Predicated region
    $region25: #{spatial_transformer_forward.2} parent=5 // pred_check
      %p186 = pneg %p185
    $region26: #{spatial_transformer_forward.2} parent=5 // pred_check_branch
      %188 = sbr.rel (%p186) target = $region28
    $region27: #{spatial_transformer_forward.2} parent=5 // pred_region
      // Predicated region
      $region29: #{spatial_transformer_forward.2} parent=27 // pred_check
        %p189 = pneg %p42
      $region30: #{spatial_transformer_forward.2} parent=27 // pred_check_branch
        %191 = sbr.rel (%p189) target = $region32
      $region31: #{spatial_transformer_forward.2} parent=27 // pred_region
        %p192 = scmp.lt.s32.totalorder %s17, 1
        %s193 = scalar_select %p192, %s17, 1
        %s194 = smul.addr %s193, 168
        %s195 = smul.addr %s194, 4
        %s196 = scalar_lea.vmem %s0, %s195
      $region32: #{spatial_transformer_forward.2} parent=27 // pred_fallthru
        _
    $region28: #{spatial_transformer_forward.2} parent=5 // pred_fallthru
      _
    %p197 = scmp.le.s32.totalorder 1, %s10
    %p198 = scmp.lt.s32.totalorder %s10, 3
    %p199 = pnand %p197, %p198
    %p200 = pneg %p199
    // Predicated region
    $region33: #{spatial_transformer_forward.2} parent=5 // pred_check
      _
    $region34: #{spatial_transformer_forward.2} parent=5 // pred_check_branch
      %202 = sbr.rel (%p199) target = $region36
    $region35: #{spatial_transformer_forward.2} parent=5 // pred_region
      %s203 = ssub.s32 %s10, 1
      %p204 = scmp.lt.s32.totalorder %s19, 1
      %s205 = scalar_select %p204, %s19, 1
      %s206 = smul.addr %s205, 168
      %s207 = smul.addr %s206, 4
      %s208 = scalar_lea.vmem %s0, %s207
      %p209 = pneg %p48
      %p210 = pneg %p45
      %p211 = scmp.lt.s32.totalorder %s20, 0
      %s212 = scalar_select %p211, %s20, 0
      %s213 = smul.addr %s212, 84
      %s214 = smul.addr %s213, 4
      %s215 = scalar_lea.vmem %s1, %s214
      %p216 = pneg %p74
      %p217 = pneg %p71
      %p218 = pneg %p95
      %p219 = pneg %p92
      %s220 = smul.u32 14, %s20
      %p221 = scmp.lt.s32.totalorder %s220, 13
      %s222 = scalar_select %p221, %s220, 13
      %s223 = smul.addr %s222, 3
      %s224 = smul.addr %s223, 8
      %s225 = scalar_lea.vmem %s3, %s224
      %p226 = pneg %p121
      %p227 = pneg %p118
      %p228 = pneg %p149
      %p229 = pneg %p146
      %p230 = scmp.lt.s32.totalorder %s19, 1
      %s231 = scalar_select %p230, %s19, 1
      %p232 = scmp.lt.s32.totalorder %s20, 0
      %s233 = scalar_select %p232, %s20, 0
      %s234 = sadd.s32 %s233, %s231
      %s235 = scalar_lea.vmem %s4, %s234
      %p236 = scmp.lt.s32.totalorder %s19, 1
      %s237 = scalar_select %p236, %s19, 1
      %s238 = smul.addr %s237, 168
      %s239 = smul.addr %s238, 4
      %s240 = scalar_lea.vmem %s0, %s239
      %p241 = scmp.lt.s32.totalorder %s20, 0
      %s242 = scalar_select %p241, %s20, 0
      %s243 = smul.addr %s242, 84
      %s244 = smul.addr %s243, 4
      %s245 = scalar_lea.vmem %s1, %s244
      %s246 = smul.u32 14, %s20
      %p247 = scmp.lt.s32.totalorder %s246, 13
      %s248 = scalar_select %p247, %s246, 13
      %s249 = smul.addr %s248, 3
      %s250 = smul.addr %s249, 8
      %s251 = scalar_lea.vmem %s3, %s250
      %s252 = smul.u32 14, %s20
      %p253 = scmp.lt.s32.totalorder %s19, 1
      %s254 = scalar_select %p253, %s19, 1
      %p255 = scmp.lt.s32.totalorder %s20, 0
      %s256 = scalar_select %p255, %s20, 0
      %s257 = sadd.s32 %s256, %s254
      %s258 = scalar_lea.vmem %s4, %s257
      %v260 = vld [vmem:[%s245] sm:$0xff]
      %v261 = vld [vmem:[%s245 + $0x8] sm:$0xff]
      %v262 = vld [vmem:[%s245 + $0x10] sm:$0xff]
      %v263 = vld [vmem:[%s245 + $0x18] sm:$0xff]
      %v264 = vld [vmem:[%s245 + $0x20] sm:$0xff]
      %v265 = vld [vmem:[%s245 + $0x28] sm:$0xff]
      %v266 = vld [vmem:[%s245 + $0x30] sm:$0xff]
      %v267 = vld [vmem:[%s245 + $0x38] sm:$0xff]
      %v268 = vld [vmem:[%s245 + $0x40] sm:$0xff]
      %v269 = vld [vmem:[%s245 + $0x48] sm:$0xff]
      %v270 = vld [vmem:[%s245 + $0x50] sm:$0xff]
      %v271 = vld [vmem:[%s245 + $0x58] sm:$0xff]
      %v272 = vld [vmem:[%s245 + $0x60] sm:$0xff]
      %v273 = vld [vmem:[%s245 + $0x68] sm:$0xff]
      %v274 = vld [vmem:[%s245 + $0x70] sm:$0xff]
      %v275 = vld [vmem:[%s245 + $0x78] sm:$0xff]
      %v276 = vld [vmem:[%s245 + $0x80] sm:$0xff]
      %v277 = vld [vmem:[%s245 + $0x88] sm:$0xff]
      %v278 = vld [vmem:[%s245 + $0x90] sm:$0xff]
      %v279 = vld [vmem:[%s245 + $0x98] sm:$0xff]
      %v280 = vld [vmem:[%s245 + $0xa0] sm:$0xff]
      %v281 = vld [vmem:[%s245 + $0xa8] sm:$0xff]
      %v282 = vld [vmem:[%s245 + $0xb0] sm:$0xff]
      %v283 = vld [vmem:[%s245 + $0xb8] sm:$0xff]
      %v284 = vld [vmem:[%s245 + $0xc0] sm:$0xff]
      %v285 = vld [vmem:[%s245 + $0xc8] sm:$0xff]
      %v286 = vld [vmem:[%s245 + $0xd0] sm:$0xff]
      %v287 = vld [vmem:[%s245 + $0xd8] sm:$0xff]
      %v288 = vld [vmem:[%s245 + $0xe0] sm:$0xff]
      %v289 = vld [vmem:[%s245 + $0xe8] sm:$0xff]
      %v290 = vld [vmem:[%s245 + $0xf0] sm:$0xff]
      %v291 = vld [vmem:[%s245 + $0xf8] sm:$0xff]
      %v292 = vld [vmem:[%s245 + $0x100] sm:$0xff]
      %v293 = vld [vmem:[%s245 + $0x108] sm:$0xff]
      %v294 = vld [vmem:[%s245 + $0x110] sm:$0xff]
      %v295 = vld [vmem:[%s245 + $0x118] sm:$0xff]
      %v296 = vld [vmem:[%s245 + $0x120] sm:$0xff]
      %v297 = vld [vmem:[%s245 + $0x128] sm:$0xff]
      %v298 = vld [vmem:[%s245 + $0x130] sm:$0xff]
      %v299 = vld [vmem:[%s245 + $0x138] sm:$0xff]
      %v300 = vld [vmem:[%s245 + $0x140] sm:$0xff]
      %v301 = vld [vmem:[%s245 + $0x148] sm:$0xff]
      %v302 = vld [vmem:[%s240] sm:$0xff]
      %v303 = vld [vmem:[%s240 + $0x8] sm:$0xff]
      %v304 = vld [vmem:[%s240 + $0x10] sm:$0xff]
      %v305 = vld [vmem:[%s240 + $0x18] sm:$0xff]
      %v306 = vld [vmem:[%s240 + $0x20] sm:$0xff]
      %v307 = vld [vmem:[%s240 + $0x28] sm:$0xff]
      %v308 = vld [vmem:[%s240 + $0x30] sm:$0xff]
      %v309 = vld [vmem:[%s240 + $0x38] sm:$0xff]
      %v310 = vld [vmem:[%s240 + $0x40] sm:$0xff]
      %v311 = vld [vmem:[%s240 + $0x48] sm:$0xff]
      %v312 = vld [vmem:[%s240 + $0x50] sm:$0xff]
      %v313 = vld [vmem:[%s240 + $0x58] sm:$0xff]
      %v314 = vld [vmem:[%s240 + $0x60] sm:$0xff]
      %v315 = vld [vmem:[%s240 + $0x68] sm:$0xff]
      %v316 = vld [vmem:[%s240 + $0x70] sm:$0xff]
      %v317 = vld [vmem:[%s240 + $0x78] sm:$0xff]
      %v318 = vld [vmem:[%s240 + $0x80] sm:$0xff]
      %v319 = vld [vmem:[%s240 + $0x88] sm:$0xff]
      %v320 = vld [vmem:[%s240 + $0x90] sm:$0xff]
      %v321 = vld [vmem:[%s240 + $0x98] sm:$0xff]
      %v322 = vld [vmem:[%s240 + $0xa0] sm:$0xff]
      %v323 = vld [vmem:[%s240 + $0xa8] sm:$0xff]
      %v324 = vld [vmem:[%s240 + $0xb0] sm:$0xff]
      %v325 = vld [vmem:[%s240 + $0xb8] sm:$0xff]
      %v326 = vld [vmem:[%s240 + $0xc0] sm:$0xff]
      %v327 = vld [vmem:[%s240 + $0xc8] sm:$0xff]
      %v328 = vld [vmem:[%s240 + $0xd0] sm:$0xff]
      %v329 = vld [vmem:[%s240 + $0xd8] sm:$0xff]
      %v372 = vunpack.c.l.b16 %v260
      %v373 = vunpack.c.h.b16 %v260
      %v374 = vunpack.c.l.b16 %v261
      %v375 = vunpack.c.h.b16 %v261
      %v376 = vunpack.c.l.b16 %v262
      %v377 = vunpack.c.h.b16 %v262
      %v378 = vunpack.c.l.b16 %v263
      %v379 = vunpack.c.h.b16 %v263
      %v380 = vunpack.c.l.b16 %v264
      %v381 = vunpack.c.h.b16 %v264
      %v382 = vunpack.c.l.b16 %v265
      %v383 = vunpack.c.h.b16 %v265
      %v384 = vunpack.c.l.b16 %v266
      %v385 = vunpack.c.h.b16 %v266
      %v386 = vunpack.c.l.b16 %v267
      %v387 = vunpack.c.h.b16 %v267
      %v388 = vunpack.c.l.b16 %v268
      %v389 = vunpack.c.h.b16 %v268
      %v390 = vunpack.c.l.b16 %v269
      %v391 = vunpack.c.h.b16 %v269
      %v392 = vunpack.c.l.b16 %v270
      %v393 = vunpack.c.h.b16 %v270
      %v394 = vunpack.c.l.b16 %v271
      %v395 = vunpack.c.h.b16 %v271
      %v396 = vunpack.c.l.b16 %v272
      %v397 = vunpack.c.h.b16 %v272
      %v398 = vunpack.c.l.b16 %v273
      %v399 = vunpack.c.h.b16 %v273
      %v400 = vunpack.c.l.b16 %v274
      %v401 = vunpack.c.h.b16 %v274
      %v402 = vunpack.c.l.b16 %v275
      %v403 = vunpack.c.h.b16 %v275
      %v404 = vunpack.c.l.b16 %v276
      %v405 = vunpack.c.h.b16 %v276
      %v406 = vunpack.c.l.b16 %v277
      %v407 = vunpack.c.h.b16 %v277
      %v408 = vunpack.c.l.b16 %v278
      %v409 = vunpack.c.h.b16 %v278
      %v410 = vunpack.c.l.b16 %v279
      %v411 = vunpack.c.h.b16 %v279
      %v412 = vunpack.c.l.b16 %v280
      %v413 = vunpack.c.h.b16 %v280
      %v414 = vunpack.c.l.b16 %v281
      %v415 = vunpack.c.h.b16 %v281
      %v416 = vunpack.c.l.b16 %v282
      %v417 = vunpack.c.h.b16 %v282
      %v418 = vunpack.c.l.b16 %v283
      %v419 = vunpack.c.h.b16 %v283
      %v420 = vunpack.c.l.b16 %v284
      %v421 = vunpack.c.h.b16 %v284
      %v422 = vunpack.c.l.b16 %v285
      %v423 = vunpack.c.h.b16 %v285
      %v424 = vunpack.c.l.b16 %v286
      %v425 = vunpack.c.h.b16 %v286
      %v426 = vunpack.c.l.b16 %v287
      %v427 = vunpack.c.h.b16 %v287
      %v428 = vunpack.c.l.b16 %v288
      %v429 = vunpack.c.h.b16 %v288
      %v430 = vunpack.c.l.b16 %v289
      %v431 = vunpack.c.h.b16 %v289
      %v432 = vunpack.c.l.b16 %v290
      %v433 = vunpack.c.h.b16 %v290
      %v434 = vunpack.c.l.b16 %v291
      %v435 = vunpack.c.h.b16 %v291
      %v436 = vunpack.c.l.b16 %v292
      %v437 = vunpack.c.h.b16 %v292
      %v438 = vunpack.c.l.b16 %v293
      %v439 = vunpack.c.h.b16 %v293
      %v440 = vunpack.c.l.b16 %v294
      %v441 = vunpack.c.h.b16 %v294
      %v442 = vunpack.c.l.b16 %v295
      %v443 = vunpack.c.h.b16 %v295
      %v444 = vunpack.c.l.b16 %v296
      %v445 = vunpack.c.h.b16 %v296
      %v446 = vunpack.c.l.b16 %v297
      %v447 = vunpack.c.h.b16 %v297
      %v448 = vunpack.c.l.b16 %v298
      %v449 = vunpack.c.h.b16 %v298
      %v450 = vunpack.c.l.b16 %v299
      %v451 = vunpack.c.h.b16 %v299
      %v452 = vunpack.c.l.b16 %v300
      %v453 = vunpack.c.h.b16 %v300
      %v454 = vunpack.c.l.b16 %v301
      %v455 = vunpack.c.h.b16 %v301
      %v456 = vpack.c.b16 %v374, %v372
      %v457 = vpack.c.b16 %v375, %v373
      %v458 = vpack.c.b16 %v378, %v376
      %v459 = vpack.c.b16 %v379, %v377
      %v460 = vpack.c.b16 %v382, %v380
      %v461 = vpack.c.b16 %v383, %v381
      %v462 = vpack.c.b16 %v386, %v384
      %v463 = vpack.c.b16 %v387, %v385
      %v464 = vpack.c.b16 %v390, %v388
      %v465 = vpack.c.b16 %v391, %v389
      %v466 = vpack.c.b16 %v394, %v392
      %v467 = vpack.c.b16 %v395, %v393
      %v468 = vpack.c.b16 %v398, %v396
      %v469 = vpack.c.b16 %v399, %v397
      %v470 = vpack.c.b16 %v402, %v400
      %v471 = vpack.c.b16 %v403, %v401
      %v472 = vpack.c.b16 %v406, %v404
      %v473 = vpack.c.b16 %v407, %v405
      %v474 = vpack.c.b16 %v410, %v408
      %v475 = vpack.c.b16 %v411, %v409
      %v476 = vpack.c.b16 %v414, %v412
      %v477 = vpack.c.b16 %v415, %v413
      %v478 = vpack.c.b16 %v418, %v416
      %v479 = vpack.c.b16 %v419, %v417
      %v480 = vpack.c.b16 %v422, %v420
      %v481 = vpack.c.b16 %v423, %v421
      %v482 = vpack.c.b16 %v426, %v424
      %v483 = vpack.c.b16 %v427, %v425
      %v484 = vpack.c.b16 %v430, %v428
      %v485 = vpack.c.b16 %v431, %v429
      %v486 = vpack.c.b16 %v434, %v432
      %v487 = vpack.c.b16 %v435, %v433
      %v488 = vpack.c.b16 %v438, %v436
      %v489 = vpack.c.b16 %v439, %v437
      %v490 = vpack.c.b16 %v442, %v440
      %v491 = vpack.c.b16 %v443, %v441
      %v492 = vpack.c.b16 %v446, %v444
      %v493 = vpack.c.b16 %v447, %v445
      %v494 = vpack.c.b16 %v450, %v448
      %v495 = vpack.c.b16 %v451, %v449
      %v496 = vpack.c.b16 %v454, %v452
      %v497 = vpack.c.b16 %v455, %v453
      %v547 = vunpack.c.l.b16 %v302
      %v548 = vunpack.c.h.b16 %v302
      %v549 = vunpack.c.l.b16 %v303
      %v550 = vunpack.c.h.b16 %v303
      %v551 = vunpack.c.l.b16 %v304
      %v552 = vunpack.c.h.b16 %v304
      %v553 = vunpack.c.l.b16 %v305
      %v554 = vunpack.c.h.b16 %v305
      %v555 = vunpack.c.l.b16 %v306
      %v556 = vunpack.c.h.b16 %v306
      %v557 = vunpack.c.l.b16 %v307
      %v558 = vunpack.c.h.b16 %v307
      %v559 = vunpack.c.l.b16 %v308
      %v560 = vunpack.c.h.b16 %v308
      %v561 = vunpack.c.l.b16 %v309
      %v562 = vunpack.c.h.b16 %v309
      %v563 = vunpack.c.l.b16 %v310
      %v564 = vunpack.c.h.b16 %v310
      %v565 = vunpack.c.l.b16 %v311
      %v566 = vunpack.c.h.b16 %v311
      %v567 = vunpack.c.l.b16 %v312
      %v568 = vunpack.c.h.b16 %v312
      %v569 = vunpack.c.l.b16 %v313
      %v570 = vunpack.c.h.b16 %v313
      %v571 = vunpack.c.l.b16 %v314
      %v572 = vunpack.c.h.b16 %v314
      %v573 = vunpack.c.l.b16 %v315
      %v574 = vunpack.c.h.b16 %v315
      %v575 = vunpack.c.l.b16 %v316
      %v576 = vunpack.c.h.b16 %v316
      %v577 = vunpack.c.l.b16 %v317
      %v578 = vunpack.c.h.b16 %v317
      %v579 = vunpack.c.l.b16 %v318
      %v580 = vunpack.c.h.b16 %v318
      %v581 = vunpack.c.l.b16 %v319
      %v582 = vunpack.c.h.b16 %v319
      %v583 = vunpack.c.l.b16 %v320
      %v584 = vunpack.c.h.b16 %v320
      %v585 = vunpack.c.l.b16 %v321
      %v586 = vunpack.c.h.b16 %v321
      %v587 = vunpack.c.l.b16 %v322
      %v588 = vunpack.c.h.b16 %v322
      %v589 = vunpack.c.l.b16 %v323
      %v590 = vunpack.c.h.b16 %v323
      %v591 = vunpack.c.l.b16 %v324
      %v592 = vunpack.c.h.b16 %v324
      %v593 = vunpack.c.l.b16 %v325
      %v594 = vunpack.c.h.b16 %v325
      %v595 = vunpack.c.l.b16 %v326
      %v596 = vunpack.c.h.b16 %v326
      %v597 = vunpack.c.l.b16 %v327
      %v598 = vunpack.c.h.b16 %v327
      %v599 = vunpack.c.l.b16 %v328
      %v600 = vunpack.c.h.b16 %v328
      %v601 = vunpack.c.l.b16 %v329
      %v602 = vunpack.c.h.b16 %v329
      %v603 = vpack.c.b16 %v549, %v547
      %v604 = vpack.c.b16 %v550, %v548
      %v605 = vpack.c.b16 %v553, %v551
      %v606 = vpack.c.b16 %v554, %v552
      %v607 = vpack.c.b16 %v557, %v555
      %v608 = vpack.c.b16 %v558, %v556
      %v609 = vpack.c.b16 %v561, %v559
      %v610 = vpack.c.b16 %v562, %v560
      %v611 = vpack.c.b16 %v565, %v563
      %v612 = vpack.c.b16 %v566, %v564
      %v613 = vpack.c.b16 %v569, %v567
      %v614 = vpack.c.b16 %v570, %v568
      %v615 = vpack.c.b16 %v573, %v571
      %v616 = vpack.c.b16 %v574, %v572
      %v617 = vpack.c.b16 %v577, %v575
      %v618 = vpack.c.b16 %v578, %v576
      %v619 = vpack.c.b16 %v581, %v579
      %v620 = vpack.c.b16 %v582, %v580
      %v621 = vpack.c.b16 %v585, %v583
      %v622 = vpack.c.b16 %v586, %v584
      %v623 = vpack.c.b16 %v589, %v587
      %v624 = vpack.c.b16 %v590, %v588
      %v625 = vpack.c.b16 %v593, %v591
      %v626 = vpack.c.b16 %v594, %v592
      %v627 = vpack.c.b16 %v597, %v595
      %v628 = vpack.c.b16 %v598, %v596
      %v629 = vpack.c.b16 %v601, %v599
      %v630 = vpack.c.b16 %v602, %v600
      %vm659 = vcmask 785408
      %v661 = vsel %vm659, %v457, 0
      %v664 = vsel %vm659, %v459, 0
      %v667 = vsel %vm659, %v461, 0
      %v670 = vsel %vm659, %v463, 0
      %v673 = vsel %vm659, %v465, 0
      %v676 = vsel %vm659, %v467, 0
      %v679 = vsel %vm659, %v469, 0
      %v682 = vsel %vm659, %v471, 0
      %v685 = vsel %vm659, %v473, 0
      %v688 = vsel %vm659, %v475, 0
      %v691 = vsel %vm659, %v477, 0
      %v694 = vsel %vm659, %v479, 0
      %v697 = vsel %vm659, %v481, 0
      %v700 = vsel %vm659, %v483, 0
      %v703 = vsel %vm659, %v485, 0
      %v706 = vsel %vm659, %v487, 0
      %v709 = vsel %vm659, %v489, 0
      %v712 = vsel %vm659, %v491, 0
      %v715 = vsel %vm659, %v493, 0
      %v718 = vsel %vm659, %v495, 0
      %v721 = vsel %vm659, %v497, 0
      %723 = vmatprep.subr.bf16.mxu0 %v618
      %724 = vmatpush1.bf16.msra.mxu0 %v617
      %725 = vmatprep.subr.bf16.mxu0 %v616
      %726 = vmatpush1.bf16.msra.mxu0 %v615
      %727 = vmatprep.subr.bf16.mxu0 %v614
      %728 = vmatpush1.bf16.msra.mxu0 %v613
      %729 = vmatprep.subr.bf16.mxu0 %v612
      %730 = vmatpush1.bf16.msra.mxu0 %v611
      %731 = vmatprep.subr.bf16.mxu0 %v610
      %732 = vmatpush1.bf16.msra.mxu0 %v609
      %733 = vmatprep.subr.bf16.mxu0 %v608
      %734 = vmatpush1.bf16.msra.mxu0 %v607
      %735 = vmatprep.subr.bf16.mxu0 %v606
      %736 = vmatpush1.bf16.msra.mxu0 %v605
      %737 = vmatprep.subr.bf16.mxu0 %v604
      %738 = vmatpush1.bf16.msra.mxu0 %v603
      %739 = vmatprep.subr.bf16.mxu0 0
      %740 = vmatpush2.bf16.msra.mxu0 0
      %741 = vmatprep.subr.bf16.mxu0 0
      %742 = vmatpush2.bf16.msra.mxu0 0
      %743 = vmatprep.subr.bf16.mxu0 %v630
      %744 = vmatpush2.bf16.msra.mxu0 %v629
      %745 = vmatprep.subr.bf16.mxu0 %v628
      %746 = vmatpush2.bf16.msra.mxu0 %v627
      %747 = vmatprep.subr.bf16.mxu0 %v626
      %748 = vmatpush2.bf16.msra.mxu0 %v625
      %749 = vmatprep.subr.bf16.mxu0 %v624
      %750 = vmatpush2.bf16.msra.mxu0 %v623
      %751 = vmatprep.subr.bf16.mxu0 %v622
      %752 = vmatpush2.bf16.msra.mxu0 %v621
      %753 = vmatprep.subr.bf16.mxu0 %v620
      %754 = vmatpush2.bf16.msra.mxu0 %v619
      %755 = vmatprep.mubr.bf16.mxu0 %v661
      %756 = vmatmul.mubr.bf16.gmra.mxu0 %v456
      %v757 = vpop.f32.mrf.mxu0
      %v758 = vadd.f32 0.0, %v757
      %v759 = vpop.f32.mrf.mxu0
      %v760 = vadd.f32 0.0, %v759
      %v761 = vpop.f32.mrf.mxu0
      %v762 = vadd.f32 0.0, %v761
      %v763 = vpop.f32.mrf.mxu0
      %v764 = vadd.f32 0.0, %v763
      %765 = vmatprep.mubr.bf16.mxu0 %v664
      %766 = vmatmul.mubr.bf16.gmra.mxu0 %v458
      %v767 = vpop.f32.mrf.mxu0
      %v768 = vadd.f32 0.0, %v767
      %v769 = vpop.f32.mrf.mxu0
      %v770 = vadd.f32 0.0, %v769
      %v771 = vpop.f32.mrf.mxu0
      %v772 = vadd.f32 0.0, %v771
      %v773 = vpop.f32.mrf.mxu0
      %v774 = vadd.f32 0.0, %v773
      %775 = vmatprep.mubr.bf16.mxu0 %v667
      %776 = vmatmul.mubr.bf16.gmra.mxu0 %v460
      %v777 = vpop.f32.mrf.mxu0
      %v778 = vadd.f32 0.0, %v777
      %v779 = vpop.f32.mrf.mxu0
      %v780 = vadd.f32 0.0, %v779
      %v781 = vpop.f32.mrf.mxu0
      %v782 = vadd.f32 0.0, %v781
      %v783 = vpop.f32.mrf.mxu0
      %v784 = vadd.f32 0.0, %v783
      %785 = vmatprep.mubr.bf16.mxu0 %v670
      %786 = vmatmul.mubr.bf16.gmra.mxu0 %v462
      %v787 = vpop.f32.mrf.mxu0
      %v788 = vadd.f32 0.0, %v787
      %v789 = vpop.f32.mrf.mxu0
      %v790 = vadd.f32 0.0, %v789
      %v791 = vpop.f32.mrf.mxu0
      %v792 = vadd.f32 0.0, %v791
      %v793 = vpop.f32.mrf.mxu0
      %v794 = vadd.f32 0.0, %v793
      %795 = vmatprep.mubr.bf16.mxu0 %v673
      %796 = vmatmul.mubr.bf16.gmra.mxu0 %v464
      %v797 = vpop.f32.mrf.mxu0
      %v798 = vadd.f32 0.0, %v797
      %v799 = vpop.f32.mrf.mxu0
      %v800 = vadd.f32 0.0, %v799
      %v801 = vpop.f32.mrf.mxu0
      %v802 = vadd.f32 0.0, %v801
      %v803 = vpop.f32.mrf.mxu0
      %v804 = vadd.f32 0.0, %v803
      %805 = vmatprep.mubr.bf16.mxu0 %v676
      %806 = vmatmul.mubr.bf16.gmra.mxu0 %v466
      %v807 = vpop.f32.mrf.mxu0
      %v808 = vadd.f32 0.0, %v807
      %v809 = vpop.f32.mrf.mxu0
      %v810 = vadd.f32 0.0, %v809
      %v811 = vpop.f32.mrf.mxu0
      %v812 = vadd.f32 0.0, %v811
      %v813 = vpop.f32.mrf.mxu0
      %v814 = vadd.f32 0.0, %v813
      %815 = vmatprep.mubr.bf16.mxu0 %v679
      %816 = vmatmul.mubr.bf16.gmra.mxu0 %v468
      %v817 = vpop.f32.mrf.mxu0
      %v818 = vadd.f32 0.0, %v817
      %v819 = vpop.f32.mrf.mxu0
      %v820 = vadd.f32 0.0, %v819
      %v821 = vpop.f32.mrf.mxu0
      %v822 = vadd.f32 0.0, %v821
      %v823 = vpop.f32.mrf.mxu0
      %v824 = vadd.f32 0.0, %v823
      %825 = vmatprep.mubr.bf16.mxu0 %v682
      %826 = vmatmul.mubr.bf16.gmra.mxu0 %v470
      %v827 = vpop.f32.mrf.mxu0
      %v828 = vadd.f32 0.0, %v827
      %v829 = vpop.f32.mrf.mxu0
      %v830 = vadd.f32 0.0, %v829
      %v831 = vpop.f32.mrf.mxu0
      %v832 = vadd.f32 0.0, %v831
      %v833 = vpop.f32.mrf.mxu0
      %v834 = vadd.f32 0.0, %v833
      %835 = vmatprep.mubr.bf16.mxu0 %v685
      %836 = vmatmul.mubr.bf16.gmra.mxu0 %v472
      %v837 = vpop.f32.mrf.mxu0
      %v838 = vadd.f32 0.0, %v837
      %v839 = vpop.f32.mrf.mxu0
      %v840 = vadd.f32 0.0, %v839
      %v841 = vpop.f32.mrf.mxu0
      %v842 = vadd.f32 0.0, %v841
      %v843 = vpop.f32.mrf.mxu0
      %v844 = vadd.f32 0.0, %v843
      %845 = vmatprep.mubr.bf16.mxu0 %v688
      %846 = vmatmul.mubr.bf16.gmra.mxu0 %v474
      %v847 = vpop.f32.mrf.mxu0
      %v848 = vadd.f32 0.0, %v847
      %v849 = vpop.f32.mrf.mxu0
      %v850 = vadd.f32 0.0, %v849
      %v851 = vpop.f32.mrf.mxu0
      %v852 = vadd.f32 0.0, %v851
      %v853 = vpop.f32.mrf.mxu0
      %v854 = vadd.f32 0.0, %v853
      %855 = vmatprep.mubr.bf16.mxu0 %v691
      %856 = vmatmul.mubr.bf16.gmra.mxu0 %v476
      %v857 = vpop.f32.mrf.mxu0
      %v858 = vadd.f32 0.0, %v857
      %v859 = vpop.f32.mrf.mxu0
      %v860 = vadd.f32 0.0, %v859
      %v861 = vpop.f32.mrf.mxu0
      %v862 = vadd.f32 0.0, %v861
      %v863 = vpop.f32.mrf.mxu0
      %v864 = vadd.f32 0.0, %v863
      %865 = vmatprep.mubr.bf16.mxu0 %v694
      %866 = vmatmul.mubr.bf16.gmra.mxu0 %v478
      %v867 = vpop.f32.mrf.mxu0
      %v868 = vadd.f32 0.0, %v867
      %v869 = vpop.f32.mrf.mxu0
      %v870 = vadd.f32 0.0, %v869
      %v871 = vpop.f32.mrf.mxu0
      %v872 = vadd.f32 0.0, %v871
      %v873 = vpop.f32.mrf.mxu0
      %v874 = vadd.f32 0.0, %v873
      %875 = vmatprep.mubr.bf16.mxu0 %v697
      %876 = vmatmul.mubr.bf16.gmra.mxu0 %v480
      %v877 = vpop.f32.mrf.mxu0
      %v878 = vadd.f32 0.0, %v877
      %v879 = vpop.f32.mrf.mxu0
      %v880 = vadd.f32 0.0, %v879
      %v881 = vpop.f32.mrf.mxu0
      %v882 = vadd.f32 0.0, %v881
      %v883 = vpop.f32.mrf.mxu0
      %v884 = vadd.f32 0.0, %v883
      %885 = vmatprep.mubr.bf16.mxu0 %v700
      %886 = vmatmul.mubr.bf16.gmra.mxu0 %v482
      %v887 = vpop.f32.mrf.mxu0
      %v888 = vadd.f32 0.0, %v887
      %v889 = vpop.f32.mrf.mxu0
      %v890 = vadd.f32 0.0, %v889
      %v891 = vpop.f32.mrf.mxu0
      %v892 = vadd.f32 0.0, %v891
      %v893 = vpop.f32.mrf.mxu0
      %v894 = vadd.f32 0.0, %v893
      %895 = vmatprep.mubr.bf16.mxu0 %v703
      %896 = vmatmul.mubr.bf16.gmra.mxu0 %v484
      %v897 = vpop.f32.mrf.mxu0
      %v898 = vadd.f32 0.0, %v897
      %v899 = vpop.f32.mrf.mxu0
      %v900 = vadd.f32 0.0, %v899
      %v901 = vpop.f32.mrf.mxu0
      %v902 = vadd.f32 0.0, %v901
      %v903 = vpop.f32.mrf.mxu0
      %v904 = vadd.f32 0.0, %v903
      %905 = vmatprep.mubr.bf16.mxu0 %v706
      %906 = vmatmul.mubr.bf16.gmra.mxu0 %v486
      %v907 = vpop.f32.mrf.mxu0
      %v908 = vadd.f32 0.0, %v907
      %v909 = vpop.f32.mrf.mxu0
      %v910 = vadd.f32 0.0, %v909
      %v911 = vpop.f32.mrf.mxu0
      %v912 = vadd.f32 0.0, %v911
      %v913 = vpop.f32.mrf.mxu0
      %v914 = vadd.f32 0.0, %v913
      %915 = vmatprep.mubr.bf16.mxu0 %v709
      %916 = vmatmul.mubr.bf16.gmra.mxu0 %v488
      %v917 = vpop.f32.mrf.mxu0
      %v918 = vadd.f32 0.0, %v917
      %v919 = vpop.f32.mrf.mxu0
      %v920 = vadd.f32 0.0, %v919
      %v921 = vpop.f32.mrf.mxu0
      %v922 = vadd.f32 0.0, %v921
      %v923 = vpop.f32.mrf.mxu0
      %v924 = vadd.f32 0.0, %v923
      %925 = vmatprep.mubr.bf16.mxu0 %v712
      %926 = vmatmul.mubr.bf16.gmra.mxu0 %v490
      %v927 = vpop.f32.mrf.mxu0
      %v928 = vadd.f32 0.0, %v927
      %v929 = vpop.f32.mrf.mxu0
      %v930 = vadd.f32 0.0, %v929
      %v931 = vpop.f32.mrf.mxu0
      %v932 = vadd.f32 0.0, %v931
      %v933 = vpop.f32.mrf.mxu0
      %v934 = vadd.f32 0.0, %v933
      %935 = vmatprep.mubr.bf16.mxu0 %v715
      %936 = vmatmul.mubr.bf16.gmra.mxu0 %v492
      %v937 = vpop.f32.mrf.mxu0
      %v938 = vadd.f32 0.0, %v937
      %v939 = vpop.f32.mrf.mxu0
      %v940 = vadd.f32 0.0, %v939
      %v941 = vpop.f32.mrf.mxu0
      %v942 = vadd.f32 0.0, %v941
      %v943 = vpop.f32.mrf.mxu0
      %v944 = vadd.f32 0.0, %v943
      %945 = vmatprep.mubr.bf16.mxu0 %v718
      %946 = vmatmul.mubr.bf16.gmra.mxu0 %v494
      %v947 = vpop.f32.mrf.mxu0
      %v948 = vadd.f32 0.0, %v947
      %v949 = vpop.f32.mrf.mxu0
      %v950 = vadd.f32 0.0, %v949
      %v951 = vpop.f32.mrf.mxu0
      %v952 = vadd.f32 0.0, %v951
      %v953 = vpop.f32.mrf.mxu0
      %v954 = vadd.f32 0.0, %v953
      %955 = vmatprep.mubr.bf16.mxu0 %v721
      %956 = vmatmul.mubr.bf16.gmra.mxu0 %v496
      %v957 = vpop.f32.mrf.mxu0
      %v958 = vadd.f32 0.0, %v957
      %v959 = vpop.f32.mrf.mxu0
      %v960 = vadd.f32 0.0, %v959
      %v961 = vpop.f32.mrf.mxu0
      %v962 = vadd.f32 0.0, %v961
      %v963 = vpop.f32.mrf.mxu0
      %v964 = vadd.f32 0.0, %v963
      %965 = vdwg.mxu0
      %v966 = vpack.c.bf16 %v762, %v758
      %v967 = vpack.c.bf16 %v764, %v760
      %v968 = vpack.c.bf16 %v772, %v768
      %v969 = vpack.c.bf16 %v774, %v770
      %v970 = vpack.c.bf16 %v782, %v778
      %v971 = vpack.c.bf16 %v784, %v780
      %v972 = vpack.c.bf16 %v792, %v788
      %v973 = vpack.c.bf16 %v794, %v790
      %v974 = vpack.c.bf16 %v802, %v798
      %v975 = vpack.c.bf16 %v804, %v800
      %v976 = vpack.c.bf16 %v812, %v808
      %v977 = vpack.c.bf16 %v814, %v810
      %v978 = vpack.c.bf16 %v822, %v818
      %v979 = vpack.c.bf16 %v824, %v820
      %v980 = vld [vmem:[%s2] sm:$0xff]
      %v981 = vld [vmem:[%s2 + $0x8] sm:$0xf]
      %v982 = vld [vmem:[%s2 + $0xc] sm:$0xff]
      %v983 = vld [vmem:[%s2 + $0x14] sm:$0xf]
      %v984 = vld [vmem:[%s2 + $0x18] sm:$0xff]
      %v985 = vld [vmem:[%s2 + $0x20] sm:$0xf]
      %v986 = vld [vmem:[%s2 + $0x24] sm:$0xff]
      %v987 = vld [vmem:[%s2 + $0x2c] sm:$0xf]
      %v988 = vld [vmem:[%s2 + $0x30] sm:$0xff]
      %v989 = vld [vmem:[%s2 + $0x38] sm:$0xf]
      %v990 = vld [vmem:[%s2 + $0x3c] sm:$0xff]
      %v991 = vld [vmem:[%s2 + $0x44] sm:$0xf]
      %v992 = vld [vmem:[%s2 + $0x48] sm:$0xff]
      %v993 = vld [vmem:[%s2 + $0x50] sm:$0xf]
      %v994 = vld [vmem:[%s2 + $0x54] sm:$0xff]
      %v995 = vld [vmem:[%s2 + $0x5c] sm:$0xf]
      %v996 = vld [vmem:[%s2 + $0x60] sm:$0xff]
      %v997 = vld [vmem:[%s2 + $0x68] sm:$0xf]
      %v998 = vld [vmem:[%s2 + $0x6c] sm:$0xff]
      %v999 = vld [vmem:[%s2 + $0x74] sm:$0xf]
      %v1000 = vld [vmem:[%s2 + $0x78] sm:$0xff]
      %v1001 = vld [vmem:[%s2 + $0x80] sm:$0xf]
      %v1002 = vld [vmem:[%s2 + $0x84] sm:$0xff]
      %v1003 = vld [vmem:[%s2 + $0x8c] sm:$0xf]
      %v1004 = vld [vmem:[%s2 + $0x90] sm:$0xff]
      %v1005 = vld [vmem:[%s2 + $0x98] sm:$0xf]
      %v1006 = vld [vmem:[%s2 + $0x9c] sm:$0xff]
      %v1007 = vld [vmem:[%s2 + $0xa4] sm:$0xf]
      %v1008 = vld [vmem:[%s2 + $0xa8] sm:$0xff]
      %v1009 = vld [vmem:[%s2 + $0xb0] sm:$0xf]
      %v1010 = vld [vmem:[%s2 + $0xb4] sm:$0xff]
      %v1011 = vld [vmem:[%s2 + $0xbc] sm:$0xf]
      %v1012 = vld [vmem:[%s2 + $0xc0] sm:$0xff]
      %v1013 = vld [vmem:[%s2 + $0xc8] sm:$0xf]
      %v1014 = vld [vmem:[%s2 + $0xcc] sm:$0xff]
      %v1015 = vld [vmem:[%s2 + $0xd4] sm:$0xf]
      %v1016 = vld [vmem:[%s2 + $0xd8] sm:$0xff]
      %v1017 = vld [vmem:[%s2 + $0xe0] sm:$0xf]
      %v1018 = vld [vmem:[%s2 + $0xe4] sm:$0xff]
      %v1019 = vld [vmem:[%s2 + $0xec] sm:$0xf]
      %v1020 = vld [vmem:[%s2 + $0xf0] sm:$0xff]
      %v1021 = vld [vmem:[%s2 + $0xf8] sm:$0xf]
      %v1022 = vld [vmem:[%s2 + $0xfc] sm:$0xff]
      %v1023 = vld [vmem:[%s2 + $0x104] sm:$0xf]
      %v1024 = vld [vmem:[%s2 + $0x108] sm:$0xff]
      %v1025 = vld [vmem:[%s2 + $0x110] sm:$0xf]
      %v1026 = vld [vmem:[%s2 + $0x114] sm:$0xff]
      %v1027 = vld [vmem:[%s2 + $0x11c] sm:$0xf]
      %v1028 = vld [vmem:[%s2 + $0x120] sm:$0xff]
      %v1029 = vld [vmem:[%s2 + $0x128] sm:$0xf]
      %v1030 = vld [vmem:[%s2 + $0x12c] sm:$0xff]
      %v1031 = vld [vmem:[%s2 + $0x134] sm:$0xf]
      %v1032 = vld [vmem:[%s2 + $0x138] sm:$0xff]
      %v1033 = vld [vmem:[%s2 + $0x140] sm:$0xf]
      %v1034 = vld [vmem:[%s2 + $0x144] sm:$0xff]
      %v1035 = vld [vmem:[%s2 + $0x14c] sm:$0xf]
      %v1036 = vpack.c.bf16 %v832, %v828
      %v1037 = vpack.c.bf16 %v834, %v830
      %v1038 = vpack.c.bf16 %v842, %v838
      %v1039 = vpack.c.bf16 %v844, %v840
      %v1040 = vpack.c.bf16 %v852, %v848
      %v1041 = vpack.c.bf16 %v854, %v850
      %v1042 = vpack.c.bf16 %v862, %v858
      %v1043 = vpack.c.bf16 %v864, %v860
      %v1044 = vpack.c.bf16 %v872, %v868
      %v1045 = vpack.c.bf16 %v874, %v870
      %v1046 = vpack.c.bf16 %v882, %v878
      %v1047 = vpack.c.bf16 %v884, %v880
      %v1048 = vpack.c.bf16 %v892, %v888
      %v1049 = vpack.c.bf16 %v894, %v890
      %s1050 = scalar_lea.vmem %s2, 336
      %v1051 = vld [vmem:[%s1050] sm:$0xff]
      %v1052 = vld [vmem:[%s1050 + $0x8] sm:$0xf]
      %v1053 = vld [vmem:[%s1050 + $0xc] sm:$0xff]
      %v1054 = vld [vmem:[%s1050 + $0x14] sm:$0xf]
      %v1055 = vld [vmem:[%s1050 + $0x18] sm:$0xff]
      %v1056 = vld [vmem:[%s1050 + $0x20] sm:$0xf]
      %v1057 = vld [vmem:[%s1050 + $0x24] sm:$0xff]
      %v1058 = vld [vmem:[%s1050 + $0x2c] sm:$0xf]
      %v1059 = vld [vmem:[%s1050 + $0x30] sm:$0xff]
      %v1060 = vld [vmem:[%s1050 + $0x38] sm:$0xf]
      %v1061 = vld [vmem:[%s1050 + $0x3c] sm:$0xff]
      %v1062 = vld [vmem:[%s1050 + $0x44] sm:$0xf]
      %v1063 = vld [vmem:[%s1050 + $0x48] sm:$0xff]
      %v1064 = vld [vmem:[%s1050 + $0x50] sm:$0xf]
      %v1065 = vld [vmem:[%s1050 + $0x54] sm:$0xff]
      %v1066 = vld [vmem:[%s1050 + $0x5c] sm:$0xf]
      %v1067 = vld [vmem:[%s1050 + $0x60] sm:$0xff]
      %v1068 = vld [vmem:[%s1050 + $0x68] sm:$0xf]
      %v1069 = vld [vmem:[%s1050 + $0x6c] sm:$0xff]
      %v1070 = vld [vmem:[%s1050 + $0x74] sm:$0xf]
      %v1071 = vld [vmem:[%s1050 + $0x78] sm:$0xff]
      %v1072 = vld [vmem:[%s1050 + $0x80] sm:$0xf]
      %v1073 = vld [vmem:[%s1050 + $0x84] sm:$0xff]
      %v1074 = vld [vmem:[%s1050 + $0x8c] sm:$0xf]
      %v1075 = vld [vmem:[%s1050 + $0x90] sm:$0xff]
      %v1076 = vld [vmem:[%s1050 + $0x98] sm:$0xf]
      %v1077 = vld [vmem:[%s1050 + $0x9c] sm:$0xff]
      %v1078 = vld [vmem:[%s1050 + $0xa4] sm:$0xf]
      %v1079 = vld [vmem:[%s1050 + $0xa8] sm:$0xff]
      %v1080 = vld [vmem:[%s1050 + $0xb0] sm:$0xf]
      %v1081 = vld [vmem:[%s1050 + $0xb4] sm:$0xff]
      %v1082 = vld [vmem:[%s1050 + $0xbc] sm:$0xf]
      %v1083 = vld [vmem:[%s1050 + $0xc0] sm:$0xff]
      %v1084 = vld [vmem:[%s1050 + $0xc8] sm:$0xf]
      %v1085 = vld [vmem:[%s1050 + $0xcc] sm:$0xff]
      %v1086 = vld [vmem:[%s1050 + $0xd4] sm:$0xf]
      %v1087 = vld [vmem:[%s1050 + $0xd8] sm:$0xff]
      %v1088 = vld [vmem:[%s1050 + $0xe0] sm:$0xf]
      %v1089 = vld [vmem:[%s1050 + $0xe4] sm:$0xff]
      %v1090 = vld [vmem:[%s1050 + $0xec] sm:$0xf]
      %v1091 = vld [vmem:[%s1050 + $0xf0] sm:$0xff]
      %v1092 = vld [vmem:[%s1050 + $0xf8] sm:$0xf]
      %v1093 = vld [vmem:[%s1050 + $0xfc] sm:$0xff]
      %v1094 = vld [vmem:[%s1050 + $0x104] sm:$0xf]
      %v1095 = vld [vmem:[%s1050 + $0x108] sm:$0xff]
      %v1096 = vld [vmem:[%s1050 + $0x110] sm:$0xf]
      %v1097 = vld [vmem:[%s1050 + $0x114] sm:$0xff]
      %v1098 = vld [vmem:[%s1050 + $0x11c] sm:$0xf]
      %v1099 = vld [vmem:[%s1050 + $0x120] sm:$0xff]
      %v1100 = vld [vmem:[%s1050 + $0x128] sm:$0xf]
      %v1101 = vld [vmem:[%s1050 + $0x12c] sm:$0xff]
      %v1102 = vld [vmem:[%s1050 + $0x134] sm:$0xf]
      %v1103 = vld [vmem:[%s1050 + $0x138] sm:$0xff]
      %v1104 = vld [vmem:[%s1050 + $0x140] sm:$0xf]
      %v1105 = vld [vmem:[%s1050 + $0x144] sm:$0xff]
      %v1106 = vld [vmem:[%s1050 + $0x14c] sm:$0xf]
      %v1163 = vunpack.c.l.b16 %v1051
      %v1164 = vunpack.c.h.b16 %v1051
      %v1165 = vunpack.c.l.b16 %v1052
      %v1166 = vunpack.c.l.b16 %v1053
      %v1167 = vunpack.c.h.b16 %v1053
      %v1168 = vunpack.c.l.b16 %v1054
      %v1169 = vunpack.c.l.b16 %v1055
      %v1170 = vunpack.c.h.b16 %v1055
      %v1171 = vunpack.c.l.b16 %v1056
      %v1172 = vunpack.c.l.b16 %v1057
      %v1173 = vunpack.c.h.b16 %v1057
      %v1174 = vunpack.c.l.b16 %v1058
      %v1175 = vunpack.c.l.b16 %v1059
      %v1176 = vunpack.c.h.b16 %v1059
      %v1177 = vunpack.c.l.b16 %v1060
      %v1178 = vunpack.c.l.b16 %v1061
      %v1179 = vunpack.c.h.b16 %v1061
      %v1180 = vunpack.c.l.b16 %v1062
      %v1181 = vunpack.c.l.b16 %v1063
      %v1182 = vunpack.c.h.b16 %v1063
      %v1183 = vunpack.c.l.b16 %v1064
      %v1184 = vunpack.c.l.b16 %v1065
      %v1185 = vunpack.c.h.b16 %v1065
      %v1186 = vunpack.c.l.b16 %v1066
      %v1187 = vunpack.c.l.b16 %v1067
      %v1188 = vunpack.c.h.b16 %v1067
      %v1189 = vunpack.c.l.b16 %v1068
      %v1190 = vunpack.c.l.b16 %v1069
      %v1191 = vunpack.c.h.b16 %v1069
      %v1192 = vunpack.c.l.b16 %v1070
      %v1193 = vunpack.c.l.b16 %v1071
      %v1194 = vunpack.c.h.b16 %v1071
      %v1195 = vunpack.c.l.b16 %v1072
      %v1196 = vunpack.c.l.b16 %v1073
      %v1197 = vunpack.c.h.b16 %v1073
      %v1198 = vunpack.c.l.b16 %v1074
      %v1199 = vunpack.c.l.b16 %v1075
      %v1200 = vunpack.c.h.b16 %v1075
      %v1201 = vunpack.c.l.b16 %v1076
      %v1202 = vunpack.c.l.b16 %v1077
      %v1203 = vunpack.c.h.b16 %v1077
      %v1204 = vunpack.c.l.b16 %v1078
      %v1205 = vunpack.c.l.b16 %v1079
      %v1206 = vunpack.c.h.b16 %v1079
      %v1207 = vunpack.c.l.b16 %v1080
      %v1208 = vunpack.c.l.b16 %v1081
      %v1209 = vunpack.c.h.b16 %v1081
      %v1210 = vunpack.c.l.b16 %v1082
      %v1211 = vunpack.c.l.b16 %v1083
      %v1212 = vunpack.c.h.b16 %v1083
      %v1213 = vunpack.c.l.b16 %v1084
      %v1214 = vunpack.c.l.b16 %v1085
      %v1215 = vunpack.c.h.b16 %v1085
      %v1216 = vunpack.c.l.b16 %v1086
      %v1217 = vunpack.c.l.b16 %v1087
      %v1218 = vunpack.c.h.b16 %v1087
      %v1219 = vunpack.c.l.b16 %v1088
      %v1220 = vunpack.c.l.b16 %v1089
      %v1221 = vunpack.c.h.b16 %v1089
      %v1222 = vunpack.c.l.b16 %v1090
      %v1223 = vunpack.c.l.b16 %v1091
      %v1224 = vunpack.c.h.b16 %v1091
      %v1225 = vunpack.c.l.b16 %v1092
      %v1226 = vunpack.c.l.b16 %v1093
      %v1227 = vunpack.c.h.b16 %v1093
      %v1228 = vunpack.c.l.b16 %v1094
      %v1229 = vunpack.c.l.b16 %v1095
      %v1230 = vunpack.c.h.b16 %v1095
      %v1231 = vunpack.c.l.b16 %v1096
      %v1232 = vunpack.c.l.b16 %v1097
      %v1233 = vunpack.c.h.b16 %v1097
      %v1234 = vunpack.c.l.b16 %v1098
      %v1235 = vunpack.c.l.b16 %v1099
      %v1236 = vunpack.c.h.b16 %v1099
      %v1237 = vunpack.c.l.b16 %v1100
      %v1238 = vunpack.c.l.b16 %v1101
      %v1239 = vunpack.c.h.b16 %v1101
      %v1240 = vunpack.c.l.b16 %v1102
      %v1241 = vunpack.c.l.b16 %v1103
      %v1242 = vunpack.c.h.b16 %v1103
      %v1243 = vunpack.c.l.b16 %v1104
      %v1244 = vunpack.c.l.b16 %v1105
      %v1245 = vunpack.c.h.b16 %v1105
      %v1246 = vunpack.c.l.b16 %v1106
      %v1247 = vpack.c.b16 %v1166, %v1163
      %v1248 = vpack.c.b16 %v1167, %v1164
      %v1249 = vpack.c.b16 %v1168, %v1165
      %v1250 = vpack.c.b16 %v1172, %v1169
      %v1251 = vpack.c.b16 %v1173, %v1170
      %v1252 = vpack.c.b16 %v1174, %v1171
      %v1253 = vpack.c.b16 %v1178, %v1175
      %v1254 = vpack.c.b16 %v1179, %v1176
      %v1255 = vpack.c.b16 %v1180, %v1177
      %v1256 = vpack.c.b16 %v1184, %v1181
      %v1257 = vpack.c.b16 %v1185, %v1182
      %v1258 = vpack.c.b16 %v1186, %v1183
      %v1259 = vpack.c.b16 %v1190, %v1187
      %v1260 = vpack.c.b16 %v1191, %v1188
      %v1261 = vpack.c.b16 %v1192, %v1189
      %v1262 = vpack.c.b16 %v1196, %v1193
      %v1263 = vpack.c.b16 %v1197, %v1194
      %v1264 = vpack.c.b16 %v1198, %v1195
      %v1265 = vpack.c.b16 %v1202, %v1199
      %v1266 = vpack.c.b16 %v1203, %v1200
      %v1267 = vpack.c.b16 %v1204, %v1201
      %v1268 = vpack.c.b16 %v1208, %v1205
      %v1269 = vpack.c.b16 %v1209, %v1206
      %v1270 = vpack.c.b16 %v1210, %v1207
      %v1271 = vpack.c.b16 %v1214, %v1211
      %v1272 = vpack.c.b16 %v1215, %v1212
      %v1273 = vpack.c.b16 %v1216, %v1213
      %v1274 = vpack.c.b16 %v1220, %v1217
      %v1275 = vpack.c.b16 %v1221, %v1218
      %v1276 = vpack.c.b16 %v1222, %v1219
      %v1277 = vpack.c.b16 %v1226, %v1223
      %v1278 = vpack.c.b16 %v1227, %v1224
      %v1279 = vpack.c.b16 %v1228, %v1225
      %v1280 = vpack.c.b16 %v1232, %v1229
      %v1281 = vpack.c.b16 %v1233, %v1230
      %v1282 = vpack.c.b16 %v1234, %v1231
      %v1283 = vpack.c.b16 %v1238, %v1235
      %v1284 = vpack.c.b16 %v1239, %v1236
      %v1285 = vpack.c.b16 %v1240, %v1237
      %v1286 = vpack.c.b16 %v1244, %v1241
      %v1287 = vpack.c.b16 %v1245, %v1242
      %v1288 = vpack.c.b16 %v1246, %v1243
      %v1332 = vsel %vm659, %v1037, 0
      %v1335 = vsel %vm659, %v1039, 0
      %v1338 = vsel %vm659, %v1041, 0
      %v1341 = vsel %vm659, %v1043, 0
      %v1344 = vsel %vm659, %v1045, 0
      %v1347 = vsel %vm659, %v1047, 0
      %v1350 = vsel %vm659, %v1049, 0
      %1352 = vmatprep.subr.bf16.mxu0 %v1269
      %1353 = vmatpush1.bf16.msra.mxu0 %v1268
      %1354 = vmatprep.subr.bf16.mxu0 %v1266
      %1355 = vmatpush1.bf16.msra.mxu0 %v1265
      %1356 = vmatprep.subr.bf16.mxu0 %v1263
      %1357 = vmatpush1.bf16.msra.mxu0 %v1262
      %1358 = vmatprep.subr.bf16.mxu0 %v1260
      %1359 = vmatpush1.bf16.msra.mxu0 %v1259
      %1360 = vmatprep.subr.bf16.mxu0 %v1257
      %1361 = vmatpush1.bf16.msra.mxu0 %v1256
      %1362 = vmatprep.subr.bf16.mxu0 %v1254
      %1363 = vmatpush1.bf16.msra.mxu0 %v1253
      %1364 = vmatprep.subr.bf16.mxu0 %v1251
      %1365 = vmatpush1.bf16.msra.mxu0 %v1250
      %1366 = vmatprep.subr.bf16.mxu0 %v1248
      %1367 = vmatpush1.bf16.msra.mxu0 %v1247
      %1368 = vmatprep.subr.bf16.mxu0 0
      %1369 = vmatpush2.bf16.msra.mxu0 0
      %1370 = vmatprep.subr.bf16.mxu0 0
      %1371 = vmatpush2.bf16.msra.mxu0 0
      %1372 = vmatprep.subr.bf16.mxu0 %v1287
      %1373 = vmatpush2.bf16.msra.mxu0 %v1286
      %1374 = vmatprep.subr.bf16.mxu0 %v1284
      %1375 = vmatpush2.bf16.msra.mxu0 %v1283
      %1376 = vmatprep.subr.bf16.mxu0 %v1281
      %1377 = vmatpush2.bf16.msra.mxu0 %v1280
      %1378 = vmatprep.subr.bf16.mxu0 %v1278
      %1379 = vmatpush2.bf16.msra.mxu0 %v1277
      %1380 = vmatprep.subr.bf16.mxu0 %v1275
      %1381 = vmatpush2.bf16.msra.mxu0 %v1274
      %1382 = vmatprep.subr.bf16.mxu0 %v1272
      %1383 = vmatpush2.bf16.msra.mxu0 %v1271
      %1384 = vmatprep.mubr.bf16.mxu0 %v1332
      %1385 = vmatmul.mubr.bf16.gmra.mxu0 %v1036
      %v1386 = vpop.f32.mrf.mxu0
      %v1387 = vadd.f32 0.0, %v1386
      %v1388 = vpop.f32.mrf.mxu0
      %v1389 = vadd.f32 0.0, %v1388
      %v1390 = vpop.f32.mrf.mxu0
      %v1391 = vadd.f32 0.0, %v1390
      %v1392 = vpop.f32.mrf.mxu0
      %v1393 = vadd.f32 0.0, %v1392
      %1394 = vmatprep.mubr.bf16.mxu0 %v1335
      %1395 = vmatmul.mubr.bf16.gmra.mxu0 %v1038
      %v1396 = vpop.f32.mrf.mxu0
      %v1397 = vadd.f32 0.0, %v1396
      %v1398 = vpop.f32.mrf.mxu0
      %v1399 = vadd.f32 0.0, %v1398
      %v1400 = vpop.f32.mrf.mxu0
      %v1401 = vadd.f32 0.0, %v1400
      %v1402 = vpop.f32.mrf.mxu0
      %v1403 = vadd.f32 0.0, %v1402
      %1404 = vmatprep.mubr.bf16.mxu0 %v1338
      %1405 = vmatmul.mubr.bf16.gmra.mxu0 %v1040
      %v1406 = vpop.f32.mrf.mxu0
      %v1407 = vadd.f32 0.0, %v1406
      %v1408 = vpop.f32.mrf.mxu0
      %v1409 = vadd.f32 0.0, %v1408
      %v1410 = vpop.f32.mrf.mxu0
      %v1411 = vadd.f32 0.0, %v1410
      %v1412 = vpop.f32.mrf.mxu0
      %v1413 = vadd.f32 0.0, %v1412
      %1414 = vmatprep.mubr.bf16.mxu0 %v1341
      %1415 = vmatmul.mubr.bf16.gmra.mxu0 %v1042
      %v1416 = vpop.f32.mrf.mxu0
      %v1417 = vadd.f32 0.0, %v1416
      %v1418 = vpop.f32.mrf.mxu0
      %v1419 = vadd.f32 0.0, %v1418
      %v1420 = vpop.f32.mrf.mxu0
      %v1421 = vadd.f32 0.0, %v1420
      %v1422 = vpop.f32.mrf.mxu0
      %v1423 = vadd.f32 0.0, %v1422
      %1424 = vmatprep.mubr.bf16.mxu0 %v1344
      %1425 = vmatmul.mubr.bf16.gmra.mxu0 %v1044
      %v1426 = vpop.f32.mrf.mxu0
      %v1427 = vadd.f32 0.0, %v1426
      %v1428 = vpop.f32.mrf.mxu0
      %v1429 = vadd.f32 0.0, %v1428
      %v1430 = vpop.f32.mrf.mxu0
      %v1431 = vadd.f32 0.0, %v1430
      %v1432 = vpop.f32.mrf.mxu0
      %v1433 = vadd.f32 0.0, %v1432
      %1434 = vmatprep.mubr.bf16.mxu0 %v1347
      %1435 = vmatmul.mubr.bf16.gmra.mxu0 %v1046
      %v1436 = vpop.f32.mrf.mxu0
      %v1437 = vadd.f32 0.0, %v1436
      %v1438 = vpop.f32.mrf.mxu0
      %v1439 = vadd.f32 0.0, %v1438
      %v1440 = vpop.f32.mrf.mxu0
      %v1441 = vadd.f32 0.0, %v1440
      %v1442 = vpop.f32.mrf.mxu0
      %v1443 = vadd.f32 0.0, %v1442
      %1444 = vmatprep.mubr.bf16.mxu0 %v1350
      %1445 = vmatmul.mubr.bf16.gmra.mxu0 %v1048
      %v1446 = vpop.f32.mrf.mxu0
      %v1447 = vadd.f32 0.0, %v1446
      %v1448 = vpop.f32.mrf.mxu0
      %v1449 = vadd.f32 0.0, %v1448
      %v1450 = vpop.f32.mrf.mxu0
      %v1451 = vadd.f32 0.0, %v1450
      %v1452 = vpop.f32.mrf.mxu0
      %v1453 = vadd.f32 0.0, %v1452
      %1454 = vdwg.mxu0
      %1455 = vmatprep.subr.bf16.mxu0 0
      %1456 = vmatpush1.bf16.msra.mxu0 %v1270
      %1457 = vmatprep.subr.bf16.mxu0 0
      %1458 = vmatpush1.bf16.msra.mxu0 %v1267
      %1459 = vmatprep.subr.bf16.mxu0 0
      %1460 = vmatpush1.bf16.msra.mxu0 %v1264
      %1461 = vmatprep.subr.bf16.mxu0 0
      %1462 = vmatpush1.bf16.msra.mxu0 %v1261
      %1463 = vmatprep.subr.bf16.mxu0 0
      %1464 = vmatpush1.bf16.msra.mxu0 %v1258
      %1465 = vmatprep.subr.bf16.mxu0 0
      %1466 = vmatpush1.bf16.msra.mxu0 %v1255
      %1467 = vmatprep.subr.bf16.mxu0 0
      %1468 = vmatpush1.bf16.msra.mxu0 %v1252
      %1469 = vmatprep.subr.bf16.mxu0 0
      %1470 = vmatpush1.bf16.msra.mxu0 %v1249
      %1471 = vmatprep.subr.bf16.mxu0 0
      %1472 = vmatpush2.bf16.msra.mxu0 0
      %1473 = vmatprep.subr.bf16.mxu0 0
      %1474 = vmatpush2.bf16.msra.mxu0 0
      %1475 = vmatprep.subr.bf16.mxu0 0
      %1476 = vmatpush2.bf16.msra.mxu0 %v1288
      %1477 = vmatprep.subr.bf16.mxu0 0
      %1478 = vmatpush2.bf16.msra.mxu0 %v1285
      %1479 = vmatprep.subr.bf16.mxu0 0
      %1480 = vmatpush2.bf16.msra.mxu0 %v1282
      %1481 = vmatprep.subr.bf16.mxu0 0
      %1482 = vmatpush2.bf16.msra.mxu0 %v1279
      %1483 = vmatprep.subr.bf16.mxu0 0
      %1484 = vmatpush2.bf16.msra.mxu0 %v1276
      %1485 = vmatprep.subr.bf16.mxu0 0
      %1486 = vmatpush2.bf16.msra.mxu0 %v1273
      %1487 = vmatprep.mubr.bf16.mxu0 %v1332
      %1488 = vmatmul.mubr.bf16.gmra.mxu0 %v1036
      %v1489 = vpop.f32.mrf.mxu0
      %v1490 = vadd.f32 0.0, %v1489
      %v1491 = vpop.f32.mrf.mxu0
      %v1492 = vpop.f32.mrf.mxu0
      %v1493 = vadd.f32 0.0, %v1492
      %v1494 = vpop.f32.mrf.mxu0
      %1495 = vmatprep.mubr.bf16.mxu0 %v1335
      %1496 = vmatmul.mubr.bf16.gmra.mxu0 %v1038
      %v1497 = vpop.f32.mrf.mxu0
      %v1498 = vadd.f32 0.0, %v1497
      %v1499 = vpop.f32.mrf.mxu0
      %v1500 = vpop.f32.mrf.mxu0
      %v1501 = vadd.f32 0.0, %v1500
      %v1502 = vpop.f32.mrf.mxu0
      %1503 = vmatprep.mubr.bf16.mxu0 %v1338
      %1504 = vmatmul.mubr.bf16.gmra.mxu0 %v1040
      %v1505 = vpop.f32.mrf.mxu0
      %v1506 = vadd.f32 0.0, %v1505
      %v1507 = vpop.f32.mrf.mxu0
      %v1508 = vpop.f32.mrf.mxu0
      %v1509 = vadd.f32 0.0, %v1508
      %v1510 = vpop.f32.mrf.mxu0
      %1511 = vmatprep.mubr.bf16.mxu0 %v1341
      %1512 = vmatmul.mubr.bf16.gmra.mxu0 %v1042
      %v1513 = vpop.f32.mrf.mxu0
      %v1514 = vadd.f32 0.0, %v1513
      %v1515 = vpop.f32.mrf.mxu0
      %v1516 = vpop.f32.mrf.mxu0
      %v1517 = vadd.f32 0.0, %v1516
      %v1518 = vpop.f32.mrf.mxu0
      %1519 = vmatprep.mubr.bf16.mxu0 %v1344
      %1520 = vmatmul.mubr.bf16.gmra.mxu0 %v1044
      %v1521 = vpop.f32.mrf.mxu0
      %v1522 = vadd.f32 0.0, %v1521
      %v1523 = vpop.f32.mrf.mxu0
      %v1524 = vpop.f32.mrf.mxu0
      %v1525 = vadd.f32 0.0, %v1524
      %v1526 = vpop.f32.mrf.mxu0
      %1527 = vmatprep.mubr.bf16.mxu0 %v1347
      %1528 = vmatmul.mubr.bf16.gmra.mxu0 %v1046
      %v1529 = vpop.f32.mrf.mxu0
      %v1530 = vadd.f32 0.0, %v1529
      %v1531 = vpop.f32.mrf.mxu0
      %v1532 = vpop.f32.mrf.mxu0
      %v1533 = vadd.f32 0.0, %v1532
      %v1534 = vpop.f32.mrf.mxu0
      %1535 = vmatprep.mubr.bf16.mxu0 %v1350
      %1536 = vmatmul.mubr.bf16.gmra.mxu0 %v1048
      %v1537 = vpop.f32.mrf.mxu0
      %v1538 = vadd.f32 0.0, %v1537
      %v1539 = vpop.f32.mrf.mxu0
      %v1540 = vpop.f32.mrf.mxu0
      %v1541 = vadd.f32 0.0, %v1540
      %v1542 = vpop.f32.mrf.mxu0
      %1543 = vdwg.mxu0
      %v1600 = vunpack.c.l.b16 %v980
      %v1601 = vunpack.c.h.b16 %v980
      %v1602 = vunpack.c.l.b16 %v981
      %v1603 = vunpack.c.l.b16 %v982
      %v1604 = vunpack.c.h.b16 %v982
      %v1605 = vunpack.c.l.b16 %v983
      %v1606 = vunpack.c.l.b16 %v984
      %v1607 = vunpack.c.h.b16 %v984
      %v1608 = vunpack.c.l.b16 %v985
      %v1609 = vunpack.c.l.b16 %v986
      %v1610 = vunpack.c.h.b16 %v986
      %v1611 = vunpack.c.l.b16 %v987
      %v1612 = vunpack.c.l.b16 %v988
      %v1613 = vunpack.c.h.b16 %v988
      %v1614 = vunpack.c.l.b16 %v989
      %v1615 = vunpack.c.l.b16 %v990
      %v1616 = vunpack.c.h.b16 %v990
      %v1617 = vunpack.c.l.b16 %v991
      %v1618 = vunpack.c.l.b16 %v992
      %v1619 = vunpack.c.h.b16 %v992
      %v1620 = vunpack.c.l.b16 %v993
      %v1621 = vunpack.c.l.b16 %v994
      %v1622 = vunpack.c.h.b16 %v994
      %v1623 = vunpack.c.l.b16 %v995
      %v1624 = vunpack.c.l.b16 %v996
      %v1625 = vunpack.c.h.b16 %v996
      %v1626 = vunpack.c.l.b16 %v997
      %v1627 = vunpack.c.l.b16 %v998
      %v1628 = vunpack.c.h.b16 %v998
      %v1629 = vunpack.c.l.b16 %v999
      %v1630 = vunpack.c.l.b16 %v1000
      %v1631 = vunpack.c.h.b16 %v1000
      %v1632 = vunpack.c.l.b16 %v1001
      %v1633 = vunpack.c.l.b16 %v1002
      %v1634 = vunpack.c.h.b16 %v1002
      %v1635 = vunpack.c.l.b16 %v1003
      %v1636 = vunpack.c.l.b16 %v1004
      %v1637 = vunpack.c.h.b16 %v1004
      %v1638 = vunpack.c.l.b16 %v1005
      %v1639 = vunpack.c.l.b16 %v1006
      %v1640 = vunpack.c.h.b16 %v1006
      %v1641 = vunpack.c.l.b16 %v1007
      %v1642 = vunpack.c.l.b16 %v1008
      %v1643 = vunpack.c.h.b16 %v1008
      %v1644 = vunpack.c.l.b16 %v1009
      %v1645 = vunpack.c.l.b16 %v1010
      %v1646 = vunpack.c.h.b16 %v1010
      %v1647 = vunpack.c.l.b16 %v1011
      %v1648 = vunpack.c.l.b16 %v1012
      %v1649 = vunpack.c.h.b16 %v1012
      %v1650 = vunpack.c.l.b16 %v1013
      %v1651 = vunpack.c.l.b16 %v1014
      %v1652 = vunpack.c.h.b16 %v1014
      %v1653 = vunpack.c.l.b16 %v1015
      %v1654 = vunpack.c.l.b16 %v1016
      %v1655 = vunpack.c.h.b16 %v1016
      %v1656 = vunpack.c.l.b16 %v1017
      %v1657 = vunpack.c.l.b16 %v1018
      %v1658 = vunpack.c.h.b16 %v1018
      %v1659 = vunpack.c.l.b16 %v1019
      %v1660 = vunpack.c.l.b16 %v1020
      %v1661 = vunpack.c.h.b16 %v1020
      %v1662 = vunpack.c.l.b16 %v1021
      %v1663 = vunpack.c.l.b16 %v1022
      %v1664 = vunpack.c.h.b16 %v1022
      %v1665 = vunpack.c.l.b16 %v1023
      %v1666 = vunpack.c.l.b16 %v1024
      %v1667 = vunpack.c.h.b16 %v1024
      %v1668 = vunpack.c.l.b16 %v1025
      %v1669 = vunpack.c.l.b16 %v1026
      %v1670 = vunpack.c.h.b16 %v1026
      %v1671 = vunpack.c.l.b16 %v1027
      %v1672 = vunpack.c.l.b16 %v1028
      %v1673 = vunpack.c.h.b16 %v1028
      %v1674 = vunpack.c.l.b16 %v1029
      %v1675 = vunpack.c.l.b16 %v1030
      %v1676 = vunpack.c.h.b16 %v1030
      %v1677 = vunpack.c.l.b16 %v1031
      %v1678 = vunpack.c.l.b16 %v1032
      %v1679 = vunpack.c.h.b16 %v1032
      %v1680 = vunpack.c.l.b16 %v1033
      %v1681 = vunpack.c.l.b16 %v1034
      %v1682 = vunpack.c.h.b16 %v1034
      %v1683 = vunpack.c.l.b16 %v1035
      %v1684 = vpack.c.b16 %v1603, %v1600
      %v1685 = vpack.c.b16 %v1604, %v1601
      %v1686 = vpack.c.b16 %v1605, %v1602
      %v1687 = vpack.c.b16 %v1609, %v1606
      %v1688 = vpack.c.b16 %v1610, %v1607
      %v1689 = vpack.c.b16 %v1611, %v1608
      %v1690 = vpack.c.b16 %v1615, %v1612
      %v1691 = vpack.c.b16 %v1616, %v1613
      %v1692 = vpack.c.b16 %v1617, %v1614
      %v1693 = vpack.c.b16 %v1621, %v1618
      %v1694 = vpack.c.b16 %v1622, %v1619
      %v1695 = vpack.c.b16 %v1623, %v1620
      %v1696 = vpack.c.b16 %v1627, %v1624
      %v1697 = vpack.c.b16 %v1628, %v1625
      %v1698 = vpack.c.b16 %v1629, %v1626
      %v1699 = vpack.c.b16 %v1633, %v1630
      %v1700 = vpack.c.b16 %v1634, %v1631
      %v1701 = vpack.c.b16 %v1635, %v1632
      %v1702 = vpack.c.b16 %v1639, %v1636
      %v1703 = vpack.c.b16 %v1640, %v1637
      %v1704 = vpack.c.b16 %v1641, %v1638
      %v1705 = vpack.c.b16 %v1645, %v1642
      %v1706 = vpack.c.b16 %v1646, %v1643
      %v1707 = vpack.c.b16 %v1647, %v1644
      %v1708 = vpack.c.b16 %v1651, %v1648
      %v1709 = vpack.c.b16 %v1652, %v1649
      %v1710 = vpack.c.b16 %v1653, %v1650
      %v1711 = vpack.c.b16 %v1657, %v1654
      %v1712 = vpack.c.b16 %v1658, %v1655
      %v1713 = vpack.c.b16 %v1659, %v1656
      %v1714 = vpack.c.b16 %v1663, %v1660
      %v1715 = vpack.c.b16 %v1664, %v1661
      %v1716 = vpack.c.b16 %v1665, %v1662
      %v1717 = vpack.c.b16 %v1669, %v1666
      %v1718 = vpack.c.b16 %v1670, %v1667
      %v1719 = vpack.c.b16 %v1671, %v1668
      %v1720 = vpack.c.b16 %v1675, %v1672
      %v1721 = vpack.c.b16 %v1676, %v1673
      %v1722 = vpack.c.b16 %v1677, %v1674
      %v1723 = vpack.c.b16 %v1681, %v1678
      %v1724 = vpack.c.b16 %v1682, %v1679
      %v1725 = vpack.c.b16 %v1683, %v1680
      %v1769 = vsel %vm659, %v967, 0
      %v1772 = vsel %vm659, %v969, 0
      %v1775 = vsel %vm659, %v971, 0
      %v1778 = vsel %vm659, %v973, 0
      %v1781 = vsel %vm659, %v975, 0
      %v1784 = vsel %vm659, %v977, 0
      %v1787 = vsel %vm659, %v979, 0
      %1789 = vmatprep.subr.bf16.mxu0 %v1706
      %1790 = vmatpush1.bf16.msra.mxu0 %v1705
      %1791 = vmatprep.subr.bf16.mxu0 %v1703
      %1792 = vmatpush1.bf16.msra.mxu0 %v1702
      %1793 = vmatprep.subr.bf16.mxu0 %v1700
      %1794 = vmatpush1.bf16.msra.mxu0 %v1699
      %1795 = vmatprep.subr.bf16.mxu0 %v1697
      %1796 = vmatpush1.bf16.msra.mxu0 %v1696
      %1797 = vmatprep.subr.bf16.mxu0 %v1694
      %1798 = vmatpush1.bf16.msra.mxu0 %v1693
      %1799 = vmatprep.subr.bf16.mxu0 %v1691
      %1800 = vmatpush1.bf16.msra.mxu0 %v1690
      %1801 = vmatprep.subr.bf16.mxu0 %v1688
      %1802 = vmatpush1.bf16.msra.mxu0 %v1687
      %1803 = vmatprep.subr.bf16.mxu0 %v1685
      %1804 = vmatpush1.bf16.msra.mxu0 %v1684
      %1805 = vmatprep.subr.bf16.mxu0 0
      %1806 = vmatpush2.bf16.msra.mxu0 0
      %1807 = vmatprep.subr.bf16.mxu0 0
      %1808 = vmatpush2.bf16.msra.mxu0 0
      %1809 = vmatprep.subr.bf16.mxu0 %v1724
      %1810 = vmatpush2.bf16.msra.mxu0 %v1723
      %1811 = vmatprep.subr.bf16.mxu0 %v1721
      %1812 = vmatpush2.bf16.msra.mxu0 %v1720
      %1813 = vmatprep.subr.bf16.mxu0 %v1718
      %1814 = vmatpush2.bf16.msra.mxu0 %v1717
      %1815 = vmatprep.subr.bf16.mxu0 %v1715
      %1816 = vmatpush2.bf16.msra.mxu0 %v1714
      %1817 = vmatprep.subr.bf16.mxu0 %v1712
      %1818 = vmatpush2.bf16.msra.mxu0 %v1711
      %1819 = vmatprep.subr.bf16.mxu0 %v1709
      %1820 = vmatpush2.bf16.msra.mxu0 %v1708
      %1821 = vmatprep.mubr.bf16.mxu0 %v1769
      %1822 = vmatmul.mubr.bf16.gmra.mxu0 %v966
      %v1823 = vpop.f32.mrf.mxu0
      %v1824 = vadd.f32 %v1387, %v1823
      %v1825 = vpop.f32.mrf.mxu0
      %v1826 = vadd.f32 %v1389, %v1825
      %v1827 = vpop.f32.mrf.mxu0
      %v1828 = vadd.f32 %v1391, %v1827
      %v1829 = vpop.f32.mrf.mxu0
      %v1830 = vadd.f32 %v1393, %v1829
      %1831 = vmatprep.mubr.bf16.mxu0 %v1772
      %1832 = vmatmul.mubr.bf16.gmra.mxu0 %v968
      %v1833 = vpop.f32.mrf.mxu0
      %v1834 = vadd.f32 %v1397, %v1833
      %v1835 = vpop.f32.mrf.mxu0
      %v1836 = vadd.f32 %v1399, %v1835
      %v1837 = vpop.f32.mrf.mxu0
      %v1838 = vadd.f32 %v1401, %v1837
      %v1839 = vpop.f32.mrf.mxu0
      %v1840 = vadd.f32 %v1403, %v1839
      %1841 = vmatprep.mubr.bf16.mxu0 %v1775
      %1842 = vmatmul.mubr.bf16.gmra.mxu0 %v970
      %v1843 = vpop.f32.mrf.mxu0
      %v1844 = vadd.f32 %v1407, %v1843
      %v1845 = vpop.f32.mrf.mxu0
      %v1846 = vadd.f32 %v1409, %v1845
      %v1847 = vpop.f32.mrf.mxu0
      %v1848 = vadd.f32 %v1411, %v1847
      %v1849 = vpop.f32.mrf.mxu0
      %v1850 = vadd.f32 %v1413, %v1849
      %1851 = vmatprep.mubr.bf16.mxu0 %v1778
      %1852 = vmatmul.mubr.bf16.gmra.mxu0 %v972
      %v1853 = vpop.f32.mrf.mxu0
      %v1854 = vadd.f32 %v1417, %v1853
      %v1855 = vpop.f32.mrf.mxu0
      %v1856 = vadd.f32 %v1419, %v1855
      %v1857 = vpop.f32.mrf.mxu0
      %v1858 = vadd.f32 %v1421, %v1857
      %v1859 = vpop.f32.mrf.mxu0
      %v1860 = vadd.f32 %v1423, %v1859
      %1861 = vmatprep.mubr.bf16.mxu0 %v1781
      %1862 = vmatmul.mubr.bf16.gmra.mxu0 %v974
      %v1863 = vpop.f32.mrf.mxu0
      %v1864 = vadd.f32 %v1427, %v1863
      %v1865 = vpop.f32.mrf.mxu0
      %v1866 = vadd.f32 %v1429, %v1865
      %v1867 = vpop.f32.mrf.mxu0
      %v1868 = vadd.f32 %v1431, %v1867
      %v1869 = vpop.f32.mrf.mxu0
      %v1870 = vadd.f32 %v1433, %v1869
      %1871 = vmatprep.mubr.bf16.mxu0 %v1784
      %1872 = vmatmul.mubr.bf16.gmra.mxu0 %v976
      %v1873 = vpop.f32.mrf.mxu0
      %v1874 = vadd.f32 %v1437, %v1873
      %v1875 = vpop.f32.mrf.mxu0
      %v1876 = vadd.f32 %v1439, %v1875
      %v1877 = vpop.f32.mrf.mxu0
      %v1878 = vadd.f32 %v1441, %v1877
      %v1879 = vpop.f32.mrf.mxu0
      %v1880 = vadd.f32 %v1443, %v1879
      %1881 = vmatprep.mubr.bf16.mxu0 %v1787
      %1882 = vmatmul.mubr.bf16.gmra.mxu0 %v978
      %v1883 = vpop.f32.mrf.mxu0
      %v1884 = vadd.f32 %v1447, %v1883
      %v1885 = vpop.f32.mrf.mxu0
      %v1886 = vadd.f32 %v1449, %v1885
      %v1887 = vpop.f32.mrf.mxu0
      %v1888 = vadd.f32 %v1451, %v1887
      %v1889 = vpop.f32.mrf.mxu0
      %v1890 = vadd.f32 %v1453, %v1889
      %1891 = vdwg.mxu0
      %1892 = vmatprep.subr.bf16.mxu0 0
      %1893 = vmatpush1.bf16.msra.mxu0 %v1707
      %1894 = vmatprep.subr.bf16.mxu0 0
      %1895 = vmatpush1.bf16.msra.mxu0 %v1704
      %1896 = vmatprep.subr.bf16.mxu0 0
      %1897 = vmatpush1.bf16.msra.mxu0 %v1701
      %1898 = vmatprep.subr.bf16.mxu0 0
      %1899 = vmatpush1.bf16.msra.mxu0 %v1698
      %1900 = vmatprep.subr.bf16.mxu0 0
      %1901 = vmatpush1.bf16.msra.mxu0 %v1695
      %1902 = vmatprep.subr.bf16.mxu0 0
      %1903 = vmatpush1.bf16.msra.mxu0 %v1692
      %1904 = vmatprep.subr.bf16.mxu0 0
      %1905 = vmatpush1.bf16.msra.mxu0 %v1689
      %1906 = vmatprep.subr.bf16.mxu0 0
      %1907 = vmatpush1.bf16.msra.mxu0 %v1686
      %1908 = vmatprep.subr.bf16.mxu0 0
      %1909 = vmatpush2.bf16.msra.mxu0 0
      %1910 = vmatprep.subr.bf16.mxu0 0
      %1911 = vmatpush2.bf16.msra.mxu0 0
      %1912 = vmatprep.subr.bf16.mxu0 0
      %1913 = vmatpush2.bf16.msra.mxu0 %v1725
      %1914 = vmatprep.subr.bf16.mxu0 0
      %1915 = vmatpush2.bf16.msra.mxu0 %v1722
      %1916 = vmatprep.subr.bf16.mxu0 0
      %1917 = vmatpush2.bf16.msra.mxu0 %v1719
      %1918 = vmatprep.subr.bf16.mxu0 0
      %1919 = vmatpush2.bf16.msra.mxu0 %v1716
      %1920 = vmatprep.subr.bf16.mxu0 0
      %1921 = vmatpush2.bf16.msra.mxu0 %v1713
      %1922 = vmatprep.subr.bf16.mxu0 0
      %1923 = vmatpush2.bf16.msra.mxu0 %v1710
      %1924 = vmatprep.mubr.bf16.mxu0 %v1769
      %1925 = vmatmul.mubr.bf16.gmra.mxu0 %v966
      %v1926 = vpop.f32.mrf.mxu0
      %v1927 = vadd.f32 %v1490, %v1926
      %v1928 = vpop.f32.mrf.mxu0
      %v1929 = vpop.f32.mrf.mxu0
      %v1930 = vadd.f32 %v1493, %v1929
      %v1931 = vpop.f32.mrf.mxu0
      %1932 = vmatprep.mubr.bf16.mxu0 %v1772
      %1933 = vmatmul.mubr.bf16.gmra.mxu0 %v968
      %v1934 = vpop.f32.mrf.mxu0
      %v1935 = vadd.f32 %v1498, %v1934
      %v1936 = vpop.f32.mrf.mxu0
      %v1937 = vpop.f32.mrf.mxu0
      %v1938 = vadd.f32 %v1501, %v1937
      %v1939 = vpop.f32.mrf.mxu0
      %1940 = vmatprep.mubr.bf16.mxu0 %v1775
      %1941 = vmatmul.mubr.bf16.gmra.mxu0 %v970
      %v1942 = vpop.f32.mrf.mxu0
      %v1943 = vadd.f32 %v1506, %v1942
      %v1944 = vpop.f32.mrf.mxu0
      %v1945 = vpop.f32.mrf.mxu0
      %v1946 = vadd.f32 %v1509, %v1945
      %v1947 = vpop.f32.mrf.mxu0
      %1948 = vmatprep.mubr.bf16.mxu0 %v1778
      %1949 = vmatmul.mubr.bf16.gmra.mxu0 %v972
      %v1950 = vpop.f32.mrf.mxu0
      %v1951 = vadd.f32 %v1514, %v1950
      %v1952 = vpop.f32.mrf.mxu0
      %v1953 = vpop.f32.mrf.mxu0
      %v1954 = vadd.f32 %v1517, %v1953
      %v1955 = vpop.f32.mrf.mxu0
      %1956 = vmatprep.mubr.bf16.mxu0 %v1781
      %1957 = vmatmul.mubr.bf16.gmra.mxu0 %v974
      %v1958 = vpop.f32.mrf.mxu0
      %v1959 = vadd.f32 %v1522, %v1958
      %v1960 = vpop.f32.mrf.mxu0
      %v1961 = vpop.f32.mrf.mxu0
      %v1962 = vadd.f32 %v1525, %v1961
      %v1963 = vpop.f32.mrf.mxu0
      %1964 = vmatprep.mubr.bf16.mxu0 %v1784
      %1965 = vmatmul.mubr.bf16.gmra.mxu0 %v976
      %v1966 = vpop.f32.mrf.mxu0
      %v1967 = vadd.f32 %v1530, %v1966
      %v1968 = vpop.f32.mrf.mxu0
      %v1969 = vpop.f32.mrf.mxu0
      %v1970 = vadd.f32 %v1533, %v1969
      %v1971 = vpop.f32.mrf.mxu0
      %1972 = vmatprep.mubr.bf16.mxu0 %v1787
      %1973 = vmatmul.mubr.bf16.gmra.mxu0 %v978
      %v1974 = vpop.f32.mrf.mxu0
      %v1975 = vadd.f32 %v1538, %v1974
      %v1976 = vpop.f32.mrf.mxu0
      %v1977 = vpop.f32.mrf.mxu0
      %v1978 = vadd.f32 %v1541, %v1977
      %v1979 = vpop.f32.mrf.mxu0
      %1980 = vdwg.mxu0
      %v1981 = vpack.c.bf16 %v902, %v898
      %v1982 = vpack.c.bf16 %v904, %v900
      %v1983 = vpack.c.bf16 %v912, %v908
      %v1984 = vpack.c.bf16 %v914, %v910
      %v1985 = vpack.c.bf16 %v922, %v918
      %v1986 = vpack.c.bf16 %v924, %v920
      %v1987 = vpack.c.bf16 %v932, %v928
      %v1988 = vpack.c.bf16 %v934, %v930
      %v1989 = vpack.c.bf16 %v942, %v938
      %v1990 = vpack.c.bf16 %v944, %v940
      %v1991 = vpack.c.bf16 %v952, %v948
      %v1992 = vpack.c.bf16 %v954, %v950
      %v1993 = vpack.c.bf16 %v962, %v958
      %v1994 = vpack.c.bf16 %v964, %v960
      %s1995 = scalar_lea.vmem %s2, 672
      %v1996 = vld [vmem:[%s1995] sm:$0xff]
      %v1997 = vld [vmem:[%s1995 + $0x8] sm:$0xf]
      %v1998 = vld [vmem:[%s1995 + $0xc] sm:$0xff]
      %v1999 = vld [vmem:[%s1995 + $0x14] sm:$0xf]
      %v2000 = vld [vmem:[%s1995 + $0x18] sm:$0xff]
      %v2001 = vld [vmem:[%s1995 + $0x20] sm:$0xf]
      %v2002 = vld [vmem:[%s1995 + $0x24] sm:$0xff]
      %v2003 = vld [vmem:[%s1995 + $0x2c] sm:$0xf]
      %v2004 = vld [vmem:[%s1995 + $0x30] sm:$0xff]
      %v2005 = vld [vmem:[%s1995 + $0x38] sm:$0xf]
      %v2006 = vld [vmem:[%s1995 + $0x3c] sm:$0xff]
      %v2007 = vld [vmem:[%s1995 + $0x44] sm:$0xf]
      %v2008 = vld [vmem:[%s1995 + $0x48] sm:$0xff]
      %v2009 = vld [vmem:[%s1995 + $0x50] sm:$0xf]
      %v2010 = vld [vmem:[%s1995 + $0x54] sm:$0xff]
      %v2011 = vld [vmem:[%s1995 + $0x5c] sm:$0xf]
      %v2012 = vld [vmem:[%s1995 + $0x60] sm:$0xff]
      %v2013 = vld [vmem:[%s1995 + $0x68] sm:$0xf]
      %v2014 = vld [vmem:[%s1995 + $0x6c] sm:$0xff]
      %v2015 = vld [vmem:[%s1995 + $0x74] sm:$0xf]
      %v2016 = vld [vmem:[%s1995 + $0x78] sm:$0xff]
      %v2017 = vld [vmem:[%s1995 + $0x80] sm:$0xf]
      %v2018 = vld [vmem:[%s1995 + $0x84] sm:$0xff]
      %v2019 = vld [vmem:[%s1995 + $0x8c] sm:$0xf]
      %v2020 = vld [vmem:[%s1995 + $0x90] sm:$0xff]
      %v2021 = vld [vmem:[%s1995 + $0x98] sm:$0xf]
      %v2022 = vld [vmem:[%s1995 + $0x9c] sm:$0xff]
      %v2023 = vld [vmem:[%s1995 + $0xa4] sm:$0xf]
      %v2024 = vld [vmem:[%s1995 + $0xa8] sm:$0xff]
      %v2025 = vld [vmem:[%s1995 + $0xb0] sm:$0xf]
      %v2026 = vld [vmem:[%s1995 + $0xb4] sm:$0xff]
      %v2027 = vld [vmem:[%s1995 + $0xbc] sm:$0xf]
      %v2028 = vld [vmem:[%s1995 + $0xc0] sm:$0xff]
      %v2029 = vld [vmem:[%s1995 + $0xc8] sm:$0xf]
      %v2030 = vld [vmem:[%s1995 + $0xcc] sm:$0xff]
      %v2031 = vld [vmem:[%s1995 + $0xd4] sm:$0xf]
      %v2032 = vld [vmem:[%s1995 + $0xd8] sm:$0xff]
      %v2033 = vld [vmem:[%s1995 + $0xe0] sm:$0xf]
      %v2034 = vld [vmem:[%s1995 + $0xe4] sm:$0xff]
      %v2035 = vld [vmem:[%s1995 + $0xec] sm:$0xf]
      %v2036 = vld [vmem:[%s1995 + $0xf0] sm:$0xff]
      %v2037 = vld [vmem:[%s1995 + $0xf8] sm:$0xf]
      %v2038 = vld [vmem:[%s1995 + $0xfc] sm:$0xff]
      %v2039 = vld [vmem:[%s1995 + $0x104] sm:$0xf]
      %v2040 = vld [vmem:[%s1995 + $0x108] sm:$0xff]
      %v2041 = vld [vmem:[%s1995 + $0x110] sm:$0xf]
      %v2042 = vld [vmem:[%s1995 + $0x114] sm:$0xff]
      %v2043 = vld [vmem:[%s1995 + $0x11c] sm:$0xf]
      %v2044 = vld [vmem:[%s1995 + $0x120] sm:$0xff]
      %v2045 = vld [vmem:[%s1995 + $0x128] sm:$0xf]
      %v2046 = vld [vmem:[%s1995 + $0x12c] sm:$0xff]
      %v2047 = vld [vmem:[%s1995 + $0x134] sm:$0xf]
      %v2048 = vld [vmem:[%s1995 + $0x138] sm:$0xff]
      %v2049 = vld [vmem:[%s1995 + $0x140] sm:$0xf]
      %v2050 = vld [vmem:[%s1995 + $0x144] sm:$0xff]
      %v2051 = vld [vmem:[%s1995 + $0x14c] sm:$0xf]
      %v2108 = vunpack.c.l.b16 %v1996
      %v2109 = vunpack.c.h.b16 %v1996
      %v2110 = vunpack.c.l.b16 %v1997
      %v2111 = vunpack.c.l.b16 %v1998
      %v2112 = vunpack.c.h.b16 %v1998
      %v2113 = vunpack.c.l.b16 %v1999
      %v2114 = vunpack.c.l.b16 %v2000
      %v2115 = vunpack.c.h.b16 %v2000
      %v2116 = vunpack.c.l.b16 %v2001
      %v2117 = vunpack.c.l.b16 %v2002
      %v2118 = vunpack.c.h.b16 %v2002
      %v2119 = vunpack.c.l.b16 %v2003
      %v2120 = vunpack.c.l.b16 %v2004
      %v2121 = vunpack.c.h.b16 %v2004
      %v2122 = vunpack.c.l.b16 %v2005
      %v2123 = vunpack.c.l.b16 %v2006
      %v2124 = vunpack.c.h.b16 %v2006
      %v2125 = vunpack.c.l.b16 %v2007
      %v2126 = vunpack.c.l.b16 %v2008
      %v2127 = vunpack.c.h.b16 %v2008
      %v2128 = vunpack.c.l.b16 %v2009
      %v2129 = vunpack.c.l.b16 %v2010
      %v2130 = vunpack.c.h.b16 %v2010
      %v2131 = vunpack.c.l.b16 %v2011
      %v2132 = vunpack.c.l.b16 %v2012
      %v2133 = vunpack.c.h.b16 %v2012
      %v2134 = vunpack.c.l.b16 %v2013
      %v2135 = vunpack.c.l.b16 %v2014
      %v2136 = vunpack.c.h.b16 %v2014
      %v2137 = vunpack.c.l.b16 %v2015
      %v2138 = vunpack.c.l.b16 %v2016
      %v2139 = vunpack.c.h.b16 %v2016
      %v2140 = vunpack.c.l.b16 %v2017
      %v2141 = vunpack.c.l.b16 %v2018
      %v2142 = vunpack.c.h.b16 %v2018
      %v2143 = vunpack.c.l.b16 %v2019
      %v2144 = vunpack.c.l.b16 %v2020
      %v2145 = vunpack.c.h.b16 %v2020
      %v2146 = vunpack.c.l.b16 %v2021
      %v2147 = vunpack.c.l.b16 %v2022
      %v2148 = vunpack.c.h.b16 %v2022
      %v2149 = vunpack.c.l.b16 %v2023
      %v2150 = vunpack.c.l.b16 %v2024
      %v2151 = vunpack.c.h.b16 %v2024
      %v2152 = vunpack.c.l.b16 %v2025
      %v2153 = vunpack.c.l.b16 %v2026
      %v2154 = vunpack.c.h.b16 %v2026
      %v2155 = vunpack.c.l.b16 %v2027
      %v2156 = vunpack.c.l.b16 %v2028
      %v2157 = vunpack.c.h.b16 %v2028
      %v2158 = vunpack.c.l.b16 %v2029
      %v2159 = vunpack.c.l.b16 %v2030
      %v2160 = vunpack.c.h.b16 %v2030
      %v2161 = vunpack.c.l.b16 %v2031
      %v2162 = vunpack.c.l.b16 %v2032
      %v2163 = vunpack.c.h.b16 %v2032
      %v2164 = vunpack.c.l.b16 %v2033
      %v2165 = vunpack.c.l.b16 %v2034
      %v2166 = vunpack.c.h.b16 %v2034
      %v2167 = vunpack.c.l.b16 %v2035
      %v2168 = vunpack.c.l.b16 %v2036
      %v2169 = vunpack.c.h.b16 %v2036
      %v2170 = vunpack.c.l.b16 %v2037
      %v2171 = vunpack.c.l.b16 %v2038
      %v2172 = vunpack.c.h.b16 %v2038
      %v2173 = vunpack.c.l.b16 %v2039
      %v2174 = vunpack.c.l.b16 %v2040
      %v2175 = vunpack.c.h.b16 %v2040
      %v2176 = vunpack.c.l.b16 %v2041
      %v2177 = vunpack.c.l.b16 %v2042
      %v2178 = vunpack.c.h.b16 %v2042
      %v2179 = vunpack.c.l.b16 %v2043
      %v2180 = vunpack.c.l.b16 %v2044
      %v2181 = vunpack.c.h.b16 %v2044
      %v2182 = vunpack.c.l.b16 %v2045
      %v2183 = vunpack.c.l.b16 %v2046
      %v2184 = vunpack.c.h.b16 %v2046
      %v2185 = vunpack.c.l.b16 %v2047
      %v2186 = vunpack.c.l.b16 %v2048
      %v2187 = vunpack.c.h.b16 %v2048
      %v2188 = vunpack.c.l.b16 %v2049
      %v2189 = vunpack.c.l.b16 %v2050
      %v2190 = vunpack.c.h.b16 %v2050
      %v2191 = vunpack.c.l.b16 %v2051
      %v2192 = vpack.c.b16 %v2111, %v2108
      %v2193 = vpack.c.b16 %v2112, %v2109
      %v2194 = vpack.c.b16 %v2113, %v2110
      %v2195 = vpack.c.b16 %v2117, %v2114
      %v2196 = vpack.c.b16 %v2118, %v2115
      %v2197 = vpack.c.b16 %v2119, %v2116
      %v2198 = vpack.c.b16 %v2123, %v2120
      %v2199 = vpack.c.b16 %v2124, %v2121
      %v2200 = vpack.c.b16 %v2125, %v2122
      %v2201 = vpack.c.b16 %v2129, %v2126
      %v2202 = vpack.c.b16 %v2130, %v2127
      %v2203 = vpack.c.b16 %v2131, %v2128
      %v2204 = vpack.c.b16 %v2135, %v2132
      %v2205 = vpack.c.b16 %v2136, %v2133
      %v2206 = vpack.c.b16 %v2137, %v2134
      %v2207 = vpack.c.b16 %v2141, %v2138
      %v2208 = vpack.c.b16 %v2142, %v2139
      %v2209 = vpack.c.b16 %v2143, %v2140
      %v2210 = vpack.c.b16 %v2147, %v2144
      %v2211 = vpack.c.b16 %v2148, %v2145
      %v2212 = vpack.c.b16 %v2149, %v2146
      %v2213 = vpack.c.b16 %v2153, %v2150
      %v2214 = vpack.c.b16 %v2154, %v2151
      %v2215 = vpack.c.b16 %v2155, %v2152
      %v2216 = vpack.c.b16 %v2159, %v2156
      %v2217 = vpack.c.b16 %v2160, %v2157
      %v2218 = vpack.c.b16 %v2161, %v2158
      %v2219 = vpack.c.b16 %v2165, %v2162
      %v2220 = vpack.c.b16 %v2166, %v2163
      %v2221 = vpack.c.b16 %v2167, %v2164
      %v2222 = vpack.c.b16 %v2171, %v2168
      %v2223 = vpack.c.b16 %v2172, %v2169
      %v2224 = vpack.c.b16 %v2173, %v2170
      %v2225 = vpack.c.b16 %v2177, %v2174
      %v2226 = vpack.c.b16 %v2178, %v2175
      %v2227 = vpack.c.b16 %v2179, %v2176
      %v2228 = vpack.c.b16 %v2183, %v2180
      %v2229 = vpack.c.b16 %v2184, %v2181
      %v2230 = vpack.c.b16 %v2185, %v2182
      %v2231 = vpack.c.b16 %v2189, %v2186
      %v2232 = vpack.c.b16 %v2190, %v2187
      %v2233 = vpack.c.b16 %v2191, %v2188
      %v2277 = vsel %vm659, %v1982, 0
      %v2280 = vsel %vm659, %v1984, 0
      %v2283 = vsel %vm659, %v1986, 0
      %v2286 = vsel %vm659, %v1988, 0
      %v2289 = vsel %vm659, %v1990, 0
      %v2292 = vsel %vm659, %v1992, 0
      %v2295 = vsel %vm659, %v1994, 0
      %2297 = vmatprep.subr.bf16.mxu0 %v2214
      %2298 = vmatpush1.bf16.msra.mxu0 %v2213
      %2299 = vmatprep.subr.bf16.mxu0 %v2211
      %2300 = vmatpush1.bf16.msra.mxu0 %v2210
      %2301 = vmatprep.subr.bf16.mxu0 %v2208
      %2302 = vmatpush1.bf16.msra.mxu0 %v2207
      %2303 = vmatprep.subr.bf16.mxu0 %v2205
      %2304 = vmatpush1.bf16.msra.mxu0 %v2204
      %2305 = vmatprep.subr.bf16.mxu0 %v2202
      %2306 = vmatpush1.bf16.msra.mxu0 %v2201
      %2307 = vmatprep.subr.bf16.mxu0 %v2199
      %2308 = vmatpush1.bf16.msra.mxu0 %v2198
      %2309 = vmatprep.subr.bf16.mxu0 %v2196
      %2310 = vmatpush1.bf16.msra.mxu0 %v2195
      %2311 = vmatprep.subr.bf16.mxu0 %v2193
      %2312 = vmatpush1.bf16.msra.mxu0 %v2192
      %2313 = vmatprep.subr.bf16.mxu0 0
      %2314 = vmatpush2.bf16.msra.mxu0 0
      %2315 = vmatprep.subr.bf16.mxu0 0
      %2316 = vmatpush2.bf16.msra.mxu0 0
      %2317 = vmatprep.subr.bf16.mxu0 %v2232
      %2318 = vmatpush2.bf16.msra.mxu0 %v2231
      %2319 = vmatprep.subr.bf16.mxu0 %v2229
      %2320 = vmatpush2.bf16.msra.mxu0 %v2228
      %2321 = vmatprep.subr.bf16.mxu0 %v2226
      %2322 = vmatpush2.bf16.msra.mxu0 %v2225
      %2323 = vmatprep.subr.bf16.mxu0 %v2223
      %2324 = vmatpush2.bf16.msra.mxu0 %v2222
      %2325 = vmatprep.subr.bf16.mxu0 %v2220
      %2326 = vmatpush2.bf16.msra.mxu0 %v2219
      %2327 = vmatprep.subr.bf16.mxu0 %v2217
      %2328 = vmatpush2.bf16.msra.mxu0 %v2216
      %2329 = vmatprep.mubr.bf16.mxu0 %v2277
      %2330 = vmatmul.mubr.bf16.gmra.mxu0 %v1981
      %v2331 = vpop.f32.mrf.mxu0
      %v2332 = vadd.f32 0.0, %v2331
      %v2333 = vpop.f32.mrf.mxu0
      %v2334 = vadd.f32 0.0, %v2333
      %v2335 = vpop.f32.mrf.mxu0
      %v2336 = vadd.f32 0.0, %v2335
      %v2337 = vpop.f32.mrf.mxu0
      %v2338 = vadd.f32 0.0, %v2337
      %2339 = vmatprep.mubr.bf16.mxu0 %v2280
      %2340 = vmatmul.mubr.bf16.gmra.mxu0 %v1983
      %v2341 = vpop.f32.mrf.mxu0
      %v2342 = vadd.f32 0.0, %v2341
      %v2343 = vpop.f32.mrf.mxu0
      %v2344 = vadd.f32 0.0, %v2343
      %v2345 = vpop.f32.mrf.mxu0
      %v2346 = vadd.f32 0.0, %v2345
      %v2347 = vpop.f32.mrf.mxu0
      %v2348 = vadd.f32 0.0, %v2347
      %2349 = vmatprep.mubr.bf16.mxu0 %v2283
      %2350 = vmatmul.mubr.bf16.gmra.mxu0 %v1985
      %v2351 = vpop.f32.mrf.mxu0
      %v2352 = vadd.f32 0.0, %v2351
      %v2353 = vpop.f32.mrf.mxu0
      %v2354 = vadd.f32 0.0, %v2353
      %v2355 = vpop.f32.mrf.mxu0
      %v2356 = vadd.f32 0.0, %v2355
      %v2357 = vpop.f32.mrf.mxu0
      %v2358 = vadd.f32 0.0, %v2357
      %2359 = vmatprep.mubr.bf16.mxu0 %v2286
      %2360 = vmatmul.mubr.bf16.gmra.mxu0 %v1987
      %v2361 = vpop.f32.mrf.mxu0
      %v2362 = vadd.f32 0.0, %v2361
      %v2363 = vpop.f32.mrf.mxu0
      %v2364 = vadd.f32 0.0, %v2363
      %v2365 = vpop.f32.mrf.mxu0
      %v2366 = vadd.f32 0.0, %v2365
      %v2367 = vpop.f32.mrf.mxu0
      %v2368 = vadd.f32 0.0, %v2367
      %2369 = vmatprep.mubr.bf16.mxu0 %v2289
      %2370 = vmatmul.mubr.bf16.gmra.mxu0 %v1989
      %v2371 = vpop.f32.mrf.mxu0
      %v2372 = vadd.f32 0.0, %v2371
      %v2373 = vpop.f32.mrf.mxu0
      %v2374 = vadd.f32 0.0, %v2373
      %v2375 = vpop.f32.mrf.mxu0
      %v2376 = vadd.f32 0.0, %v2375
      %v2377 = vpop.f32.mrf.mxu0
      %v2378 = vadd.f32 0.0, %v2377
      %2379 = vmatprep.mubr.bf16.mxu0 %v2292
      %2380 = vmatmul.mubr.bf16.gmra.mxu0 %v1991
      %v2381 = vpop.f32.mrf.mxu0
      %v2382 = vadd.f32 0.0, %v2381
      %v2383 = vpop.f32.mrf.mxu0
      %v2384 = vadd.f32 0.0, %v2383
      %v2385 = vpop.f32.mrf.mxu0
      %v2386 = vadd.f32 0.0, %v2385
      %v2387 = vpop.f32.mrf.mxu0
      %v2388 = vadd.f32 0.0, %v2387
      %2389 = vmatprep.mubr.bf16.mxu0 %v2295
      %2390 = vmatmul.mubr.bf16.gmra.mxu0 %v1993
      %v2391 = vpop.f32.mrf.mxu0
      %v2392 = vadd.f32 0.0, %v2391
      %v2393 = vpop.f32.mrf.mxu0
      %v2394 = vadd.f32 0.0, %v2393
      %v2395 = vpop.f32.mrf.mxu0
      %v2396 = vadd.f32 0.0, %v2395
      %v2397 = vpop.f32.mrf.mxu0
      %v2398 = vadd.f32 0.0, %v2397
      %2399 = vdwg.mxu0
      %2400 = vmatprep.subr.bf16.mxu0 0
      %2401 = vmatpush1.bf16.msra.mxu0 %v2215
      %2402 = vmatprep.subr.bf16.mxu0 0
      %2403 = vmatpush1.bf16.msra.mxu0 %v2212
      %2404 = vmatprep.subr.bf16.mxu0 0
      %2405 = vmatpush1.bf16.msra.mxu0 %v2209
      %2406 = vmatprep.subr.bf16.mxu0 0
      %2407 = vmatpush1.bf16.msra.mxu0 %v2206
      %2408 = vmatprep.subr.bf16.mxu0 0
      %2409 = vmatpush1.bf16.msra.mxu0 %v2203
      %2410 = vmatprep.subr.bf16.mxu0 0
      %2411 = vmatpush1.bf16.msra.mxu0 %v2200
      %2412 = vmatprep.subr.bf16.mxu0 0
      %2413 = vmatpush1.bf16.msra.mxu0 %v2197
      %2414 = vmatprep.subr.bf16.mxu0 0
      %2415 = vmatpush1.bf16.msra.mxu0 %v2194
      %2416 = vmatprep.subr.bf16.mxu0 0
      %2417 = vmatpush2.bf16.msra.mxu0 0
      %2418 = vmatprep.subr.bf16.mxu0 0
      %2419 = vmatpush2.bf16.msra.mxu0 0
      %2420 = vmatprep.subr.bf16.mxu0 0
      %2421 = vmatpush2.bf16.msra.mxu0 %v2233
      %2422 = vmatprep.subr.bf16.mxu0 0
      %2423 = vmatpush2.bf16.msra.mxu0 %v2230
      %2424 = vmatprep.subr.bf16.mxu0 0
      %2425 = vmatpush2.bf16.msra.mxu0 %v2227
      %2426 = vmatprep.subr.bf16.mxu0 0
      %2427 = vmatpush2.bf16.msra.mxu0 %v2224
      %2428 = vmatprep.subr.bf16.mxu0 0
      %2429 = vmatpush2.bf16.msra.mxu0 %v2221
      %2430 = vmatprep.subr.bf16.mxu0 0
      %2431 = vmatpush2.bf16.msra.mxu0 %v2218
      %2432 = vmatprep.mubr.bf16.mxu0 %v2277
      %2433 = vmatmul.mubr.bf16.gmra.mxu0 %v1981
      %v2434 = vpop.f32.mrf.mxu0
      %v2435 = vadd.f32 0.0, %v2434
      %v2436 = vpop.f32.mrf.mxu0
      %v2437 = vpop.f32.mrf.mxu0
      %v2438 = vadd.f32 0.0, %v2437
      %v2439 = vpop.f32.mrf.mxu0
      %2440 = vmatprep.mubr.bf16.mxu0 %v2280
      %2441 = vmatmul.mubr.bf16.gmra.mxu0 %v1983
      %v2442 = vpop.f32.mrf.mxu0
      %v2443 = vadd.f32 0.0, %v2442
      %v2444 = vpop.f32.mrf.mxu0
      %v2445 = vpop.f32.mrf.mxu0
      %v2446 = vadd.f32 0.0, %v2445
      %v2447 = vpop.f32.mrf.mxu0
      %2448 = vmatprep.mubr.bf16.mxu0 %v2283
      %2449 = vmatmul.mubr.bf16.gmra.mxu0 %v1985
      %v2450 = vpop.f32.mrf.mxu0
      %v2451 = vadd.f32 0.0, %v2450
      %v2452 = vpop.f32.mrf.mxu0
      %v2453 = vpop.f32.mrf.mxu0
      %v2454 = vadd.f32 0.0, %v2453
      %v2455 = vpop.f32.mrf.mxu0
      %2456 = vmatprep.mubr.bf16.mxu0 %v2286
      %2457 = vmatmul.mubr.bf16.gmra.mxu0 %v1987
      %v2458 = vpop.f32.mrf.mxu0
      %v2459 = vadd.f32 0.0, %v2458
      %v2460 = vpop.f32.mrf.mxu0
      %v2461 = vpop.f32.mrf.mxu0
      %v2462 = vadd.f32 0.0, %v2461
      %v2463 = vpop.f32.mrf.mxu0
      %2464 = vmatprep.mubr.bf16.mxu0 %v2289
      %2465 = vmatmul.mubr.bf16.gmra.mxu0 %v1989
      %v2466 = vpop.f32.mrf.mxu0
      %v2467 = vadd.f32 0.0, %v2466
      %v2468 = vpop.f32.mrf.mxu0
      %v2469 = vpop.f32.mrf.mxu0
      %v2470 = vadd.f32 0.0, %v2469
      %v2471 = vpop.f32.mrf.mxu0
      %2472 = vmatprep.mubr.bf16.mxu0 %v2292
      %2473 = vmatmul.mubr.bf16.gmra.mxu0 %v1991
      %v2474 = vpop.f32.mrf.mxu0
      %v2475 = vadd.f32 0.0, %v2474
      %v2476 = vpop.f32.mrf.mxu0
      %v2477 = vpop.f32.mrf.mxu0
      %v2478 = vadd.f32 0.0, %v2477
      %v2479 = vpop.f32.mrf.mxu0
      %2480 = vmatprep.mubr.bf16.mxu0 %v2295
      %2481 = vmatmul.mubr.bf16.gmra.mxu0 %v1993
      %v2482 = vpop.f32.mrf.mxu0
      %v2483 = vadd.f32 0.0, %v2482
      %v2484 = vpop.f32.mrf.mxu0
      %v2485 = vpop.f32.mrf.mxu0
      %v2486 = vadd.f32 0.0, %v2485
      %v2487 = vpop.f32.mrf.mxu0
      %2488 = vdwg.mxu0
      %v2489 = vadd.f32 %v1824, %v2332
      %v2490 = vadd.f32 %v1826, %v2334
      %v2491 = vadd.f32 %v1927, %v2435
      %v2492 = vadd.f32 %v1828, %v2336
      %v2493 = vadd.f32 %v1830, %v2338
      %v2494 = vadd.f32 %v1930, %v2438
      %v2495 = vadd.f32 %v1834, %v2342
      %v2496 = vadd.f32 %v1836, %v2344
      %v2497 = vadd.f32 %v1935, %v2443
      %v2498 = vadd.f32 %v1838, %v2346
      %v2499 = vadd.f32 %v1840, %v2348
      %v2500 = vadd.f32 %v1938, %v2446
      %v2501 = vadd.f32 %v1844, %v2352
      %v2502 = vadd.f32 %v1846, %v2354
      %v2503 = vadd.f32 %v1943, %v2451
      %v2504 = vadd.f32 %v1848, %v2356
      %v2505 = vadd.f32 %v1850, %v2358
      %v2506 = vadd.f32 %v1946, %v2454
      %v2507 = vadd.f32 %v1854, %v2362
      %v2508 = vadd.f32 %v1856, %v2364
      %v2509 = vadd.f32 %v1951, %v2459
      %v2510 = vadd.f32 %v1858, %v2366
      %v2511 = vadd.f32 %v1860, %v2368
      %v2512 = vadd.f32 %v1954, %v2462
      %v2513 = vadd.f32 %v1864, %v2372
      %v2514 = vadd.f32 %v1866, %v2374
      %v2515 = vadd.f32 %v1959, %v2467
      %v2516 = vadd.f32 %v1868, %v2376
      %v2517 = vadd.f32 %v1870, %v2378
      %v2518 = vadd.f32 %v1962, %v2470
      %v2519 = vadd.f32 %v1874, %v2382
      %v2520 = vadd.f32 %v1876, %v2384
      %v2521 = vadd.f32 %v1967, %v2475
      %v2522 = vadd.f32 %v1878, %v2386
      %v2523 = vadd.f32 %v1880, %v2388
      %v2524 = vadd.f32 %v1970, %v2478
      %v2525 = vadd.f32 %v1884, %v2392
      %v2526 = vadd.f32 %v1886, %v2394
      %v2527 = vadd.f32 %v1975, %v2483
      %v2528 = vadd.f32 %v1888, %v2396
      %v2529 = vadd.f32 %v1890, %v2398
      %v2530 = vadd.f32 %v1978, %v2486
      %s2531 = scalar_lea.vmem %s240, 224
      %v2532 = vld [vmem:[%s2531] sm:$0xff]
      %v2533 = vld [vmem:[%s2531 + $0x8] sm:$0xff]
      %v2534 = vld [vmem:[%s2531 + $0x10] sm:$0xff]
      %v2535 = vld [vmem:[%s2531 + $0x18] sm:$0xff]
      %v2536 = vld [vmem:[%s2531 + $0x20] sm:$0xff]
      %v2537 = vld [vmem:[%s2531 + $0x28] sm:$0xff]
      %v2538 = vld [vmem:[%s2531 + $0x30] sm:$0xff]
      %v2539 = vld [vmem:[%s2531 + $0x38] sm:$0xff]
      %v2540 = vld [vmem:[%s2531 + $0x40] sm:$0xff]
      %v2541 = vld [vmem:[%s2531 + $0x48] sm:$0xff]
      %v2542 = vld [vmem:[%s2531 + $0x50] sm:$0xff]
      %v2543 = vld [vmem:[%s2531 + $0x58] sm:$0xff]
      %v2544 = vld [vmem:[%s2531 + $0x60] sm:$0xff]
      %v2545 = vld [vmem:[%s2531 + $0x68] sm:$0xff]
      %v2546 = vld [vmem:[%s2531 + $0x70] sm:$0xff]
      %v2547 = vld [vmem:[%s2531 + $0x78] sm:$0xff]
      %v2548 = vld [vmem:[%s2531 + $0x80] sm:$0xff]
      %v2549 = vld [vmem:[%s2531 + $0x88] sm:$0xff]
      %v2550 = vld [vmem:[%s2531 + $0x90] sm:$0xff]
      %v2551 = vld [vmem:[%s2531 + $0x98] sm:$0xff]
      %v2552 = vld [vmem:[%s2531 + $0xa0] sm:$0xff]
      %v2553 = vld [vmem:[%s2531 + $0xa8] sm:$0xff]
      %v2554 = vld [vmem:[%s2531 + $0xb0] sm:$0xff]
      %v2555 = vld [vmem:[%s2531 + $0xb8] sm:$0xff]
      %v2556 = vld [vmem:[%s2531 + $0xc0] sm:$0xff]
      %v2557 = vld [vmem:[%s2531 + $0xc8] sm:$0xff]
      %v2558 = vld [vmem:[%s2531 + $0xd0] sm:$0xff]
      %v2559 = vld [vmem:[%s2531 + $0xd8] sm:$0xff]
      %v2588 = vunpack.c.l.b16 %v2532
      %v2589 = vunpack.c.h.b16 %v2532
      %v2590 = vunpack.c.l.b16 %v2533
      %v2591 = vunpack.c.h.b16 %v2533
      %v2592 = vunpack.c.l.b16 %v2534
      %v2593 = vunpack.c.h.b16 %v2534
      %v2594 = vunpack.c.l.b16 %v2535
      %v2595 = vunpack.c.h.b16 %v2535
      %v2596 = vunpack.c.l.b16 %v2536
      %v2597 = vunpack.c.h.b16 %v2536
      %v2598 = vunpack.c.l.b16 %v2537
      %v2599 = vunpack.c.h.b16 %v2537
      %v2600 = vunpack.c.l.b16 %v2538
      %v2601 = vunpack.c.h.b16 %v2538
      %v2602 = vunpack.c.l.b16 %v2539
      %v2603 = vunpack.c.h.b16 %v2539
      %v2604 = vunpack.c.l.b16 %v2540
      %v2605 = vunpack.c.h.b16 %v2540
      %v2606 = vunpack.c.l.b16 %v2541
      %v2607 = vunpack.c.h.b16 %v2541
      %v2608 = vunpack.c.l.b16 %v2542
      %v2609 = vunpack.c.h.b16 %v2542
      %v2610 = vunpack.c.l.b16 %v2543
      %v2611 = vunpack.c.h.b16 %v2543
      %v2612 = vunpack.c.l.b16 %v2544
      %v2613 = vunpack.c.h.b16 %v2544
      %v2614 = vunpack.c.l.b16 %v2545
      %v2615 = vunpack.c.h.b16 %v2545
      %v2616 = vunpack.c.l.b16 %v2546
      %v2617 = vunpack.c.h.b16 %v2546
      %v2618 = vunpack.c.l.b16 %v2547
      %v2619 = vunpack.c.h.b16 %v2547
      %v2620 = vunpack.c.l.b16 %v2548
      %v2621 = vunpack.c.h.b16 %v2548
      %v2622 = vunpack.c.l.b16 %v2549
      %v2623 = vunpack.c.h.b16 %v2549
      %v2624 = vunpack.c.l.b16 %v2550
      %v2625 = vunpack.c.h.b16 %v2550
      %v2626 = vunpack.c.l.b16 %v2551
      %v2627 = vunpack.c.h.b16 %v2551
      %v2628 = vunpack.c.l.b16 %v2552
      %v2629 = vunpack.c.h.b16 %v2552
      %v2630 = vunpack.c.l.b16 %v2553
      %v2631 = vunpack.c.h.b16 %v2553
      %v2632 = vunpack.c.l.b16 %v2554
      %v2633 = vunpack.c.h.b16 %v2554
      %v2634 = vunpack.c.l.b16 %v2555
      %v2635 = vunpack.c.h.b16 %v2555
      %v2636 = vunpack.c.l.b16 %v2556
      %v2637 = vunpack.c.h.b16 %v2556
      %v2638 = vunpack.c.l.b16 %v2557
      %v2639 = vunpack.c.h.b16 %v2557
      %v2640 = vunpack.c.l.b16 %v2558
      %v2641 = vunpack.c.h.b16 %v2558
      %v2642 = vunpack.c.l.b16 %v2559
      %v2643 = vunpack.c.h.b16 %v2559
      %v2644 = vpack.c.b16 %v2590, %v2588
      %v2645 = vpack.c.b16 %v2591, %v2589
      %v2646 = vpack.c.b16 %v2594, %v2592
      %v2647 = vpack.c.b16 %v2595, %v2593
      %v2648 = vpack.c.b16 %v2598, %v2596
      %v2649 = vpack.c.b16 %v2599, %v2597
      %v2650 = vpack.c.b16 %v2602, %v2600
      %v2651 = vpack.c.b16 %v2603, %v2601
      %v2652 = vpack.c.b16 %v2606, %v2604
      %v2653 = vpack.c.b16 %v2607, %v2605
      %v2654 = vpack.c.b16 %v2610, %v2608
      %v2655 = vpack.c.b16 %v2611, %v2609
      %v2656 = vpack.c.b16 %v2614, %v2612
      %v2657 = vpack.c.b16 %v2615, %v2613
      %v2658 = vpack.c.b16 %v2618, %v2616
      %v2659 = vpack.c.b16 %v2619, %v2617
      %v2660 = vpack.c.b16 %v2622, %v2620
      %v2661 = vpack.c.b16 %v2623, %v2621
      %v2662 = vpack.c.b16 %v2626, %v2624
      %v2663 = vpack.c.b16 %v2627, %v2625
      %v2664 = vpack.c.b16 %v2630, %v2628
      %v2665 = vpack.c.b16 %v2631, %v2629
      %v2666 = vpack.c.b16 %v2634, %v2632
      %v2667 = vpack.c.b16 %v2635, %v2633
      %v2668 = vpack.c.b16 %v2638, %v2636
      %v2669 = vpack.c.b16 %v2639, %v2637
      %v2670 = vpack.c.b16 %v2642, %v2640
      %v2671 = vpack.c.b16 %v2643, %v2641
      %2700 = vmatprep.subr.bf16.mxu0 %v2659
      %2701 = vmatpush1.bf16.msra.mxu0 %v2658
      %2702 = vmatprep.subr.bf16.mxu0 %v2657
      %2703 = vmatpush1.bf16.msra.mxu0 %v2656
      %2704 = vmatprep.subr.bf16.mxu0 %v2655
      %2705 = vmatpush1.bf16.msra.mxu0 %v2654
      %2706 = vmatprep.subr.bf16.mxu0 %v2653
      %2707 = vmatpush1.bf16.msra.mxu0 %v2652
      %2708 = vmatprep.subr.bf16.mxu0 %v2651
      %2709 = vmatpush1.bf16.msra.mxu0 %v2650
      %2710 = vmatprep.subr.bf16.mxu0 %v2649
      %2711 = vmatpush1.bf16.msra.mxu0 %v2648
      %2712 = vmatprep.subr.bf16.mxu0 %v2647
      %2713 = vmatpush1.bf16.msra.mxu0 %v2646
      %2714 = vmatprep.subr.bf16.mxu0 %v2645
      %2715 = vmatpush1.bf16.msra.mxu0 %v2644
      %2716 = vmatprep.subr.bf16.mxu0 0
      %2717 = vmatpush2.bf16.msra.mxu0 0
      %2718 = vmatprep.subr.bf16.mxu0 0
      %2719 = vmatpush2.bf16.msra.mxu0 0
      %2720 = vmatprep.subr.bf16.mxu0 %v2671
      %2721 = vmatpush2.bf16.msra.mxu0 %v2670
      %2722 = vmatprep.subr.bf16.mxu0 %v2669
      %2723 = vmatpush2.bf16.msra.mxu0 %v2668
      %2724 = vmatprep.subr.bf16.mxu0 %v2667
      %2725 = vmatpush2.bf16.msra.mxu0 %v2666
      %2726 = vmatprep.subr.bf16.mxu0 %v2665
      %2727 = vmatpush2.bf16.msra.mxu0 %v2664
      %2728 = vmatprep.subr.bf16.mxu0 %v2663
      %2729 = vmatpush2.bf16.msra.mxu0 %v2662
      %2730 = vmatprep.subr.bf16.mxu0 %v2661
      %2731 = vmatpush2.bf16.msra.mxu0 %v2660
      %2732 = vmatprep.mubr.bf16.mxu0 %v661
      %2733 = vmatmul.mubr.bf16.gmra.mxu0 %v456
      %v2734 = vpop.f32.mrf.mxu0
      %v2735 = vadd.f32 0.0, %v2734
      %v2736 = vpop.f32.mrf.mxu0
      %v2737 = vadd.f32 0.0, %v2736
      %v2738 = vpop.f32.mrf.mxu0
      %v2739 = vadd.f32 0.0, %v2738
      %v2740 = vpop.f32.mrf.mxu0
      %v2741 = vadd.f32 0.0, %v2740
      %2742 = vmatprep.mubr.bf16.mxu0 %v664
      %2743 = vmatmul.mubr.bf16.gmra.mxu0 %v458
      %v2744 = vpop.f32.mrf.mxu0
      %v2745 = vadd.f32 0.0, %v2744
      %v2746 = vpop.f32.mrf.mxu0
      %v2747 = vadd.f32 0.0, %v2746
      %v2748 = vpop.f32.mrf.mxu0
      %v2749 = vadd.f32 0.0, %v2748
      %v2750 = vpop.f32.mrf.mxu0
      %v2751 = vadd.f32 0.0, %v2750
      %2752 = vmatprep.mubr.bf16.mxu0 %v667
      %2753 = vmatmul.mubr.bf16.gmra.mxu0 %v460
      %v2754 = vpop.f32.mrf.mxu0
      %v2755 = vadd.f32 0.0, %v2754
      %v2756 = vpop.f32.mrf.mxu0
      %v2757 = vadd.f32 0.0, %v2756
      %v2758 = vpop.f32.mrf.mxu0
      %v2759 = vadd.f32 0.0, %v2758
      %v2760 = vpop.f32.mrf.mxu0
      %v2761 = vadd.f32 0.0, %v2760
      %2762 = vmatprep.mubr.bf16.mxu0 %v670
      %2763 = vmatmul.mubr.bf16.gmra.mxu0 %v462
      %v2764 = vpop.f32.mrf.mxu0
      %v2765 = vadd.f32 0.0, %v2764
      %v2766 = vpop.f32.mrf.mxu0
      %v2767 = vadd.f32 0.0, %v2766
      %v2768 = vpop.f32.mrf.mxu0
      %v2769 = vadd.f32 0.0, %v2768
      %v2770 = vpop.f32.mrf.mxu0
      %v2771 = vadd.f32 0.0, %v2770
      %2772 = vmatprep.mubr.bf16.mxu0 %v673
      %2773 = vmatmul.mubr.bf16.gmra.mxu0 %v464
      %v2774 = vpop.f32.mrf.mxu0
      %v2775 = vadd.f32 0.0, %v2774
      %v2776 = vpop.f32.mrf.mxu0
      %v2777 = vadd.f32 0.0, %v2776
      %v2778 = vpop.f32.mrf.mxu0
      %v2779 = vadd.f32 0.0, %v2778
      %v2780 = vpop.f32.mrf.mxu0
      %v2781 = vadd.f32 0.0, %v2780
      %2782 = vmatprep.mubr.bf16.mxu0 %v676
      %2783 = vmatmul.mubr.bf16.gmra.mxu0 %v466
      %v2784 = vpop.f32.mrf.mxu0
      %v2785 = vadd.f32 0.0, %v2784
      %v2786 = vpop.f32.mrf.mxu0
      %v2787 = vadd.f32 0.0, %v2786
      %v2788 = vpop.f32.mrf.mxu0
      %v2789 = vadd.f32 0.0, %v2788
      %v2790 = vpop.f32.mrf.mxu0
      %v2791 = vadd.f32 0.0, %v2790
      %2792 = vmatprep.mubr.bf16.mxu0 %v679
      %2793 = vmatmul.mubr.bf16.gmra.mxu0 %v468
      %v2794 = vpop.f32.mrf.mxu0
      %v2795 = vadd.f32 0.0, %v2794
      %v2796 = vpop.f32.mrf.mxu0
      %v2797 = vadd.f32 0.0, %v2796
      %v2798 = vpop.f32.mrf.mxu0
      %v2799 = vadd.f32 0.0, %v2798
      %v2800 = vpop.f32.mrf.mxu0
      %v2801 = vadd.f32 0.0, %v2800
      %2802 = vmatprep.mubr.bf16.mxu0 %v682
      %2803 = vmatmul.mubr.bf16.gmra.mxu0 %v470
      %v2804 = vpop.f32.mrf.mxu0
      %v2805 = vadd.f32 0.0, %v2804
      %v2806 = vpop.f32.mrf.mxu0
      %v2807 = vadd.f32 0.0, %v2806
      %v2808 = vpop.f32.mrf.mxu0
      %v2809 = vadd.f32 0.0, %v2808
      %v2810 = vpop.f32.mrf.mxu0
      %v2811 = vadd.f32 0.0, %v2810
      %2812 = vmatprep.mubr.bf16.mxu0 %v685
      %2813 = vmatmul.mubr.bf16.gmra.mxu0 %v472
      %v2814 = vpop.f32.mrf.mxu0
      %v2815 = vadd.f32 0.0, %v2814
      %v2816 = vpop.f32.mrf.mxu0
      %v2817 = vadd.f32 0.0, %v2816
      %v2818 = vpop.f32.mrf.mxu0
      %v2819 = vadd.f32 0.0, %v2818
      %v2820 = vpop.f32.mrf.mxu0
      %v2821 = vadd.f32 0.0, %v2820
      %2822 = vmatprep.mubr.bf16.mxu0 %v688
      %2823 = vmatmul.mubr.bf16.gmra.mxu0 %v474
      %v2824 = vpop.f32.mrf.mxu0
      %v2825 = vadd.f32 0.0, %v2824
      %v2826 = vpop.f32.mrf.mxu0
      %v2827 = vadd.f32 0.0, %v2826
      %v2828 = vpop.f32.mrf.mxu0
      %v2829 = vadd.f32 0.0, %v2828
      %v2830 = vpop.f32.mrf.mxu0
      %v2831 = vadd.f32 0.0, %v2830
      %2832 = vmatprep.mubr.bf16.mxu0 %v691
      %2833 = vmatmul.mubr.bf16.gmra.mxu0 %v476
      %v2834 = vpop.f32.mrf.mxu0
      %v2835 = vadd.f32 0.0, %v2834
      %v2836 = vpop.f32.mrf.mxu0
      %v2837 = vadd.f32 0.0, %v2836
      %v2838 = vpop.f32.mrf.mxu0
      %v2839 = vadd.f32 0.0, %v2838
      %v2840 = vpop.f32.mrf.mxu0
      %v2841 = vadd.f32 0.0, %v2840
      %2842 = vmatprep.mubr.bf16.mxu0 %v694
      %2843 = vmatmul.mubr.bf16.gmra.mxu0 %v478
      %v2844 = vpop.f32.mrf.mxu0
      %v2845 = vadd.f32 0.0, %v2844
      %v2846 = vpop.f32.mrf.mxu0
      %v2847 = vadd.f32 0.0, %v2846
      %v2848 = vpop.f32.mrf.mxu0
      %v2849 = vadd.f32 0.0, %v2848
      %v2850 = vpop.f32.mrf.mxu0
      %v2851 = vadd.f32 0.0, %v2850
      %2852 = vmatprep.mubr.bf16.mxu0 %v697
      %2853 = vmatmul.mubr.bf16.gmra.mxu0 %v480
      %v2854 = vpop.f32.mrf.mxu0
      %v2855 = vadd.f32 0.0, %v2854
      %v2856 = vpop.f32.mrf.mxu0
      %v2857 = vadd.f32 0.0, %v2856
      %v2858 = vpop.f32.mrf.mxu0
      %v2859 = vadd.f32 0.0, %v2858
      %v2860 = vpop.f32.mrf.mxu0
      %v2861 = vadd.f32 0.0, %v2860
      %2862 = vmatprep.mubr.bf16.mxu0 %v700
      %2863 = vmatmul.mubr.bf16.gmra.mxu0 %v482
      %v2864 = vpop.f32.mrf.mxu0
      %v2865 = vadd.f32 0.0, %v2864
      %v2866 = vpop.f32.mrf.mxu0
      %v2867 = vadd.f32 0.0, %v2866
      %v2868 = vpop.f32.mrf.mxu0
      %v2869 = vadd.f32 0.0, %v2868
      %v2870 = vpop.f32.mrf.mxu0
      %v2871 = vadd.f32 0.0, %v2870
      %2872 = vmatprep.mubr.bf16.mxu0 %v703
      %2873 = vmatmul.mubr.bf16.gmra.mxu0 %v484
      %v2874 = vpop.f32.mrf.mxu0
      %v2875 = vadd.f32 0.0, %v2874
      %v2876 = vpop.f32.mrf.mxu0
      %v2877 = vadd.f32 0.0, %v2876
      %v2878 = vpop.f32.mrf.mxu0
      %v2879 = vadd.f32 0.0, %v2878
      %v2880 = vpop.f32.mrf.mxu0
      %v2881 = vadd.f32 0.0, %v2880
      %2882 = vmatprep.mubr.bf16.mxu0 %v706
      %2883 = vmatmul.mubr.bf16.gmra.mxu0 %v486
      %v2884 = vpop.f32.mrf.mxu0
      %v2885 = vadd.f32 0.0, %v2884
      %v2886 = vpop.f32.mrf.mxu0
      %v2887 = vadd.f32 0.0, %v2886
      %v2888 = vpop.f32.mrf.mxu0
      %v2889 = vadd.f32 0.0, %v2888
      %v2890 = vpop.f32.mrf.mxu0
      %v2891 = vadd.f32 0.0, %v2890
      %2892 = vmatprep.mubr.bf16.mxu0 %v709
      %2893 = vmatmul.mubr.bf16.gmra.mxu0 %v488
      %v2894 = vpop.f32.mrf.mxu0
      %v2895 = vadd.f32 0.0, %v2894
      %v2896 = vpop.f32.mrf.mxu0
      %v2897 = vadd.f32 0.0, %v2896
      %v2898 = vpop.f32.mrf.mxu0
      %v2899 = vadd.f32 0.0, %v2898
      %v2900 = vpop.f32.mrf.mxu0
      %v2901 = vadd.f32 0.0, %v2900
      %2902 = vmatprep.mubr.bf16.mxu0 %v712
      %2903 = vmatmul.mubr.bf16.gmra.mxu0 %v490
      %v2904 = vpop.f32.mrf.mxu0
      %v2905 = vadd.f32 0.0, %v2904
      %v2906 = vpop.f32.mrf.mxu0
      %v2907 = vadd.f32 0.0, %v2906
      %v2908 = vpop.f32.mrf.mxu0
      %v2909 = vadd.f32 0.0, %v2908
      %v2910 = vpop.f32.mrf.mxu0
      %v2911 = vadd.f32 0.0, %v2910
      %2912 = vmatprep.mubr.bf16.mxu0 %v715
      %2913 = vmatmul.mubr.bf16.gmra.mxu0 %v492
      %v2914 = vpop.f32.mrf.mxu0
      %v2915 = vadd.f32 0.0, %v2914
      %v2916 = vpop.f32.mrf.mxu0
      %v2917 = vadd.f32 0.0, %v2916
      %v2918 = vpop.f32.mrf.mxu0
      %v2919 = vadd.f32 0.0, %v2918
      %v2920 = vpop.f32.mrf.mxu0
      %v2921 = vadd.f32 0.0, %v2920
      %2922 = vmatprep.mubr.bf16.mxu0 %v718
      %2923 = vmatmul.mubr.bf16.gmra.mxu0 %v494
      %v2924 = vpop.f32.mrf.mxu0
      %v2925 = vadd.f32 0.0, %v2924
      %v2926 = vpop.f32.mrf.mxu0
      %v2927 = vadd.f32 0.0, %v2926
      %v2928 = vpop.f32.mrf.mxu0
      %v2929 = vadd.f32 0.0, %v2928
      %v2930 = vpop.f32.mrf.mxu0
      %v2931 = vadd.f32 0.0, %v2930
      %2932 = vmatprep.mubr.bf16.mxu0 %v721
      %2933 = vmatmul.mubr.bf16.gmra.mxu0 %v496
      %v2934 = vpop.f32.mrf.mxu0
      %v2935 = vadd.f32 0.0, %v2934
      %v2936 = vpop.f32.mrf.mxu0
      %v2937 = vadd.f32 0.0, %v2936
      %v2938 = vpop.f32.mrf.mxu0
      %v2939 = vadd.f32 0.0, %v2938
      %v2940 = vpop.f32.mrf.mxu0
      %v2941 = vadd.f32 0.0, %v2940
      %2942 = vdwg.mxu0
      %v2943 = vpack.c.bf16 %v2739, %v2735
      %v2944 = vpack.c.bf16 %v2741, %v2737
      %v2945 = vpack.c.bf16 %v2749, %v2745
      %v2946 = vpack.c.bf16 %v2751, %v2747
      %v2947 = vpack.c.bf16 %v2759, %v2755
      %v2948 = vpack.c.bf16 %v2761, %v2757
      %v2949 = vpack.c.bf16 %v2769, %v2765
      %v2950 = vpack.c.bf16 %v2771, %v2767
      %v2951 = vpack.c.bf16 %v2779, %v2775
      %v2952 = vpack.c.bf16 %v2781, %v2777
      %v2953 = vpack.c.bf16 %v2789, %v2785
      %v2954 = vpack.c.bf16 %v2791, %v2787
      %v2955 = vpack.c.bf16 %v2799, %v2795
      %v2956 = vpack.c.bf16 %v2801, %v2797
      %s2957 = scalar_lea.vmem %s2, 1008
      %v2958 = vld [vmem:[%s2957] sm:$0xff]
      %v2959 = vld [vmem:[%s2957 + $0x8] sm:$0xf]
      %v2960 = vld [vmem:[%s2957 + $0xc] sm:$0xff]
      %v2961 = vld [vmem:[%s2957 + $0x14] sm:$0xf]
      %v2962 = vld [vmem:[%s2957 + $0x18] sm:$0xff]
      %v2963 = vld [vmem:[%s2957 + $0x20] sm:$0xf]
      %v2964 = vld [vmem:[%s2957 + $0x24] sm:$0xff]
      %v2965 = vld [vmem:[%s2957 + $0x2c] sm:$0xf]
      %v2966 = vld [vmem:[%s2957 + $0x30] sm:$0xff]
      %v2967 = vld [vmem:[%s2957 + $0x38] sm:$0xf]
      %v2968 = vld [vmem:[%s2957 + $0x3c] sm:$0xff]
      %v2969 = vld [vmem:[%s2957 + $0x44] sm:$0xf]
      %v2970 = vld [vmem:[%s2957 + $0x48] sm:$0xff]
      %v2971 = vld [vmem:[%s2957 + $0x50] sm:$0xf]
      %v2972 = vld [vmem:[%s2957 + $0x54] sm:$0xff]
      %v2973 = vld [vmem:[%s2957 + $0x5c] sm:$0xf]
      %v2974 = vld [vmem:[%s2957 + $0x60] sm:$0xff]
      %v2975 = vld [vmem:[%s2957 + $0x68] sm:$0xf]
      %v2976 = vld [vmem:[%s2957 + $0x6c] sm:$0xff]
      %v2977 = vld [vmem:[%s2957 + $0x74] sm:$0xf]
      %v2978 = vld [vmem:[%s2957 + $0x78] sm:$0xff]
      %v2979 = vld [vmem:[%s2957 + $0x80] sm:$0xf]
      %v2980 = vld [vmem:[%s2957 + $0x84] sm:$0xff]
      %v2981 = vld [vmem:[%s2957 + $0x8c] sm:$0xf]
      %v2982 = vld [vmem:[%s2957 + $0x90] sm:$0xff]
      %v2983 = vld [vmem:[%s2957 + $0x98] sm:$0xf]
      %v2984 = vld [vmem:[%s2957 + $0x9c] sm:$0xff]
      %v2985 = vld [vmem:[%s2957 + $0xa4] sm:$0xf]
      %v2986 = vld [vmem:[%s2957 + $0xa8] sm:$0xff]
      %v2987 = vld [vmem:[%s2957 + $0xb0] sm:$0xf]
      %v2988 = vld [vmem:[%s2957 + $0xb4] sm:$0xff]
      %v2989 = vld [vmem:[%s2957 + $0xbc] sm:$0xf]
      %v2990 = vld [vmem:[%s2957 + $0xc0] sm:$0xff]
      %v2991 = vld [vmem:[%s2957 + $0xc8] sm:$0xf]
      %v2992 = vld [vmem:[%s2957 + $0xcc] sm:$0xff]
      %v2993 = vld [vmem:[%s2957 + $0xd4] sm:$0xf]
      %v2994 = vld [vmem:[%s2957 + $0xd8] sm:$0xff]
      %v2995 = vld [vmem:[%s2957 + $0xe0] sm:$0xf]
      %v2996 = vld [vmem:[%s2957 + $0xe4] sm:$0xff]
      %v2997 = vld [vmem:[%s2957 + $0xec] sm:$0xf]
      %v2998 = vld [vmem:[%s2957 + $0xf0] sm:$0xff]
      %v2999 = vld [vmem:[%s2957 + $0xf8] sm:$0xf]
      %v3000 = vld [vmem:[%s2957 + $0xfc] sm:$0xff]
      %v3001 = vld [vmem:[%s2957 + $0x104] sm:$0xf]
      %v3002 = vld [vmem:[%s2957 + $0x108] sm:$0xff]
      %v3003 = vld [vmem:[%s2957 + $0x110] sm:$0xf]
      %v3004 = vld [vmem:[%s2957 + $0x114] sm:$0xff]
      %v3005 = vld [vmem:[%s2957 + $0x11c] sm:$0xf]
      %v3006 = vld [vmem:[%s2957 + $0x120] sm:$0xff]
      %v3007 = vld [vmem:[%s2957 + $0x128] sm:$0xf]
      %v3008 = vld [vmem:[%s2957 + $0x12c] sm:$0xff]
      %v3009 = vld [vmem:[%s2957 + $0x134] sm:$0xf]
      %v3010 = vld [vmem:[%s2957 + $0x138] sm:$0xff]
      %v3011 = vld [vmem:[%s2957 + $0x140] sm:$0xf]
      %v3012 = vld [vmem:[%s2957 + $0x144] sm:$0xff]
      %v3013 = vld [vmem:[%s2957 + $0x14c] sm:$0xf]
      %v3070 = vunpack.c.l.b16 %v2958
      %v3071 = vunpack.c.h.b16 %v2958
      %v3072 = vunpack.c.l.b16 %v2959
      %v3073 = vunpack.c.l.b16 %v2960
      %v3074 = vunpack.c.h.b16 %v2960
      %v3075 = vunpack.c.l.b16 %v2961
      %v3076 = vunpack.c.l.b16 %v2962
      %v3077 = vunpack.c.h.b16 %v2962
      %v3078 = vunpack.c.l.b16 %v2963
      %v3079 = vunpack.c.l.b16 %v2964
      %v3080 = vunpack.c.h.b16 %v2964
      %v3081 = vunpack.c.l.b16 %v2965
      %v3082 = vunpack.c.l.b16 %v2966
      %v3083 = vunpack.c.h.b16 %v2966
      %v3084 = vunpack.c.l.b16 %v2967
      %v3085 = vunpack.c.l.b16 %v2968
      %v3086 = vunpack.c.h.b16 %v2968
      %v3087 = vunpack.c.l.b16 %v2969
      %v3088 = vunpack.c.l.b16 %v2970
      %v3089 = vunpack.c.h.b16 %v2970
      %v3090 = vunpack.c.l.b16 %v2971
      %v3091 = vunpack.c.l.b16 %v2972
      %v3092 = vunpack.c.h.b16 %v2972
      %v3093 = vunpack.c.l.b16 %v2973
      %v3094 = vunpack.c.l.b16 %v2974
      %v3095 = vunpack.c.h.b16 %v2974
      %v3096 = vunpack.c.l.b16 %v2975
      %v3097 = vunpack.c.l.b16 %v2976
      %v3098 = vunpack.c.h.b16 %v2976
      %v3099 = vunpack.c.l.b16 %v2977
      %v3100 = vunpack.c.l.b16 %v2978
      %v3101 = vunpack.c.h.b16 %v2978
      %v3102 = vunpack.c.l.b16 %v2979
      %v3103 = vunpack.c.l.b16 %v2980
      %v3104 = vunpack.c.h.b16 %v2980
      %v3105 = vunpack.c.l.b16 %v2981
      %v3106 = vunpack.c.l.b16 %v2982
      %v3107 = vunpack.c.h.b16 %v2982
      %v3108 = vunpack.c.l.b16 %v2983
      %v3109 = vunpack.c.l.b16 %v2984
      %v3110 = vunpack.c.h.b16 %v2984
      %v3111 = vunpack.c.l.b16 %v2985
      %v3112 = vunpack.c.l.b16 %v2986
      %v3113 = vunpack.c.h.b16 %v2986
      %v3114 = vunpack.c.l.b16 %v2987
      %v3115 = vunpack.c.l.b16 %v2988
      %v3116 = vunpack.c.h.b16 %v2988
      %v3117 = vunpack.c.l.b16 %v2989
      %v3118 = vunpack.c.l.b16 %v2990
      %v3119 = vunpack.c.h.b16 %v2990
      %v3120 = vunpack.c.l.b16 %v2991
      %v3121 = vunpack.c.l.b16 %v2992
      %v3122 = vunpack.c.h.b16 %v2992
      %v3123 = vunpack.c.l.b16 %v2993
      %v3124 = vunpack.c.l.b16 %v2994
      %v3125 = vunpack.c.h.b16 %v2994
      %v3126 = vunpack.c.l.b16 %v2995
      %v3127 = vunpack.c.l.b16 %v2996
      %v3128 = vunpack.c.h.b16 %v2996
      %v3129 = vunpack.c.l.b16 %v2997
      %v3130 = vunpack.c.l.b16 %v2998
      %v3131 = vunpack.c.h.b16 %v2998
      %v3132 = vunpack.c.l.b16 %v2999
      %v3133 = vunpack.c.l.b16 %v3000
      %v3134 = vunpack.c.h.b16 %v3000
      %v3135 = vunpack.c.l.b16 %v3001
      %v3136 = vunpack.c.l.b16 %v3002
      %v3137 = vunpack.c.h.b16 %v3002
      %v3138 = vunpack.c.l.b16 %v3003
      %v3139 = vunpack.c.l.b16 %v3004
      %v3140 = vunpack.c.h.b16 %v3004
      %v3141 = vunpack.c.l.b16 %v3005
      %v3142 = vunpack.c.l.b16 %v3006
      %v3143 = vunpack.c.h.b16 %v3006
      %v3144 = vunpack.c.l.b16 %v3007
      %v3145 = vunpack.c.l.b16 %v3008
      %v3146 = vunpack.c.h.b16 %v3008
      %v3147 = vunpack.c.l.b16 %v3009
      %v3148 = vunpack.c.l.b16 %v3010
      %v3149 = vunpack.c.h.b16 %v3010
      %v3150 = vunpack.c.l.b16 %v3011
      %v3151 = vunpack.c.l.b16 %v3012
      %v3152 = vunpack.c.h.b16 %v3012
      %v3153 = vunpack.c.l.b16 %v3013
      %v3154 = vpack.c.b16 %v3073, %v3070
      %v3155 = vpack.c.b16 %v3074, %v3071
      %v3156 = vpack.c.b16 %v3075, %v3072
      %v3157 = vpack.c.b16 %v3079, %v3076
      %v3158 = vpack.c.b16 %v3080, %v3077
      %v3159 = vpack.c.b16 %v3081, %v3078
      %v3160 = vpack.c.b16 %v3085, %v3082
      %v3161 = vpack.c.b16 %v3086, %v3083
      %v3162 = vpack.c.b16 %v3087, %v3084
      %v3163 = vpack.c.b16 %v3091, %v3088
      %v3164 = vpack.c.b16 %v3092, %v3089
      %v3165 = vpack.c.b16 %v3093, %v3090
      %v3166 = vpack.c.b16 %v3097, %v3094
      %v3167 = vpack.c.b16 %v3098, %v3095
      %v3168 = vpack.c.b16 %v3099, %v3096
      %v3169 = vpack.c.b16 %v3103, %v3100
      %v3170 = vpack.c.b16 %v3104, %v3101
      %v3171 = vpack.c.b16 %v3105, %v3102
      %v3172 = vpack.c.b16 %v3109, %v3106
      %v3173 = vpack.c.b16 %v3110, %v3107
      %v3174 = vpack.c.b16 %v3111, %v3108
      %v3175 = vpack.c.b16 %v3115, %v3112
      %v3176 = vpack.c.b16 %v3116, %v3113
      %v3177 = vpack.c.b16 %v3117, %v3114
      %v3178 = vpack.c.b16 %v3121, %v3118
      %v3179 = vpack.c.b16 %v3122, %v3119
      %v3180 = vpack.c.b16 %v3123, %v3120
      %v3181 = vpack.c.b16 %v3127, %v3124
      %v3182 = vpack.c.b16 %v3128, %v3125
      %v3183 = vpack.c.b16 %v3129, %v3126
      %v3184 = vpack.c.b16 %v3133, %v3130
      %v3185 = vpack.c.b16 %v3134, %v3131
      %v3186 = vpack.c.b16 %v3135, %v3132
      %v3187 = vpack.c.b16 %v3139, %v3136
      %v3188 = vpack.c.b16 %v3140, %v3137
      %v3189 = vpack.c.b16 %v3141, %v3138
      %v3190 = vpack.c.b16 %v3145, %v3142
      %v3191 = vpack.c.b16 %v3146, %v3143
      %v3192 = vpack.c.b16 %v3147, %v3144
      %v3193 = vpack.c.b16 %v3151, %v3148
      %v3194 = vpack.c.b16 %v3152, %v3149
      %v3195 = vpack.c.b16 %v3153, %v3150
      %v3239 = vsel %vm659, %v2944, 0
      %v3242 = vsel %vm659, %v2946, 0
      %v3245 = vsel %vm659, %v2948, 0
      %v3248 = vsel %vm659, %v2950, 0
      %v3251 = vsel %vm659, %v2952, 0
      %v3254 = vsel %vm659, %v2954, 0
      %v3257 = vsel %vm659, %v2956, 0
      %3259 = vmatprep.subr.bf16.mxu0 %v3176
      %3260 = vmatpush1.bf16.msra.mxu0 %v3175
      %3261 = vmatprep.subr.bf16.mxu0 %v3173
      %3262 = vmatpush1.bf16.msra.mxu0 %v3172
      %3263 = vmatprep.subr.bf16.mxu0 %v3170
      %3264 = vmatpush1.bf16.msra.mxu0 %v3169
      %3265 = vmatprep.subr.bf16.mxu0 %v3167
      %3266 = vmatpush1.bf16.msra.mxu0 %v3166
      %3267 = vmatprep.subr.bf16.mxu0 %v3164
      %3268 = vmatpush1.bf16.msra.mxu0 %v3163
      %3269 = vmatprep.subr.bf16.mxu0 %v3161
      %3270 = vmatpush1.bf16.msra.mxu0 %v3160
      %3271 = vmatprep.subr.bf16.mxu0 %v3158
      %3272 = vmatpush1.bf16.msra.mxu0 %v3157
      %3273 = vmatprep.subr.bf16.mxu0 %v3155
      %3274 = vmatpush1.bf16.msra.mxu0 %v3154
      %3275 = vmatprep.subr.bf16.mxu0 0
      %3276 = vmatpush2.bf16.msra.mxu0 0
      %3277 = vmatprep.subr.bf16.mxu0 0
      %3278 = vmatpush2.bf16.msra.mxu0 0
      %3279 = vmatprep.subr.bf16.mxu0 %v3194
      %3280 = vmatpush2.bf16.msra.mxu0 %v3193
      %3281 = vmatprep.subr.bf16.mxu0 %v3191
      %3282 = vmatpush2.bf16.msra.mxu0 %v3190
      %3283 = vmatprep.subr.bf16.mxu0 %v3188
      %3284 = vmatpush2.bf16.msra.mxu0 %v3187
      %3285 = vmatprep.subr.bf16.mxu0 %v3185
      %3286 = vmatpush2.bf16.msra.mxu0 %v3184
      %3287 = vmatprep.subr.bf16.mxu0 %v3182
      %3288 = vmatpush2.bf16.msra.mxu0 %v3181
      %3289 = vmatprep.subr.bf16.mxu0 %v3179
      %3290 = vmatpush2.bf16.msra.mxu0 %v3178
      %3291 = vmatprep.mubr.bf16.mxu0 %v3239
      %3292 = vmatmul.mubr.bf16.gmra.mxu0 %v2943
      %v3293 = vpop.f32.mrf.mxu0
      %v3294 = vadd.f32 0.0, %v3293
      %v3295 = vpop.f32.mrf.mxu0
      %v3296 = vadd.f32 0.0, %v3295
      %v3297 = vpop.f32.mrf.mxu0
      %v3298 = vadd.f32 0.0, %v3297
      %v3299 = vpop.f32.mrf.mxu0
      %v3300 = vadd.f32 0.0, %v3299
      %3301 = vmatprep.mubr.bf16.mxu0 %v3242
      %3302 = vmatmul.mubr.bf16.gmra.mxu0 %v2945
      %v3303 = vpop.f32.mrf.mxu0
      %v3304 = vadd.f32 0.0, %v3303
      %v3305 = vpop.f32.mrf.mxu0
      %v3306 = vadd.f32 0.0, %v3305
      %v3307 = vpop.f32.mrf.mxu0
      %v3308 = vadd.f32 0.0, %v3307
      %v3309 = vpop.f32.mrf.mxu0
      %v3310 = vadd.f32 0.0, %v3309
      %3311 = vmatprep.mubr.bf16.mxu0 %v3245
      %3312 = vmatmul.mubr.bf16.gmra.mxu0 %v2947
      %v3313 = vpop.f32.mrf.mxu0
      %v3314 = vadd.f32 0.0, %v3313
      %v3315 = vpop.f32.mrf.mxu0
      %v3316 = vadd.f32 0.0, %v3315
      %v3317 = vpop.f32.mrf.mxu0
      %v3318 = vadd.f32 0.0, %v3317
      %v3319 = vpop.f32.mrf.mxu0
      %v3320 = vadd.f32 0.0, %v3319
      %3321 = vmatprep.mubr.bf16.mxu0 %v3248
      %3322 = vmatmul.mubr.bf16.gmra.mxu0 %v2949
      %v3323 = vpop.f32.mrf.mxu0
      %v3324 = vadd.f32 0.0, %v3323
      %v3325 = vpop.f32.mrf.mxu0
      %v3326 = vadd.f32 0.0, %v3325
      %v3327 = vpop.f32.mrf.mxu0
      %v3328 = vadd.f32 0.0, %v3327
      %v3329 = vpop.f32.mrf.mxu0
      %v3330 = vadd.f32 0.0, %v3329
      %3331 = vmatprep.mubr.bf16.mxu0 %v3251
      %3332 = vmatmul.mubr.bf16.gmra.mxu0 %v2951
      %v3333 = vpop.f32.mrf.mxu0
      %v3334 = vadd.f32 0.0, %v3333
      %v3335 = vpop.f32.mrf.mxu0
      %v3336 = vadd.f32 0.0, %v3335
      %v3337 = vpop.f32.mrf.mxu0
      %v3338 = vadd.f32 0.0, %v3337
      %v3339 = vpop.f32.mrf.mxu0
      %v3340 = vadd.f32 0.0, %v3339
      %3341 = vmatprep.mubr.bf16.mxu0 %v3254
      %3342 = vmatmul.mubr.bf16.gmra.mxu0 %v2953
      %v3343 = vpop.f32.mrf.mxu0
      %v3344 = vadd.f32 0.0, %v3343
      %v3345 = vpop.f32.mrf.mxu0
      %v3346 = vadd.f32 0.0, %v3345
      %v3347 = vpop.f32.mrf.mxu0
      %v3348 = vadd.f32 0.0, %v3347
      %v3349 = vpop.f32.mrf.mxu0
      %v3350 = vadd.f32 0.0, %v3349
      %3351 = vmatprep.mubr.bf16.mxu0 %v3257
      %3352 = vmatmul.mubr.bf16.gmra.mxu0 %v2955
      %v3353 = vpop.f32.mrf.mxu0
      %v3354 = vadd.f32 0.0, %v3353
      %v3355 = vpop.f32.mrf.mxu0
      %v3356 = vadd.f32 0.0, %v3355
      %v3357 = vpop.f32.mrf.mxu0
      %v3358 = vadd.f32 0.0, %v3357
      %v3359 = vpop.f32.mrf.mxu0
      %v3360 = vadd.f32 0.0, %v3359
      %3361 = vdwg.mxu0
      %3362 = vmatprep.subr.bf16.mxu0 0
      %3363 = vmatpush1.bf16.msra.mxu0 %v3177
      %3364 = vmatprep.subr.bf16.mxu0 0
      %3365 = vmatpush1.bf16.msra.mxu0 %v3174
      %3366 = vmatprep.subr.bf16.mxu0 0
      %3367 = vmatpush1.bf16.msra.mxu0 %v3171
      %3368 = vmatprep.subr.bf16.mxu0 0
      %3369 = vmatpush1.bf16.msra.mxu0 %v3168
      %3370 = vmatprep.subr.bf16.mxu0 0
      %3371 = vmatpush1.bf16.msra.mxu0 %v3165
      %3372 = vmatprep.subr.bf16.mxu0 0
      %3373 = vmatpush1.bf16.msra.mxu0 %v3162
      %3374 = vmatprep.subr.bf16.mxu0 0
      %3375 = vmatpush1.bf16.msra.mxu0 %v3159
      %3376 = vmatprep.subr.bf16.mxu0 0
      %3377 = vmatpush1.bf16.msra.mxu0 %v3156
      %3378 = vmatprep.subr.bf16.mxu0 0
      %3379 = vmatpush2.bf16.msra.mxu0 0
      %3380 = vmatprep.subr.bf16.mxu0 0
      %3381 = vmatpush2.bf16.msra.mxu0 0
      %3382 = vmatprep.subr.bf16.mxu0 0
      %3383 = vmatpush2.bf16.msra.mxu0 %v3195
      %3384 = vmatprep.subr.bf16.mxu0 0
      %3385 = vmatpush2.bf16.msra.mxu0 %v3192
      %3386 = vmatprep.subr.bf16.mxu0 0
      %3387 = vmatpush2.bf16.msra.mxu0 %v3189
      %3388 = vmatprep.subr.bf16.mxu0 0
      %3389 = vmatpush2.bf16.msra.mxu0 %v3186
      %3390 = vmatprep.subr.bf16.mxu0 0
      %3391 = vmatpush2.bf16.msra.mxu0 %v3183
      %3392 = vmatprep.subr.bf16.mxu0 0
      %3393 = vmatpush2.bf16.msra.mxu0 %v3180
      %3394 = vmatprep.mubr.bf16.mxu0 %v3239
      %3395 = vmatmul.mubr.bf16.gmra.mxu0 %v2943
      %v3396 = vpop.f32.mrf.mxu0
      %v3397 = vadd.f32 0.0, %v3396
      %v3398 = vpop.f32.mrf.mxu0
      %v3399 = vpop.f32.mrf.mxu0
      %v3400 = vadd.f32 0.0, %v3399
      %v3401 = vpop.f32.mrf.mxu0
      %3402 = vmatprep.mubr.bf16.mxu0 %v3242
      %3403 = vmatmul.mubr.bf16.gmra.mxu0 %v2945
      %v3404 = vpop.f32.mrf.mxu0
      %v3405 = vadd.f32 0.0, %v3404
      %v3406 = vpop.f32.mrf.mxu0
      %v3407 = vpop.f32.mrf.mxu0
      %v3408 = vadd.f32 0.0, %v3407
      %v3409 = vpop.f32.mrf.mxu0
      %3410 = vmatprep.mubr.bf16.mxu0 %v3245
      %3411 = vmatmul.mubr.bf16.gmra.mxu0 %v2947
      %v3412 = vpop.f32.mrf.mxu0
      %v3413 = vadd.f32 0.0, %v3412
      %v3414 = vpop.f32.mrf.mxu0
      %v3415 = vpop.f32.mrf.mxu0
      %v3416 = vadd.f32 0.0, %v3415
      %v3417 = vpop.f32.mrf.mxu0
      %3418 = vmatprep.mubr.bf16.mxu0 %v3248
      %3419 = vmatmul.mubr.bf16.gmra.mxu0 %v2949
      %v3420 = vpop.f32.mrf.mxu0
      %v3421 = vadd.f32 0.0, %v3420
      %v3422 = vpop.f32.mrf.mxu0
      %v3423 = vpop.f32.mrf.mxu0
      %v3424 = vadd.f32 0.0, %v3423
      %v3425 = vpop.f32.mrf.mxu0
      %3426 = vmatprep.mubr.bf16.mxu0 %v3251
      %3427 = vmatmul.mubr.bf16.gmra.mxu0 %v2951
      %v3428 = vpop.f32.mrf.mxu0
      %v3429 = vadd.f32 0.0, %v3428
      %v3430 = vpop.f32.mrf.mxu0
      %v3431 = vpop.f32.mrf.mxu0
      %v3432 = vadd.f32 0.0, %v3431
      %v3433 = vpop.f32.mrf.mxu0
      %3434 = vmatprep.mubr.bf16.mxu0 %v3254
      %3435 = vmatmul.mubr.bf16.gmra.mxu0 %v2953
      %v3436 = vpop.f32.mrf.mxu0
      %v3437 = vadd.f32 0.0, %v3436
      %v3438 = vpop.f32.mrf.mxu0
      %v3439 = vpop.f32.mrf.mxu0
      %v3440 = vadd.f32 0.0, %v3439
      %v3441 = vpop.f32.mrf.mxu0
      %3442 = vmatprep.mubr.bf16.mxu0 %v3257
      %3443 = vmatmul.mubr.bf16.gmra.mxu0 %v2955
      %v3444 = vpop.f32.mrf.mxu0
      %v3445 = vadd.f32 0.0, %v3444
      %v3446 = vpop.f32.mrf.mxu0
      %v3447 = vpop.f32.mrf.mxu0
      %v3448 = vadd.f32 0.0, %v3447
      %v3449 = vpop.f32.mrf.mxu0
      %3450 = vdwg.mxu0
      %v3451 = vadd.f32 %v2489, %v3294
      %v3452 = vadd.f32 %v2490, %v3296
      %v3453 = vadd.f32 %v2491, %v3397
      %v3454 = vadd.f32 %v2492, %v3298
      %v3455 = vadd.f32 %v2493, %v3300
      %v3456 = vadd.f32 %v2494, %v3400
      %v3457 = vadd.f32 %v2495, %v3304
      %v3458 = vadd.f32 %v2496, %v3306
      %v3459 = vadd.f32 %v2497, %v3405
      %v3460 = vadd.f32 %v2498, %v3308
      %v3461 = vadd.f32 %v2499, %v3310
      %v3462 = vadd.f32 %v2500, %v3408
      %v3463 = vadd.f32 %v2501, %v3314
      %v3464 = vadd.f32 %v2502, %v3316
      %v3465 = vadd.f32 %v2503, %v3413
      %v3466 = vadd.f32 %v2504, %v3318
      %v3467 = vadd.f32 %v2505, %v3320
      %v3468 = vadd.f32 %v2506, %v3416
      %v3469 = vadd.f32 %v2507, %v3324
      %v3470 = vadd.f32 %v2508, %v3326
      %v3471 = vadd.f32 %v2509, %v3421
      %v3472 = vadd.f32 %v2510, %v3328
      %v3473 = vadd.f32 %v2511, %v3330
      %v3474 = vadd.f32 %v2512, %v3424
      %v3475 = vadd.f32 %v2513, %v3334
      %v3476 = vadd.f32 %v2514, %v3336
      %v3477 = vadd.f32 %v2515, %v3429
      %v3478 = vadd.f32 %v2516, %v3338
      %v3479 = vadd.f32 %v2517, %v3340
      %v3480 = vadd.f32 %v2518, %v3432
      %v3481 = vadd.f32 %v2519, %v3344
      %v3482 = vadd.f32 %v2520, %v3346
      %v3483 = vadd.f32 %v2521, %v3437
      %v3484 = vadd.f32 %v2522, %v3348
      %v3485 = vadd.f32 %v2523, %v3350
      %v3486 = vadd.f32 %v2524, %v3440
      %v3487 = vadd.f32 %v2525, %v3354
      %v3488 = vadd.f32 %v2526, %v3356
      %v3489 = vadd.f32 %v2527, %v3445
      %v3490 = vadd.f32 %v2528, %v3358
      %v3491 = vadd.f32 %v2529, %v3360
      %v3492 = vadd.f32 %v2530, %v3448
      %v3493 = vpack.c.bf16 %v2809, %v2805
      %v3494 = vpack.c.bf16 %v2811, %v2807
      %v3495 = vpack.c.bf16 %v2819, %v2815
      %v3496 = vpack.c.bf16 %v2821, %v2817
      %v3497 = vpack.c.bf16 %v2829, %v2825
      %v3498 = vpack.c.bf16 %v2831, %v2827
      %v3499 = vpack.c.bf16 %v2839, %v2835
      %v3500 = vpack.c.bf16 %v2841, %v2837
      %v3501 = vpack.c.bf16 %v2849, %v2845
      %v3502 = vpack.c.bf16 %v2851, %v2847
      %v3503 = vpack.c.bf16 %v2859, %v2855
      %v3504 = vpack.c.bf16 %v2861, %v2857
      %v3505 = vpack.c.bf16 %v2869, %v2865
      %v3506 = vpack.c.bf16 %v2871, %v2867
      %s3507 = scalar_lea.vmem %s2, 1344
      %v3508 = vld [vmem:[%s3507] sm:$0xff]
      %v3509 = vld [vmem:[%s3507 + $0x8] sm:$0xf]
      %v3510 = vld [vmem:[%s3507 + $0xc] sm:$0xff]
      %v3511 = vld [vmem:[%s3507 + $0x14] sm:$0xf]
      %v3512 = vld [vmem:[%s3507 + $0x18] sm:$0xff]
      %v3513 = vld [vmem:[%s3507 + $0x20] sm:$0xf]
      %v3514 = vld [vmem:[%s3507 + $0x24] sm:$0xff]
      %v3515 = vld [vmem:[%s3507 + $0x2c] sm:$0xf]
      %v3516 = vld [vmem:[%s3507 + $0x30] sm:$0xff]
      %v3517 = vld [vmem:[%s3507 + $0x38] sm:$0xf]
      %v3518 = vld [vmem:[%s3507 + $0x3c] sm:$0xff]
      %v3519 = vld [vmem:[%s3507 + $0x44] sm:$0xf]
      %v3520 = vld [vmem:[%s3507 + $0x48] sm:$0xff]
      %v3521 = vld [vmem:[%s3507 + $0x50] sm:$0xf]
      %v3522 = vld [vmem:[%s3507 + $0x54] sm:$0xff]
      %v3523 = vld [vmem:[%s3507 + $0x5c] sm:$0xf]
      %v3524 = vld [vmem:[%s3507 + $0x60] sm:$0xff]
      %v3525 = vld [vmem:[%s3507 + $0x68] sm:$0xf]
      %v3526 = vld [vmem:[%s3507 + $0x6c] sm:$0xff]
      %v3527 = vld [vmem:[%s3507 + $0x74] sm:$0xf]
      %v3528 = vld [vmem:[%s3507 + $0x78] sm:$0xff]
      %v3529 = vld [vmem:[%s3507 + $0x80] sm:$0xf]
      %v3530 = vld [vmem:[%s3507 + $0x84] sm:$0xff]
      %v3531 = vld [vmem:[%s3507 + $0x8c] sm:$0xf]
      %v3532 = vld [vmem:[%s3507 + $0x90] sm:$0xff]
      %v3533 = vld [vmem:[%s3507 + $0x98] sm:$0xf]
      %v3534 = vld [vmem:[%s3507 + $0x9c] sm:$0xff]
      %v3535 = vld [vmem:[%s3507 + $0xa4] sm:$0xf]
      %v3536 = vld [vmem:[%s3507 + $0xa8] sm:$0xff]
      %v3537 = vld [vmem:[%s3507 + $0xb0] sm:$0xf]
      %v3538 = vld [vmem:[%s3507 + $0xb4] sm:$0xff]
      %v3539 = vld [vmem:[%s3507 + $0xbc] sm:$0xf]
      %v3540 = vld [vmem:[%s3507 + $0xc0] sm:$0xff]
      %v3541 = vld [vmem:[%s3507 + $0xc8] sm:$0xf]
      %v3542 = vld [vmem:[%s3507 + $0xcc] sm:$0xff]
      %v3543 = vld [vmem:[%s3507 + $0xd4] sm:$0xf]
      %v3544 = vld [vmem:[%s3507 + $0xd8] sm:$0xff]
      %v3545 = vld [vmem:[%s3507 + $0xe0] sm:$0xf]
      %v3546 = vld [vmem:[%s3507 + $0xe4] sm:$0xff]
      %v3547 = vld [vmem:[%s3507 + $0xec] sm:$0xf]
      %v3548 = vld [vmem:[%s3507 + $0xf0] sm:$0xff]
      %v3549 = vld [vmem:[%s3507 + $0xf8] sm:$0xf]
      %v3550 = vld [vmem:[%s3507 + $0xfc] sm:$0xff]
      %v3551 = vld [vmem:[%s3507 + $0x104] sm:$0xf]
      %v3552 = vld [vmem:[%s3507 + $0x108] sm:$0xff]
      %v3553 = vld [vmem:[%s3507 + $0x110] sm:$0xf]
      %v3554 = vld [vmem:[%s3507 + $0x114] sm:$0xff]
      %v3555 = vld [vmem:[%s3507 + $0x11c] sm:$0xf]
      %v3556 = vld [vmem:[%s3507 + $0x120] sm:$0xff]
      %v3557 = vld [vmem:[%s3507 + $0x128] sm:$0xf]
      %v3558 = vld [vmem:[%s3507 + $0x12c] sm:$0xff]
      %v3559 = vld [vmem:[%s3507 + $0x134] sm:$0xf]
      %v3560 = vld [vmem:[%s3507 + $0x138] sm:$0xff]
      %v3561 = vld [vmem:[%s3507 + $0x140] sm:$0xf]
      %v3562 = vld [vmem:[%s3507 + $0x144] sm:$0xff]
      %v3563 = vld [vmem:[%s3507 + $0x14c] sm:$0xf]
      %v3620 = vunpack.c.l.b16 %v3508
      %v3621 = vunpack.c.h.b16 %v3508
      %v3622 = vunpack.c.l.b16 %v3509
      %v3623 = vunpack.c.l.b16 %v3510
      %v3624 = vunpack.c.h.b16 %v3510
      %v3625 = vunpack.c.l.b16 %v3511
      %v3626 = vunpack.c.l.b16 %v3512
      %v3627 = vunpack.c.h.b16 %v3512
      %v3628 = vunpack.c.l.b16 %v3513
      %v3629 = vunpack.c.l.b16 %v3514
      %v3630 = vunpack.c.h.b16 %v3514
      %v3631 = vunpack.c.l.b16 %v3515
      %v3632 = vunpack.c.l.b16 %v3516
      %v3633 = vunpack.c.h.b16 %v3516
      %v3634 = vunpack.c.l.b16 %v3517
      %v3635 = vunpack.c.l.b16 %v3518
      %v3636 = vunpack.c.h.b16 %v3518
      %v3637 = vunpack.c.l.b16 %v3519
      %v3638 = vunpack.c.l.b16 %v3520
      %v3639 = vunpack.c.h.b16 %v3520
      %v3640 = vunpack.c.l.b16 %v3521
      %v3641 = vunpack.c.l.b16 %v3522
      %v3642 = vunpack.c.h.b16 %v3522
      %v3643 = vunpack.c.l.b16 %v3523
      %v3644 = vunpack.c.l.b16 %v3524
      %v3645 = vunpack.c.h.b16 %v3524
      %v3646 = vunpack.c.l.b16 %v3525
      %v3647 = vunpack.c.l.b16 %v3526
      %v3648 = vunpack.c.h.b16 %v3526
      %v3649 = vunpack.c.l.b16 %v3527
      %v3650 = vunpack.c.l.b16 %v3528
      %v3651 = vunpack.c.h.b16 %v3528
      %v3652 = vunpack.c.l.b16 %v3529
      %v3653 = vunpack.c.l.b16 %v3530
      %v3654 = vunpack.c.h.b16 %v3530
      %v3655 = vunpack.c.l.b16 %v3531
      %v3656 = vunpack.c.l.b16 %v3532
      %v3657 = vunpack.c.h.b16 %v3532
      %v3658 = vunpack.c.l.b16 %v3533
      %v3659 = vunpack.c.l.b16 %v3534
      %v3660 = vunpack.c.h.b16 %v3534
      %v3661 = vunpack.c.l.b16 %v3535
      %v3662 = vunpack.c.l.b16 %v3536
      %v3663 = vunpack.c.h.b16 %v3536
      %v3664 = vunpack.c.l.b16 %v3537
      %v3665 = vunpack.c.l.b16 %v3538
      %v3666 = vunpack.c.h.b16 %v3538
      %v3667 = vunpack.c.l.b16 %v3539
      %v3668 = vunpack.c.l.b16 %v3540
      %v3669 = vunpack.c.h.b16 %v3540
      %v3670 = vunpack.c.l.b16 %v3541
      %v3671 = vunpack.c.l.b16 %v3542
      %v3672 = vunpack.c.h.b16 %v3542
      %v3673 = vunpack.c.l.b16 %v3543
      %v3674 = vunpack.c.l.b16 %v3544
      %v3675 = vunpack.c.h.b16 %v3544
      %v3676 = vunpack.c.l.b16 %v3545
      %v3677 = vunpack.c.l.b16 %v3546
      %v3678 = vunpack.c.h.b16 %v3546
      %v3679 = vunpack.c.l.b16 %v3547
      %v3680 = vunpack.c.l.b16 %v3548
      %v3681 = vunpack.c.h.b16 %v3548
      %v3682 = vunpack.c.l.b16 %v3549
      %v3683 = vunpack.c.l.b16 %v3550
      %v3684 = vunpack.c.h.b16 %v3550
      %v3685 = vunpack.c.l.b16 %v3551
      %v3686 = vunpack.c.l.b16 %v3552
      %v3687 = vunpack.c.h.b16 %v3552
      %v3688 = vunpack.c.l.b16 %v3553
      %v3689 = vunpack.c.l.b16 %v3554
      %v3690 = vunpack.c.h.b16 %v3554
      %v3691 = vunpack.c.l.b16 %v3555
      %v3692 = vunpack.c.l.b16 %v3556
      %v3693 = vunpack.c.h.b16 %v3556
      %v3694 = vunpack.c.l.b16 %v3557
      %v3695 = vunpack.c.l.b16 %v3558
      %v3696 = vunpack.c.h.b16 %v3558
      %v3697 = vunpack.c.l.b16 %v3559
      %v3698 = vunpack.c.l.b16 %v3560
      %v3699 = vunpack.c.h.b16 %v3560
      %v3700 = vunpack.c.l.b16 %v3561
      %v3701 = vunpack.c.l.b16 %v3562
      %v3702 = vunpack.c.h.b16 %v3562
      %v3703 = vunpack.c.l.b16 %v3563
      %v3704 = vpack.c.b16 %v3623, %v3620
      %v3705 = vpack.c.b16 %v3624, %v3621
      %v3706 = vpack.c.b16 %v3625, %v3622
      %v3707 = vpack.c.b16 %v3629, %v3626
      %v3708 = vpack.c.b16 %v3630, %v3627
      %v3709 = vpack.c.b16 %v3631, %v3628
      %v3710 = vpack.c.b16 %v3635, %v3632
      %v3711 = vpack.c.b16 %v3636, %v3633
      %v3712 = vpack.c.b16 %v3637, %v3634
      %v3713 = vpack.c.b16 %v3641, %v3638
      %v3714 = vpack.c.b16 %v3642, %v3639
      %v3715 = vpack.c.b16 %v3643, %v3640
      %v3716 = vpack.c.b16 %v3647, %v3644
      %v3717 = vpack.c.b16 %v3648, %v3645
      %v3718 = vpack.c.b16 %v3649, %v3646
      %v3719 = vpack.c.b16 %v3653, %v3650
      %v3720 = vpack.c.b16 %v3654, %v3651
      %v3721 = vpack.c.b16 %v3655, %v3652
      %v3722 = vpack.c.b16 %v3659, %v3656
      %v3723 = vpack.c.b16 %v3660, %v3657
      %v3724 = vpack.c.b16 %v3661, %v3658
      %v3725 = vpack.c.b16 %v3665, %v3662
      %v3726 = vpack.c.b16 %v3666, %v3663
      %v3727 = vpack.c.b16 %v3667, %v3664
      %v3728 = vpack.c.b16 %v3671, %v3668
      %v3729 = vpack.c.b16 %v3672, %v3669
      %v3730 = vpack.c.b16 %v3673, %v3670
      %v3731 = vpack.c.b16 %v3677, %v3674
      %v3732 = vpack.c.b16 %v3678, %v3675
      %v3733 = vpack.c.b16 %v3679, %v3676
      %v3734 = vpack.c.b16 %v3683, %v3680
      %v3735 = vpack.c.b16 %v3684, %v3681
      %v3736 = vpack.c.b16 %v3685, %v3682
      %v3737 = vpack.c.b16 %v3689, %v3686
      %v3738 = vpack.c.b16 %v3690, %v3687
      %v3739 = vpack.c.b16 %v3691, %v3688
      %v3740 = vpack.c.b16 %v3695, %v3692
      %v3741 = vpack.c.b16 %v3696, %v3693
      %v3742 = vpack.c.b16 %v3697, %v3694
      %v3743 = vpack.c.b16 %v3701, %v3698
      %v3744 = vpack.c.b16 %v3702, %v3699
      %v3745 = vpack.c.b16 %v3703, %v3700
      %v3789 = vsel %vm659, %v3494, 0
      %v3792 = vsel %vm659, %v3496, 0
      %v3795 = vsel %vm659, %v3498, 0
      %v3798 = vsel %vm659, %v3500, 0
      %v3801 = vsel %vm659, %v3502, 0
      %v3804 = vsel %vm659, %v3504, 0
      %v3807 = vsel %vm659, %v3506, 0
      %3809 = vmatprep.subr.bf16.mxu0 %v3726
      %3810 = vmatpush1.bf16.msra.mxu0 %v3725
      %3811 = vmatprep.subr.bf16.mxu0 %v3723
      %3812 = vmatpush1.bf16.msra.mxu0 %v3722
      %3813 = vmatprep.subr.bf16.mxu0 %v3720
      %3814 = vmatpush1.bf16.msra.mxu0 %v3719
      %3815 = vmatprep.subr.bf16.mxu0 %v3717
      %3816 = vmatpush1.bf16.msra.mxu0 %v3716
      %3817 = vmatprep.subr.bf16.mxu0 %v3714
      %3818 = vmatpush1.bf16.msra.mxu0 %v3713
      %3819 = vmatprep.subr.bf16.mxu0 %v3711
      %3820 = vmatpush1.bf16.msra.mxu0 %v3710
      %3821 = vmatprep.subr.bf16.mxu0 %v3708
      %3822 = vmatpush1.bf16.msra.mxu0 %v3707
      %3823 = vmatprep.subr.bf16.mxu0 %v3705
      %3824 = vmatpush1.bf16.msra.mxu0 %v3704
      %3825 = vmatprep.subr.bf16.mxu0 0
      %3826 = vmatpush2.bf16.msra.mxu0 0
      %3827 = vmatprep.subr.bf16.mxu0 0
      %3828 = vmatpush2.bf16.msra.mxu0 0
      %3829 = vmatprep.subr.bf16.mxu0 %v3744
      %3830 = vmatpush2.bf16.msra.mxu0 %v3743
      %3831 = vmatprep.subr.bf16.mxu0 %v3741
      %3832 = vmatpush2.bf16.msra.mxu0 %v3740
      %3833 = vmatprep.subr.bf16.mxu0 %v3738
      %3834 = vmatpush2.bf16.msra.mxu0 %v3737
      %3835 = vmatprep.subr.bf16.mxu0 %v3735
      %3836 = vmatpush2.bf16.msra.mxu0 %v3734
      %3837 = vmatprep.subr.bf16.mxu0 %v3732
      %3838 = vmatpush2.bf16.msra.mxu0 %v3731
      %3839 = vmatprep.subr.bf16.mxu0 %v3729
      %3840 = vmatpush2.bf16.msra.mxu0 %v3728
      %3841 = vmatprep.mubr.bf16.mxu0 %v3789
      %3842 = vmatmul.mubr.bf16.gmra.mxu0 %v3493
      %v3843 = vpop.f32.mrf.mxu0
      %v3844 = vadd.f32 0.0, %v3843
      %v3845 = vpop.f32.mrf.mxu0
      %v3846 = vadd.f32 0.0, %v3845
      %v3847 = vpop.f32.mrf.mxu0
      %v3848 = vadd.f32 0.0, %v3847
      %v3849 = vpop.f32.mrf.mxu0
      %v3850 = vadd.f32 0.0, %v3849
      %3851 = vmatprep.mubr.bf16.mxu0 %v3792
      %3852 = vmatmul.mubr.bf16.gmra.mxu0 %v3495
      %v3853 = vpop.f32.mrf.mxu0
      %v3854 = vadd.f32 0.0, %v3853
      %v3855 = vpop.f32.mrf.mxu0
      %v3856 = vadd.f32 0.0, %v3855
      %v3857 = vpop.f32.mrf.mxu0
      %v3858 = vadd.f32 0.0, %v3857
      %v3859 = vpop.f32.mrf.mxu0
      %v3860 = vadd.f32 0.0, %v3859
      %3861 = vmatprep.mubr.bf16.mxu0 %v3795
      %3862 = vmatmul.mubr.bf16.gmra.mxu0 %v3497
      %v3863 = vpop.f32.mrf.mxu0
      %v3864 = vadd.f32 0.0, %v3863
      %v3865 = vpop.f32.mrf.mxu0
      %v3866 = vadd.f32 0.0, %v3865
      %v3867 = vpop.f32.mrf.mxu0
      %v3868 = vadd.f32 0.0, %v3867
      %v3869 = vpop.f32.mrf.mxu0
      %v3870 = vadd.f32 0.0, %v3869
      %3871 = vmatprep.mubr.bf16.mxu0 %v3798
      %3872 = vmatmul.mubr.bf16.gmra.mxu0 %v3499
      %v3873 = vpop.f32.mrf.mxu0
      %v3874 = vadd.f32 0.0, %v3873
      %v3875 = vpop.f32.mrf.mxu0
      %v3876 = vadd.f32 0.0, %v3875
      %v3877 = vpop.f32.mrf.mxu0
      %v3878 = vadd.f32 0.0, %v3877
      %v3879 = vpop.f32.mrf.mxu0
      %v3880 = vadd.f32 0.0, %v3879
      %3881 = vmatprep.mubr.bf16.mxu0 %v3801
      %3882 = vmatmul.mubr.bf16.gmra.mxu0 %v3501
      %v3883 = vpop.f32.mrf.mxu0
      %v3884 = vadd.f32 0.0, %v3883
      %v3885 = vpop.f32.mrf.mxu0
      %v3886 = vadd.f32 0.0, %v3885
      %v3887 = vpop.f32.mrf.mxu0
      %v3888 = vadd.f32 0.0, %v3887
      %v3889 = vpop.f32.mrf.mxu0
      %v3890 = vadd.f32 0.0, %v3889
      %3891 = vmatprep.mubr.bf16.mxu0 %v3804
      %3892 = vmatmul.mubr.bf16.gmra.mxu0 %v3503
      %v3893 = vpop.f32.mrf.mxu0
      %v3894 = vadd.f32 0.0, %v3893
      %v3895 = vpop.f32.mrf.mxu0
      %v3896 = vadd.f32 0.0, %v3895
      %v3897 = vpop.f32.mrf.mxu0
      %v3898 = vadd.f32 0.0, %v3897
      %v3899 = vpop.f32.mrf.mxu0
      %v3900 = vadd.f32 0.0, %v3899
      %3901 = vmatprep.mubr.bf16.mxu0 %v3807
      %3902 = vmatmul.mubr.bf16.gmra.mxu0 %v3505
      %v3903 = vpop.f32.mrf.mxu0
      %v3904 = vadd.f32 0.0, %v3903
      %v3905 = vpop.f32.mrf.mxu0
      %v3906 = vadd.f32 0.0, %v3905
      %v3907 = vpop.f32.mrf.mxu0
      %v3908 = vadd.f32 0.0, %v3907
      %v3909 = vpop.f32.mrf.mxu0
      %v3910 = vadd.f32 0.0, %v3909
      %3911 = vdwg.mxu0
      %3912 = vmatprep.subr.bf16.mxu0 0
      %3913 = vmatpush1.bf16.msra.mxu0 %v3727
      %3914 = vmatprep.subr.bf16.mxu0 0
      %3915 = vmatpush1.bf16.msra.mxu0 %v3724
      %3916 = vmatprep.subr.bf16.mxu0 0
      %3917 = vmatpush1.bf16.msra.mxu0 %v3721
      %3918 = vmatprep.subr.bf16.mxu0 0
      %3919 = vmatpush1.bf16.msra.mxu0 %v3718
      %3920 = vmatprep.subr.bf16.mxu0 0
      %3921 = vmatpush1.bf16.msra.mxu0 %v3715
      %3922 = vmatprep.subr.bf16.mxu0 0
      %3923 = vmatpush1.bf16.msra.mxu0 %v3712
      %3924 = vmatprep.subr.bf16.mxu0 0
      %3925 = vmatpush1.bf16.msra.mxu0 %v3709
      %3926 = vmatprep.subr.bf16.mxu0 0
      %3927 = vmatpush1.bf16.msra.mxu0 %v3706
      %3928 = vmatprep.subr.bf16.mxu0 0
      %3929 = vmatpush2.bf16.msra.mxu0 0
      %3930 = vmatprep.subr.bf16.mxu0 0
      %3931 = vmatpush2.bf16.msra.mxu0 0
      %3932 = vmatprep.subr.bf16.mxu0 0
      %3933 = vmatpush2.bf16.msra.mxu0 %v3745
      %3934 = vmatprep.subr.bf16.mxu0 0
      %3935 = vmatpush2.bf16.msra.mxu0 %v3742
      %3936 = vmatprep.subr.bf16.mxu0 0
      %3937 = vmatpush2.bf16.msra.mxu0 %v3739
      %3938 = vmatprep.subr.bf16.mxu0 0
      %3939 = vmatpush2.bf16.msra.mxu0 %v3736
      %3940 = vmatprep.subr.bf16.mxu0 0
      %3941 = vmatpush2.bf16.msra.mxu0 %v3733
      %3942 = vmatprep.subr.bf16.mxu0 0
      %3943 = vmatpush2.bf16.msra.mxu0 %v3730
      %3944 = vmatprep.mubr.bf16.mxu0 %v3789
      %3945 = vmatmul.mubr.bf16.gmra.mxu0 %v3493
      %v3946 = vpop.f32.mrf.mxu0
      %v3947 = vadd.f32 0.0, %v3946
      %v3948 = vpop.f32.mrf.mxu0
      %v3949 = vpop.f32.mrf.mxu0
      %v3950 = vadd.f32 0.0, %v3949
      %v3951 = vpop.f32.mrf.mxu0
      %3952 = vmatprep.mubr.bf16.mxu0 %v3792
      %3953 = vmatmul.mubr.bf16.gmra.mxu0 %v3495
      %v3954 = vpop.f32.mrf.mxu0
      %v3955 = vadd.f32 0.0, %v3954
      %v3956 = vpop.f32.mrf.mxu0
      %v3957 = vpop.f32.mrf.mxu0
      %v3958 = vadd.f32 0.0, %v3957
      %v3959 = vpop.f32.mrf.mxu0
      %3960 = vmatprep.mubr.bf16.mxu0 %v3795
      %3961 = vmatmul.mubr.bf16.gmra.mxu0 %v3497
      %v3962 = vpop.f32.mrf.mxu0
      %v3963 = vadd.f32 0.0, %v3962
      %v3964 = vpop.f32.mrf.mxu0
      %v3965 = vpop.f32.mrf.mxu0
      %v3966 = vadd.f32 0.0, %v3965
      %v3967 = vpop.f32.mrf.mxu0
      %3968 = vmatprep.mubr.bf16.mxu0 %v3798
      %3969 = vmatmul.mubr.bf16.gmra.mxu0 %v3499
      %v3970 = vpop.f32.mrf.mxu0
      %v3971 = vadd.f32 0.0, %v3970
      %v3972 = vpop.f32.mrf.mxu0
      %v3973 = vpop.f32.mrf.mxu0
      %v3974 = vadd.f32 0.0, %v3973
      %v3975 = vpop.f32.mrf.mxu0
      %3976 = vmatprep.mubr.bf16.mxu0 %v3801
      %3977 = vmatmul.mubr.bf16.gmra.mxu0 %v3501
      %v3978 = vpop.f32.mrf.mxu0
      %v3979 = vadd.f32 0.0, %v3978
      %v3980 = vpop.f32.mrf.mxu0
      %v3981 = vpop.f32.mrf.mxu0
      %v3982 = vadd.f32 0.0, %v3981
      %v3983 = vpop.f32.mrf.mxu0
      %3984 = vmatprep.mubr.bf16.mxu0 %v3804
      %3985 = vmatmul.mubr.bf16.gmra.mxu0 %v3503
      %v3986 = vpop.f32.mrf.mxu0
      %v3987 = vadd.f32 0.0, %v3986
      %v3988 = vpop.f32.mrf.mxu0
      %v3989 = vpop.f32.mrf.mxu0
      %v3990 = vadd.f32 0.0, %v3989
      %v3991 = vpop.f32.mrf.mxu0
      %3992 = vmatprep.mubr.bf16.mxu0 %v3807
      %3993 = vmatmul.mubr.bf16.gmra.mxu0 %v3505
      %v3994 = vpop.f32.mrf.mxu0
      %v3995 = vadd.f32 0.0, %v3994
      %v3996 = vpop.f32.mrf.mxu0
      %v3997 = vpop.f32.mrf.mxu0
      %v3998 = vadd.f32 0.0, %v3997
      %v3999 = vpop.f32.mrf.mxu0
      %4000 = vdwg.mxu0
      %v4001 = vadd.f32 %v3451, %v3844
      %v4002 = vadd.f32 %v3452, %v3846
      %v4003 = vadd.f32 %v3453, %v3947
      %v4004 = vadd.f32 %v3454, %v3848
      %v4005 = vadd.f32 %v3455, %v3850
      %v4006 = vadd.f32 %v3456, %v3950
      %v4007 = vadd.f32 %v3457, %v3854
      %v4008 = vadd.f32 %v3458, %v3856
      %v4009 = vadd.f32 %v3459, %v3955
      %v4010 = vadd.f32 %v3460, %v3858
      %v4011 = vadd.f32 %v3461, %v3860
      %v4012 = vadd.f32 %v3462, %v3958
      %v4013 = vadd.f32 %v3463, %v3864
      %v4014 = vadd.f32 %v3464, %v3866
      %v4015 = vadd.f32 %v3465, %v3963
      %v4016 = vadd.f32 %v3466, %v3868
      %v4017 = vadd.f32 %v3467, %v3870
      %v4018 = vadd.f32 %v3468, %v3966
      %v4019 = vadd.f32 %v3469, %v3874
      %v4020 = vadd.f32 %v3470, %v3876
      %v4021 = vadd.f32 %v3471, %v3971
      %v4022 = vadd.f32 %v3472, %v3878
      %v4023 = vadd.f32 %v3473, %v3880
      %v4024 = vadd.f32 %v3474, %v3974
      %v4025 = vadd.f32 %v3475, %v3884
      %v4026 = vadd.f32 %v3476, %v3886
      %v4027 = vadd.f32 %v3477, %v3979
      %v4028 = vadd.f32 %v3478, %v3888
      %v4029 = vadd.f32 %v3479, %v3890
      %v4030 = vadd.f32 %v3480, %v3982
      %v4031 = vadd.f32 %v3481, %v3894
      %v4032 = vadd.f32 %v3482, %v3896
      %v4033 = vadd.f32 %v3483, %v3987
      %v4034 = vadd.f32 %v3484, %v3898
      %v4035 = vadd.f32 %v3485, %v3900
      %v4036 = vadd.f32 %v3486, %v3990
      %v4037 = vadd.f32 %v3487, %v3904
      %v4038 = vadd.f32 %v3488, %v3906
      %v4039 = vadd.f32 %v3489, %v3995
      %v4040 = vadd.f32 %v3490, %v3908
      %v4041 = vadd.f32 %v3491, %v3910
      %v4042 = vadd.f32 %v3492, %v3998
      %v4043 = vpack.c.bf16 %v2879, %v2875
      %v4044 = vpack.c.bf16 %v2881, %v2877
      %v4045 = vpack.c.bf16 %v2889, %v2885
      %v4046 = vpack.c.bf16 %v2891, %v2887
      %v4047 = vpack.c.bf16 %v2899, %v2895
      %v4048 = vpack.c.bf16 %v2901, %v2897
      %v4049 = vpack.c.bf16 %v2909, %v2905
      %v4050 = vpack.c.bf16 %v2911, %v2907
      %v4051 = vpack.c.bf16 %v2919, %v2915
      %v4052 = vpack.c.bf16 %v2921, %v2917
      %v4053 = vpack.c.bf16 %v2929, %v2925
      %v4054 = vpack.c.bf16 %v2931, %v2927
      %v4055 = vpack.c.bf16 %v2939, %v2935
      %v4056 = vpack.c.bf16 %v2941, %v2937
      %s4057 = scalar_lea.vmem %s2, 1680
      %v4058 = vld [vmem:[%s4057] sm:$0xff]
      %v4059 = vld [vmem:[%s4057 + $0x8] sm:$0xf]
      %v4060 = vld [vmem:[%s4057 + $0xc] sm:$0xff]
      %v4061 = vld [vmem:[%s4057 + $0x14] sm:$0xf]
      %v4062 = vld [vmem:[%s4057 + $0x18] sm:$0xff]
      %v4063 = vld [vmem:[%s4057 + $0x20] sm:$0xf]
      %v4064 = vld [vmem:[%s4057 + $0x24] sm:$0xff]
      %v4065 = vld [vmem:[%s4057 + $0x2c] sm:$0xf]
      %v4066 = vld [vmem:[%s4057 + $0x30] sm:$0xff]
      %v4067 = vld [vmem:[%s4057 + $0x38] sm:$0xf]
      %v4068 = vld [vmem:[%s4057 + $0x3c] sm:$0xff]
      %v4069 = vld [vmem:[%s4057 + $0x44] sm:$0xf]
      %v4070 = vld [vmem:[%s4057 + $0x48] sm:$0xff]
      %v4071 = vld [vmem:[%s4057 + $0x50] sm:$0xf]
      %v4072 = vld [vmem:[%s4057 + $0x54] sm:$0xff]
      %v4073 = vld [vmem:[%s4057 + $0x5c] sm:$0xf]
      %v4074 = vld [vmem:[%s4057 + $0x60] sm:$0xff]
      %v4075 = vld [vmem:[%s4057 + $0x68] sm:$0xf]
      %v4076 = vld [vmem:[%s4057 + $0x6c] sm:$0xff]
      %v4077 = vld [vmem:[%s4057 + $0x74] sm:$0xf]
      %v4078 = vld [vmem:[%s4057 + $0x78] sm:$0xff]
      %v4079 = vld [vmem:[%s4057 + $0x80] sm:$0xf]
      %v4080 = vld [vmem:[%s4057 + $0x84] sm:$0xff]
      %v4081 = vld [vmem:[%s4057 + $0x8c] sm:$0xf]
      %v4082 = vld [vmem:[%s4057 + $0x90] sm:$0xff]
      %v4083 = vld [vmem:[%s4057 + $0x98] sm:$0xf]
      %v4084 = vld [vmem:[%s4057 + $0x9c] sm:$0xff]
      %v4085 = vld [vmem:[%s4057 + $0xa4] sm:$0xf]
      %v4086 = vld [vmem:[%s4057 + $0xa8] sm:$0xff]
      %v4087 = vld [vmem:[%s4057 + $0xb0] sm:$0xf]
      %v4088 = vld [vmem:[%s4057 + $0xb4] sm:$0xff]
      %v4089 = vld [vmem:[%s4057 + $0xbc] sm:$0xf]
      %v4090 = vld [vmem:[%s4057 + $0xc0] sm:$0xff]
      %v4091 = vld [vmem:[%s4057 + $0xc8] sm:$0xf]
      %v4092 = vld [vmem:[%s4057 + $0xcc] sm:$0xff]
      %v4093 = vld [vmem:[%s4057 + $0xd4] sm:$0xf]
      %v4094 = vld [vmem:[%s4057 + $0xd8] sm:$0xff]
      %v4095 = vld [vmem:[%s4057 + $0xe0] sm:$0xf]
      %v4096 = vld [vmem:[%s4057 + $0xe4] sm:$0xff]
      %v4097 = vld [vmem:[%s4057 + $0xec] sm:$0xf]
      %v4098 = vld [vmem:[%s4057 + $0xf0] sm:$0xff]
      %v4099 = vld [vmem:[%s4057 + $0xf8] sm:$0xf]
      %v4100 = vld [vmem:[%s4057 + $0xfc] sm:$0xff]
      %v4101 = vld [vmem:[%s4057 + $0x104] sm:$0xf]
      %v4102 = vld [vmem:[%s4057 + $0x108] sm:$0xff]
      %v4103 = vld [vmem:[%s4057 + $0x110] sm:$0xf]
      %v4104 = vld [vmem:[%s4057 + $0x114] sm:$0xff]
      %v4105 = vld [vmem:[%s4057 + $0x11c] sm:$0xf]
      %v4106 = vld [vmem:[%s4057 + $0x120] sm:$0xff]
      %v4107 = vld [vmem:[%s4057 + $0x128] sm:$0xf]
      %v4108 = vld [vmem:[%s4057 + $0x12c] sm:$0xff]
      %v4109 = vld [vmem:[%s4057 + $0x134] sm:$0xf]
      %v4110 = vld [vmem:[%s4057 + $0x138] sm:$0xff]
      %v4111 = vld [vmem:[%s4057 + $0x140] sm:$0xf]
      %v4112 = vld [vmem:[%s4057 + $0x144] sm:$0xff]
      %v4113 = vld [vmem:[%s4057 + $0x14c] sm:$0xf]
      %v4170 = vunpack.c.l.b16 %v4058
      %v4171 = vunpack.c.h.b16 %v4058
      %v4172 = vunpack.c.l.b16 %v4059
      %v4173 = vunpack.c.l.b16 %v4060
      %v4174 = vunpack.c.h.b16 %v4060
      %v4175 = vunpack.c.l.b16 %v4061
      %v4176 = vunpack.c.l.b16 %v4062
      %v4177 = vunpack.c.h.b16 %v4062
      %v4178 = vunpack.c.l.b16 %v4063
      %v4179 = vunpack.c.l.b16 %v4064
      %v4180 = vunpack.c.h.b16 %v4064
      %v4181 = vunpack.c.l.b16 %v4065
      %v4182 = vunpack.c.l.b16 %v4066
      %v4183 = vunpack.c.h.b16 %v4066
      %v4184 = vunpack.c.l.b16 %v4067
      %v4185 = vunpack.c.l.b16 %v4068
      %v4186 = vunpack.c.h.b16 %v4068
      %v4187 = vunpack.c.l.b16 %v4069
      %v4188 = vunpack.c.l.b16 %v4070
      %v4189 = vunpack.c.h.b16 %v4070
      %v4190 = vunpack.c.l.b16 %v4071
      %v4191 = vunpack.c.l.b16 %v4072
      %v4192 = vunpack.c.h.b16 %v4072
      %v4193 = vunpack.c.l.b16 %v4073
      %v4194 = vunpack.c.l.b16 %v4074
      %v4195 = vunpack.c.h.b16 %v4074
      %v4196 = vunpack.c.l.b16 %v4075
      %v4197 = vunpack.c.l.b16 %v4076
      %v4198 = vunpack.c.h.b16 %v4076
      %v4199 = vunpack.c.l.b16 %v4077
      %v4200 = vunpack.c.l.b16 %v4078
      %v4201 = vunpack.c.h.b16 %v4078
      %v4202 = vunpack.c.l.b16 %v4079
      %v4203 = vunpack.c.l.b16 %v4080
      %v4204 = vunpack.c.h.b16 %v4080
      %v4205 = vunpack.c.l.b16 %v4081
      %v4206 = vunpack.c.l.b16 %v4082
      %v4207 = vunpack.c.h.b16 %v4082
      %v4208 = vunpack.c.l.b16 %v4083
      %v4209 = vunpack.c.l.b16 %v4084
      %v4210 = vunpack.c.h.b16 %v4084
      %v4211 = vunpack.c.l.b16 %v4085
      %v4212 = vunpack.c.l.b16 %v4086
      %v4213 = vunpack.c.h.b16 %v4086
      %v4214 = vunpack.c.l.b16 %v4087
      %v4215 = vunpack.c.l.b16 %v4088
      %v4216 = vunpack.c.h.b16 %v4088
      %v4217 = vunpack.c.l.b16 %v4089
      %v4218 = vunpack.c.l.b16 %v4090
      %v4219 = vunpack.c.h.b16 %v4090
      %v4220 = vunpack.c.l.b16 %v4091
      %v4221 = vunpack.c.l.b16 %v4092
      %v4222 = vunpack.c.h.b16 %v4092
      %v4223 = vunpack.c.l.b16 %v4093
      %v4224 = vunpack.c.l.b16 %v4094
      %v4225 = vunpack.c.h.b16 %v4094
      %v4226 = vunpack.c.l.b16 %v4095
      %v4227 = vunpack.c.l.b16 %v4096
      %v4228 = vunpack.c.h.b16 %v4096
      %v4229 = vunpack.c.l.b16 %v4097
      %v4230 = vunpack.c.l.b16 %v4098
      %v4231 = vunpack.c.h.b16 %v4098
      %v4232 = vunpack.c.l.b16 %v4099
      %v4233 = vunpack.c.l.b16 %v4100
      %v4234 = vunpack.c.h.b16 %v4100
      %v4235 = vunpack.c.l.b16 %v4101
      %v4236 = vunpack.c.l.b16 %v4102
      %v4237 = vunpack.c.h.b16 %v4102
      %v4238 = vunpack.c.l.b16 %v4103
      %v4239 = vunpack.c.l.b16 %v4104
      %v4240 = vunpack.c.h.b16 %v4104
      %v4241 = vunpack.c.l.b16 %v4105
      %v4242 = vunpack.c.l.b16 %v4106
      %v4243 = vunpack.c.h.b16 %v4106
      %v4244 = vunpack.c.l.b16 %v4107
      %v4245 = vunpack.c.l.b16 %v4108
      %v4246 = vunpack.c.h.b16 %v4108
      %v4247 = vunpack.c.l.b16 %v4109
      %v4248 = vunpack.c.l.b16 %v4110
      %v4249 = vunpack.c.h.b16 %v4110
      %v4250 = vunpack.c.l.b16 %v4111
      %v4251 = vunpack.c.l.b16 %v4112
      %v4252 = vunpack.c.h.b16 %v4112
      %v4253 = vunpack.c.l.b16 %v4113
      %v4254 = vpack.c.b16 %v4173, %v4170
      %v4255 = vpack.c.b16 %v4174, %v4171
      %v4256 = vpack.c.b16 %v4175, %v4172
      %v4257 = vpack.c.b16 %v4179, %v4176
      %v4258 = vpack.c.b16 %v4180, %v4177
      %v4259 = vpack.c.b16 %v4181, %v4178
      %v4260 = vpack.c.b16 %v4185, %v4182
      %v4261 = vpack.c.b16 %v4186, %v4183
      %v4262 = vpack.c.b16 %v4187, %v4184
      %v4263 = vpack.c.b16 %v4191, %v4188
      %v4264 = vpack.c.b16 %v4192, %v4189
      %v4265 = vpack.c.b16 %v4193, %v4190
      %v4266 = vpack.c.b16 %v4197, %v4194
      %v4267 = vpack.c.b16 %v4198, %v4195
      %v4268 = vpack.c.b16 %v4199, %v4196
      %v4269 = vpack.c.b16 %v4203, %v4200
      %v4270 = vpack.c.b16 %v4204, %v4201
      %v4271 = vpack.c.b16 %v4205, %v4202
      %v4272 = vpack.c.b16 %v4209, %v4206
      %v4273 = vpack.c.b16 %v4210, %v4207
      %v4274 = vpack.c.b16 %v4211, %v4208
      %v4275 = vpack.c.b16 %v4215, %v4212
      %v4276 = vpack.c.b16 %v4216, %v4213
      %v4277 = vpack.c.b16 %v4217, %v4214
      %v4278 = vpack.c.b16 %v4221, %v4218
      %v4279 = vpack.c.b16 %v4222, %v4219
      %v4280 = vpack.c.b16 %v4223, %v4220
      %v4281 = vpack.c.b16 %v4227, %v4224
      %v4282 = vpack.c.b16 %v4228, %v4225
      %v4283 = vpack.c.b16 %v4229, %v4226
      %v4284 = vpack.c.b16 %v4233, %v4230
      %v4285 = vpack.c.b16 %v4234, %v4231
      %v4286 = vpack.c.b16 %v4235, %v4232
      %v4287 = vpack.c.b16 %v4239, %v4236
      %v4288 = vpack.c.b16 %v4240, %v4237
      %v4289 = vpack.c.b16 %v4241, %v4238
      %v4290 = vpack.c.b16 %v4245, %v4242
      %v4291 = vpack.c.b16 %v4246, %v4243
      %v4292 = vpack.c.b16 %v4247, %v4244
      %v4293 = vpack.c.b16 %v4251, %v4248
      %v4294 = vpack.c.b16 %v4252, %v4249
      %v4295 = vpack.c.b16 %v4253, %v4250
      %v4339 = vsel %vm659, %v4044, 0
      %v4342 = vsel %vm659, %v4046, 0
      %v4345 = vsel %vm659, %v4048, 0
      %v4348 = vsel %vm659, %v4050, 0
      %v4351 = vsel %vm659, %v4052, 0
      %v4354 = vsel %vm659, %v4054, 0
      %v4357 = vsel %vm659, %v4056, 0
      %4359 = vmatprep.subr.bf16.mxu0 %v4276
      %4360 = vmatpush1.bf16.msra.mxu0 %v4275
      %4361 = vmatprep.subr.bf16.mxu0 %v4273
      %4362 = vmatpush1.bf16.msra.mxu0 %v4272
      %4363 = vmatprep.subr.bf16.mxu0 %v4270
      %4364 = vmatpush1.bf16.msra.mxu0 %v4269
      %4365 = vmatprep.subr.bf16.mxu0 %v4267
      %4366 = vmatpush1.bf16.msra.mxu0 %v4266
      %4367 = vmatprep.subr.bf16.mxu0 %v4264
      %4368 = vmatpush1.bf16.msra.mxu0 %v4263
      %4369 = vmatprep.subr.bf16.mxu0 %v4261
      %4370 = vmatpush1.bf16.msra.mxu0 %v4260
      %4371 = vmatprep.subr.bf16.mxu0 %v4258
      %4372 = vmatpush1.bf16.msra.mxu0 %v4257
      %4373 = vmatprep.subr.bf16.mxu0 %v4255
      %4374 = vmatpush1.bf16.msra.mxu0 %v4254
      %4375 = vmatprep.subr.bf16.mxu0 0
      %4376 = vmatpush2.bf16.msra.mxu0 0
      %4377 = vmatprep.subr.bf16.mxu0 0
      %4378 = vmatpush2.bf16.msra.mxu0 0
      %4379 = vmatprep.subr.bf16.mxu0 %v4294
      %4380 = vmatpush2.bf16.msra.mxu0 %v4293
      %4381 = vmatprep.subr.bf16.mxu0 %v4291
      %4382 = vmatpush2.bf16.msra.mxu0 %v4290
      %4383 = vmatprep.subr.bf16.mxu0 %v4288
      %4384 = vmatpush2.bf16.msra.mxu0 %v4287
      %4385 = vmatprep.subr.bf16.mxu0 %v4285
      %4386 = vmatpush2.bf16.msra.mxu0 %v4284
      %4387 = vmatprep.subr.bf16.mxu0 %v4282
      %4388 = vmatpush2.bf16.msra.mxu0 %v4281
      %4389 = vmatprep.subr.bf16.mxu0 %v4279
      %4390 = vmatpush2.bf16.msra.mxu0 %v4278
      %4391 = vmatprep.mubr.bf16.mxu0 %v4339
      %4392 = vmatmul.mubr.bf16.gmra.mxu0 %v4043
      %v4393 = vpop.f32.mrf.mxu0
      %v4394 = vadd.f32 0.0, %v4393
      %v4395 = vpop.f32.mrf.mxu0
      %v4396 = vadd.f32 0.0, %v4395
      %v4397 = vpop.f32.mrf.mxu0
      %v4398 = vadd.f32 0.0, %v4397
      %v4399 = vpop.f32.mrf.mxu0
      %v4400 = vadd.f32 0.0, %v4399
      %4401 = vmatprep.mubr.bf16.mxu0 %v4342
      %4402 = vmatmul.mubr.bf16.gmra.mxu0 %v4045
      %v4403 = vpop.f32.mrf.mxu0
      %v4404 = vadd.f32 0.0, %v4403
      %v4405 = vpop.f32.mrf.mxu0
      %v4406 = vadd.f32 0.0, %v4405
      %v4407 = vpop.f32.mrf.mxu0
      %v4408 = vadd.f32 0.0, %v4407
      %v4409 = vpop.f32.mrf.mxu0
      %v4410 = vadd.f32 0.0, %v4409
      %4411 = vmatprep.mubr.bf16.mxu0 %v4345
      %4412 = vmatmul.mubr.bf16.gmra.mxu0 %v4047
      %v4413 = vpop.f32.mrf.mxu0
      %v4414 = vadd.f32 0.0, %v4413
      %v4415 = vpop.f32.mrf.mxu0
      %v4416 = vadd.f32 0.0, %v4415
      %v4417 = vpop.f32.mrf.mxu0
      %v4418 = vadd.f32 0.0, %v4417
      %v4419 = vpop.f32.mrf.mxu0
      %v4420 = vadd.f32 0.0, %v4419
      %4421 = vmatprep.mubr.bf16.mxu0 %v4348
      %4422 = vmatmul.mubr.bf16.gmra.mxu0 %v4049
      %v4423 = vpop.f32.mrf.mxu0
      %v4424 = vadd.f32 0.0, %v4423
      %v4425 = vpop.f32.mrf.mxu0
      %v4426 = vadd.f32 0.0, %v4425
      %v4427 = vpop.f32.mrf.mxu0
      %v4428 = vadd.f32 0.0, %v4427
      %v4429 = vpop.f32.mrf.mxu0
      %v4430 = vadd.f32 0.0, %v4429
      %4431 = vmatprep.mubr.bf16.mxu0 %v4351
      %4432 = vmatmul.mubr.bf16.gmra.mxu0 %v4051
      %v4433 = vpop.f32.mrf.mxu0
      %v4434 = vadd.f32 0.0, %v4433
      %v4435 = vpop.f32.mrf.mxu0
      %v4436 = vadd.f32 0.0, %v4435
      %v4437 = vpop.f32.mrf.mxu0
      %v4438 = vadd.f32 0.0, %v4437
      %v4439 = vpop.f32.mrf.mxu0
      %v4440 = vadd.f32 0.0, %v4439
      %4441 = vmatprep.mubr.bf16.mxu0 %v4354
      %4442 = vmatmul.mubr.bf16.gmra.mxu0 %v4053
      %v4443 = vpop.f32.mrf.mxu0
      %v4444 = vadd.f32 0.0, %v4443
      %v4445 = vpop.f32.mrf.mxu0
      %v4446 = vadd.f32 0.0, %v4445
      %v4447 = vpop.f32.mrf.mxu0
      %v4448 = vadd.f32 0.0, %v4447
      %v4449 = vpop.f32.mrf.mxu0
      %v4450 = vadd.f32 0.0, %v4449
      %4451 = vmatprep.mubr.bf16.mxu0 %v4357
      %4452 = vmatmul.mubr.bf16.gmra.mxu0 %v4055
      %v4453 = vpop.f32.mrf.mxu0
      %v4454 = vadd.f32 0.0, %v4453
      %v4455 = vpop.f32.mrf.mxu0
      %v4456 = vadd.f32 0.0, %v4455
      %v4457 = vpop.f32.mrf.mxu0
      %v4458 = vadd.f32 0.0, %v4457
      %v4459 = vpop.f32.mrf.mxu0
      %v4460 = vadd.f32 0.0, %v4459
      %4461 = vdwg.mxu0
      %4462 = vmatprep.subr.bf16.mxu0 0
      %4463 = vmatpush1.bf16.msra.mxu0 %v4277
      %4464 = vmatprep.subr.bf16.mxu0 0
      %4465 = vmatpush1.bf16.msra.mxu0 %v4274
      %4466 = vmatprep.subr.bf16.mxu0 0
      %4467 = vmatpush1.bf16.msra.mxu0 %v4271
      %4468 = vmatprep.subr.bf16.mxu0 0
      %4469 = vmatpush1.bf16.msra.mxu0 %v4268
      %4470 = vmatprep.subr.bf16.mxu0 0
      %4471 = vmatpush1.bf16.msra.mxu0 %v4265
      %4472 = vmatprep.subr.bf16.mxu0 0
      %4473 = vmatpush1.bf16.msra.mxu0 %v4262
      %4474 = vmatprep.subr.bf16.mxu0 0
      %4475 = vmatpush1.bf16.msra.mxu0 %v4259
      %4476 = vmatprep.subr.bf16.mxu0 0
      %4477 = vmatpush1.bf16.msra.mxu0 %v4256
      %4478 = vmatprep.subr.bf16.mxu0 0
      %4479 = vmatpush2.bf16.msra.mxu0 0
      %4480 = vmatprep.subr.bf16.mxu0 0
      %4481 = vmatpush2.bf16.msra.mxu0 0
      %4482 = vmatprep.subr.bf16.mxu0 0
      %4483 = vmatpush2.bf16.msra.mxu0 %v4295
      %4484 = vmatprep.subr.bf16.mxu0 0
      %4485 = vmatpush2.bf16.msra.mxu0 %v4292
      %4486 = vmatprep.subr.bf16.mxu0 0
      %4487 = vmatpush2.bf16.msra.mxu0 %v4289
      %4488 = vmatprep.subr.bf16.mxu0 0
      %4489 = vmatpush2.bf16.msra.mxu0 %v4286
      %4490 = vmatprep.subr.bf16.mxu0 0
      %4491 = vmatpush2.bf16.msra.mxu0 %v4283
      %4492 = vmatprep.subr.bf16.mxu0 0
      %4493 = vmatpush2.bf16.msra.mxu0 %v4280
      %4494 = vmatprep.mubr.bf16.mxu0 %v4339
      %4495 = vmatmul.mubr.bf16.gmra.mxu0 %v4043
      %v4496 = vpop.f32.mrf.mxu0
      %v4497 = vadd.f32 0.0, %v4496
      %v4498 = vpop.f32.mrf.mxu0
      %v4499 = vpop.f32.mrf.mxu0
      %v4500 = vadd.f32 0.0, %v4499
      %v4501 = vpop.f32.mrf.mxu0
      %4502 = vmatprep.mubr.bf16.mxu0 %v4342
      %4503 = vmatmul.mubr.bf16.gmra.mxu0 %v4045
      %v4504 = vpop.f32.mrf.mxu0
      %v4505 = vadd.f32 0.0, %v4504
      %v4506 = vpop.f32.mrf.mxu0
      %v4507 = vpop.f32.mrf.mxu0
      %v4508 = vadd.f32 0.0, %v4507
      %v4509 = vpop.f32.mrf.mxu0
      %4510 = vmatprep.mubr.bf16.mxu0 %v4345
      %4511 = vmatmul.mubr.bf16.gmra.mxu0 %v4047
      %v4512 = vpop.f32.mrf.mxu0
      %v4513 = vadd.f32 0.0, %v4512
      %v4514 = vpop.f32.mrf.mxu0
      %v4515 = vpop.f32.mrf.mxu0
      %v4516 = vadd.f32 0.0, %v4515
      %v4517 = vpop.f32.mrf.mxu0
      %4518 = vmatprep.mubr.bf16.mxu0 %v4348
      %4519 = vmatmul.mubr.bf16.gmra.mxu0 %v4049
      %v4520 = vpop.f32.mrf.mxu0
      %v4521 = vadd.f32 0.0, %v4520
      %v4522 = vpop.f32.mrf.mxu0
      %v4523 = vpop.f32.mrf.mxu0
      %v4524 = vadd.f32 0.0, %v4523
      %v4525 = vpop.f32.mrf.mxu0
      %4526 = vmatprep.mubr.bf16.mxu0 %v4351
      %4527 = vmatmul.mubr.bf16.gmra.mxu0 %v4051
      %v4528 = vpop.f32.mrf.mxu0
      %v4529 = vadd.f32 0.0, %v4528
      %v4530 = vpop.f32.mrf.mxu0
      %v4531 = vpop.f32.mrf.mxu0
      %v4532 = vadd.f32 0.0, %v4531
      %v4533 = vpop.f32.mrf.mxu0
      %4534 = vmatprep.mubr.bf16.mxu0 %v4354
      %4535 = vmatmul.mubr.bf16.gmra.mxu0 %v4053
      %v4536 = vpop.f32.mrf.mxu0
      %v4537 = vadd.f32 0.0, %v4536
      %v4538 = vpop.f32.mrf.mxu0
      %v4539 = vpop.f32.mrf.mxu0
      %v4540 = vadd.f32 0.0, %v4539
      %v4541 = vpop.f32.mrf.mxu0
      %4542 = vmatprep.mubr.bf16.mxu0 %v4357
      %4543 = vmatmul.mubr.bf16.gmra.mxu0 %v4055
      %v4544 = vpop.f32.mrf.mxu0
      %v4545 = vadd.f32 0.0, %v4544
      %v4546 = vpop.f32.mrf.mxu0
      %v4547 = vpop.f32.mrf.mxu0
      %v4548 = vadd.f32 0.0, %v4547
      %v4549 = vpop.f32.mrf.mxu0
      %4550 = vdwg.mxu0
      %v4551 = vadd.f32 %v4001, %v4394
      %v4552 = vadd.f32 %v4002, %v4396
      %v4553 = vadd.f32 %v4003, %v4497
      %v4554 = vadd.f32 %v4004, %v4398
      %v4555 = vadd.f32 %v4005, %v4400
      %v4556 = vadd.f32 %v4006, %v4500
      %v4557 = vadd.f32 %v4007, %v4404
      %v4558 = vadd.f32 %v4008, %v4406
      %v4559 = vadd.f32 %v4009, %v4505
      %v4560 = vadd.f32 %v4010, %v4408
      %v4561 = vadd.f32 %v4011, %v4410
      %v4562 = vadd.f32 %v4012, %v4508
      %v4563 = vadd.f32 %v4013, %v4414
      %v4564 = vadd.f32 %v4014, %v4416
      %v4565 = vadd.f32 %v4015, %v4513
      %v4566 = vadd.f32 %v4016, %v4418
      %v4567 = vadd.f32 %v4017, %v4420
      %v4568 = vadd.f32 %v4018, %v4516
      %v4569 = vadd.f32 %v4019, %v4424
      %v4570 = vadd.f32 %v4020, %v4426
      %v4571 = vadd.f32 %v4021, %v4521
      %v4572 = vadd.f32 %v4022, %v4428
      %v4573 = vadd.f32 %v4023, %v4430
      %v4574 = vadd.f32 %v4024, %v4524
      %v4575 = vadd.f32 %v4025, %v4434
      %v4576 = vadd.f32 %v4026, %v4436
      %v4577 = vadd.f32 %v4027, %v4529
      %v4578 = vadd.f32 %v4028, %v4438
      %v4579 = vadd.f32 %v4029, %v4440
      %v4580 = vadd.f32 %v4030, %v4532
      %v4581 = vadd.f32 %v4031, %v4444
      %v4582 = vadd.f32 %v4032, %v4446
      %v4583 = vadd.f32 %v4033, %v4537
      %v4584 = vadd.f32 %v4034, %v4448
      %v4585 = vadd.f32 %v4035, %v4450
      %v4586 = vadd.f32 %v4036, %v4540
      %v4587 = vadd.f32 %v4037, %v4454
      %v4588 = vadd.f32 %v4038, %v4456
      %v4589 = vadd.f32 %v4039, %v4545
      %v4590 = vadd.f32 %v4040, %v4458
      %v4591 = vadd.f32 %v4041, %v4460
      %v4592 = vadd.f32 %v4042, %v4548
      %s4593 = scalar_lea.vmem %s240, 448
      %v4594 = vld [vmem:[%s4593] sm:$0xff]
      %v4595 = vld [vmem:[%s4593 + $0x8] sm:$0xff]
      %v4596 = vld [vmem:[%s4593 + $0x10] sm:$0xff]
      %v4597 = vld [vmem:[%s4593 + $0x18] sm:$0xff]
      %v4598 = vld [vmem:[%s4593 + $0x20] sm:$0xff]
      %v4599 = vld [vmem:[%s4593 + $0x28] sm:$0xff]
      %v4600 = vld [vmem:[%s4593 + $0x30] sm:$0xff]
      %v4601 = vld [vmem:[%s4593 + $0x38] sm:$0xff]
      %v4602 = vld [vmem:[%s4593 + $0x40] sm:$0xff]
      %v4603 = vld [vmem:[%s4593 + $0x48] sm:$0xff]
      %v4604 = vld [vmem:[%s4593 + $0x50] sm:$0xff]
      %v4605 = vld [vmem:[%s4593 + $0x58] sm:$0xff]
      %v4606 = vld [vmem:[%s4593 + $0x60] sm:$0xff]
      %v4607 = vld [vmem:[%s4593 + $0x68] sm:$0xff]
      %v4608 = vld [vmem:[%s4593 + $0x70] sm:$0xff]
      %v4609 = vld [vmem:[%s4593 + $0x78] sm:$0xff]
      %v4610 = vld [vmem:[%s4593 + $0x80] sm:$0xff]
      %v4611 = vld [vmem:[%s4593 + $0x88] sm:$0xff]
      %v4612 = vld [vmem:[%s4593 + $0x90] sm:$0xff]
      %v4613 = vld [vmem:[%s4593 + $0x98] sm:$0xff]
      %v4614 = vld [vmem:[%s4593 + $0xa0] sm:$0xff]
      %v4615 = vld [vmem:[%s4593 + $0xa8] sm:$0xff]
      %v4616 = vld [vmem:[%s4593 + $0xb0] sm:$0xff]
      %v4617 = vld [vmem:[%s4593 + $0xb8] sm:$0xff]
      %v4618 = vld [vmem:[%s4593 + $0xc0] sm:$0xff]
      %v4619 = vld [vmem:[%s4593 + $0xc8] sm:$0xff]
      %v4620 = vld [vmem:[%s4593 + $0xd0] sm:$0xff]
      %v4621 = vld [vmem:[%s4593 + $0xd8] sm:$0xff]
      %v4650 = vunpack.c.l.b16 %v4594
      %v4651 = vunpack.c.h.b16 %v4594
      %v4652 = vunpack.c.l.b16 %v4595
      %v4653 = vunpack.c.h.b16 %v4595
      %v4654 = vunpack.c.l.b16 %v4596
      %v4655 = vunpack.c.h.b16 %v4596
      %v4656 = vunpack.c.l.b16 %v4597
      %v4657 = vunpack.c.h.b16 %v4597
      %v4658 = vunpack.c.l.b16 %v4598
      %v4659 = vunpack.c.h.b16 %v4598
      %v4660 = vunpack.c.l.b16 %v4599
      %v4661 = vunpack.c.h.b16 %v4599
      %v4662 = vunpack.c.l.b16 %v4600
      %v4663 = vunpack.c.h.b16 %v4600
      %v4664 = vunpack.c.l.b16 %v4601
      %v4665 = vunpack.c.h.b16 %v4601
      %v4666 = vunpack.c.l.b16 %v4602
      %v4667 = vunpack.c.h.b16 %v4602
      %v4668 = vunpack.c.l.b16 %v4603
      %v4669 = vunpack.c.h.b16 %v4603
      %v4670 = vunpack.c.l.b16 %v4604
      %v4671 = vunpack.c.h.b16 %v4604
      %v4672 = vunpack.c.l.b16 %v4605
      %v4673 = vunpack.c.h.b16 %v4605
      %v4674 = vunpack.c.l.b16 %v4606
      %v4675 = vunpack.c.h.b16 %v4606
      %v4676 = vunpack.c.l.b16 %v4607
      %v4677 = vunpack.c.h.b16 %v4607
      %v4678 = vunpack.c.l.b16 %v4608
      %v4679 = vunpack.c.h.b16 %v4608
      %v4680 = vunpack.c.l.b16 %v4609
      %v4681 = vunpack.c.h.b16 %v4609
      %v4682 = vunpack.c.l.b16 %v4610
      %v4683 = vunpack.c.h.b16 %v4610
      %v4684 = vunpack.c.l.b16 %v4611
      %v4685 = vunpack.c.h.b16 %v4611
      %v4686 = vunpack.c.l.b16 %v4612
      %v4687 = vunpack.c.h.b16 %v4612
      %v4688 = vunpack.c.l.b16 %v4613
      %v4689 = vunpack.c.h.b16 %v4613
      %v4690 = vunpack.c.l.b16 %v4614
      %v4691 = vunpack.c.h.b16 %v4614
      %v4692 = vunpack.c.l.b16 %v4615
      %v4693 = vunpack.c.h.b16 %v4615
      %v4694 = vunpack.c.l.b16 %v4616
      %v4695 = vunpack.c.h.b16 %v4616
      %v4696 = vunpack.c.l.b16 %v4617
      %v4697 = vunpack.c.h.b16 %v4617
      %v4698 = vunpack.c.l.b16 %v4618
      %v4699 = vunpack.c.h.b16 %v4618
      %v4700 = vunpack.c.l.b16 %v4619
      %v4701 = vunpack.c.h.b16 %v4619
      %v4702 = vunpack.c.l.b16 %v4620
      %v4703 = vunpack.c.h.b16 %v4620
      %v4704 = vunpack.c.l.b16 %v4621
      %v4705 = vunpack.c.h.b16 %v4621
      %v4706 = vpack.c.b16 %v4652, %v4650
      %v4707 = vpack.c.b16 %v4653, %v4651
      %v4708 = vpack.c.b16 %v4656, %v4654
      %v4709 = vpack.c.b16 %v4657, %v4655
      %v4710 = vpack.c.b16 %v4660, %v4658
      %v4711 = vpack.c.b16 %v4661, %v4659
      %v4712 = vpack.c.b16 %v4664, %v4662
      %v4713 = vpack.c.b16 %v4665, %v4663
      %v4714 = vpack.c.b16 %v4668, %v4666
      %v4715 = vpack.c.b16 %v4669, %v4667
      %v4716 = vpack.c.b16 %v4672, %v4670
      %v4717 = vpack.c.b16 %v4673, %v4671
      %v4718 = vpack.c.b16 %v4676, %v4674
      %v4719 = vpack.c.b16 %v4677, %v4675
      %v4720 = vpack.c.b16 %v4680, %v4678
      %v4721 = vpack.c.b16 %v4681, %v4679
      %v4722 = vpack.c.b16 %v4684, %v4682
      %v4723 = vpack.c.b16 %v4685, %v4683
      %v4724 = vpack.c.b16 %v4688, %v4686
      %v4725 = vpack.c.b16 %v4689, %v4687
      %v4726 = vpack.c.b16 %v4692, %v4690
      %v4727 = vpack.c.b16 %v4693, %v4691
      %v4728 = vpack.c.b16 %v4696, %v4694
      %v4729 = vpack.c.b16 %v4697, %v4695
      %v4730 = vpack.c.b16 %v4700, %v4698
      %v4731 = vpack.c.b16 %v4701, %v4699
      %v4732 = vpack.c.b16 %v4704, %v4702
      %v4733 = vpack.c.b16 %v4705, %v4703
      %4762 = vmatprep.subr.bf16.mxu0 %v4721
      %4763 = vmatpush1.bf16.msra.mxu0 %v4720
      %4764 = vmatprep.subr.bf16.mxu0 %v4719
      %4765 = vmatpush1.bf16.msra.mxu0 %v4718
      %4766 = vmatprep.subr.bf16.mxu0 %v4717
      %4767 = vmatpush1.bf16.msra.mxu0 %v4716
      %4768 = vmatprep.subr.bf16.mxu0 %v4715
      %4769 = vmatpush1.bf16.msra.mxu0 %v4714
      %4770 = vmatprep.subr.bf16.mxu0 %v4713
      %4771 = vmatpush1.bf16.msra.mxu0 %v4712
      %4772 = vmatprep.subr.bf16.mxu0 %v4711
      %4773 = vmatpush1.bf16.msra.mxu0 %v4710
      %4774 = vmatprep.subr.bf16.mxu0 %v4709
      %4775 = vmatpush1.bf16.msra.mxu0 %v4708
      %4776 = vmatprep.subr.bf16.mxu0 %v4707
      %4777 = vmatpush1.bf16.msra.mxu0 %v4706
      %4778 = vmatprep.subr.bf16.mxu0 0
      %4779 = vmatpush2.bf16.msra.mxu0 0
      %4780 = vmatprep.subr.bf16.mxu0 0
      %4781 = vmatpush2.bf16.msra.mxu0 0
      %4782 = vmatprep.subr.bf16.mxu0 %v4733
      %4783 = vmatpush2.bf16.msra.mxu0 %v4732
      %4784 = vmatprep.subr.bf16.mxu0 %v4731
      %4785 = vmatpush2.bf16.msra.mxu0 %v4730
      %4786 = vmatprep.subr.bf16.mxu0 %v4729
      %4787 = vmatpush2.bf16.msra.mxu0 %v4728
      %4788 = vmatprep.subr.bf16.mxu0 %v4727
      %4789 = vmatpush2.bf16.msra.mxu0 %v4726
      %4790 = vmatprep.subr.bf16.mxu0 %v4725
      %4791 = vmatpush2.bf16.msra.mxu0 %v4724
      %4792 = vmatprep.subr.bf16.mxu0 %v4723
      %4793 = vmatpush2.bf16.msra.mxu0 %v4722
      %4794 = vmatprep.mubr.bf16.mxu0 %v661
      %4795 = vmatmul.mubr.bf16.gmra.mxu0 %v456
      %v4796 = vpop.f32.mrf.mxu0
      %v4797 = vadd.f32 0.0, %v4796
      %v4798 = vpop.f32.mrf.mxu0
      %v4799 = vadd.f32 0.0, %v4798
      %v4800 = vpop.f32.mrf.mxu0
      %v4801 = vadd.f32 0.0, %v4800
      %v4802 = vpop.f32.mrf.mxu0
      %v4803 = vadd.f32 0.0, %v4802
      %4804 = vmatprep.mubr.bf16.mxu0 %v664
      %4805 = vmatmul.mubr.bf16.gmra.mxu0 %v458
      %v4806 = vpop.f32.mrf.mxu0
      %v4807 = vadd.f32 0.0, %v4806
      %v4808 = vpop.f32.mrf.mxu0
      %v4809 = vadd.f32 0.0, %v4808
      %v4810 = vpop.f32.mrf.mxu0
      %v4811 = vadd.f32 0.0, %v4810
      %v4812 = vpop.f32.mrf.mxu0
      %v4813 = vadd.f32 0.0, %v4812
      %4814 = vmatprep.mubr.bf16.mxu0 %v667
      %4815 = vmatmul.mubr.bf16.gmra.mxu0 %v460
      %v4816 = vpop.f32.mrf.mxu0
      %v4817 = vadd.f32 0.0, %v4816
      %v4818 = vpop.f32.mrf.mxu0
      %v4819 = vadd.f32 0.0, %v4818
      %v4820 = vpop.f32.mrf.mxu0
      %v4821 = vadd.f32 0.0, %v4820
      %v4822 = vpop.f32.mrf.mxu0
      %v4823 = vadd.f32 0.0, %v4822
      %4824 = vmatprep.mubr.bf16.mxu0 %v670
      %4825 = vmatmul.mubr.bf16.gmra.mxu0 %v462
      %v4826 = vpop.f32.mrf.mxu0
      %v4827 = vadd.f32 0.0, %v4826
      %v4828 = vpop.f32.mrf.mxu0
      %v4829 = vadd.f32 0.0, %v4828
      %v4830 = vpop.f32.mrf.mxu0
      %v4831 = vadd.f32 0.0, %v4830
      %v4832 = vpop.f32.mrf.mxu0
      %v4833 = vadd.f32 0.0, %v4832
      %4834 = vmatprep.mubr.bf16.mxu0 %v673
      %4835 = vmatmul.mubr.bf16.gmra.mxu0 %v464
      %v4836 = vpop.f32.mrf.mxu0
      %v4837 = vadd.f32 0.0, %v4836
      %v4838 = vpop.f32.mrf.mxu0
      %v4839 = vadd.f32 0.0, %v4838
      %v4840 = vpop.f32.mrf.mxu0
      %v4841 = vadd.f32 0.0, %v4840
      %v4842 = vpop.f32.mrf.mxu0
      %v4843 = vadd.f32 0.0, %v4842
      %4844 = vmatprep.mubr.bf16.mxu0 %v676
      %4845 = vmatmul.mubr.bf16.gmra.mxu0 %v466
      %v4846 = vpop.f32.mrf.mxu0
      %v4847 = vadd.f32 0.0, %v4846
      %v4848 = vpop.f32.mrf.mxu0
      %v4849 = vadd.f32 0.0, %v4848
      %v4850 = vpop.f32.mrf.mxu0
      %v4851 = vadd.f32 0.0, %v4850
      %v4852 = vpop.f32.mrf.mxu0
      %v4853 = vadd.f32 0.0, %v4852
      %4854 = vmatprep.mubr.bf16.mxu0 %v679
      %4855 = vmatmul.mubr.bf16.gmra.mxu0 %v468
      %v4856 = vpop.f32.mrf.mxu0
      %v4857 = vadd.f32 0.0, %v4856
      %v4858 = vpop.f32.mrf.mxu0
      %v4859 = vadd.f32 0.0, %v4858
      %v4860 = vpop.f32.mrf.mxu0
      %v4861 = vadd.f32 0.0, %v4860
      %v4862 = vpop.f32.mrf.mxu0
      %v4863 = vadd.f32 0.0, %v4862
      %4864 = vmatprep.mubr.bf16.mxu0 %v682
      %4865 = vmatmul.mubr.bf16.gmra.mxu0 %v470
      %v4866 = vpop.f32.mrf.mxu0
      %v4867 = vadd.f32 0.0, %v4866
      %v4868 = vpop.f32.mrf.mxu0
      %v4869 = vadd.f32 0.0, %v4868
      %v4870 = vpop.f32.mrf.mxu0
      %v4871 = vadd.f32 0.0, %v4870
      %v4872 = vpop.f32.mrf.mxu0
      %v4873 = vadd.f32 0.0, %v4872
      %4874 = vmatprep.mubr.bf16.mxu0 %v685
      %4875 = vmatmul.mubr.bf16.gmra.mxu0 %v472
      %v4876 = vpop.f32.mrf.mxu0
      %v4877 = vadd.f32 0.0, %v4876
      %v4878 = vpop.f32.mrf.mxu0
      %v4879 = vadd.f32 0.0, %v4878
      %v4880 = vpop.f32.mrf.mxu0
      %v4881 = vadd.f32 0.0, %v4880
      %v4882 = vpop.f32.mrf.mxu0
      %v4883 = vadd.f32 0.0, %v4882
      %4884 = vmatprep.mubr.bf16.mxu0 %v688
      %4885 = vmatmul.mubr.bf16.gmra.mxu0 %v474
      %v4886 = vpop.f32.mrf.mxu0
      %v4887 = vadd.f32 0.0, %v4886
      %v4888 = vpop.f32.mrf.mxu0
      %v4889 = vadd.f32 0.0, %v4888
      %v4890 = vpop.f32.mrf.mxu0
      %v4891 = vadd.f32 0.0, %v4890
      %v4892 = vpop.f32.mrf.mxu0
      %v4893 = vadd.f32 0.0, %v4892
      %4894 = vmatprep.mubr.bf16.mxu0 %v691
      %4895 = vmatmul.mubr.bf16.gmra.mxu0 %v476
      %v4896 = vpop.f32.mrf.mxu0
      %v4897 = vadd.f32 0.0, %v4896
      %v4898 = vpop.f32.mrf.mxu0
      %v4899 = vadd.f32 0.0, %v4898
      %v4900 = vpop.f32.mrf.mxu0
      %v4901 = vadd.f32 0.0, %v4900
      %v4902 = vpop.f32.mrf.mxu0
      %v4903 = vadd.f32 0.0, %v4902
      %4904 = vmatprep.mubr.bf16.mxu0 %v694
      %4905 = vmatmul.mubr.bf16.gmra.mxu0 %v478
      %v4906 = vpop.f32.mrf.mxu0
      %v4907 = vadd.f32 0.0, %v4906
      %v4908 = vpop.f32.mrf.mxu0
      %v4909 = vadd.f32 0.0, %v4908
      %v4910 = vpop.f32.mrf.mxu0
      %v4911 = vadd.f32 0.0, %v4910
      %v4912 = vpop.f32.mrf.mxu0
      %v4913 = vadd.f32 0.0, %v4912
      %4914 = vmatprep.mubr.bf16.mxu0 %v697
      %4915 = vmatmul.mubr.bf16.gmra.mxu0 %v480
      %v4916 = vpop.f32.mrf.mxu0
      %v4917 = vadd.f32 0.0, %v4916
      %v4918 = vpop.f32.mrf.mxu0
      %v4919 = vadd.f32 0.0, %v4918
      %v4920 = vpop.f32.mrf.mxu0
      %v4921 = vadd.f32 0.0, %v4920
      %v4922 = vpop.f32.mrf.mxu0
      %v4923 = vadd.f32 0.0, %v4922
      %4924 = vmatprep.mubr.bf16.mxu0 %v700
      %4925 = vmatmul.mubr.bf16.gmra.mxu0 %v482
      %v4926 = vpop.f32.mrf.mxu0
      %v4927 = vadd.f32 0.0, %v4926
      %v4928 = vpop.f32.mrf.mxu0
      %v4929 = vadd.f32 0.0, %v4928
      %v4930 = vpop.f32.mrf.mxu0
      %v4931 = vadd.f32 0.0, %v4930
      %v4932 = vpop.f32.mrf.mxu0
      %v4933 = vadd.f32 0.0, %v4932
      %4934 = vmatprep.mubr.bf16.mxu0 %v703
      %4935 = vmatmul.mubr.bf16.gmra.mxu0 %v484
      %v4936 = vpop.f32.mrf.mxu0
      %v4937 = vadd.f32 0.0, %v4936
      %v4938 = vpop.f32.mrf.mxu0
      %v4939 = vadd.f32 0.0, %v4938
      %v4940 = vpop.f32.mrf.mxu0
      %v4941 = vadd.f32 0.0, %v4940
      %v4942 = vpop.f32.mrf.mxu0
      %v4943 = vadd.f32 0.0, %v4942
      %4944 = vmatprep.mubr.bf16.mxu0 %v706
      %4945 = vmatmul.mubr.bf16.gmra.mxu0 %v486
      %v4946 = vpop.f32.mrf.mxu0
      %v4947 = vadd.f32 0.0, %v4946
      %v4948 = vpop.f32.mrf.mxu0
      %v4949 = vadd.f32 0.0, %v4948
      %v4950 = vpop.f32.mrf.mxu0
      %v4951 = vadd.f32 0.0, %v4950
      %v4952 = vpop.f32.mrf.mxu0
      %v4953 = vadd.f32 0.0, %v4952
      %4954 = vmatprep.mubr.bf16.mxu0 %v709
      %4955 = vmatmul.mubr.bf16.gmra.mxu0 %v488
      %v4956 = vpop.f32.mrf.mxu0
      %v4957 = vadd.f32 0.0, %v4956
      %v4958 = vpop.f32.mrf.mxu0
      %v4959 = vadd.f32 0.0, %v4958
      %v4960 = vpop.f32.mrf.mxu0
      %v4961 = vadd.f32 0.0, %v4960
      %v4962 = vpop.f32.mrf.mxu0
      %v4963 = vadd.f32 0.0, %v4962
      %4964 = vmatprep.mubr.bf16.mxu0 %v712
      %4965 = vmatmul.mubr.bf16.gmra.mxu0 %v490
      %v4966 = vpop.f32.mrf.mxu0
      %v4967 = vadd.f32 0.0, %v4966
      %v4968 = vpop.f32.mrf.mxu0
      %v4969 = vadd.f32 0.0, %v4968
      %v4970 = vpop.f32.mrf.mxu0
      %v4971 = vadd.f32 0.0, %v4970
      %v4972 = vpop.f32.mrf.mxu0
      %v4973 = vadd.f32 0.0, %v4972
      %4974 = vmatprep.mubr.bf16.mxu0 %v715
      %4975 = vmatmul.mubr.bf16.gmra.mxu0 %v492
      %v4976 = vpop.f32.mrf.mxu0
      %v4977 = vadd.f32 0.0, %v4976
      %v4978 = vpop.f32.mrf.mxu0
      %v4979 = vadd.f32 0.0, %v4978
      %v4980 = vpop.f32.mrf.mxu0
      %v4981 = vadd.f32 0.0, %v4980
      %v4982 = vpop.f32.mrf.mxu0
      %v4983 = vadd.f32 0.0, %v4982
      %4984 = vmatprep.mubr.bf16.mxu0 %v718
      %4985 = vmatmul.mubr.bf16.gmra.mxu0 %v494
      %v4986 = vpop.f32.mrf.mxu0
      %v4987 = vadd.f32 0.0, %v4986
      %v4988 = vpop.f32.mrf.mxu0
      %v4989 = vadd.f32 0.0, %v4988
      %v4990 = vpop.f32.mrf.mxu0
      %v4991 = vadd.f32 0.0, %v4990
      %v4992 = vpop.f32.mrf.mxu0
      %v4993 = vadd.f32 0.0, %v4992
      %4994 = vmatprep.mubr.bf16.mxu0 %v721
      %4995 = vmatmul.mubr.bf16.gmra.mxu0 %v496
      %v4996 = vpop.f32.mrf.mxu0
      %v4997 = vadd.f32 0.0, %v4996
      %v4998 = vpop.f32.mrf.mxu0
      %v4999 = vadd.f32 0.0, %v4998
      %v5000 = vpop.f32.mrf.mxu0
      %v5001 = vadd.f32 0.0, %v5000
      %v5002 = vpop.f32.mrf.mxu0
      %v5003 = vadd.f32 0.0, %v5002
      %5004 = vdwg.mxu0
      %v5005 = vpack.c.bf16 %v4801, %v4797
      %v5006 = vpack.c.bf16 %v4803, %v4799
      %v5007 = vpack.c.bf16 %v4811, %v4807
      %v5008 = vpack.c.bf16 %v4813, %v4809
      %v5009 = vpack.c.bf16 %v4821, %v4817
      %v5010 = vpack.c.bf16 %v4823, %v4819
      %v5011 = vpack.c.bf16 %v4831, %v4827
      %v5012 = vpack.c.bf16 %v4833, %v4829
      %v5013 = vpack.c.bf16 %v4841, %v4837
      %v5014 = vpack.c.bf16 %v4843, %v4839
      %v5015 = vpack.c.bf16 %v4851, %v4847
      %v5016 = vpack.c.bf16 %v4853, %v4849
      %v5017 = vpack.c.bf16 %v4861, %v4857
      %v5018 = vpack.c.bf16 %v4863, %v4859
      %s5019 = scalar_lea.vmem %s2, 2016
      %v5020 = vld [vmem:[%s5019] sm:$0xff]
      %v5021 = vld [vmem:[%s5019 + $0x8] sm:$0xf]
      %v5022 = vld [vmem:[%s5019 + $0xc] sm:$0xff]
      %v5023 = vld [vmem:[%s5019 + $0x14] sm:$0xf]
      %v5024 = vld [vmem:[%s5019 + $0x18] sm:$0xff]
      %v5025 = vld [vmem:[%s5019 + $0x20] sm:$0xf]
      %v5026 = vld [vmem:[%s5019 + $0x24] sm:$0xff]
      %v5027 = vld [vmem:[%s5019 + $0x2c] sm:$0xf]
      %v5028 = vld [vmem:[%s5019 + $0x30] sm:$0xff]
      %v5029 = vld [vmem:[%s5019 + $0x38] sm:$0xf]
      %v5030 = vld [vmem:[%s5019 + $0x3c] sm:$0xff]
      %v5031 = vld [vmem:[%s5019 + $0x44] sm:$0xf]
      %v5032 = vld [vmem:[%s5019 + $0x48] sm:$0xff]
      %v5033 = vld [vmem:[%s5019 + $0x50] sm:$0xf]
      %v5034 = vld [vmem:[%s5019 + $0x54] sm:$0xff]
      %v5035 = vld [vmem:[%s5019 + $0x5c] sm:$0xf]
      %v5036 = vld [vmem:[%s5019 + $0x60] sm:$0xff]
      %v5037 = vld [vmem:[%s5019 + $0x68] sm:$0xf]
      %v5038 = vld [vmem:[%s5019 + $0x6c] sm:$0xff]
      %v5039 = vld [vmem:[%s5019 + $0x74] sm:$0xf]
      %v5040 = vld [vmem:[%s5019 + $0x78] sm:$0xff]
      %v5041 = vld [vmem:[%s5019 + $0x80] sm:$0xf]
      %v5042 = vld [vmem:[%s5019 + $0x84] sm:$0xff]
      %v5043 = vld [vmem:[%s5019 + $0x8c] sm:$0xf]
      %v5044 = vld [vmem:[%s5019 + $0x90] sm:$0xff]
      %v5045 = vld [vmem:[%s5019 + $0x98] sm:$0xf]
      %v5046 = vld [vmem:[%s5019 + $0x9c] sm:$0xff]
      %v5047 = vld [vmem:[%s5019 + $0xa4] sm:$0xf]
      %v5048 = vld [vmem:[%s5019 + $0xa8] sm:$0xff]
      %v5049 = vld [vmem:[%s5019 + $0xb0] sm:$0xf]
      %v5050 = vld [vmem:[%s5019 + $0xb4] sm:$0xff]
      %v5051 = vld [vmem:[%s5019 + $0xbc] sm:$0xf]
      %v5052 = vld [vmem:[%s5019 + $0xc0] sm:$0xff]
      %v5053 = vld [vmem:[%s5019 + $0xc8] sm:$0xf]
      %v5054 = vld [vmem:[%s5019 + $0xcc] sm:$0xff]
      %v5055 = vld [vmem:[%s5019 + $0xd4] sm:$0xf]
      %v5056 = vld [vmem:[%s5019 + $0xd8] sm:$0xff]
      %v5057 = vld [vmem:[%s5019 + $0xe0] sm:$0xf]
      %v5058 = vld [vmem:[%s5019 + $0xe4] sm:$0xff]
      %v5059 = vld [vmem:[%s5019 + $0xec] sm:$0xf]
      %v5060 = vld [vmem:[%s5019 + $0xf0] sm:$0xff]
      %v5061 = vld [vmem:[%s5019 + $0xf8] sm:$0xf]
      %v5062 = vld [vmem:[%s5019 + $0xfc] sm:$0xff]
      %v5063 = vld [vmem:[%s5019 + $0x104] sm:$0xf]
      %v5064 = vld [vmem:[%s5019 + $0x108] sm:$0xff]
      %v5065 = vld [vmem:[%s5019 + $0x110] sm:$0xf]
      %v5066 = vld [vmem:[%s5019 + $0x114] sm:$0xff]
      %v5067 = vld [vmem:[%s5019 + $0x11c] sm:$0xf]
      %v5068 = vld [vmem:[%s5019 + $0x120] sm:$0xff]
      %v5069 = vld [vmem:[%s5019 + $0x128] sm:$0xf]
      %v5070 = vld [vmem:[%s5019 + $0x12c] sm:$0xff]
      %v5071 = vld [vmem:[%s5019 + $0x134] sm:$0xf]
      %v5072 = vld [vmem:[%s5019 + $0x138] sm:$0xff]
      %v5073 = vld [vmem:[%s5019 + $0x140] sm:$0xf]
      %v5074 = vld [vmem:[%s5019 + $0x144] sm:$0xff]
      %v5075 = vld [vmem:[%s5019 + $0x14c] sm:$0xf]
      %v5132 = vunpack.c.l.b16 %v5020
      %v5133 = vunpack.c.h.b16 %v5020
      %v5134 = vunpack.c.l.b16 %v5021
      %v5135 = vunpack.c.l.b16 %v5022
      %v5136 = vunpack.c.h.b16 %v5022
      %v5137 = vunpack.c.l.b16 %v5023
      %v5138 = vunpack.c.l.b16 %v5024
      %v5139 = vunpack.c.h.b16 %v5024
      %v5140 = vunpack.c.l.b16 %v5025
      %v5141 = vunpack.c.l.b16 %v5026
      %v5142 = vunpack.c.h.b16 %v5026
      %v5143 = vunpack.c.l.b16 %v5027
      %v5144 = vunpack.c.l.b16 %v5028
      %v5145 = vunpack.c.h.b16 %v5028
      %v5146 = vunpack.c.l.b16 %v5029
      %v5147 = vunpack.c.l.b16 %v5030
      %v5148 = vunpack.c.h.b16 %v5030
      %v5149 = vunpack.c.l.b16 %v5031
      %v5150 = vunpack.c.l.b16 %v5032
      %v5151 = vunpack.c.h.b16 %v5032
      %v5152 = vunpack.c.l.b16 %v5033
      %v5153 = vunpack.c.l.b16 %v5034
      %v5154 = vunpack.c.h.b16 %v5034
      %v5155 = vunpack.c.l.b16 %v5035
      %v5156 = vunpack.c.l.b16 %v5036
      %v5157 = vunpack.c.h.b16 %v5036
      %v5158 = vunpack.c.l.b16 %v5037
      %v5159 = vunpack.c.l.b16 %v5038
      %v5160 = vunpack.c.h.b16 %v5038
      %v5161 = vunpack.c.l.b16 %v5039
      %v5162 = vunpack.c.l.b16 %v5040
      %v5163 = vunpack.c.h.b16 %v5040
      %v5164 = vunpack.c.l.b16 %v5041
      %v5165 = vunpack.c.l.b16 %v5042
      %v5166 = vunpack.c.h.b16 %v5042
      %v5167 = vunpack.c.l.b16 %v5043
      %v5168 = vunpack.c.l.b16 %v5044
      %v5169 = vunpack.c.h.b16 %v5044
      %v5170 = vunpack.c.l.b16 %v5045
      %v5171 = vunpack.c.l.b16 %v5046
      %v5172 = vunpack.c.h.b16 %v5046
      %v5173 = vunpack.c.l.b16 %v5047
      %v5174 = vunpack.c.l.b16 %v5048
      %v5175 = vunpack.c.h.b16 %v5048
      %v5176 = vunpack.c.l.b16 %v5049
      %v5177 = vunpack.c.l.b16 %v5050
      %v5178 = vunpack.c.h.b16 %v5050
      %v5179 = vunpack.c.l.b16 %v5051
      %v5180 = vunpack.c.l.b16 %v5052
      %v5181 = vunpack.c.h.b16 %v5052
      %v5182 = vunpack.c.l.b16 %v5053
      %v5183 = vunpack.c.l.b16 %v5054
      %v5184 = vunpack.c.h.b16 %v5054
      %v5185 = vunpack.c.l.b16 %v5055
      %v5186 = vunpack.c.l.b16 %v5056
      %v5187 = vunpack.c.h.b16 %v5056
      %v5188 = vunpack.c.l.b16 %v5057
      %v5189 = vunpack.c.l.b16 %v5058
      %v5190 = vunpack.c.h.b16 %v5058
      %v5191 = vunpack.c.l.b16 %v5059
      %v5192 = vunpack.c.l.b16 %v5060
      %v5193 = vunpack.c.h.b16 %v5060
      %v5194 = vunpack.c.l.b16 %v5061
      %v5195 = vunpack.c.l.b16 %v5062
      %v5196 = vunpack.c.h.b16 %v5062
      %v5197 = vunpack.c.l.b16 %v5063
      %v5198 = vunpack.c.l.b16 %v5064
      %v5199 = vunpack.c.h.b16 %v5064
      %v5200 = vunpack.c.l.b16 %v5065
      %v5201 = vunpack.c.l.b16 %v5066
      %v5202 = vunpack.c.h.b16 %v5066
      %v5203 = vunpack.c.l.b16 %v5067
      %v5204 = vunpack.c.l.b16 %v5068
      %v5205 = vunpack.c.h.b16 %v5068
      %v5206 = vunpack.c.l.b16 %v5069
      %v5207 = vunpack.c.l.b16 %v5070
      %v5208 = vunpack.c.h.b16 %v5070
      %v5209 = vunpack.c.l.b16 %v5071
      %v5210 = vunpack.c.l.b16 %v5072
      %v5211 = vunpack.c.h.b16 %v5072
      %v5212 = vunpack.c.l.b16 %v5073
      %v5213 = vunpack.c.l.b16 %v5074
      %v5214 = vunpack.c.h.b16 %v5074
      %v5215 = vunpack.c.l.b16 %v5075
      %v5216 = vpack.c.b16 %v5135, %v5132
      %v5217 = vpack.c.b16 %v5136, %v5133
      %v5218 = vpack.c.b16 %v5137, %v5134
      %v5219 = vpack.c.b16 %v5141, %v5138
      %v5220 = vpack.c.b16 %v5142, %v5139
      %v5221 = vpack.c.b16 %v5143, %v5140
      %v5222 = vpack.c.b16 %v5147, %v5144
      %v5223 = vpack.c.b16 %v5148, %v5145
      %v5224 = vpack.c.b16 %v5149, %v5146
      %v5225 = vpack.c.b16 %v5153, %v5150
      %v5226 = vpack.c.b16 %v5154, %v5151
      %v5227 = vpack.c.b16 %v5155, %v5152
      %v5228 = vpack.c.b16 %v5159, %v5156
      %v5229 = vpack.c.b16 %v5160, %v5157
      %v5230 = vpack.c.b16 %v5161, %v5158
      %v5231 = vpack.c.b16 %v5165, %v5162
      %v5232 = vpack.c.b16 %v5166, %v5163
      %v5233 = vpack.c.b16 %v5167, %v5164
      %v5234 = vpack.c.b16 %v5171, %v5168
      %v5235 = vpack.c.b16 %v5172, %v5169
      %v5236 = vpack.c.b16 %v5173, %v5170
      %v5237 = vpack.c.b16 %v5177, %v5174
      %v5238 = vpack.c.b16 %v5178, %v5175
      %v5239 = vpack.c.b16 %v5179, %v5176
      %v5240 = vpack.c.b16 %v5183, %v5180
      %v5241 = vpack.c.b16 %v5184, %v5181
      %v5242 = vpack.c.b16 %v5185, %v5182
      %v5243 = vpack.c.b16 %v5189, %v5186
      %v5244 = vpack.c.b16 %v5190, %v5187
      %v5245 = vpack.c.b16 %v5191, %v5188
      %v5246 = vpack.c.b16 %v5195, %v5192
      %v5247 = vpack.c.b16 %v5196, %v5193
      %v5248 = vpack.c.b16 %v5197, %v5194
      %v5249 = vpack.c.b16 %v5201, %v5198
      %v5250 = vpack.c.b16 %v5202, %v5199
      %v5251 = vpack.c.b16 %v5203, %v5200
      %v5252 = vpack.c.b16 %v5207, %v5204
      %v5253 = vpack.c.b16 %v5208, %v5205
      %v5254 = vpack.c.b16 %v5209, %v5206
      %v5255 = vpack.c.b16 %v5213, %v5210
      %v5256 = vpack.c.b16 %v5214, %v5211
      %v5257 = vpack.c.b16 %v5215, %v5212
      %v5301 = vsel %vm659, %v5006, 0
      %v5304 = vsel %vm659, %v5008, 0
      %v5307 = vsel %vm659, %v5010, 0
      %v5310 = vsel %vm659, %v5012, 0
      %v5313 = vsel %vm659, %v5014, 0
      %v5316 = vsel %vm659, %v5016, 0
      %v5319 = vsel %vm659, %v5018, 0
      %5321 = vmatprep.subr.bf16.mxu0 %v5238
      %5322 = vmatpush1.bf16.msra.mxu0 %v5237
      %5323 = vmatprep.subr.bf16.mxu0 %v5235
      %5324 = vmatpush1.bf16.msra.mxu0 %v5234
      %5325 = vmatprep.subr.bf16.mxu0 %v5232
      %5326 = vmatpush1.bf16.msra.mxu0 %v5231
      %5327 = vmatprep.subr.bf16.mxu0 %v5229
      %5328 = vmatpush1.bf16.msra.mxu0 %v5228
      %5329 = vmatprep.subr.bf16.mxu0 %v5226
      %5330 = vmatpush1.bf16.msra.mxu0 %v5225
      %5331 = vmatprep.subr.bf16.mxu0 %v5223
      %5332 = vmatpush1.bf16.msra.mxu0 %v5222
      %5333 = vmatprep.subr.bf16.mxu0 %v5220
      %5334 = vmatpush1.bf16.msra.mxu0 %v5219
      %5335 = vmatprep.subr.bf16.mxu0 %v5217
      %5336 = vmatpush1.bf16.msra.mxu0 %v5216
      %5337 = vmatprep.subr.bf16.mxu0 0
      %5338 = vmatpush2.bf16.msra.mxu0 0
      %5339 = vmatprep.subr.bf16.mxu0 0
      %5340 = vmatpush2.bf16.msra.mxu0 0
      %5341 = vmatprep.subr.bf16.mxu0 %v5256
      %5342 = vmatpush2.bf16.msra.mxu0 %v5255
      %5343 = vmatprep.subr.bf16.mxu0 %v5253
      %5344 = vmatpush2.bf16.msra.mxu0 %v5252
      %5345 = vmatprep.subr.bf16.mxu0 %v5250
      %5346 = vmatpush2.bf16.msra.mxu0 %v5249
      %5347 = vmatprep.subr.bf16.mxu0 %v5247
      %5348 = vmatpush2.bf16.msra.mxu0 %v5246
      %5349 = vmatprep.subr.bf16.mxu0 %v5244
      %5350 = vmatpush2.bf16.msra.mxu0 %v5243
      %5351 = vmatprep.subr.bf16.mxu0 %v5241
      %5352 = vmatpush2.bf16.msra.mxu0 %v5240
      %5353 = vmatprep.mubr.bf16.mxu0 %v5301
      %5354 = vmatmul.mubr.bf16.gmra.mxu0 %v5005
      %v5355 = vpop.f32.mrf.mxu0
      %v5356 = vadd.f32 0.0, %v5355
      %v5357 = vpop.f32.mrf.mxu0
      %v5358 = vadd.f32 0.0, %v5357
      %v5359 = vpop.f32.mrf.mxu0
      %v5360 = vadd.f32 0.0, %v5359
      %v5361 = vpop.f32.mrf.mxu0
      %v5362 = vadd.f32 0.0, %v5361
      %5363 = vmatprep.mubr.bf16.mxu0 %v5304
      %5364 = vmatmul.mubr.bf16.gmra.mxu0 %v5007
      %v5365 = vpop.f32.mrf.mxu0
      %v5366 = vadd.f32 0.0, %v5365
      %v5367 = vpop.f32.mrf.mxu0
      %v5368 = vadd.f32 0.0, %v5367
      %v5369 = vpop.f32.mrf.mxu0
      %v5370 = vadd.f32 0.0, %v5369
      %v5371 = vpop.f32.mrf.mxu0
      %v5372 = vadd.f32 0.0, %v5371
      %5373 = vmatprep.mubr.bf16.mxu0 %v5307
      %5374 = vmatmul.mubr.bf16.gmra.mxu0 %v5009
      %v5375 = vpop.f32.mrf.mxu0
      %v5376 = vadd.f32 0.0, %v5375
      %v5377 = vpop.f32.mrf.mxu0
      %v5378 = vadd.f32 0.0, %v5377
      %v5379 = vpop.f32.mrf.mxu0
      %v5380 = vadd.f32 0.0, %v5379
      %v5381 = vpop.f32.mrf.mxu0
      %v5382 = vadd.f32 0.0, %v5381
      %5383 = vmatprep.mubr.bf16.mxu0 %v5310
      %5384 = vmatmul.mubr.bf16.gmra.mxu0 %v5011
      %v5385 = vpop.f32.mrf.mxu0
      %v5386 = vadd.f32 0.0, %v5385
      %v5387 = vpop.f32.mrf.mxu0
      %v5388 = vadd.f32 0.0, %v5387
      %v5389 = vpop.f32.mrf.mxu0
      %v5390 = vadd.f32 0.0, %v5389
      %v5391 = vpop.f32.mrf.mxu0
      %v5392 = vadd.f32 0.0, %v5391
      %5393 = vmatprep.mubr.bf16.mxu0 %v5313
      %5394 = vmatmul.mubr.bf16.gmra.mxu0 %v5013
      %v5395 = vpop.f32.mrf.mxu0
      %v5396 = vadd.f32 0.0, %v5395
      %v5397 = vpop.f32.mrf.mxu0
      %v5398 = vadd.f32 0.0, %v5397
      %v5399 = vpop.f32.mrf.mxu0
      %v5400 = vadd.f32 0.0, %v5399
      %v5401 = vpop.f32.mrf.mxu0
      %v5402 = vadd.f32 0.0, %v5401
      %5403 = vmatprep.mubr.bf16.mxu0 %v5316
      %5404 = vmatmul.mubr.bf16.gmra.mxu0 %v5015
      %v5405 = vpop.f32.mrf.mxu0
      %v5406 = vadd.f32 0.0, %v5405
      %v5407 = vpop.f32.mrf.mxu0
      %v5408 = vadd.f32 0.0, %v5407
      %v5409 = vpop.f32.mrf.mxu0
      %v5410 = vadd.f32 0.0, %v5409
      %v5411 = vpop.f32.mrf.mxu0
      %v5412 = vadd.f32 0.0, %v5411
      %5413 = vmatprep.mubr.bf16.mxu0 %v5319
      %5414 = vmatmul.mubr.bf16.gmra.mxu0 %v5017
      %v5415 = vpop.f32.mrf.mxu0
      %v5416 = vadd.f32 0.0, %v5415
      %v5417 = vpop.f32.mrf.mxu0
      %v5418 = vadd.f32 0.0, %v5417
      %v5419 = vpop.f32.mrf.mxu0
      %v5420 = vadd.f32 0.0, %v5419
      %v5421 = vpop.f32.mrf.mxu0
      %v5422 = vadd.f32 0.0, %v5421
      %5423 = vdwg.mxu0
      %5424 = vmatprep.subr.bf16.mxu0 0
      %5425 = vmatpush1.bf16.msra.mxu0 %v5239
      %5426 = vmatprep.subr.bf16.mxu0 0
      %5427 = vmatpush1.bf16.msra.mxu0 %v5236
      %5428 = vmatprep.subr.bf16.mxu0 0
      %5429 = vmatpush1.bf16.msra.mxu0 %v5233
      %5430 = vmatprep.subr.bf16.mxu0 0
      %5431 = vmatpush1.bf16.msra.mxu0 %v5230
      %5432 = vmatprep.subr.bf16.mxu0 0
      %5433 = vmatpush1.bf16.msra.mxu0 %v5227
      %5434 = vmatprep.subr.bf16.mxu0 0
      %5435 = vmatpush1.bf16.msra.mxu0 %v5224
      %5436 = vmatprep.subr.bf16.mxu0 0
      %5437 = vmatpush1.bf16.msra.mxu0 %v5221
      %5438 = vmatprep.subr.bf16.mxu0 0
      %5439 = vmatpush1.bf16.msra.mxu0 %v5218
      %5440 = vmatprep.subr.bf16.mxu0 0
      %5441 = vmatpush2.bf16.msra.mxu0 0
      %5442 = vmatprep.subr.bf16.mxu0 0
      %5443 = vmatpush2.bf16.msra.mxu0 0
      %5444 = vmatprep.subr.bf16.mxu0 0
      %5445 = vmatpush2.bf16.msra.mxu0 %v5257
      %5446 = vmatprep.subr.bf16.mxu0 0
      %5447 = vmatpush2.bf16.msra.mxu0 %v5254
      %5448 = vmatprep.subr.bf16.mxu0 0
      %5449 = vmatpush2.bf16.msra.mxu0 %v5251
      %5450 = vmatprep.subr.bf16.mxu0 0
      %5451 = vmatpush2.bf16.msra.mxu0 %v5248
      %5452 = vmatprep.subr.bf16.mxu0 0
      %5453 = vmatpush2.bf16.msra.mxu0 %v5245
      %5454 = vmatprep.subr.bf16.mxu0 0
      %5455 = vmatpush2.bf16.msra.mxu0 %v5242
      %5456 = vmatprep.mubr.bf16.mxu0 %v5301
      %5457 = vmatmul.mubr.bf16.gmra.mxu0 %v5005
      %v5458 = vpop.f32.mrf.mxu0
      %v5459 = vadd.f32 0.0, %v5458
      %v5460 = vpop.f32.mrf.mxu0
      %v5461 = vpop.f32.mrf.mxu0
      %v5462 = vadd.f32 0.0, %v5461
      %v5463 = vpop.f32.mrf.mxu0
      %5464 = vmatprep.mubr.bf16.mxu0 %v5304
      %5465 = vmatmul.mubr.bf16.gmra.mxu0 %v5007
      %v5466 = vpop.f32.mrf.mxu0
      %v5467 = vadd.f32 0.0, %v5466
      %v5468 = vpop.f32.mrf.mxu0
      %v5469 = vpop.f32.mrf.mxu0
      %v5470 = vadd.f32 0.0, %v5469
      %v5471 = vpop.f32.mrf.mxu0
      %5472 = vmatprep.mubr.bf16.mxu0 %v5307
      %5473 = vmatmul.mubr.bf16.gmra.mxu0 %v5009
      %v5474 = vpop.f32.mrf.mxu0
      %v5475 = vadd.f32 0.0, %v5474
      %v5476 = vpop.f32.mrf.mxu0
      %v5477 = vpop.f32.mrf.mxu0
      %v5478 = vadd.f32 0.0, %v5477
      %v5479 = vpop.f32.mrf.mxu0
      %5480 = vmatprep.mubr.bf16.mxu0 %v5310
      %5481 = vmatmul.mubr.bf16.gmra.mxu0 %v5011
      %v5482 = vpop.f32.mrf.mxu0
      %v5483 = vadd.f32 0.0, %v5482
      %v5484 = vpop.f32.mrf.mxu0
      %v5485 = vpop.f32.mrf.mxu0
      %v5486 = vadd.f32 0.0, %v5485
      %v5487 = vpop.f32.mrf.mxu0
      %5488 = vmatprep.mubr.bf16.mxu0 %v5313
      %5489 = vmatmul.mubr.bf16.gmra.mxu0 %v5013
      %v5490 = vpop.f32.mrf.mxu0
      %v5491 = vadd.f32 0.0, %v5490
      %v5492 = vpop.f32.mrf.mxu0
      %v5493 = vpop.f32.mrf.mxu0
      %v5494 = vadd.f32 0.0, %v5493
      %v5495 = vpop.f32.mrf.mxu0
      %5496 = vmatprep.mubr.bf16.mxu0 %v5316
      %5497 = vmatmul.mubr.bf16.gmra.mxu0 %v5015
      %v5498 = vpop.f32.mrf.mxu0
      %v5499 = vadd.f32 0.0, %v5498
      %v5500 = vpop.f32.mrf.mxu0
      %v5501 = vpop.f32.mrf.mxu0
      %v5502 = vadd.f32 0.0, %v5501
      %v5503 = vpop.f32.mrf.mxu0
      %5504 = vmatprep.mubr.bf16.mxu0 %v5319
      %5505 = vmatmul.mubr.bf16.gmra.mxu0 %v5017
      %v5506 = vpop.f32.mrf.mxu0
      %v5507 = vadd.f32 0.0, %v5506
      %v5508 = vpop.f32.mrf.mxu0
      %v5509 = vpop.f32.mrf.mxu0
      %v5510 = vadd.f32 0.0, %v5509
      %v5511 = vpop.f32.mrf.mxu0
      %5512 = vdwg.mxu0
      %v5513 = vadd.f32 %v4551, %v5356
      %v5514 = vadd.f32 %v4552, %v5358
      %v5515 = vadd.f32 %v4553, %v5459
      %v5516 = vadd.f32 %v4554, %v5360
      %v5517 = vadd.f32 %v4555, %v5362
      %v5518 = vadd.f32 %v4556, %v5462
      %v5519 = vadd.f32 %v4557, %v5366
      %v5520 = vadd.f32 %v4558, %v5368
      %v5521 = vadd.f32 %v4559, %v5467
      %v5522 = vadd.f32 %v4560, %v5370
      %v5523 = vadd.f32 %v4561, %v5372
      %v5524 = vadd.f32 %v4562, %v5470
      %v5525 = vadd.f32 %v4563, %v5376
      %v5526 = vadd.f32 %v4564, %v5378
      %v5527 = vadd.f32 %v4565, %v5475
      %v5528 = vadd.f32 %v4566, %v5380
      %v5529 = vadd.f32 %v4567, %v5382
      %v5530 = vadd.f32 %v4568, %v5478
      %v5531 = vadd.f32 %v4569, %v5386
      %v5532 = vadd.f32 %v4570, %v5388
      %v5533 = vadd.f32 %v4571, %v5483
      %v5534 = vadd.f32 %v4572, %v5390
      %v5535 = vadd.f32 %v4573, %v5392
      %v5536 = vadd.f32 %v4574, %v5486
      %v5537 = vadd.f32 %v4575, %v5396
      %v5538 = vadd.f32 %v4576, %v5398
      %v5539 = vadd.f32 %v4577, %v5491
      %v5540 = vadd.f32 %v4578, %v5400
      %v5541 = vadd.f32 %v4579, %v5402
      %v5542 = vadd.f32 %v4580, %v5494
      %v5543 = vadd.f32 %v4581, %v5406
      %v5544 = vadd.f32 %v4582, %v5408
      %v5545 = vadd.f32 %v4583, %v5499
      %v5546 = vadd.f32 %v4584, %v5410
      %v5547 = vadd.f32 %v4585, %v5412
      %v5548 = vadd.f32 %v4586, %v5502
      %v5549 = vadd.f32 %v4587, %v5416
      %v5550 = vadd.f32 %v4588, %v5418
      %v5551 = vadd.f32 %v4589, %v5507
      %v5552 = vadd.f32 %v4590, %v5420
      %v5553 = vadd.f32 %v4591, %v5422
      %v5554 = vadd.f32 %v4592, %v5510
      %v5555 = vpack.c.bf16 %v4871, %v4867
      %v5556 = vpack.c.bf16 %v4873, %v4869
      %v5557 = vpack.c.bf16 %v4881, %v4877
      %v5558 = vpack.c.bf16 %v4883, %v4879
      %v5559 = vpack.c.bf16 %v4891, %v4887
      %v5560 = vpack.c.bf16 %v4893, %v4889
      %v5561 = vpack.c.bf16 %v4901, %v4897
      %v5562 = vpack.c.bf16 %v4903, %v4899
      %v5563 = vpack.c.bf16 %v4911, %v4907
      %v5564 = vpack.c.bf16 %v4913, %v4909
      %v5565 = vpack.c.bf16 %v4921, %v4917
      %v5566 = vpack.c.bf16 %v4923, %v4919
      %v5567 = vpack.c.bf16 %v4931, %v4927
      %v5568 = vpack.c.bf16 %v4933, %v4929
      %s5569 = scalar_lea.vmem %s2, 2352
      %v5570 = vld [vmem:[%s5569] sm:$0xff]
      %v5571 = vld [vmem:[%s5569 + $0x8] sm:$0xf]
      %v5572 = vld [vmem:[%s5569 + $0xc] sm:$0xff]
      %v5573 = vld [vmem:[%s5569 + $0x14] sm:$0xf]
      %v5574 = vld [vmem:[%s5569 + $0x18] sm:$0xff]
      %v5575 = vld [vmem:[%s5569 + $0x20] sm:$0xf]
      %v5576 = vld [vmem:[%s5569 + $0x24] sm:$0xff]
      %v5577 = vld [vmem:[%s5569 + $0x2c] sm:$0xf]
      %v5578 = vld [vmem:[%s5569 + $0x30] sm:$0xff]
      %v5579 = vld [vmem:[%s5569 + $0x38] sm:$0xf]
      %v5580 = vld [vmem:[%s5569 + $0x3c] sm:$0xff]
      %v5581 = vld [vmem:[%s5569 + $0x44] sm:$0xf]
      %v5582 = vld [vmem:[%s5569 + $0x48] sm:$0xff]
      %v5583 = vld [vmem:[%s5569 + $0x50] sm:$0xf]
      %v5584 = vld [vmem:[%s5569 + $0x54] sm:$0xff]
      %v5585 = vld [vmem:[%s5569 + $0x5c] sm:$0xf]
      %v5586 = vld [vmem:[%s5569 + $0x60] sm:$0xff]
      %v5587 = vld [vmem:[%s5569 + $0x68] sm:$0xf]
      %v5588 = vld [vmem:[%s5569 + $0x6c] sm:$0xff]
      %v5589 = vld [vmem:[%s5569 + $0x74] sm:$0xf]
      %v5590 = vld [vmem:[%s5569 + $0x78] sm:$0xff]
      %v5591 = vld [vmem:[%s5569 + $0x80] sm:$0xf]
      %v5592 = vld [vmem:[%s5569 + $0x84] sm:$0xff]
      %v5593 = vld [vmem:[%s5569 + $0x8c] sm:$0xf]
      %v5594 = vld [vmem:[%s5569 + $0x90] sm:$0xff]
      %v5595 = vld [vmem:[%s5569 + $0x98] sm:$0xf]
      %v5596 = vld [vmem:[%s5569 + $0x9c] sm:$0xff]
      %v5597 = vld [vmem:[%s5569 + $0xa4] sm:$0xf]
      %v5598 = vld [vmem:[%s5569 + $0xa8] sm:$0xff]
      %v5599 = vld [vmem:[%s5569 + $0xb0] sm:$0xf]
      %v5600 = vld [vmem:[%s5569 + $0xb4] sm:$0xff]
      %v5601 = vld [vmem:[%s5569 + $0xbc] sm:$0xf]
      %v5602 = vld [vmem:[%s5569 + $0xc0] sm:$0xff]
      %v5603 = vld [vmem:[%s5569 + $0xc8] sm:$0xf]
      %v5604 = vld [vmem:[%s5569 + $0xcc] sm:$0xff]
      %v5605 = vld [vmem:[%s5569 + $0xd4] sm:$0xf]
      %v5606 = vld [vmem:[%s5569 + $0xd8] sm:$0xff]
      %v5607 = vld [vmem:[%s5569 + $0xe0] sm:$0xf]
      %v5608 = vld [vmem:[%s5569 + $0xe4] sm:$0xff]
      %v5609 = vld [vmem:[%s5569 + $0xec] sm:$0xf]
      %v5610 = vld [vmem:[%s5569 + $0xf0] sm:$0xff]
      %v5611 = vld [vmem:[%s5569 + $0xf8] sm:$0xf]
      %v5612 = vld [vmem:[%s5569 + $0xfc] sm:$0xff]
      %v5613 = vld [vmem:[%s5569 + $0x104] sm:$0xf]
      %v5614 = vld [vmem:[%s5569 + $0x108] sm:$0xff]
      %v5615 = vld [vmem:[%s5569 + $0x110] sm:$0xf]
      %v5616 = vld [vmem:[%s5569 + $0x114] sm:$0xff]
      %v5617 = vld [vmem:[%s5569 + $0x11c] sm:$0xf]
      %v5618 = vld [vmem:[%s5569 + $0x120] sm:$0xff]
      %v5619 = vld [vmem:[%s5569 + $0x128] sm:$0xf]
      %v5620 = vld [vmem:[%s5569 + $0x12c] sm:$0xff]
      %v5621 = vld [vmem:[%s5569 + $0x134] sm:$0xf]
      %v5622 = vld [vmem:[%s5569 + $0x138] sm:$0xff]
      %v5623 = vld [vmem:[%s5569 + $0x140] sm:$0xf]
      %v5624 = vld [vmem:[%s5569 + $0x144] sm:$0xff]
      %v5625 = vld [vmem:[%s5569 + $0x14c] sm:$0xf]
      %v5682 = vunpack.c.l.b16 %v5570
      %v5683 = vunpack.c.h.b16 %v5570
      %v5684 = vunpack.c.l.b16 %v5571
      %v5685 = vunpack.c.l.b16 %v5572
      %v5686 = vunpack.c.h.b16 %v5572
      %v5687 = vunpack.c.l.b16 %v5573
      %v5688 = vunpack.c.l.b16 %v5574
      %v5689 = vunpack.c.h.b16 %v5574
      %v5690 = vunpack.c.l.b16 %v5575
      %v5691 = vunpack.c.l.b16 %v5576
      %v5692 = vunpack.c.h.b16 %v5576
      %v5693 = vunpack.c.l.b16 %v5577
      %v5694 = vunpack.c.l.b16 %v5578
      %v5695 = vunpack.c.h.b16 %v5578
      %v5696 = vunpack.c.l.b16 %v5579
      %v5697 = vunpack.c.l.b16 %v5580
      %v5698 = vunpack.c.h.b16 %v5580
      %v5699 = vunpack.c.l.b16 %v5581
      %v5700 = vunpack.c.l.b16 %v5582
      %v5701 = vunpack.c.h.b16 %v5582
      %v5702 = vunpack.c.l.b16 %v5583
      %v5703 = vunpack.c.l.b16 %v5584
      %v5704 = vunpack.c.h.b16 %v5584
      %v5705 = vunpack.c.l.b16 %v5585
      %v5706 = vunpack.c.l.b16 %v5586
      %v5707 = vunpack.c.h.b16 %v5586
      %v5708 = vunpack.c.l.b16 %v5587
      %v5709 = vunpack.c.l.b16 %v5588
      %v5710 = vunpack.c.h.b16 %v5588
      %v5711 = vunpack.c.l.b16 %v5589
      %v5712 = vunpack.c.l.b16 %v5590
      %v5713 = vunpack.c.h.b16 %v5590
      %v5714 = vunpack.c.l.b16 %v5591
      %v5715 = vunpack.c.l.b16 %v5592
      %v5716 = vunpack.c.h.b16 %v5592
      %v5717 = vunpack.c.l.b16 %v5593
      %v5718 = vunpack.c.l.b16 %v5594
      %v5719 = vunpack.c.h.b16 %v5594
      %v5720 = vunpack.c.l.b16 %v5595
      %v5721 = vunpack.c.l.b16 %v5596
      %v5722 = vunpack.c.h.b16 %v5596
      %v5723 = vunpack.c.l.b16 %v5597
      %v5724 = vunpack.c.l.b16 %v5598
      %v5725 = vunpack.c.h.b16 %v5598
      %v5726 = vunpack.c.l.b16 %v5599
      %v5727 = vunpack.c.l.b16 %v5600
      %v5728 = vunpack.c.h.b16 %v5600
      %v5729 = vunpack.c.l.b16 %v5601
      %v5730 = vunpack.c.l.b16 %v5602
      %v5731 = vunpack.c.h.b16 %v5602
      %v5732 = vunpack.c.l.b16 %v5603
      %v5733 = vunpack.c.l.b16 %v5604
      %v5734 = vunpack.c.h.b16 %v5604
      %v5735 = vunpack.c.l.b16 %v5605
      %v5736 = vunpack.c.l.b16 %v5606
      %v5737 = vunpack.c.h.b16 %v5606
      %v5738 = vunpack.c.l.b16 %v5607
      %v5739 = vunpack.c.l.b16 %v5608
      %v5740 = vunpack.c.h.b16 %v5608
      %v5741 = vunpack.c.l.b16 %v5609
      %v5742 = vunpack.c.l.b16 %v5610
      %v5743 = vunpack.c.h.b16 %v5610
      %v5744 = vunpack.c.l.b16 %v5611
      %v5745 = vunpack.c.l.b16 %v5612
      %v5746 = vunpack.c.h.b16 %v5612
      %v5747 = vunpack.c.l.b16 %v5613
      %v5748 = vunpack.c.l.b16 %v5614
      %v5749 = vunpack.c.h.b16 %v5614
      %v5750 = vunpack.c.l.b16 %v5615
      %v5751 = vunpack.c.l.b16 %v5616
      %v5752 = vunpack.c.h.b16 %v5616
      %v5753 = vunpack.c.l.b16 %v5617
      %v5754 = vunpack.c.l.b16 %v5618
      %v5755 = vunpack.c.h.b16 %v5618
      %v5756 = vunpack.c.l.b16 %v5619
      %v5757 = vunpack.c.l.b16 %v5620
      %v5758 = vunpack.c.h.b16 %v5620
      %v5759 = vunpack.c.l.b16 %v5621
      %v5760 = vunpack.c.l.b16 %v5622
      %v5761 = vunpack.c.h.b16 %v5622
      %v5762 = vunpack.c.l.b16 %v5623
      %v5763 = vunpack.c.l.b16 %v5624
      %v5764 = vunpack.c.h.b16 %v5624
      %v5765 = vunpack.c.l.b16 %v5625
      %v5766 = vpack.c.b16 %v5685, %v5682
      %v5767 = vpack.c.b16 %v5686, %v5683
      %v5768 = vpack.c.b16 %v5687, %v5684
      %v5769 = vpack.c.b16 %v5691, %v5688
      %v5770 = vpack.c.b16 %v5692, %v5689
      %v5771 = vpack.c.b16 %v5693, %v5690
      %v5772 = vpack.c.b16 %v5697, %v5694
      %v5773 = vpack.c.b16 %v5698, %v5695
      %v5774 = vpack.c.b16 %v5699, %v5696
      %v5775 = vpack.c.b16 %v5703, %v5700
      %v5776 = vpack.c.b16 %v5704, %v5701
      %v5777 = vpack.c.b16 %v5705, %v5702
      %v5778 = vpack.c.b16 %v5709, %v5706
      %v5779 = vpack.c.b16 %v5710, %v5707
      %v5780 = vpack.c.b16 %v5711, %v5708
      %v5781 = vpack.c.b16 %v5715, %v5712
      %v5782 = vpack.c.b16 %v5716, %v5713
      %v5783 = vpack.c.b16 %v5717, %v5714
      %v5784 = vpack.c.b16 %v5721, %v5718
      %v5785 = vpack.c.b16 %v5722, %v5719
      %v5786 = vpack.c.b16 %v5723, %v5720
      %v5787 = vpack.c.b16 %v5727, %v5724
      %v5788 = vpack.c.b16 %v5728, %v5725
      %v5789 = vpack.c.b16 %v5729, %v5726
      %v5790 = vpack.c.b16 %v5733, %v5730
      %v5791 = vpack.c.b16 %v5734, %v5731
      %v5792 = vpack.c.b16 %v5735, %v5732
      %v5793 = vpack.c.b16 %v5739, %v5736
      %v5794 = vpack.c.b16 %v5740, %v5737
      %v5795 = vpack.c.b16 %v5741, %v5738
      %v5796 = vpack.c.b16 %v5745, %v5742
      %v5797 = vpack.c.b16 %v5746, %v5743
      %v5798 = vpack.c.b16 %v5747, %v5744
      %v5799 = vpack.c.b16 %v5751, %v5748
      %v5800 = vpack.c.b16 %v5752, %v5749
      %v5801 = vpack.c.b16 %v5753, %v5750
      %v5802 = vpack.c.b16 %v5757, %v5754
      %v5803 = vpack.c.b16 %v5758, %v5755
      %v5804 = vpack.c.b16 %v5759, %v5756
      %v5805 = vpack.c.b16 %v5763, %v5760
      %v5806 = vpack.c.b16 %v5764, %v5761
      %v5807 = vpack.c.b16 %v5765, %v5762
      %v5851 = vsel %vm659, %v5556, 0
      %v5854 = vsel %vm659, %v5558, 0
      %v5857 = vsel %vm659, %v5560, 0
      %v5860 = vsel %vm659, %v5562, 0
      %v5863 = vsel %vm659, %v5564, 0
      %v5866 = vsel %vm659, %v5566, 0
      %v5869 = vsel %vm659, %v5568, 0
      %5871 = vmatprep.subr.bf16.mxu0 %v5788
      %5872 = vmatpush1.bf16.msra.mxu0 %v5787
      %5873 = vmatprep.subr.bf16.mxu0 %v5785
      %5874 = vmatpush1.bf16.msra.mxu0 %v5784
      %5875 = vmatprep.subr.bf16.mxu0 %v5782
      %5876 = vmatpush1.bf16.msra.mxu0 %v5781
      %5877 = vmatprep.subr.bf16.mxu0 %v5779
      %5878 = vmatpush1.bf16.msra.mxu0 %v5778
      %5879 = vmatprep.subr.bf16.mxu0 %v5776
      %5880 = vmatpush1.bf16.msra.mxu0 %v5775
      %5881 = vmatprep.subr.bf16.mxu0 %v5773
      %5882 = vmatpush1.bf16.msra.mxu0 %v5772
      %5883 = vmatprep.subr.bf16.mxu0 %v5770
      %5884 = vmatpush1.bf16.msra.mxu0 %v5769
      %5885 = vmatprep.subr.bf16.mxu0 %v5767
      %5886 = vmatpush1.bf16.msra.mxu0 %v5766
      %5887 = vmatprep.subr.bf16.mxu0 0
      %5888 = vmatpush2.bf16.msra.mxu0 0
      %5889 = vmatprep.subr.bf16.mxu0 0
      %5890 = vmatpush2.bf16.msra.mxu0 0
      %5891 = vmatprep.subr.bf16.mxu0 %v5806
      %5892 = vmatpush2.bf16.msra.mxu0 %v5805
      %5893 = vmatprep.subr.bf16.mxu0 %v5803
      %5894 = vmatpush2.bf16.msra.mxu0 %v5802
      %5895 = vmatprep.subr.bf16.mxu0 %v5800
      %5896 = vmatpush2.bf16.msra.mxu0 %v5799
      %5897 = vmatprep.subr.bf16.mxu0 %v5797
      %5898 = vmatpush2.bf16.msra.mxu0 %v5796
      %5899 = vmatprep.subr.bf16.mxu0 %v5794
      %5900 = vmatpush2.bf16.msra.mxu0 %v5793
      %5901 = vmatprep.subr.bf16.mxu0 %v5791
      %5902 = vmatpush2.bf16.msra.mxu0 %v5790
      %5903 = vmatprep.mubr.bf16.mxu0 %v5851
      %5904 = vmatmul.mubr.bf16.gmra.mxu0 %v5555
      %v5905 = vpop.f32.mrf.mxu0
      %v5906 = vadd.f32 0.0, %v5905
      %v5907 = vpop.f32.mrf.mxu0
      %v5908 = vadd.f32 0.0, %v5907
      %v5909 = vpop.f32.mrf.mxu0
      %v5910 = vadd.f32 0.0, %v5909
      %v5911 = vpop.f32.mrf.mxu0
      %v5912 = vadd.f32 0.0, %v5911
      %5913 = vmatprep.mubr.bf16.mxu0 %v5854
      %5914 = vmatmul.mubr.bf16.gmra.mxu0 %v5557
      %v5915 = vpop.f32.mrf.mxu0
      %v5916 = vadd.f32 0.0, %v5915
      %v5917 = vpop.f32.mrf.mxu0
      %v5918 = vadd.f32 0.0, %v5917
      %v5919 = vpop.f32.mrf.mxu0
      %v5920 = vadd.f32 0.0, %v5919
      %v5921 = vpop.f32.mrf.mxu0
      %v5922 = vadd.f32 0.0, %v5921
      %5923 = vmatprep.mubr.bf16.mxu0 %v5857
      %5924 = vmatmul.mubr.bf16.gmra.mxu0 %v5559
      %v5925 = vpop.f32.mrf.mxu0
      %v5926 = vadd.f32 0.0, %v5925
      %v5927 = vpop.f32.mrf.mxu0
      %v5928 = vadd.f32 0.0, %v5927
      %v5929 = vpop.f32.mrf.mxu0
      %v5930 = vadd.f32 0.0, %v5929
      %v5931 = vpop.f32.mrf.mxu0
      %v5932 = vadd.f32 0.0, %v5931
      %5933 = vmatprep.mubr.bf16.mxu0 %v5860
      %5934 = vmatmul.mubr.bf16.gmra.mxu0 %v5561
      %v5935 = vpop.f32.mrf.mxu0
      %v5936 = vadd.f32 0.0, %v5935
      %v5937 = vpop.f32.mrf.mxu0
      %v5938 = vadd.f32 0.0, %v5937
      %v5939 = vpop.f32.mrf.mxu0
      %v5940 = vadd.f32 0.0, %v5939
      %v5941 = vpop.f32.mrf.mxu0
      %v5942 = vadd.f32 0.0, %v5941
      %5943 = vmatprep.mubr.bf16.mxu0 %v5863
      %5944 = vmatmul.mubr.bf16.gmra.mxu0 %v5563
      %v5945 = vpop.f32.mrf.mxu0
      %v5946 = vadd.f32 0.0, %v5945
      %v5947 = vpop.f32.mrf.mxu0
      %v5948 = vadd.f32 0.0, %v5947
      %v5949 = vpop.f32.mrf.mxu0
      %v5950 = vadd.f32 0.0, %v5949
      %v5951 = vpop.f32.mrf.mxu0
      %v5952 = vadd.f32 0.0, %v5951
      %5953 = vmatprep.mubr.bf16.mxu0 %v5866
      %5954 = vmatmul.mubr.bf16.gmra.mxu0 %v5565
      %v5955 = vpop.f32.mrf.mxu0
      %v5956 = vadd.f32 0.0, %v5955
      %v5957 = vpop.f32.mrf.mxu0
      %v5958 = vadd.f32 0.0, %v5957
      %v5959 = vpop.f32.mrf.mxu0
      %v5960 = vadd.f32 0.0, %v5959
      %v5961 = vpop.f32.mrf.mxu0
      %v5962 = vadd.f32 0.0, %v5961
      %5963 = vmatprep.mubr.bf16.mxu0 %v5869
      %5964 = vmatmul.mubr.bf16.gmra.mxu0 %v5567
      %v5965 = vpop.f32.mrf.mxu0
      %v5966 = vadd.f32 0.0, %v5965
      %v5967 = vpop.f32.mrf.mxu0
      %v5968 = vadd.f32 0.0, %v5967
      %v5969 = vpop.f32.mrf.mxu0
      %v5970 = vadd.f32 0.0, %v5969
      %v5971 = vpop.f32.mrf.mxu0
      %v5972 = vadd.f32 0.0, %v5971
      %5973 = vdwg.mxu0
      %5974 = vmatprep.subr.bf16.mxu0 0
      %5975 = vmatpush1.bf16.msra.mxu0 %v5789
      %5976 = vmatprep.subr.bf16.mxu0 0
      %5977 = vmatpush1.bf16.msra.mxu0 %v5786
      %5978 = vmatprep.subr.bf16.mxu0 0
      %5979 = vmatpush1.bf16.msra.mxu0 %v5783
      %5980 = vmatprep.subr.bf16.mxu0 0
      %5981 = vmatpush1.bf16.msra.mxu0 %v5780
      %5982 = vmatprep.subr.bf16.mxu0 0
      %5983 = vmatpush1.bf16.msra.mxu0 %v5777
      %5984 = vmatprep.subr.bf16.mxu0 0
      %5985 = vmatpush1.bf16.msra.mxu0 %v5774
      %5986 = vmatprep.subr.bf16.mxu0 0
      %5987 = vmatpush1.bf16.msra.mxu0 %v5771
      %5988 = vmatprep.subr.bf16.mxu0 0
      %5989 = vmatpush1.bf16.msra.mxu0 %v5768
      %5990 = vmatprep.subr.bf16.mxu0 0
      %5991 = vmatpush2.bf16.msra.mxu0 0
      %5992 = vmatprep.subr.bf16.mxu0 0
      %5993 = vmatpush2.bf16.msra.mxu0 0
      %5994 = vmatprep.subr.bf16.mxu0 0
      %5995 = vmatpush2.bf16.msra.mxu0 %v5807
      %5996 = vmatprep.subr.bf16.mxu0 0
      %5997 = vmatpush2.bf16.msra.mxu0 %v5804
      %5998 = vmatprep.subr.bf16.mxu0 0
      %5999 = vmatpush2.bf16.msra.mxu0 %v5801
      %6000 = vmatprep.subr.bf16.mxu0 0
      %6001 = vmatpush2.bf16.msra.mxu0 %v5798
      %6002 = vmatprep.subr.bf16.mxu0 0
      %6003 = vmatpush2.bf16.msra.mxu0 %v5795
      %6004 = vmatprep.subr.bf16.mxu0 0
      %6005 = vmatpush2.bf16.msra.mxu0 %v5792
      %6006 = vmatprep.mubr.bf16.mxu0 %v5851
      %6007 = vmatmul.mubr.bf16.gmra.mxu0 %v5555
      %v6008 = vpop.f32.mrf.mxu0
      %v6009 = vadd.f32 0.0, %v6008
      %v6010 = vpop.f32.mrf.mxu0
      %v6011 = vpop.f32.mrf.mxu0
      %v6012 = vadd.f32 0.0, %v6011
      %v6013 = vpop.f32.mrf.mxu0
      %6014 = vmatprep.mubr.bf16.mxu0 %v5854
      %6015 = vmatmul.mubr.bf16.gmra.mxu0 %v5557
      %v6016 = vpop.f32.mrf.mxu0
      %v6017 = vadd.f32 0.0, %v6016
      %v6018 = vpop.f32.mrf.mxu0
      %v6019 = vpop.f32.mrf.mxu0
      %v6020 = vadd.f32 0.0, %v6019
      %v6021 = vpop.f32.mrf.mxu0
      %6022 = vmatprep.mubr.bf16.mxu0 %v5857
      %6023 = vmatmul.mubr.bf16.gmra.mxu0 %v5559
      %v6024 = vpop.f32.mrf.mxu0
      %v6025 = vadd.f32 0.0, %v6024
      %v6026 = vpop.f32.mrf.mxu0
      %v6027 = vpop.f32.mrf.mxu0
      %v6028 = vadd.f32 0.0, %v6027
      %v6029 = vpop.f32.mrf.mxu0
      %6030 = vmatprep.mubr.bf16.mxu0 %v5860
      %6031 = vmatmul.mubr.bf16.gmra.mxu0 %v5561
      %v6032 = vpop.f32.mrf.mxu0
      %v6033 = vadd.f32 0.0, %v6032
      %v6034 = vpop.f32.mrf.mxu0
      %v6035 = vpop.f32.mrf.mxu0
      %v6036 = vadd.f32 0.0, %v6035
      %v6037 = vpop.f32.mrf.mxu0
      %6038 = vmatprep.mubr.bf16.mxu0 %v5863
      %6039 = vmatmul.mubr.bf16.gmra.mxu0 %v5563
      %v6040 = vpop.f32.mrf.mxu0
      %v6041 = vadd.f32 0.0, %v6040
      %v6042 = vpop.f32.mrf.mxu0
      %v6043 = vpop.f32.mrf.mxu0
      %v6044 = vadd.f32 0.0, %v6043
      %v6045 = vpop.f32.mrf.mxu0
      %6046 = vmatprep.mubr.bf16.mxu0 %v5866
      %6047 = vmatmul.mubr.bf16.gmra.mxu0 %v5565
      %v6048 = vpop.f32.mrf.mxu0
      %v6049 = vadd.f32 0.0, %v6048
      %v6050 = vpop.f32.mrf.mxu0
      %v6051 = vpop.f32.mrf.mxu0
      %v6052 = vadd.f32 0.0, %v6051
      %v6053 = vpop.f32.mrf.mxu0
      %6054 = vmatprep.mubr.bf16.mxu0 %v5869
      %6055 = vmatmul.mubr.bf16.gmra.mxu0 %v5567
      %v6056 = vpop.f32.mrf.mxu0
      %v6057 = vadd.f32 0.0, %v6056
      %v6058 = vpop.f32.mrf.mxu0
      %v6059 = vpop.f32.mrf.mxu0
      %v6060 = vadd.f32 0.0, %v6059
      %v6061 = vpop.f32.mrf.mxu0
      %6062 = vdwg.mxu0
      %v6063 = vadd.f32 %v5513, %v5906
      %v6064 = vadd.f32 %v5514, %v5908
      %v6065 = vadd.f32 %v5515, %v6009
      %v6066 = vadd.f32 %v5516, %v5910
      %v6067 = vadd.f32 %v5517, %v5912
      %v6068 = vadd.f32 %v5518, %v6012
      %v6069 = vadd.f32 %v5519, %v5916
      %v6070 = vadd.f32 %v5520, %v5918
      %v6071 = vadd.f32 %v5521, %v6017
      %v6072 = vadd.f32 %v5522, %v5920
      %v6073 = vadd.f32 %v5523, %v5922
      %v6074 = vadd.f32 %v5524, %v6020
      %v6075 = vadd.f32 %v5525, %v5926
      %v6076 = vadd.f32 %v5526, %v5928
      %v6077 = vadd.f32 %v5527, %v6025
      %v6078 = vadd.f32 %v5528, %v5930
      %v6079 = vadd.f32 %v5529, %v5932
      %v6080 = vadd.f32 %v5530, %v6028
      %v6081 = vadd.f32 %v5531, %v5936
      %v6082 = vadd.f32 %v5532, %v5938
      %v6083 = vadd.f32 %v5533, %v6033
      %v6084 = vadd.f32 %v5534, %v5940
      %v6085 = vadd.f32 %v5535, %v5942
      %v6086 = vadd.f32 %v5536, %v6036
      %v6087 = vadd.f32 %v5537, %v5946
      %v6088 = vadd.f32 %v5538, %v5948
      %v6089 = vadd.f32 %v5539, %v6041
      %v6090 = vadd.f32 %v5540, %v5950
      %v6091 = vadd.f32 %v5541, %v5952
      %v6092 = vadd.f32 %v5542, %v6044
      %v6093 = vadd.f32 %v5543, %v5956
      %v6094 = vadd.f32 %v5544, %v5958
      %v6095 = vadd.f32 %v5545, %v6049
      %v6096 = vadd.f32 %v5546, %v5960
      %v6097 = vadd.f32 %v5547, %v5962
      %v6098 = vadd.f32 %v5548, %v6052
      %v6099 = vadd.f32 %v5549, %v5966
      %v6100 = vadd.f32 %v5550, %v5968
      %v6101 = vadd.f32 %v5551, %v6057
      %v6102 = vadd.f32 %v5552, %v5970
      %v6103 = vadd.f32 %v5553, %v5972
      %v6104 = vadd.f32 %v5554, %v6060
      %v6105 = vpack.c.bf16 %v4941, %v4937
      %v6106 = vpack.c.bf16 %v4943, %v4939
      %v6107 = vpack.c.bf16 %v4951, %v4947
      %v6108 = vpack.c.bf16 %v4953, %v4949
      %v6109 = vpack.c.bf16 %v4961, %v4957
      %v6110 = vpack.c.bf16 %v4963, %v4959
      %v6111 = vpack.c.bf16 %v4971, %v4967
      %v6112 = vpack.c.bf16 %v4973, %v4969
      %v6113 = vpack.c.bf16 %v4981, %v4977
      %v6114 = vpack.c.bf16 %v4983, %v4979
      %v6115 = vpack.c.bf16 %v4991, %v4987
      %v6116 = vpack.c.bf16 %v4993, %v4989
      %v6117 = vpack.c.bf16 %v5001, %v4997
      %v6118 = vpack.c.bf16 %v5003, %v4999
      %s6119 = scalar_lea.vmem %s2, 2688
      %v6120 = vld [vmem:[%s6119] sm:$0xff]
      %v6121 = vld [vmem:[%s6119 + $0x8] sm:$0xf]
      %v6122 = vld [vmem:[%s6119 + $0xc] sm:$0xff]
      %v6123 = vld [vmem:[%s6119 + $0x14] sm:$0xf]
      %v6124 = vld [vmem:[%s6119 + $0x18] sm:$0xff]
      %v6125 = vld [vmem:[%s6119 + $0x20] sm:$0xf]
      %v6126 = vld [vmem:[%s6119 + $0x24] sm:$0xff]
      %v6127 = vld [vmem:[%s6119 + $0x2c] sm:$0xf]
      %v6128 = vld [vmem:[%s6119 + $0x30] sm:$0xff]
      %v6129 = vld [vmem:[%s6119 + $0x38] sm:$0xf]
      %v6130 = vld [vmem:[%s6119 + $0x3c] sm:$0xff]
      %v6131 = vld [vmem:[%s6119 + $0x44] sm:$0xf]
      %v6132 = vld [vmem:[%s6119 + $0x48] sm:$0xff]
      %v6133 = vld [vmem:[%s6119 + $0x50] sm:$0xf]
      %v6134 = vld [vmem:[%s6119 + $0x54] sm:$0xff]
      %v6135 = vld [vmem:[%s6119 + $0x5c] sm:$0xf]
      %v6136 = vld [vmem:[%s6119 + $0x60] sm:$0xff]
      %v6137 = vld [vmem:[%s6119 + $0x68] sm:$0xf]
      %v6138 = vld [vmem:[%s6119 + $0x6c] sm:$0xff]
      %v6139 = vld [vmem:[%s6119 + $0x74] sm:$0xf]
      %v6140 = vld [vmem:[%s6119 + $0x78] sm:$0xff]
      %v6141 = vld [vmem:[%s6119 + $0x80] sm:$0xf]
      %v6142 = vld [vmem:[%s6119 + $0x84] sm:$0xff]
      %v6143 = vld [vmem:[%s6119 + $0x8c] sm:$0xf]
      %v6144 = vld [vmem:[%s6119 + $0x90] sm:$0xff]
      %v6145 = vld [vmem:[%s6119 + $0x98] sm:$0xf]
      %v6146 = vld [vmem:[%s6119 + $0x9c] sm:$0xff]
      %v6147 = vld [vmem:[%s6119 + $0xa4] sm:$0xf]
      %v6148 = vld [vmem:[%s6119 + $0xa8] sm:$0xff]
      %v6149 = vld [vmem:[%s6119 + $0xb0] sm:$0xf]
      %v6150 = vld [vmem:[%s6119 + $0xb4] sm:$0xff]
      %v6151 = vld [vmem:[%s6119 + $0xbc] sm:$0xf]
      %v6152 = vld [vmem:[%s6119 + $0xc0] sm:$0xff]
      %v6153 = vld [vmem:[%s6119 + $0xc8] sm:$0xf]
      %v6154 = vld [vmem:[%s6119 + $0xcc] sm:$0xff]
      %v6155 = vld [vmem:[%s6119 + $0xd4] sm:$0xf]
      %v6156 = vld [vmem:[%s6119 + $0xd8] sm:$0xff]
      %v6157 = vld [vmem:[%s6119 + $0xe0] sm:$0xf]
      %v6158 = vld [vmem:[%s6119 + $0xe4] sm:$0xff]
      %v6159 = vld [vmem:[%s6119 + $0xec] sm:$0xf]
      %v6160 = vld [vmem:[%s6119 + $0xf0] sm:$0xff]
      %v6161 = vld [vmem:[%s6119 + $0xf8] sm:$0xf]
      %v6162 = vld [vmem:[%s6119 + $0xfc] sm:$0xff]
      %v6163 = vld [vmem:[%s6119 + $0x104] sm:$0xf]
      %v6164 = vld [vmem:[%s6119 + $0x108] sm:$0xff]
      %v6165 = vld [vmem:[%s6119 + $0x110] sm:$0xf]
      %v6166 = vld [vmem:[%s6119 + $0x114] sm:$0xff]
      %v6167 = vld [vmem:[%s6119 + $0x11c] sm:$0xf]
      %v6168 = vld [vmem:[%s6119 + $0x120] sm:$0xff]
      %v6169 = vld [vmem:[%s6119 + $0x128] sm:$0xf]
      %v6170 = vld [vmem:[%s6119 + $0x12c] sm:$0xff]
      %v6171 = vld [vmem:[%s6119 + $0x134] sm:$0xf]
      %v6172 = vld [vmem:[%s6119 + $0x138] sm:$0xff]
      %v6173 = vld [vmem:[%s6119 + $0x140] sm:$0xf]
      %v6174 = vld [vmem:[%s6119 + $0x144] sm:$0xff]
      %v6175 = vld [vmem:[%s6119 + $0x14c] sm:$0xf]
      %v6232 = vunpack.c.l.b16 %v6120
      %v6233 = vunpack.c.h.b16 %v6120
      %v6234 = vunpack.c.l.b16 %v6121
      %v6235 = vunpack.c.l.b16 %v6122
      %v6236 = vunpack.c.h.b16 %v6122
      %v6237 = vunpack.c.l.b16 %v6123
      %v6238 = vunpack.c.l.b16 %v6124
      %v6239 = vunpack.c.h.b16 %v6124
      %v6240 = vunpack.c.l.b16 %v6125
      %v6241 = vunpack.c.l.b16 %v6126
      %v6242 = vunpack.c.h.b16 %v6126
      %v6243 = vunpack.c.l.b16 %v6127
      %v6244 = vunpack.c.l.b16 %v6128
      %v6245 = vunpack.c.h.b16 %v6128
      %v6246 = vunpack.c.l.b16 %v6129
      %v6247 = vunpack.c.l.b16 %v6130
      %v6248 = vunpack.c.h.b16 %v6130
      %v6249 = vunpack.c.l.b16 %v6131
      %v6250 = vunpack.c.l.b16 %v6132
      %v6251 = vunpack.c.h.b16 %v6132
      %v6252 = vunpack.c.l.b16 %v6133
      %v6253 = vunpack.c.l.b16 %v6134
      %v6254 = vunpack.c.h.b16 %v6134
      %v6255 = vunpack.c.l.b16 %v6135
      %v6256 = vunpack.c.l.b16 %v6136
      %v6257 = vunpack.c.h.b16 %v6136
      %v6258 = vunpack.c.l.b16 %v6137
      %v6259 = vunpack.c.l.b16 %v6138
      %v6260 = vunpack.c.h.b16 %v6138
      %v6261 = vunpack.c.l.b16 %v6139
      %v6262 = vunpack.c.l.b16 %v6140
      %v6263 = vunpack.c.h.b16 %v6140
      %v6264 = vunpack.c.l.b16 %v6141
      %v6265 = vunpack.c.l.b16 %v6142
      %v6266 = vunpack.c.h.b16 %v6142
      %v6267 = vunpack.c.l.b16 %v6143
      %v6268 = vunpack.c.l.b16 %v6144
      %v6269 = vunpack.c.h.b16 %v6144
      %v6270 = vunpack.c.l.b16 %v6145
      %v6271 = vunpack.c.l.b16 %v6146
      %v6272 = vunpack.c.h.b16 %v6146
      %v6273 = vunpack.c.l.b16 %v6147
      %v6274 = vunpack.c.l.b16 %v6148
      %v6275 = vunpack.c.h.b16 %v6148
      %v6276 = vunpack.c.l.b16 %v6149
      %v6277 = vunpack.c.l.b16 %v6150
      %v6278 = vunpack.c.h.b16 %v6150
      %v6279 = vunpack.c.l.b16 %v6151
      %v6280 = vunpack.c.l.b16 %v6152
      %v6281 = vunpack.c.h.b16 %v6152
      %v6282 = vunpack.c.l.b16 %v6153
      %v6283 = vunpack.c.l.b16 %v6154
      %v6284 = vunpack.c.h.b16 %v6154
      %v6285 = vunpack.c.l.b16 %v6155
      %v6286 = vunpack.c.l.b16 %v6156
      %v6287 = vunpack.c.h.b16 %v6156
      %v6288 = vunpack.c.l.b16 %v6157
      %v6289 = vunpack.c.l.b16 %v6158
      %v6290 = vunpack.c.h.b16 %v6158
      %v6291 = vunpack.c.l.b16 %v6159
      %v6292 = vunpack.c.l.b16 %v6160
      %v6293 = vunpack.c.h.b16 %v6160
      %v6294 = vunpack.c.l.b16 %v6161
      %v6295 = vunpack.c.l.b16 %v6162
      %v6296 = vunpack.c.h.b16 %v6162
      %v6297 = vunpack.c.l.b16 %v6163
      %v6298 = vunpack.c.l.b16 %v6164
      %v6299 = vunpack.c.h.b16 %v6164
      %v6300 = vunpack.c.l.b16 %v6165
      %v6301 = vunpack.c.l.b16 %v6166
      %v6302 = vunpack.c.h.b16 %v6166
      %v6303 = vunpack.c.l.b16 %v6167
      %v6304 = vunpack.c.l.b16 %v6168
      %v6305 = vunpack.c.h.b16 %v6168
      %v6306 = vunpack.c.l.b16 %v6169
      %v6307 = vunpack.c.l.b16 %v6170
      %v6308 = vunpack.c.h.b16 %v6170
      %v6309 = vunpack.c.l.b16 %v6171
      %v6310 = vunpack.c.l.b16 %v6172
      %v6311 = vunpack.c.h.b16 %v6172
      %v6312 = vunpack.c.l.b16 %v6173
      %v6313 = vunpack.c.l.b16 %v6174
      %v6314 = vunpack.c.h.b16 %v6174
      %v6315 = vunpack.c.l.b16 %v6175
      %v6316 = vpack.c.b16 %v6235, %v6232
      %v6317 = vpack.c.b16 %v6236, %v6233
      %v6318 = vpack.c.b16 %v6237, %v6234
      %v6319 = vpack.c.b16 %v6241, %v6238
      %v6320 = vpack.c.b16 %v6242, %v6239
      %v6321 = vpack.c.b16 %v6243, %v6240
      %v6322 = vpack.c.b16 %v6247, %v6244
      %v6323 = vpack.c.b16 %v6248, %v6245
      %v6324 = vpack.c.b16 %v6249, %v6246
      %v6325 = vpack.c.b16 %v6253, %v6250
      %v6326 = vpack.c.b16 %v6254, %v6251
      %v6327 = vpack.c.b16 %v6255, %v6252
      %v6328 = vpack.c.b16 %v6259, %v6256
      %v6329 = vpack.c.b16 %v6260, %v6257
      %v6330 = vpack.c.b16 %v6261, %v6258
      %v6331 = vpack.c.b16 %v6265, %v6262
      %v6332 = vpack.c.b16 %v6266, %v6263
      %v6333 = vpack.c.b16 %v6267, %v6264
      %v6334 = vpack.c.b16 %v6271, %v6268
      %v6335 = vpack.c.b16 %v6272, %v6269
      %v6336 = vpack.c.b16 %v6273, %v6270
      %v6337 = vpack.c.b16 %v6277, %v6274
      %v6338 = vpack.c.b16 %v6278, %v6275
      %v6339 = vpack.c.b16 %v6279, %v6276
      %v6340 = vpack.c.b16 %v6283, %v6280
      %v6341 = vpack.c.b16 %v6284, %v6281
      %v6342 = vpack.c.b16 %v6285, %v6282
      %v6343 = vpack.c.b16 %v6289, %v6286
      %v6344 = vpack.c.b16 %v6290, %v6287
      %v6345 = vpack.c.b16 %v6291, %v6288
      %v6346 = vpack.c.b16 %v6295, %v6292
      %v6347 = vpack.c.b16 %v6296, %v6293
      %v6348 = vpack.c.b16 %v6297, %v6294
      %v6349 = vpack.c.b16 %v6301, %v6298
      %v6350 = vpack.c.b16 %v6302, %v6299
      %v6351 = vpack.c.b16 %v6303, %v6300
      %v6352 = vpack.c.b16 %v6307, %v6304
      %v6353 = vpack.c.b16 %v6308, %v6305
      %v6354 = vpack.c.b16 %v6309, %v6306
      %v6355 = vpack.c.b16 %v6313, %v6310
      %v6356 = vpack.c.b16 %v6314, %v6311
      %v6357 = vpack.c.b16 %v6315, %v6312
      %v6401 = vsel %vm659, %v6106, 0
      %v6404 = vsel %vm659, %v6108, 0
      %v6407 = vsel %vm659, %v6110, 0
      %v6410 = vsel %vm659, %v6112, 0
      %v6413 = vsel %vm659, %v6114, 0
      %v6416 = vsel %vm659, %v6116, 0
      %v6419 = vsel %vm659, %v6118, 0
      %6421 = vmatprep.subr.bf16.mxu0 %v6338
      %6422 = vmatpush1.bf16.msra.mxu0 %v6337
      %6423 = vmatprep.subr.bf16.mxu0 %v6335
      %6424 = vmatpush1.bf16.msra.mxu0 %v6334
      %6425 = vmatprep.subr.bf16.mxu0 %v6332
      %6426 = vmatpush1.bf16.msra.mxu0 %v6331
      %6427 = vmatprep.subr.bf16.mxu0 %v6329
      %6428 = vmatpush1.bf16.msra.mxu0 %v6328
      %6429 = vmatprep.subr.bf16.mxu0 %v6326
      %6430 = vmatpush1.bf16.msra.mxu0 %v6325
      %6431 = vmatprep.subr.bf16.mxu0 %v6323
      %6432 = vmatpush1.bf16.msra.mxu0 %v6322
      %6433 = vmatprep.subr.bf16.mxu0 %v6320
      %6434 = vmatpush1.bf16.msra.mxu0 %v6319
      %6435 = vmatprep.subr.bf16.mxu0 %v6317
      %6436 = vmatpush1.bf16.msra.mxu0 %v6316
      %6437 = vmatprep.subr.bf16.mxu0 0
      %6438 = vmatpush2.bf16.msra.mxu0 0
      %6439 = vmatprep.subr.bf16.mxu0 0
      %6440 = vmatpush2.bf16.msra.mxu0 0
      %6441 = vmatprep.subr.bf16.mxu0 %v6356
      %6442 = vmatpush2.bf16.msra.mxu0 %v6355
      %6443 = vmatprep.subr.bf16.mxu0 %v6353
      %6444 = vmatpush2.bf16.msra.mxu0 %v6352
      %6445 = vmatprep.subr.bf16.mxu0 %v6350
      %6446 = vmatpush2.bf16.msra.mxu0 %v6349
      %6447 = vmatprep.subr.bf16.mxu0 %v6347
      %6448 = vmatpush2.bf16.msra.mxu0 %v6346
      %6449 = vmatprep.subr.bf16.mxu0 %v6344
      %6450 = vmatpush2.bf16.msra.mxu0 %v6343
      %6451 = vmatprep.subr.bf16.mxu0 %v6341
      %6452 = vmatpush2.bf16.msra.mxu0 %v6340
      %6453 = vmatprep.mubr.bf16.mxu0 %v6401
      %6454 = vmatmul.mubr.bf16.gmra.mxu0 %v6105
      %v6455 = vpop.f32.mrf.mxu0
      %v6456 = vadd.f32 0.0, %v6455
      %v6457 = vpop.f32.mrf.mxu0
      %v6458 = vadd.f32 0.0, %v6457
      %v6459 = vpop.f32.mrf.mxu0
      %v6460 = vadd.f32 0.0, %v6459
      %v6461 = vpop.f32.mrf.mxu0
      %v6462 = vadd.f32 0.0, %v6461
      %6463 = vmatprep.mubr.bf16.mxu0 %v6404
      %6464 = vmatmul.mubr.bf16.gmra.mxu0 %v6107
      %v6465 = vpop.f32.mrf.mxu0
      %v6466 = vadd.f32 0.0, %v6465
      %v6467 = vpop.f32.mrf.mxu0
      %v6468 = vadd.f32 0.0, %v6467
      %v6469 = vpop.f32.mrf.mxu0
      %v6470 = vadd.f32 0.0, %v6469
      %v6471 = vpop.f32.mrf.mxu0
      %v6472 = vadd.f32 0.0, %v6471
      %6473 = vmatprep.mubr.bf16.mxu0 %v6407
      %6474 = vmatmul.mubr.bf16.gmra.mxu0 %v6109
      %v6475 = vpop.f32.mrf.mxu0
      %v6476 = vadd.f32 0.0, %v6475
      %v6477 = vpop.f32.mrf.mxu0
      %v6478 = vadd.f32 0.0, %v6477
      %v6479 = vpop.f32.mrf.mxu0
      %v6480 = vadd.f32 0.0, %v6479
      %v6481 = vpop.f32.mrf.mxu0
      %v6482 = vadd.f32 0.0, %v6481
      %6483 = vmatprep.mubr.bf16.mxu0 %v6410
      %6484 = vmatmul.mubr.bf16.gmra.mxu0 %v6111
      %v6485 = vpop.f32.mrf.mxu0
      %v6486 = vadd.f32 0.0, %v6485
      %v6487 = vpop.f32.mrf.mxu0
      %v6488 = vadd.f32 0.0, %v6487
      %v6489 = vpop.f32.mrf.mxu0
      %v6490 = vadd.f32 0.0, %v6489
      %v6491 = vpop.f32.mrf.mxu0
      %v6492 = vadd.f32 0.0, %v6491
      %6493 = vmatprep.mubr.bf16.mxu0 %v6413
      %6494 = vmatmul.mubr.bf16.gmra.mxu0 %v6113
      %v6495 = vpop.f32.mrf.mxu0
      %v6496 = vadd.f32 0.0, %v6495
      %v6497 = vpop.f32.mrf.mxu0
      %v6498 = vadd.f32 0.0, %v6497
      %v6499 = vpop.f32.mrf.mxu0
      %v6500 = vadd.f32 0.0, %v6499
      %v6501 = vpop.f32.mrf.mxu0
      %v6502 = vadd.f32 0.0, %v6501
      %6503 = vmatprep.mubr.bf16.mxu0 %v6416
      %6504 = vmatmul.mubr.bf16.gmra.mxu0 %v6115
      %v6505 = vpop.f32.mrf.mxu0
      %v6506 = vadd.f32 0.0, %v6505
      %v6507 = vpop.f32.mrf.mxu0
      %v6508 = vadd.f32 0.0, %v6507
      %v6509 = vpop.f32.mrf.mxu0
      %v6510 = vadd.f32 0.0, %v6509
      %v6511 = vpop.f32.mrf.mxu0
      %v6512 = vadd.f32 0.0, %v6511
      %6513 = vmatprep.mubr.bf16.mxu0 %v6419
      %6514 = vmatmul.mubr.bf16.gmra.mxu0 %v6117
      %v6515 = vpop.f32.mrf.mxu0
      %v6516 = vadd.f32 0.0, %v6515
      %v6517 = vpop.f32.mrf.mxu0
      %v6518 = vadd.f32 0.0, %v6517
      %v6519 = vpop.f32.mrf.mxu0
      %v6520 = vadd.f32 0.0, %v6519
      %v6521 = vpop.f32.mrf.mxu0
      %v6522 = vadd.f32 0.0, %v6521
      %6523 = vdwg.mxu0
      %6524 = vmatprep.subr.bf16.mxu0 0
      %6525 = vmatpush1.bf16.msra.mxu0 %v6339
      %6526 = vmatprep.subr.bf16.mxu0 0
      %6527 = vmatpush1.bf16.msra.mxu0 %v6336
      %6528 = vmatprep.subr.bf16.mxu0 0
      %6529 = vmatpush1.bf16.msra.mxu0 %v6333
      %6530 = vmatprep.subr.bf16.mxu0 0
      %6531 = vmatpush1.bf16.msra.mxu0 %v6330
      %6532 = vmatprep.subr.bf16.mxu0 0
      %6533 = vmatpush1.bf16.msra.mxu0 %v6327
      %6534 = vmatprep.subr.bf16.mxu0 0
      %6535 = vmatpush1.bf16.msra.mxu0 %v6324
      %6536 = vmatprep.subr.bf16.mxu0 0
      %6537 = vmatpush1.bf16.msra.mxu0 %v6321
      %6538 = vmatprep.subr.bf16.mxu0 0
      %6539 = vmatpush1.bf16.msra.mxu0 %v6318
      %6540 = vmatprep.subr.bf16.mxu0 0
      %6541 = vmatpush2.bf16.msra.mxu0 0
      %6542 = vmatprep.subr.bf16.mxu0 0
      %6543 = vmatpush2.bf16.msra.mxu0 0
      %6544 = vmatprep.subr.bf16.mxu0 0
      %6545 = vmatpush2.bf16.msra.mxu0 %v6357
      %6546 = vmatprep.subr.bf16.mxu0 0
      %6547 = vmatpush2.bf16.msra.mxu0 %v6354
      %6548 = vmatprep.subr.bf16.mxu0 0
      %6549 = vmatpush2.bf16.msra.mxu0 %v6351
      %6550 = vmatprep.subr.bf16.mxu0 0
      %6551 = vmatpush2.bf16.msra.mxu0 %v6348
      %6552 = vmatprep.subr.bf16.mxu0 0
      %6553 = vmatpush2.bf16.msra.mxu0 %v6345
      %6554 = vmatprep.subr.bf16.mxu0 0
      %6555 = vmatpush2.bf16.msra.mxu0 %v6342
      %6556 = vmatprep.mubr.bf16.mxu0 %v6401
      %6557 = vmatmul.mubr.bf16.gmra.mxu0 %v6105
      %v6558 = vpop.f32.mrf.mxu0
      %v6559 = vadd.f32 0.0, %v6558
      %v6560 = vpop.f32.mrf.mxu0
      %v6561 = vpop.f32.mrf.mxu0
      %v6562 = vadd.f32 0.0, %v6561
      %v6563 = vpop.f32.mrf.mxu0
      %6564 = vmatprep.mubr.bf16.mxu0 %v6404
      %6565 = vmatmul.mubr.bf16.gmra.mxu0 %v6107
      %v6566 = vpop.f32.mrf.mxu0
      %v6567 = vadd.f32 0.0, %v6566
      %v6568 = vpop.f32.mrf.mxu0
      %v6569 = vpop.f32.mrf.mxu0
      %v6570 = vadd.f32 0.0, %v6569
      %v6571 = vpop.f32.mrf.mxu0
      %6572 = vmatprep.mubr.bf16.mxu0 %v6407
      %6573 = vmatmul.mubr.bf16.gmra.mxu0 %v6109
      %v6574 = vpop.f32.mrf.mxu0
      %v6575 = vadd.f32 0.0, %v6574
      %v6576 = vpop.f32.mrf.mxu0
      %v6577 = vpop.f32.mrf.mxu0
      %v6578 = vadd.f32 0.0, %v6577
      %v6579 = vpop.f32.mrf.mxu0
      %6580 = vmatprep.mubr.bf16.mxu0 %v6410
      %6581 = vmatmul.mubr.bf16.gmra.mxu0 %v6111
      %v6582 = vpop.f32.mrf.mxu0
      %v6583 = vadd.f32 0.0, %v6582
      %v6584 = vpop.f32.mrf.mxu0
      %v6585 = vpop.f32.mrf.mxu0
      %v6586 = vadd.f32 0.0, %v6585
      %v6587 = vpop.f32.mrf.mxu0
      %6588 = vmatprep.mubr.bf16.mxu0 %v6413
      %6589 = vmatmul.mubr.bf16.gmra.mxu0 %v6113
      %v6590 = vpop.f32.mrf.mxu0
      %v6591 = vadd.f32 0.0, %v6590
      %v6592 = vpop.f32.mrf.mxu0
      %v6593 = vpop.f32.mrf.mxu0
      %v6594 = vadd.f32 0.0, %v6593
      %v6595 = vpop.f32.mrf.mxu0
      %6596 = vmatprep.mubr.bf16.mxu0 %v6416
      %6597 = vmatmul.mubr.bf16.gmra.mxu0 %v6115
      %v6598 = vpop.f32.mrf.mxu0
      %v6599 = vadd.f32 0.0, %v6598
      %v6600 = vpop.f32.mrf.mxu0
      %v6601 = vpop.f32.mrf.mxu0
      %v6602 = vadd.f32 0.0, %v6601
      %v6603 = vpop.f32.mrf.mxu0
      %6604 = vmatprep.mubr.bf16.mxu0 %v6419
      %6605 = vmatmul.mubr.bf16.gmra.mxu0 %v6117
      %v6606 = vpop.f32.mrf.mxu0
      %v6607 = vadd.f32 0.0, %v6606
      %v6608 = vpop.f32.mrf.mxu0
      %v6609 = vpop.f32.mrf.mxu0
      %v6610 = vadd.f32 0.0, %v6609
      %v6611 = vpop.f32.mrf.mxu0
      %6612 = vdwg.mxu0
      %v6613 = vadd.f32 %v6063, %v6456
      %v6614 = vadd.f32 %v6064, %v6458
      %v6615 = vadd.f32 %v6065, %v6559
      %v6616 = vadd.f32 %v6066, %v6460
      %v6617 = vadd.f32 %v6067, %v6462
      %v6618 = vadd.f32 %v6068, %v6562
      %v6619 = vadd.f32 %v6069, %v6466
      %v6620 = vadd.f32 %v6070, %v6468
      %v6621 = vadd.f32 %v6071, %v6567
      %v6622 = vadd.f32 %v6072, %v6470
      %v6623 = vadd.f32 %v6073, %v6472
      %v6624 = vadd.f32 %v6074, %v6570
      %v6625 = vadd.f32 %v6075, %v6476
      %v6626 = vadd.f32 %v6076, %v6478
      %v6627 = vadd.f32 %v6077, %v6575
      %v6628 = vadd.f32 %v6078, %v6480
      %v6629 = vadd.f32 %v6079, %v6482
      %v6630 = vadd.f32 %v6080, %v6578
      %v6631 = vadd.f32 %v6081, %v6486
      %v6632 = vadd.f32 %v6082, %v6488
      %v6633 = vadd.f32 %v6083, %v6583
      %v6634 = vadd.f32 %v6084, %v6490
      %v6635 = vadd.f32 %v6085, %v6492
      %v6636 = vadd.f32 %v6086, %v6586
      %v6637 = vadd.f32 %v6087, %v6496
      %v6638 = vadd.f32 %v6088, %v6498
      %v6639 = vadd.f32 %v6089, %v6591
      %v6640 = vadd.f32 %v6090, %v6500
      %v6641 = vadd.f32 %v6091, %v6502
      %v6642 = vadd.f32 %v6092, %v6594
      %v6643 = vadd.f32 %v6093, %v6506
      %v6644 = vadd.f32 %v6094, %v6508
      %v6645 = vadd.f32 %v6095, %v6599
      %v6646 = vadd.f32 %v6096, %v6510
      %v6647 = vadd.f32 %v6097, %v6512
      %v6648 = vadd.f32 %v6098, %v6602
      %v6649 = vadd.f32 %v6099, %v6516
      %v6650 = vadd.f32 %v6100, %v6518
      %v6651 = vadd.f32 %v6101, %v6607
      %v6652 = vadd.f32 %v6102, %v6520
      %v6653 = vadd.f32 %v6103, %v6522
      %v6654 = vadd.f32 %v6104, %v6610
      %v6655 = vlaneseq
      %v6656 = vand.u32 %v6655, 127
      %v6657 = vld [vmem:[%s251] sm:$0xff]
      %v6658 = vld [vmem:[%s251 + $0x8] sm:$0xff]
      %v6659 = vld [vmem:[%s251 + $0x10] sm:$0xff]
      %v6660 = vld [vmem:[%s251 + $0x18] sm:$0xff]
      %v6661 = vld [vmem:[%s251 + $0x20] sm:$0xff]
      %v6662 = vld [vmem:[%s251 + $0x28] sm:$0xff]
      %v6663 = vld [vmem:[%s251 + $0x30] sm:$0xff]
      %v6664 = vld [vmem:[%s251 + $0x38] sm:$0xff]
      %v6665 = vld [vmem:[%s251 + $0x40] sm:$0xff]
      %v6666 = vld [vmem:[%s251 + $0x48] sm:$0xff]
      %v6667 = vld [vmem:[%s251 + $0x50] sm:$0xff]
      %v6668 = vld [vmem:[%s251 + $0x58] sm:$0xff]
      %v6669 = vld [vmem:[%s251 + $0x60] sm:$0xff]
      %v6670 = vld [vmem:[%s251 + $0x68] sm:$0xff]
      %v6671 = vld [vmem:[%s251 + $0x70] sm:$0xff]
      %v6672 = vld [vmem:[%s251 + $0x78] sm:$0xff]
      %v6673 = vld [vmem:[%s251 + $0x80] sm:$0xff]
      %v6674 = vld [vmem:[%s251 + $0x88] sm:$0xff]
      %v6675 = vld [vmem:[%s251 + $0x90] sm:$0xff]
      %v6676 = vld [vmem:[%s251 + $0x98] sm:$0xff]
      %v6677 = vld [vmem:[%s251 + $0xa0] sm:$0xff]
      %v6678 = vld [vmem:[%s251 + $0xa8] sm:$0xff]
      %v6679 = vld [vmem:[%s251 + $0xb0] sm:$0xff]
      %v6680 = vld [vmem:[%s251 + $0xb8] sm:$0xff]
      %v6681 = vld [vmem:[%s251 + $0xc0] sm:$0xff]
      %v6682 = vld [vmem:[%s251 + $0xc8] sm:$0xff]
      %v6683 = vld [vmem:[%s251 + $0xd0] sm:$0xff]
      %v6684 = vld [vmem:[%s251 + $0xd8] sm:$0xff]
      %v6685 = vld [vmem:[%s251 + $0xe0] sm:$0xff]
      %v6686 = vld [vmem:[%s251 + $0xe8] sm:$0xff]
      %v6687 = vld [vmem:[%s251 + $0xf0] sm:$0xff]
      %v6688 = vld [vmem:[%s251 + $0xf8] sm:$0xff]
      %v6689 = vld [vmem:[%s251 + $0x100] sm:$0xff]
      %v6690 = vld [vmem:[%s251 + $0x108] sm:$0xff]
      %v6691 = vld [vmem:[%s251 + $0x110] sm:$0xff]
      %v6692 = vld [vmem:[%s251 + $0x118] sm:$0xff]
      %v6693 = vld [vmem:[%s251 + $0x120] sm:$0xff]
      %v6694 = vld [vmem:[%s251 + $0x128] sm:$0xff]
      %v6695 = vld [vmem:[%s251 + $0x130] sm:$0xff]
      %v6696 = vld [vmem:[%s251 + $0x138] sm:$0xff]
      %v6697 = vld [vmem:[%s251 + $0x140] sm:$0xff]
      %v6698 = vld [vmem:[%s251 + $0x148] sm:$0xff]
      %v6699 = vmul.f32 %v6613, %v6657
      %v6700 = vmul.f32 %v6614, %v6658
      %v6701 = vmul.f32 %v6615, %v6659
      %v6702 = vmul.f32 %v6616, %v6660
      %v6703 = vmul.f32 %v6617, %v6661
      %v6704 = vmul.f32 %v6618, %v6662
      %v6705 = vmul.f32 %v6619, %v6663
      %v6706 = vmul.f32 %v6620, %v6664
      %v6707 = vmul.f32 %v6621, %v6665
      %v6708 = vmul.f32 %v6622, %v6666
      %v6709 = vmul.f32 %v6623, %v6667
      %v6710 = vmul.f32 %v6624, %v6668
      %v6711 = vmul.f32 %v6625, %v6669
      %v6712 = vmul.f32 %v6626, %v6670
      %v6713 = vmul.f32 %v6627, %v6671
      %v6714 = vmul.f32 %v6628, %v6672
      %v6715 = vmul.f32 %v6629, %v6673
      %v6716 = vmul.f32 %v6630, %v6674
      %v6717 = vmul.f32 %v6631, %v6675
      %v6718 = vmul.f32 %v6632, %v6676
      %v6719 = vmul.f32 %v6633, %v6677
      %v6720 = vmul.f32 %v6634, %v6678
      %v6721 = vmul.f32 %v6635, %v6679
      %v6722 = vmul.f32 %v6636, %v6680
      %v6723 = vmul.f32 %v6637, %v6681
      %v6724 = vmul.f32 %v6638, %v6682
      %v6725 = vmul.f32 %v6639, %v6683
      %v6726 = vmul.f32 %v6640, %v6684
      %v6727 = vmul.f32 %v6641, %v6685
      %v6728 = vmul.f32 %v6642, %v6686
      %v6729 = vmul.f32 %v6643, %v6687
      %v6730 = vmul.f32 %v6644, %v6688
      %v6731 = vmul.f32 %v6645, %v6689
      %v6732 = vmul.f32 %v6646, %v6690
      %v6733 = vmul.f32 %v6647, %v6691
      %v6734 = vmul.f32 %v6648, %v6692
      %v6735 = vmul.f32 %v6649, %v6693
      %v6736 = vmul.f32 %v6650, %v6694
      %v6737 = vmul.f32 %v6651, %v6695
      %v6738 = vmul.f32 %v6652, %v6696
      %v6739 = vmul.f32 %v6653, %v6697
      %v6740 = vmul.f32 %v6654, %v6698
      %v6741 = vadd.f32 %v6699, %v6700
      %vm6742 = vcmask 654336
      %v6743 = vsel %vm6742, %v6701, 0.0
      %v6744 = vadd.f32 %v6741, %v6743
      %6745 = vadd.xlane.f32.xlu0 %v6744
      %v6746 = vpop.xlane.xlu0 %6745
      %v6747 = vadd.f32 %v6702, %v6703
      %v6748 = vsel %vm6742, %v6704, 0.0
      %v6749 = vadd.f32 %v6747, %v6748
      %6750 = vadd.xlane.f32.xlu0 %v6749
      %v6751 = vpop.xlane.xlu0 %6750
      %v6752 = vadd.f32 %v6705, %v6706
      %v6753 = vsel %vm6742, %v6707, 0.0
      %v6754 = vadd.f32 %v6752, %v6753
      %6755 = vadd.xlane.f32.xlu0 %v6754
      %v6756 = vpop.xlane.xlu0 %6755
      %v6757 = vadd.f32 %v6708, %v6709
      %v6758 = vsel %vm6742, %v6710, 0.0
      %v6759 = vadd.f32 %v6757, %v6758
      %6760 = vadd.xlane.f32.xlu0 %v6759
      %v6761 = vpop.xlane.xlu0 %6760
      %v6762 = vadd.f32 %v6711, %v6712
      %v6763 = vsel %vm6742, %v6713, 0.0
      %v6764 = vadd.f32 %v6762, %v6763
      %6765 = vadd.xlane.f32.xlu0 %v6764
      %v6766 = vpop.xlane.xlu0 %6765
      %v6767 = vadd.f32 %v6714, %v6715
      %v6768 = vsel %vm6742, %v6716, 0.0
      %v6769 = vadd.f32 %v6767, %v6768
      %6770 = vadd.xlane.f32.xlu0 %v6769
      %v6771 = vpop.xlane.xlu0 %6770
      %v6772 = vadd.f32 %v6717, %v6718
      %v6773 = vsel %vm6742, %v6719, 0.0
      %v6774 = vadd.f32 %v6772, %v6773
      %6775 = vadd.xlane.f32.xlu0 %v6774
      %v6776 = vpop.xlane.xlu0 %6775
      %v6777 = vadd.f32 %v6720, %v6721
      %v6778 = vsel %vm6742, %v6722, 0.0
      %v6779 = vadd.f32 %v6777, %v6778
      %6780 = vadd.xlane.f32.xlu0 %v6779
      %v6781 = vpop.xlane.xlu0 %6780
      %v6782 = vadd.f32 %v6723, %v6724
      %v6783 = vsel %vm6742, %v6725, 0.0
      %v6784 = vadd.f32 %v6782, %v6783
      %6785 = vadd.xlane.f32.xlu0 %v6784
      %v6786 = vpop.xlane.xlu0 %6785
      %v6787 = vadd.f32 %v6726, %v6727
      %v6788 = vsel %vm6742, %v6728, 0.0
      %v6789 = vadd.f32 %v6787, %v6788
      %6790 = vadd.xlane.f32.xlu0 %v6789
      %v6791 = vpop.xlane.xlu0 %6790
      %v6792 = vadd.f32 %v6729, %v6730
      %v6793 = vsel %vm6742, %v6731, 0.0
      %v6794 = vadd.f32 %v6792, %v6793
      %6795 = vadd.xlane.f32.xlu0 %v6794
      %v6796 = vpop.xlane.xlu0 %6795
      %v6797 = vadd.f32 %v6732, %v6733
      %v6798 = vsel %vm6742, %v6734, 0.0
      %v6799 = vadd.f32 %v6797, %v6798
      %6800 = vadd.xlane.f32.xlu0 %v6799
      %v6801 = vpop.xlane.xlu0 %6800
      %v6802 = vadd.f32 %v6735, %v6736
      %v6803 = vsel %vm6742, %v6737, 0.0
      %v6804 = vadd.f32 %v6802, %v6803
      %6805 = vadd.xlane.f32.xlu0 %v6804
      %v6806 = vpop.xlane.xlu0 %6805
      %v6807 = vadd.f32 %v6738, %v6739
      %v6808 = vsel %vm6742, %v6740, 0.0
      %v6809 = vadd.f32 %v6807, %v6808
      %6810 = vadd.xlane.f32.xlu0 %v6809
      %v6811 = vpop.xlane.xlu0 %6810
      %v6812 = vadd.f32 %v6746, %v6751
      %v6813 = vadd.f32 %v6812, %v6756
      %v6814 = vadd.f32 %v6813, %v6761
      %v6815 = vadd.f32 %v6814, %v6766
      %v6816 = vadd.f32 %v6815, %v6771
      %v6817 = vadd.f32 %v6816, %v6776
      %v6818 = vadd.f32 %v6817, %v6781
      %v6819 = vadd.f32 %v6818, %v6786
      %v6820 = vadd.f32 %v6819, %v6791
      %v6821 = vadd.f32 %v6820, %v6796
      %v6822 = vadd.f32 %v6821, %v6801
      %v6823 = vadd.f32 %v6822, %v6806
      %v6824 = vadd.f32 %v6823, %v6811
      %v6825 = vrot.slane %v6824, 4
      %v6826 = vadd.f32 %v6824, %v6825
      %v6827 = vrot.slane %v6826, 2
      %v6828 = vadd.f32 %v6826, %v6827
      %v6829 = vrot.slane %v6828, 1
      %v6830 = vadd.f32 %v6828, %v6829
      %vm6831 = vcmp.eq.s32.totalorder %v6656, 0
      %v6832 = vsel %vm6831, 1, 0
      %v6833 = vcvt.s32.f32 %v6832
      %v6834 = vmul.f32 %v6830, %v6833
      %s6835 = scalar_lea.vmem %s251, 336
      %v6836 = vld [vmem:[%s6835] sm:$0xff]
      %v6837 = vld [vmem:[%s6835 + $0x8] sm:$0xff]
      %v6838 = vld [vmem:[%s6835 + $0x10] sm:$0xff]
      %v6839 = vld [vmem:[%s6835 + $0x18] sm:$0xff]
      %v6840 = vld [vmem:[%s6835 + $0x20] sm:$0xff]
      %v6841 = vld [vmem:[%s6835 + $0x28] sm:$0xff]
      %v6842 = vld [vmem:[%s6835 + $0x30] sm:$0xff]
      %v6843 = vld [vmem:[%s6835 + $0x38] sm:$0xff]
      %v6844 = vld [vmem:[%s6835 + $0x40] sm:$0xff]
      %v6845 = vld [vmem:[%s6835 + $0x48] sm:$0xff]
      %v6846 = vld [vmem:[%s6835 + $0x50] sm:$0xff]
      %v6847 = vld [vmem:[%s6835 + $0x58] sm:$0xff]
      %v6848 = vld [vmem:[%s6835 + $0x60] sm:$0xff]
      %v6849 = vld [vmem:[%s6835 + $0x68] sm:$0xff]
      %v6850 = vld [vmem:[%s6835 + $0x70] sm:$0xff]
      %v6851 = vld [vmem:[%s6835 + $0x78] sm:$0xff]
      %v6852 = vld [vmem:[%s6835 + $0x80] sm:$0xff]
      %v6853 = vld [vmem:[%s6835 + $0x88] sm:$0xff]
      %v6854 = vld [vmem:[%s6835 + $0x90] sm:$0xff]
      %v6855 = vld [vmem:[%s6835 + $0x98] sm:$0xff]
      %v6856 = vld [vmem:[%s6835 + $0xa0] sm:$0xff]
      %v6857 = vld [vmem:[%s6835 + $0xa8] sm:$0xff]
      %v6858 = vld [vmem:[%s6835 + $0xb0] sm:$0xff]
      %v6859 = vld [vmem:[%s6835 + $0xb8] sm:$0xff]
      %v6860 = vld [vmem:[%s6835 + $0xc0] sm:$0xff]
      %v6861 = vld [vmem:[%s6835 + $0xc8] sm:$0xff]
      %v6862 = vld [vmem:[%s6835 + $0xd0] sm:$0xff]
      %v6863 = vld [vmem:[%s6835 + $0xd8] sm:$0xff]
      %v6864 = vld [vmem:[%s6835 + $0xe0] sm:$0xff]
      %v6865 = vld [vmem:[%s6835 + $0xe8] sm:$0xff]
      %v6866 = vld [vmem:[%s6835 + $0xf0] sm:$0xff]
      %v6867 = vld [vmem:[%s6835 + $0xf8] sm:$0xff]
      %v6868 = vld [vmem:[%s6835 + $0x100] sm:$0xff]
      %v6869 = vld [vmem:[%s6835 + $0x108] sm:$0xff]
      %v6870 = vld [vmem:[%s6835 + $0x110] sm:$0xff]
      %v6871 = vld [vmem:[%s6835 + $0x118] sm:$0xff]
      %v6872 = vld [vmem:[%s6835 + $0x120] sm:$0xff]
      %v6873 = vld [vmem:[%s6835 + $0x128] sm:$0xff]
      %v6874 = vld [vmem:[%s6835 + $0x130] sm:$0xff]
      %v6875 = vld [vmem:[%s6835 + $0x138] sm:$0xff]
      %v6876 = vld [vmem:[%s6835 + $0x140] sm:$0xff]
      %v6877 = vld [vmem:[%s6835 + $0x148] sm:$0xff]
      %v6878 = vmul.f32 %v6613, %v6836
      %v6879 = vmul.f32 %v6614, %v6837
      %v6880 = vmul.f32 %v6615, %v6838
      %v6881 = vmul.f32 %v6616, %v6839
      %v6882 = vmul.f32 %v6617, %v6840
      %v6883 = vmul.f32 %v6618, %v6841
      %v6884 = vmul.f32 %v6619, %v6842
      %v6885 = vmul.f32 %v6620, %v6843
      %v6886 = vmul.f32 %v6621, %v6844
      %v6887 = vmul.f32 %v6622, %v6845
      %v6888 = vmul.f32 %v6623, %v6846
      %v6889 = vmul.f32 %v6624, %v6847
      %v6890 = vmul.f32 %v6625, %v6848
      %v6891 = vmul.f32 %v6626, %v6849
      %v6892 = vmul.f32 %v6627, %v6850
      %v6893 = vmul.f32 %v6628, %v6851
      %v6894 = vmul.f32 %v6629, %v6852
      %v6895 = vmul.f32 %v6630, %v6853
      %v6896 = vmul.f32 %v6631, %v6854
      %v6897 = vmul.f32 %v6632, %v6855
      %v6898 = vmul.f32 %v6633, %v6856
      %v6899 = vmul.f32 %v6634, %v6857
      %v6900 = vmul.f32 %v6635, %v6858
      %v6901 = vmul.f32 %v6636, %v6859
      %v6902 = vmul.f32 %v6637, %v6860
      %v6903 = vmul.f32 %v6638, %v6861
      %v6904 = vmul.f32 %v6639, %v6862
      %v6905 = vmul.f32 %v6640, %v6863
      %v6906 = vmul.f32 %v6641, %v6864
      %v6907 = vmul.f32 %v6642, %v6865
      %v6908 = vmul.f32 %v6643, %v6866
      %v6909 = vmul.f32 %v6644, %v6867
      %v6910 = vmul.f32 %v6645, %v6868
      %v6911 = vmul.f32 %v6646, %v6869
      %v6912 = vmul.f32 %v6647, %v6870
      %v6913 = vmul.f32 %v6648, %v6871
      %v6914 = vmul.f32 %v6649, %v6872
      %v6915 = vmul.f32 %v6650, %v6873
      %v6916 = vmul.f32 %v6651, %v6874
      %v6917 = vmul.f32 %v6652, %v6875
      %v6918 = vmul.f32 %v6653, %v6876
      %v6919 = vmul.f32 %v6654, %v6877
      %v6920 = vadd.f32 %v6878, %v6879
      %v6921 = vsel %vm6742, %v6880, 0.0
      %v6922 = vadd.f32 %v6920, %v6921
      %6923 = vadd.xlane.f32.xlu0 %v6922
      %v6924 = vpop.xlane.xlu0 %6923
      %v6925 = vadd.f32 %v6881, %v6882
      %v6926 = vsel %vm6742, %v6883, 0.0
      %v6927 = vadd.f32 %v6925, %v6926
      %6928 = vadd.xlane.f32.xlu0 %v6927
      %v6929 = vpop.xlane.xlu0 %6928
      %v6930 = vadd.f32 %v6884, %v6885
      %v6931 = vsel %vm6742, %v6886, 0.0
      %v6932 = vadd.f32 %v6930, %v6931
      %6933 = vadd.xlane.f32.xlu0 %v6932
      %v6934 = vpop.xlane.xlu0 %6933
      %v6935 = vadd.f32 %v6887, %v6888
      %v6936 = vsel %vm6742, %v6889, 0.0
      %v6937 = vadd.f32 %v6935, %v6936
      %6938 = vadd.xlane.f32.xlu0 %v6937
      %v6939 = vpop.xlane.xlu0 %6938
      %v6940 = vadd.f32 %v6890, %v6891
      %v6941 = vsel %vm6742, %v6892, 0.0
      %v6942 = vadd.f32 %v6940, %v6941
      %6943 = vadd.xlane.f32.xlu0 %v6942
      %v6944 = vpop.xlane.xlu0 %6943
      %v6945 = vadd.f32 %v6893, %v6894
      %v6946 = vsel %vm6742, %v6895, 0.0
      %v6947 = vadd.f32 %v6945, %v6946
      %6948 = vadd.xlane.f32.xlu0 %v6947
      %v6949 = vpop.xlane.xlu0 %6948
      %v6950 = vadd.f32 %v6896, %v6897
      %v6951 = vsel %vm6742, %v6898, 0.0
      %v6952 = vadd.f32 %v6950, %v6951
      %6953 = vadd.xlane.f32.xlu0 %v6952
      %v6954 = vpop.xlane.xlu0 %6953
      %v6955 = vadd.f32 %v6899, %v6900
      %v6956 = vsel %vm6742, %v6901, 0.0
      %v6957 = vadd.f32 %v6955, %v6956
      %6958 = vadd.xlane.f32.xlu0 %v6957
      %v6959 = vpop.xlane.xlu0 %6958
      %v6960 = vadd.f32 %v6902, %v6903
      %v6961 = vsel %vm6742, %v6904, 0.0
      %v6962 = vadd.f32 %v6960, %v6961
      %6963 = vadd.xlane.f32.xlu0 %v6962
      %v6964 = vpop.xlane.xlu0 %6963
      %v6965 = vadd.f32 %v6905, %v6906
      %v6966 = vsel %vm6742, %v6907, 0.0
      %v6967 = vadd.f32 %v6965, %v6966
      %6968 = vadd.xlane.f32.xlu0 %v6967
      %v6969 = vpop.xlane.xlu0 %6968
      %v6970 = vadd.f32 %v6908, %v6909
      %v6971 = vsel %vm6742, %v6910, 0.0
      %v6972 = vadd.f32 %v6970, %v6971
      %6973 = vadd.xlane.f32.xlu0 %v6972
      %v6974 = vpop.xlane.xlu0 %6973
      %v6975 = vadd.f32 %v6911, %v6912
      %v6976 = vsel %vm6742, %v6913, 0.0
      %v6977 = vadd.f32 %v6975, %v6976
      %6978 = vadd.xlane.f32.xlu0 %v6977
      %v6979 = vpop.xlane.xlu0 %6978
      %v6980 = vadd.f32 %v6914, %v6915
      %v6981 = vsel %vm6742, %v6916, 0.0
      %v6982 = vadd.f32 %v6980, %v6981
      %6983 = vadd.xlane.f32.xlu0 %v6982
      %v6984 = vpop.xlane.xlu0 %6983
      %v6985 = vadd.f32 %v6917, %v6918
      %v6986 = vsel %vm6742, %v6919, 0.0
      %v6987 = vadd.f32 %v6985, %v6986
      %6988 = vadd.xlane.f32.xlu0 %v6987
      %v6989 = vpop.xlane.xlu0 %6988
      %v6990 = vadd.f32 %v6924, %v6929
      %v6991 = vadd.f32 %v6990, %v6934
      %v6992 = vadd.f32 %v6991, %v6939
      %v6993 = vadd.f32 %v6992, %v6944
      %v6994 = vadd.f32 %v6993, %v6949
      %v6995 = vadd.f32 %v6994, %v6954
      %v6996 = vadd.f32 %v6995, %v6959
      %v6997 = vadd.f32 %v6996, %v6964
      %v6998 = vadd.f32 %v6997, %v6969
      %v6999 = vadd.f32 %v6998, %v6974
      %v7000 = vadd.f32 %v6999, %v6979
      %v7001 = vadd.f32 %v7000, %v6984
      %v7002 = vadd.f32 %v7001, %v6989
      %v7003 = vrot.slane %v7002, 4
      %v7004 = vadd.f32 %v7002, %v7003
      %v7005 = vrot.slane %v7004, 2
      %v7006 = vadd.f32 %v7004, %v7005
      %v7007 = vrot.slane %v7006, 1
      %v7008 = vadd.f32 %v7006, %v7007
      %vm7009 = vcmp.eq.s32.totalorder %v6656, 1
      %v7010 = vsel %vm7009, 1, 0
      %v7011 = vcvt.s32.f32 %v7010
      %v7012 = vmul.f32 %v7008, %v7011
      %s7013 = scalar_lea.vmem %s251, 672
      %v7014 = vld [vmem:[%s7013] sm:$0xff]
      %v7015 = vld [vmem:[%s7013 + $0x8] sm:$0xff]
      %v7016 = vld [vmem:[%s7013 + $0x10] sm:$0xff]
      %v7017 = vld [vmem:[%s7013 + $0x18] sm:$0xff]
      %v7018 = vld [vmem:[%s7013 + $0x20] sm:$0xff]
      %v7019 = vld [vmem:[%s7013 + $0x28] sm:$0xff]
      %v7020 = vld [vmem:[%s7013 + $0x30] sm:$0xff]
      %v7021 = vld [vmem:[%s7013 + $0x38] sm:$0xff]
      %v7022 = vld [vmem:[%s7013 + $0x40] sm:$0xff]
      %v7023 = vld [vmem:[%s7013 + $0x48] sm:$0xff]
      %v7024 = vld [vmem:[%s7013 + $0x50] sm:$0xff]
      %v7025 = vld [vmem:[%s7013 + $0x58] sm:$0xff]
      %v7026 = vld [vmem:[%s7013 + $0x60] sm:$0xff]
      %v7027 = vld [vmem:[%s7013 + $0x68] sm:$0xff]
      %v7028 = vld [vmem:[%s7013 + $0x70] sm:$0xff]
      %v7029 = vld [vmem:[%s7013 + $0x78] sm:$0xff]
      %v7030 = vld [vmem:[%s7013 + $0x80] sm:$0xff]
      %v7031 = vld [vmem:[%s7013 + $0x88] sm:$0xff]
      %v7032 = vld [vmem:[%s7013 + $0x90] sm:$0xff]
      %v7033 = vld [vmem:[%s7013 + $0x98] sm:$0xff]
      %v7034 = vld [vmem:[%s7013 + $0xa0] sm:$0xff]
      %v7035 = vld [vmem:[%s7013 + $0xa8] sm:$0xff]
      %v7036 = vld [vmem:[%s7013 + $0xb0] sm:$0xff]
      %v7037 = vld [vmem:[%s7013 + $0xb8] sm:$0xff]
      %v7038 = vld [vmem:[%s7013 + $0xc0] sm:$0xff]
      %v7039 = vld [vmem:[%s7013 + $0xc8] sm:$0xff]
      %v7040 = vld [vmem:[%s7013 + $0xd0] sm:$0xff]
      %v7041 = vld [vmem:[%s7013 + $0xd8] sm:$0xff]
      %v7042 = vld [vmem:[%s7013 + $0xe0] sm:$0xff]
      %v7043 = vld [vmem:[%s7013 + $0xe8] sm:$0xff]
      %v7044 = vld [vmem:[%s7013 + $0xf0] sm:$0xff]
      %v7045 = vld [vmem:[%s7013 + $0xf8] sm:$0xff]
      %v7046 = vld [vmem:[%s7013 + $0x100] sm:$0xff]
      %v7047 = vld [vmem:[%s7013 + $0x108] sm:$0xff]
      %v7048 = vld [vmem:[%s7013 + $0x110] sm:$0xff]
      %v7049 = vld [vmem:[%s7013 + $0x118] sm:$0xff]
      %v7050 = vld [vmem:[%s7013 + $0x120] sm:$0xff]
      %v7051 = vld [vmem:[%s7013 + $0x128] sm:$0xff]
      %v7052 = vld [vmem:[%s7013 + $0x130] sm:$0xff]
      %v7053 = vld [vmem:[%s7013 + $0x138] sm:$0xff]
      %v7054 = vld [vmem:[%s7013 + $0x140] sm:$0xff]
      %v7055 = vld [vmem:[%s7013 + $0x148] sm:$0xff]
      %v7056 = vmul.f32 %v6613, %v7014
      %v7057 = vmul.f32 %v6614, %v7015
      %v7058 = vmul.f32 %v6615, %v7016
      %v7059 = vmul.f32 %v6616, %v7017
      %v7060 = vmul.f32 %v6617, %v7018
      %v7061 = vmul.f32 %v6618, %v7019
      %v7062 = vmul.f32 %v6619, %v7020
      %v7063 = vmul.f32 %v6620, %v7021
      %v7064 = vmul.f32 %v6621, %v7022
      %v7065 = vmul.f32 %v6622, %v7023
      %v7066 = vmul.f32 %v6623, %v7024
      %v7067 = vmul.f32 %v6624, %v7025
      %v7068 = vmul.f32 %v6625, %v7026
      %v7069 = vmul.f32 %v6626, %v7027
      %v7070 = vmul.f32 %v6627, %v7028
      %v7071 = vmul.f32 %v6628, %v7029
      %v7072 = vmul.f32 %v6629, %v7030
      %v7073 = vmul.f32 %v6630, %v7031
      %v7074 = vmul.f32 %v6631, %v7032
      %v7075 = vmul.f32 %v6632, %v7033
      %v7076 = vmul.f32 %v6633, %v7034
      %v7077 = vmul.f32 %v6634, %v7035
      %v7078 = vmul.f32 %v6635, %v7036
      %v7079 = vmul.f32 %v6636, %v7037
      %v7080 = vmul.f32 %v6637, %v7038
      %v7081 = vmul.f32 %v6638, %v7039
      %v7082 = vmul.f32 %v6639, %v7040
      %v7083 = vmul.f32 %v6640, %v7041
      %v7084 = vmul.f32 %v6641, %v7042
      %v7085 = vmul.f32 %v6642, %v7043
      %v7086 = vmul.f32 %v6643, %v7044
      %v7087 = vmul.f32 %v6644, %v7045
      %v7088 = vmul.f32 %v6645, %v7046
      %v7089 = vmul.f32 %v6646, %v7047
      %v7090 = vmul.f32 %v6647, %v7048
      %v7091 = vmul.f32 %v6648, %v7049
      %v7092 = vmul.f32 %v6649, %v7050
      %v7093 = vmul.f32 %v6650, %v7051
      %v7094 = vmul.f32 %v6651, %v7052
      %v7095 = vmul.f32 %v6652, %v7053
      %v7096 = vmul.f32 %v6653, %v7054
      %v7097 = vmul.f32 %v6654, %v7055
      %v7098 = vadd.f32 %v7056, %v7057
      %v7099 = vsel %vm6742, %v7058, 0.0
      %v7100 = vadd.f32 %v7098, %v7099
      %7101 = vadd.xlane.f32.xlu0 %v7100
      %v7102 = vpop.xlane.xlu0 %7101
      %v7103 = vadd.f32 %v7059, %v7060
      %v7104 = vsel %vm6742, %v7061, 0.0
      %v7105 = vadd.f32 %v7103, %v7104
      %7106 = vadd.xlane.f32.xlu0 %v7105
      %v7107 = vpop.xlane.xlu0 %7106
      %v7108 = vadd.f32 %v7062, %v7063
      %v7109 = vsel %vm6742, %v7064, 0.0
      %v7110 = vadd.f32 %v7108, %v7109
      %7111 = vadd.xlane.f32.xlu0 %v7110
      %v7112 = vpop.xlane.xlu0 %7111
      %v7113 = vadd.f32 %v7065, %v7066
      %v7114 = vsel %vm6742, %v7067, 0.0
      %v7115 = vadd.f32 %v7113, %v7114
      %7116 = vadd.xlane.f32.xlu0 %v7115
      %v7117 = vpop.xlane.xlu0 %7116
      %v7118 = vadd.f32 %v7068, %v7069
      %v7119 = vsel %vm6742, %v7070, 0.0
      %v7120 = vadd.f32 %v7118, %v7119
      %7121 = vadd.xlane.f32.xlu0 %v7120
      %v7122 = vpop.xlane.xlu0 %7121
      %v7123 = vadd.f32 %v7071, %v7072
      %v7124 = vsel %vm6742, %v7073, 0.0
      %v7125 = vadd.f32 %v7123, %v7124
      %7126 = vadd.xlane.f32.xlu0 %v7125
      %v7127 = vpop.xlane.xlu0 %7126
      %v7128 = vadd.f32 %v7074, %v7075
      %v7129 = vsel %vm6742, %v7076, 0.0
      %v7130 = vadd.f32 %v7128, %v7129
      %7131 = vadd.xlane.f32.xlu0 %v7130
      %v7132 = vpop.xlane.xlu0 %7131
      %v7133 = vadd.f32 %v7077, %v7078
      %v7134 = vsel %vm6742, %v7079, 0.0
      %v7135 = vadd.f32 %v7133, %v7134
      %7136 = vadd.xlane.f32.xlu0 %v7135
      %v7137 = vpop.xlane.xlu0 %7136
      %v7138 = vadd.f32 %v7080, %v7081
      %v7139 = vsel %vm6742, %v7082, 0.0
      %v7140 = vadd.f32 %v7138, %v7139
      %7141 = vadd.xlane.f32.xlu0 %v7140
      %v7142 = vpop.xlane.xlu0 %7141
      %v7143 = vadd.f32 %v7083, %v7084
      %v7144 = vsel %vm6742, %v7085, 0.0
      %v7145 = vadd.f32 %v7143, %v7144
      %7146 = vadd.xlane.f32.xlu0 %v7145
      %v7147 = vpop.xlane.xlu0 %7146
      %v7148 = vadd.f32 %v7086, %v7087
      %v7149 = vsel %vm6742, %v7088, 0.0
      %v7150 = vadd.f32 %v7148, %v7149
      %7151 = vadd.xlane.f32.xlu0 %v7150
      %v7152 = vpop.xlane.xlu0 %7151
      %v7153 = vadd.f32 %v7089, %v7090
      %v7154 = vsel %vm6742, %v7091, 0.0
      %v7155 = vadd.f32 %v7153, %v7154
      %7156 = vadd.xlane.f32.xlu0 %v7155
      %v7157 = vpop.xlane.xlu0 %7156
      %v7158 = vadd.f32 %v7092, %v7093
      %v7159 = vsel %vm6742, %v7094, 0.0
      %v7160 = vadd.f32 %v7158, %v7159
      %7161 = vadd.xlane.f32.xlu0 %v7160
      %v7162 = vpop.xlane.xlu0 %7161
      %v7163 = vadd.f32 %v7095, %v7096
      %v7164 = vsel %vm6742, %v7097, 0.0
      %v7165 = vadd.f32 %v7163, %v7164
      %7166 = vadd.xlane.f32.xlu0 %v7165
      %v7167 = vpop.xlane.xlu0 %7166
      %v7168 = vadd.f32 %v7102, %v7107
      %v7169 = vadd.f32 %v7168, %v7112
      %v7170 = vadd.f32 %v7169, %v7117
      %v7171 = vadd.f32 %v7170, %v7122
      %v7172 = vadd.f32 %v7171, %v7127
      %v7173 = vadd.f32 %v7172, %v7132
      %v7174 = vadd.f32 %v7173, %v7137
      %v7175 = vadd.f32 %v7174, %v7142
      %v7176 = vadd.f32 %v7175, %v7147
      %v7177 = vadd.f32 %v7176, %v7152
      %v7178 = vadd.f32 %v7177, %v7157
      %v7179 = vadd.f32 %v7178, %v7162
      %v7180 = vadd.f32 %v7179, %v7167
      %v7181 = vrot.slane %v7180, 4
      %v7182 = vadd.f32 %v7180, %v7181
      %v7183 = vrot.slane %v7182, 2
      %v7184 = vadd.f32 %v7182, %v7183
      %v7185 = vrot.slane %v7184, 1
      %v7186 = vadd.f32 %v7184, %v7185
      %vm7187 = vcmp.eq.s32.totalorder %v6656, 2
      %v7188 = vsel %vm7187, 1, 0
      %v7189 = vcvt.s32.f32 %v7188
      %v7190 = vmul.f32 %v7186, %v7189
      %s7191 = scalar_lea.vmem %s251, 1008
      %v7192 = vld [vmem:[%s7191] sm:$0xff]
      %v7193 = vld [vmem:[%s7191 + $0x8] sm:$0xff]
      %v7194 = vld [vmem:[%s7191 + $0x10] sm:$0xff]
      %v7195 = vld [vmem:[%s7191 + $0x18] sm:$0xff]
      %v7196 = vld [vmem:[%s7191 + $0x20] sm:$0xff]
      %v7197 = vld [vmem:[%s7191 + $0x28] sm:$0xff]
      %v7198 = vld [vmem:[%s7191 + $0x30] sm:$0xff]
      %v7199 = vld [vmem:[%s7191 + $0x38] sm:$0xff]
      %v7200 = vld [vmem:[%s7191 + $0x40] sm:$0xff]
      %v7201 = vld [vmem:[%s7191 + $0x48] sm:$0xff]
      %v7202 = vld [vmem:[%s7191 + $0x50] sm:$0xff]
      %v7203 = vld [vmem:[%s7191 + $0x58] sm:$0xff]
      %v7204 = vld [vmem:[%s7191 + $0x60] sm:$0xff]
      %v7205 = vld [vmem:[%s7191 + $0x68] sm:$0xff]
      %v7206 = vld [vmem:[%s7191 + $0x70] sm:$0xff]
      %v7207 = vld [vmem:[%s7191 + $0x78] sm:$0xff]
      %v7208 = vld [vmem:[%s7191 + $0x80] sm:$0xff]
      %v7209 = vld [vmem:[%s7191 + $0x88] sm:$0xff]
      %v7210 = vld [vmem:[%s7191 + $0x90] sm:$0xff]
      %v7211 = vld [vmem:[%s7191 + $0x98] sm:$0xff]
      %v7212 = vld [vmem:[%s7191 + $0xa0] sm:$0xff]
      %v7213 = vld [vmem:[%s7191 + $0xa8] sm:$0xff]
      %v7214 = vld [vmem:[%s7191 + $0xb0] sm:$0xff]
      %v7215 = vld [vmem:[%s7191 + $0xb8] sm:$0xff]
      %v7216 = vld [vmem:[%s7191 + $0xc0] sm:$0xff]
      %v7217 = vld [vmem:[%s7191 + $0xc8] sm:$0xff]
      %v7218 = vld [vmem:[%s7191 + $0xd0] sm:$0xff]
      %v7219 = vld [vmem:[%s7191 + $0xd8] sm:$0xff]
      %v7220 = vld [vmem:[%s7191 + $0xe0] sm:$0xff]
      %v7221 = vld [vmem:[%s7191 + $0xe8] sm:$0xff]
      %v7222 = vld [vmem:[%s7191 + $0xf0] sm:$0xff]
      %v7223 = vld [vmem:[%s7191 + $0xf8] sm:$0xff]
      %v7224 = vld [vmem:[%s7191 + $0x100] sm:$0xff]
      %v7225 = vld [vmem:[%s7191 + $0x108] sm:$0xff]
      %v7226 = vld [vmem:[%s7191 + $0x110] sm:$0xff]
      %v7227 = vld [vmem:[%s7191 + $0x118] sm:$0xff]
      %v7228 = vld [vmem:[%s7191 + $0x120] sm:$0xff]
      %v7229 = vld [vmem:[%s7191 + $0x128] sm:$0xff]
      %v7230 = vld [vmem:[%s7191 + $0x130] sm:$0xff]
      %v7231 = vld [vmem:[%s7191 + $0x138] sm:$0xff]
      %v7232 = vld [vmem:[%s7191 + $0x140] sm:$0xff]
      %v7233 = vld [vmem:[%s7191 + $0x148] sm:$0xff]
      %v7234 = vmul.f32 %v6613, %v7192
      %v7235 = vmul.f32 %v6614, %v7193
      %v7236 = vmul.f32 %v6615, %v7194
      %v7237 = vmul.f32 %v6616, %v7195
      %v7238 = vmul.f32 %v6617, %v7196
      %v7239 = vmul.f32 %v6618, %v7197
      %v7240 = vmul.f32 %v6619, %v7198
      %v7241 = vmul.f32 %v6620, %v7199
      %v7242 = vmul.f32 %v6621, %v7200
      %v7243 = vmul.f32 %v6622, %v7201
      %v7244 = vmul.f32 %v6623, %v7202
      %v7245 = vmul.f32 %v6624, %v7203
      %v7246 = vmul.f32 %v6625, %v7204
      %v7247 = vmul.f32 %v6626, %v7205
      %v7248 = vmul.f32 %v6627, %v7206
      %v7249 = vmul.f32 %v6628, %v7207
      %v7250 = vmul.f32 %v6629, %v7208
      %v7251 = vmul.f32 %v6630, %v7209
      %v7252 = vmul.f32 %v6631, %v7210
      %v7253 = vmul.f32 %v6632, %v7211
      %v7254 = vmul.f32 %v6633, %v7212
      %v7255 = vmul.f32 %v6634, %v7213
      %v7256 = vmul.f32 %v6635, %v7214
      %v7257 = vmul.f32 %v6636, %v7215
      %v7258 = vmul.f32 %v6637, %v7216
      %v7259 = vmul.f32 %v6638, %v7217
      %v7260 = vmul.f32 %v6639, %v7218
      %v7261 = vmul.f32 %v6640, %v7219
      %v7262 = vmul.f32 %v6641, %v7220
      %v7263 = vmul.f32 %v6642, %v7221
      %v7264 = vmul.f32 %v6643, %v7222
      %v7265 = vmul.f32 %v6644, %v7223
      %v7266 = vmul.f32 %v6645, %v7224
      %v7267 = vmul.f32 %v6646, %v7225
      %v7268 = vmul.f32 %v6647, %v7226
      %v7269 = vmul.f32 %v6648, %v7227
      %v7270 = vmul.f32 %v6649, %v7228
      %v7271 = vmul.f32 %v6650, %v7229
      %v7272 = vmul.f32 %v6651, %v7230
      %v7273 = vmul.f32 %v6652, %v7231
      %v7274 = vmul.f32 %v6653, %v7232
      %v7275 = vmul.f32 %v6654, %v7233
      %v7276 = vadd.f32 %v7234, %v7235
      %v7277 = vsel %vm6742, %v7236, 0.0
      %v7278 = vadd.f32 %v7276, %v7277
      %7279 = vadd.xlane.f32.xlu0 %v7278
      %v7280 = vpop.xlane.xlu0 %7279
      %v7281 = vadd.f32 %v7237, %v7238
      %v7282 = vsel %vm6742, %v7239, 0.0
      %v7283 = vadd.f32 %v7281, %v7282
      %7284 = vadd.xlane.f32.xlu0 %v7283
      %v7285 = vpop.xlane.xlu0 %7284
      %v7286 = vadd.f32 %v7240, %v7241
      %v7287 = vsel %vm6742, %v7242, 0.0
      %v7288 = vadd.f32 %v7286, %v7287
      %7289 = vadd.xlane.f32.xlu0 %v7288
      %v7290 = vpop.xlane.xlu0 %7289
      %v7291 = vadd.f32 %v7243, %v7244
      %v7292 = vsel %vm6742, %v7245, 0.0
      %v7293 = vadd.f32 %v7291, %v7292
      %7294 = vadd.xlane.f32.xlu0 %v7293
      %v7295 = vpop.xlane.xlu0 %7294
      %v7296 = vadd.f32 %v7246, %v7247
      %v7297 = vsel %vm6742, %v7248, 0.0
      %v7298 = vadd.f32 %v7296, %v7297
      %7299 = vadd.xlane.f32.xlu0 %v7298
      %v7300 = vpop.xlane.xlu0 %7299
      %v7301 = vadd.f32 %v7249, %v7250
      %v7302 = vsel %vm6742, %v7251, 0.0
      %v7303 = vadd.f32 %v7301, %v7302
      %7304 = vadd.xlane.f32.xlu0 %v7303
      %v7305 = vpop.xlane.xlu0 %7304
      %v7306 = vadd.f32 %v7252, %v7253
      %v7307 = vsel %vm6742, %v7254, 0.0
      %v7308 = vadd.f32 %v7306, %v7307
      %7309 = vadd.xlane.f32.xlu0 %v7308
      %v7310 = vpop.xlane.xlu0 %7309
      %v7311 = vadd.f32 %v7255, %v7256
      %v7312 = vsel %vm6742, %v7257, 0.0
      %v7313 = vadd.f32 %v7311, %v7312
      %7314 = vadd.xlane.f32.xlu0 %v7313
      %v7315 = vpop.xlane.xlu0 %7314
      %v7316 = vadd.f32 %v7258, %v7259
      %v7317 = vsel %vm6742, %v7260, 0.0
      %v7318 = vadd.f32 %v7316, %v7317
      %7319 = vadd.xlane.f32.xlu0 %v7318
      %v7320 = vpop.xlane.xlu0 %7319
      %v7321 = vadd.f32 %v7261, %v7262
      %v7322 = vsel %vm6742, %v7263, 0.0
      %v7323 = vadd.f32 %v7321, %v7322
      %7324 = vadd.xlane.f32.xlu0 %v7323
      %v7325 = vpop.xlane.xlu0 %7324
      %v7326 = vadd.f32 %v7264, %v7265
      %v7327 = vsel %vm6742, %v7266, 0.0
      %v7328 = vadd.f32 %v7326, %v7327
      %7329 = vadd.xlane.f32.xlu0 %v7328
      %v7330 = vpop.xlane.xlu0 %7329
      %v7331 = vadd.f32 %v7267, %v7268
      %v7332 = vsel %vm6742, %v7269, 0.0
      %v7333 = vadd.f32 %v7331, %v7332
      %7334 = vadd.xlane.f32.xlu0 %v7333
      %v7335 = vpop.xlane.xlu0 %7334
      %v7336 = vadd.f32 %v7270, %v7271
      %v7337 = vsel %vm6742, %v7272, 0.0
      %v7338 = vadd.f32 %v7336, %v7337
      %7339 = vadd.xlane.f32.xlu0 %v7338
      %v7340 = vpop.xlane.xlu0 %7339
      %v7341 = vadd.f32 %v7273, %v7274
      %v7342 = vsel %vm6742, %v7275, 0.0
      %v7343 = vadd.f32 %v7341, %v7342
      %7344 = vadd.xlane.f32.xlu0 %v7343
      %v7345 = vpop.xlane.xlu0 %7344
      %v7346 = vadd.f32 %v7280, %v7285
      %v7347 = vadd.f32 %v7346, %v7290
      %v7348 = vadd.f32 %v7347, %v7295
      %v7349 = vadd.f32 %v7348, %v7300
      %v7350 = vadd.f32 %v7349, %v7305
      %v7351 = vadd.f32 %v7350, %v7310
      %v7352 = vadd.f32 %v7351, %v7315
      %v7353 = vadd.f32 %v7352, %v7320
      %v7354 = vadd.f32 %v7353, %v7325
      %v7355 = vadd.f32 %v7354, %v7330
      %v7356 = vadd.f32 %v7355, %v7335
      %v7357 = vadd.f32 %v7356, %v7340
      %v7358 = vadd.f32 %v7357, %v7345
      %v7359 = vrot.slane %v7358, 4
      %v7360 = vadd.f32 %v7358, %v7359
      %v7361 = vrot.slane %v7360, 2
      %v7362 = vadd.f32 %v7360, %v7361
      %v7363 = vrot.slane %v7362, 1
      %v7364 = vadd.f32 %v7362, %v7363
      %vm7365 = vcmp.eq.s32.totalorder %v6656, 3
      %v7366 = vsel %vm7365, 1, 0
      %v7367 = vcvt.s32.f32 %v7366
      %v7368 = vmul.f32 %v7364, %v7367
      %v7369 = vadd.f32 %v6834, %v7012
      %v7370 = vadd.f32 %v7369, %v7190
      %v7371 = vadd.f32 %v7370, %v7368
      %vm7372 = vcmask 24576
      %7373 = vst.msk [vmem:[%s258] sm:$0x1] %vm7372, %v7371
      %p7374 = scmp.lt.s32.totalorder %s19, 1
      %s7375 = scalar_select %p7374, %s19, 1
      %p7376 = scmp.lt.s32.totalorder %s20, 0
      %s7377 = scalar_select %p7376, %s20, 0
      %s7378 = sadd.s32 %s7377, %s7375
      %s7379 = scalar_lea.vmem %s4, %s7378
      // Predicated region
      $region37: #{spatial_transformer_forward.2} parent=35 // pred_check
        %p7380 = pneg %p146
      $region38: #{spatial_transformer_forward.2} parent=35 // pred_check_branch
        %7382 = sbr.rel (%p7380) target = $region40
      $region39: #{spatial_transformer_forward.2} parent=35 // pred_region
        _
      $region40: #{spatial_transformer_forward.2} parent=35 // pred_fallthru
        _
    $region36: #{spatial_transformer_forward.2} parent=5 // pred_fallthru
      _
    %p7383 = scmp.le.s32.totalorder 2, %s10
    // Predicated region
    $region41: #{spatial_transformer_forward.2} parent=5 // pred_check
      %p7384 = pneg %p7383
    $region42: #{spatial_transformer_forward.2} parent=5 // pred_check_branch
      %7386 = sbr.rel (%p7384) target = $region44
    $region43: #{spatial_transformer_forward.2} parent=5 // pred_region
      %s7387 = ssub.s32 %s10, 2
      // Predicated region
      $region45: #{spatial_transformer_forward.2} parent=43 // pred_check
        %p7388 = pneg %p152
      $region46: #{spatial_transformer_forward.2} parent=43 // pred_check_branch
        %7390 = sbr.rel (%p7388) target = $region48
      $region47: #{spatial_transformer_forward.2} parent=43 // pred_region
        %p7391 = scmp.lt.s32.totalorder %s21, 1
        %s7392 = scalar_select %p7391, %s21, 1
        %p7393 = scmp.lt.s32.totalorder %s22, 0
        %s7394 = scalar_select %p7393, %s22, 0
        %s7395 = sadd.s32 %s7394, %s7392
        %s7396 = scalar_lea.vmem %s4, %s7395
      $region48: #{spatial_transformer_forward.2} parent=43 // pred_fallthru
        _
    $region44: #{spatial_transformer_forward.2} parent=5 // pred_fallthru
      _
  $region6: #{spatial_transformer_forward.2} parent=0 // loop_footer
    %s14 = sadd.s32 1, %s10
  $region7: #{spatial_transformer_forward.2} parent=0 // loop_footer_branch
    %9 = sbr.rel target = $region3
  $region8: #{spatial_transformer_forward.2} parent=0 // loop_exit
    _

</llo_original>
